<compile_context>
chip_gen: v6e
topology: v6e:2x2x1
jax: 0.10.0
libtpu: 0.0.40
codegen_flags: <defaults>
</compile_context>

<pallas_src>
import math

import jax
import jax.numpy as jnp
from jax.experimental import pallas as pl
from jax.experimental.pallas import tpu as pltpu

# ----------------------------- hyper-parameters -----------------------------
N_TOKENS_SRC = 50
N_TOKENS_TGT = 60
DIM_EMB = 32
DIM_HIDDEN = 32
N_LAYERS = 2
DROPOUT = 0.0            # identity dropout -> deterministic forward
SRC_PAD_IDX = 0
TGT_PAD_IDX = 0
MODEL_TYPE = "GRU"       # this script implements the GRU cell variant

H = DIM_HIDDEN           # 32
GP = 128                 # one 128-lane block per gate (r | z | n)
G3 = 3 * GP              # 384 fused gate lanes
OUT_W_ROW = 8            # out_w starts at this (sublane-aligned) row of `misc`


# ------------------------------- Pallas kernel -------------------------------
def fused_translation_kernel(src_ref, tgt_ref, wi_ref, wh_ref, b_ref, misc_ref,
                             logits_ref):
    """Whole TranslationRNN forward in a single kernel invocation (no grid).

    src_ref : (T_src, B, E)  time-major source embeddings (already flipped)
    tgt_ref : (T_tgt, B, E)  time-major target embeddings
    wi_ref  : (4, E, 384)    per-layer input-gate weights, gates in 128-lane
                             blocks [r|z|n]; lanes >= H inside a block are zero
    wh_ref  : (4, H, 384)    per-layer hidden-gate weights, same layout
    b_ref   : (4, 512)       lanes 0:384 fused input bias (b_i + b_h for r,z and
                             b_in for n), lanes 384:512 = b_hn (kept separate)
    misc_ref: (40, 128)      row 0 out_b, row 1 LN gamma, row 2 LN beta,
                             rows 8:40 out_w (columns >= 60 are zero)
    logits_ref: (T_tgt, B, 128) time-major padded logits
    """
    T_src, B, E = src_ref.shape
    T_tgt = tgt_ref.shape[0]

    def gru_step(gi, h, wh, bhn):
        # gi: (B, 384) input-side gates (bias folded in); h: (B, 128) padded.
        gh = jnp.dot(h[:, :H], wh, preferred_element_type=jnp.float32)  # (B,384)
        s = gi + gh
        rz = jax.nn.sigmoid(s[:, :2 * GP])     # r and z in one 256-lane sigmoid
        r = rz[:, :GP]
        z = rz[:, GP:]
        n = jnp.tanh(gi[:, 2 * GP:] + r * (gh[:, 2 * GP:] + bhn))
        return z * h + (1.0 - z) * n           # pad lanes stay exactly 0

    def gru_stack2(x_tm, h0, h1, l0, l1, want_ys):
        """Two stacked GRU layers, wavefront-interleaved over T+1 waves."""
        T = x_tm.shape[0]
        wi0, wh0 = wi_ref[l0], wh_ref[l0]
        wi1, wh1 = wi_ref[l1], wh_ref[l1]
        bi0, bhn0 = b_ref[l0:l0 + 1, :G3], b_ref[l0:l0 + 1, G3:]
        bi1, bhn1 = b_ref[l1:l1 + 1, :G3], b_ref[l1:l1 + 1, G3:]

        # Hoisted layer-0 input projection: one (T*B, E) x (E, 384) matmul.
        xi0 = jnp.dot(x_tm.reshape(T * B, E), wi0,
                      preferred_element_type=jnp.float32) + bi0
        xi0 = xi0.reshape(T, B, G3)

        # TODO(synk): hold wh0/wh1 weight-stationary across the 8 steps via
        # pltpu.matmul_push_rhs/matmul_acc_lhs/matmul_pop (and pin the two
        # wavefront layers to different mxu_index values on v5e) to drop the
        # per-step RHS re-push; kept on jnp.dot for robustness/portability.
        ys1 = []
        y0 = None
        for w in range(T + 1):                 # static -> fully unrolled
            if w >= 1:                         # layer-1 step w-1 (uses wave w-1's y0)
                gi1 = jnp.dot(y0, wi1, preferred_element_type=jnp.float32) + bi1
                h1 = gru_step(gi1, h1, wh1, bhn1)
                if want_ys:
                    ys1.append(h1)             # dropout(p=0) == identity
            if w < T:                          # layer-0 step w (independent chain)
                h0 = gru_step(xi0[w], h0, wh0, bhn0)
                y0 = h0[:, :H]
        ys = jnp.stack(ys1, axis=0) if want_ys else None
        return ys, h0, h1

    out_b = misc_ref[0:1, :]                   # (1, 128)
    gamma = misc_ref[1:2, :]                   # LN gamma, zero past lane H
    beta = misc_ref[2:3, :]                    # LN beta,  zero past lane H
    out_w = misc_ref[OUT_W_ROW:OUT_W_ROW + H, :]   # (32, 128)

    inv_h = 1.0 / H

    def layer_norm(h):                          # h: (B, 128), pad lanes exactly 0
        mean = jnp.sum(h, axis=-1, keepdims=True) * inv_h
        ex2 = jnp.sum(h * h, axis=-1, keepdims=True) * inv_h
        var = ex2 - mean * mean                 # biased variance over H real lanes
        return (h - mean) * jax.lax.rsqrt(var + 1e-5) * gamma + beta  # pad -> 0

    hz = jnp.zeros((B, GP), jnp.float32)

    # ----- encoder (2 stacked GRU layers, zero initial hidden) -----
    _, h_e0, h_e1 = gru_stack2(src_ref[...], hz, hz, 0, 1, want_ys=False)

    # ----- decoder (init hidden = LayerNorm of encoder final hiddens) -----
    y_d1, _, _ = gru_stack2(tgt_ref[...], layer_norm(h_e0), layer_norm(h_e1),
                            2, 3, want_ys=True)

    # ----- lane-dense output projection (padded to 128, sliced in wrapper) -----
    logits = jnp.dot(y_d1.reshape(T_tgt * B, GP)[:, :H], out_w,
                     preferred_element_type=jnp.float32) + out_b
    logits_ref[...] = logits.reshape(T_tgt, B, GP)


# ------------------------------ Pallas wrapper -------------------------------
def _cost_estimate(B, T_src, T_tgt):
    waves = T_src + T_tgt
    flops = 2 * B * H * G3 * (3 * waves)            # per-step hidden/input matmuls
    flops += 2 * waves * B * DIM_EMB * G3           # hoisted layer-0 projections
    flops += 2 * T_tgt * B * H * GP                 # output projection
    trans = 2 * B * G3 * waves                      # sigmoid + tanh lanes (approx)
    bytes_acc = 4 * (4 * DIM_EMB * G3 + 4 * H * G3 + 4 * 512 + 40 * GP
                     + waves * B * DIM_EMB + T_tgt * B * GP)
    return pl.CostEstimate(flops=flops, transcendentals=trans,
                           bytes_accessed=bytes_acc)


def translation_rnn_forward(params, source, target):
    """source: [B, S_src] int32, target: [B, S_tgt] int32 -> [B, S_tgt, 60] f32."""
    B, S_src = source.shape
    S_tgt = target.shape[1]
    # Embedding gathers + torch.fliplr stay in plain JAX; produce time-major acts.
    src_tm = jnp.take(params["src_emb"], jnp.flip(source, axis=1).T, axis=0)
    tgt_tm = jnp.take(params["tgt_emb"], target.T, axis=0)

    logits_tm = pl.pallas_call(
        fused_translation_kernel,
        out_shape=jax.ShapeDtypeStruct((S_tgt, B, GP), jnp.float32),
        in_specs=[pl.BlockSpec(memory_space=pltpu.MemorySpace.VMEM)] * 6,
        out_specs=pl.BlockSpec(memory_space=pltpu.MemorySpace.VMEM),
        cost_estimate=_cost_estimate(B, S_src, S_tgt),
        # No grid / no batch-parallel axis at B=2 (per review): the serial
        # recurrence chain, not per-step width, is the bottleneck.
    )(src_tm, tgt_tm, params["wi_stack"], params["wh_stack"],
      params["bias_stack"], params["misc"])

    # One transpose back to batch-major + drop the padded vocab lanes.
    return jnp.transpose(logits_tm, (1, 0, 2))[..., :N_TOKENS_TGT]


# ------------------------------ parameter init -------------------------------
def init_params(key):
    assert DIM_EMB == DIM_HIDDEN, "uniform (E == H) weight stacking assumed"
    keys = iter(jax.random.split(key, 64))

    def unif(shape, bound):
        return jax.random.uniform(next(keys), shape, jnp.float32, -bound, bound)

    def init_gru_cell(input_size, hidden_size):
        """nn.Linear-style init per gate; gates packed into 128-lane blocks."""
        bi = 1.0 / math.sqrt(input_size)
        bh = 1.0 / math.sqrt(hidden_size)
        wi = jnp.zeros((input_size, G3), jnp.float32)
        wh = jnp.zeros((hidden_size, G3), jnp.float32)
        bias = jnp.zeros((G3 + GP,), jnp.float32)
        for g in range(3):                            # 0=r, 1=z, 2=n
            w_i = unif((input_size, hidden_size), bi)
            b_i = unif((hidden_size,), bi)
            w_h = unif((hidden_size, hidden_size), bh)
            b_h = unif((hidden_size,), bh)
            wi = wi.at[:, g * GP:g * GP + hidden_size].set(w_i)
            wh = wh.at[:, g * GP:g * GP + hidden_size].set(w_h)
            if g < 2:        # b_hr / b_hz fold into the input-side bias
                bias = bias.at[g * GP:g * GP + hidden_size].set(b_i + b_h)
            else:            # b_hn stays separate: n = tanh(.. + r*(Whn h + b_hn))
                bias = bias.at[g * GP:g * GP + hidden_size].set(b_i)
                bias = bias.at[G3:G3 + hidden_size].set(b_h)
        return wi, wh, bias

    cells = [init_gru_cell(DIM_EMB if l == 0 else DIM_HIDDEN, DIM_HIDDEN)
             for l in range(N_LAYERS)]                 # encoder layers 0,1
    cells += [init_gru_cell(DIM_EMB if l == 0 else DIM_HIDDEN, DIM_HIDDEN)
              for l in range(N_LAYERS)]                # decoder layers 2,3
    wi_stack = jnp.stack([c[0] for c in cells])        # (4, 32, 384)
    wh_stack = jnp.stack([c[1] for c in cells])        # (4, 32, 384)
    bias_stack = jnp.stack([c[2] for c in cells])      # (4, 512)

    src_emb = jax.random.normal(next(keys), (N_TOKENS_SRC, DIM_EMB), jnp.float32)
    src_emb = src_emb.at[SRC_PAD_IDX].set(0.0)
    tgt_emb = jax.random.normal(next(keys), (N_TOKENS_TGT, DIM_EMB), jnp.float32)
    tgt_emb = tgt_emb.at[TGT_PAD_IDX].set(0.0)

    bo = 1.0 / math.sqrt(DIM_HIDDEN)
    out_w = unif((DIM_HIDDEN, N_TOKENS_TGT), bo)
    out_b = unif((N_TOKENS_TGT,), bo)
    misc = jnp.zeros((OUT_W_ROW + DIM_HIDDEN, GP), jnp.float32)
    misc = misc.at[0, :N_TOKENS_TGT].set(out_b)            # out bias (row 0)
    misc = misc.at[1, :DIM_HIDDEN].set(1.0)                # LN gamma  (row 1)
    # row 2: LN beta stays zero
    misc = misc.at[OUT_W_ROW:, :N_TOKENS_TGT].set(out_w)   # out projection

    return {"src_emb": src_emb, "tgt_emb": tgt_emb, "wi_stack": wi_stack,
            "wh_stack": wh_stack, "bias_stack": bias_stack, "misc": misc}


# --------------------------- pure-JAX reference ------------------------------
def reference_forward(params, source, target):
    """Direct per-step translation of the PyTorch module (same params)."""
    def cell_weights(l):
        wi, wh, b = params["wi_stack"][l], params["wh_stack"][l], params["bias_stack"][l]
        w = {}
        for g, name in enumerate(("r", "z", "n")):
            w[f"wi_{name}"] = wi[:, g * GP:g * GP + H]
            w[f"wh_{name}"] = wh[:, g * GP:g * GP + H]
            w[f"bi_{name}"] = b[g * GP:g * GP + H]
        w["bh_n"] = b[G3:G3 + H]
        return w

    def gru_cell(x, h, w):                        # x: (B, T, H), h: (B, H)
        ys = []
        for t in range(x.shape[1]):
            xt = x[:, t, :]
            r = jax.nn.sigmoid(xt @ w["wi_r"] + w["bi_r"] + h @ w["wh_r"])
            z = jax.nn.sigmoid(xt @ w["wi_z"] + w["bi_z"] + h @ w["wh_z"])
            n = jnp.tanh(xt @ w["wi_n"] + w["bi_n"] + r * (h @ w["wh_n"] + w["bh_n"]))
            h = z * h + (1.0 - z) * n
            ys.append(h)
        return jnp.stack(ys, axis=1), h

    def ln(v):
        m = jnp.mean(v, -1, keepdims=True)
        var = jnp.mean((v - m) ** 2, -1, keepdims=True)
        return ((v - m) / jnp.sqrt(var + 1e-5) * params["misc"][1, :H]
                + params["misc"][2, :H])

    src = jnp.take(params["src_emb"], jnp.flip(source, axis=1), axis=0)
    tgt = jnp.take(params["tgt_emb"], target, axis=0)
    h0 = jnp.zeros((source.shape[0], H), jnp.float32)
    y0, he0 = gru_cell(src, h0, cell_weights(0))
    _, he1 = gru_cell(y0, h0, cell_weights(1))
    d0, _ = gru_cell(tgt, ln(he0), cell_weights(2))
    d1, _ = gru_cell(d0, ln(he1), cell_weights(3))
    out_w = params["misc"][OUT_W_ROW:OUT_W_ROW + H, :N_TOKENS_TGT]
    out_b = params["misc"][0, :N_TOKENS_TGT]
    return d1 @ out_w + out_b


# ----------------------------------- main ------------------------------------
if __name__ == "__main__":
    key = jax.random.PRNGKey(0)
    pkey, skey, tkey = jax.random.split(key, 3)

    params = init_params(pkey)

    B, S_SRC, S_TGT = 2, 8, 8
    source = jax.random.randint(skey, (B, S_SRC), 0, N_TOKENS_SRC, dtype=jnp.int32)
    target = jax.random.randint(tkey, (B, S_TGT), 0, N_TOKENS_TGT, dtype=jnp.int32)

    fwd = jax.jit(translation_rnn_forward)
    logits = jax.block_until_ready(fwd(params, source, target))

    assert logits.shape == (B, S_TGT, N_TOKENS_TGT), logits.shape
    assert logits.dtype == jnp.float32

    ref = reference_forward(params, source, target)
    err = float(jnp.max(jnp.abs(logits - ref)))
    assert err < 2e-3, f"kernel/reference mismatch: {err}"

    print("KERNEL_OK")
</pallas_src>

<mosaic_0001>
module attributes {stable_mosaic.version = 11 : i64} {
  func.func @fused_translation_kernel(%arg0: memref<8x2x32xf32, #tpu.memory_space<vmem>>, %arg1: memref<8x2x32xf32, #tpu.memory_space<vmem>>, %arg2: memref<4x32x384xf32, #tpu.memory_space<vmem>>, %arg3: memref<4x32x384xf32, #tpu.memory_space<vmem>>, %arg4: memref<4x512xf32, #tpu.memory_space<vmem>>, %arg5: memref<40x128xf32, #tpu.memory_space<vmem>>, %arg6: memref<8x2x128xf32, #tpu.memory_space<vmem>>) attributes {dimension_semantics = [], scalar_prefetch = 0 : i64, scratch_operands = 0 : i64, tpu.core_type = #tpu.core_type<tc>} {
    %c0 = arith.constant 0 : index
    %c0_0 = arith.constant 0 : index
    %0 = vector.load %arg5[%c0, %c0_0] : memref<40x128xf32, #tpu.memory_space<vmem>>, vector<1x128xf32>
    %c1 = arith.constant 1 : index
    %c0_1 = arith.constant 0 : index
    %1 = vector.load %arg5[%c1, %c0_1] : memref<40x128xf32, #tpu.memory_space<vmem>>, vector<1x128xf32>
    %c2 = arith.constant 2 : index
    %c0_2 = arith.constant 0 : index
    %2 = vector.load %arg5[%c2, %c0_2] : memref<40x128xf32, #tpu.memory_space<vmem>>, vector<1x128xf32>
    %c8 = arith.constant 8 : index
    %c0_3 = arith.constant 0 : index
    %3 = vector.load %arg5[%c8, %c0_3] : memref<40x128xf32, #tpu.memory_space<vmem>>, vector<32x128xf32>
    %cst = arith.constant 0.000000e+00 : f32
    %4 = vector.broadcast %cst : f32 to vector<2x128xf32>
    %c0_4 = arith.constant 0 : index
    %c0_5 = arith.constant 0 : index
    %c0_6 = arith.constant 0 : index
    %5 = vector.load %arg0[%c0_4, %c0_5, %c0_6] : memref<8x2x32xf32, #tpu.memory_space<vmem>>, vector<8x2x32xf32>
    %c0_7 = arith.constant 0 : index
    %c0_8 = arith.constant 0 : index
    %c0_9 = arith.constant 0 : index
    %6 = vector.load %arg2[%c0_7, %c0_8, %c0_9] : memref<4x32x384xf32, #tpu.memory_space<vmem>>, vector<1x32x384xf32>
    %7 = vector.shape_cast %6 : vector<1x32x384xf32> to vector<32x384xf32>
    %c0_10 = arith.constant 0 : index
    %c0_11 = arith.constant 0 : index
    %c0_12 = arith.constant 0 : index
    %8 = vector.load %arg3[%c0_10, %c0_11, %c0_12] : memref<4x32x384xf32, #tpu.memory_space<vmem>>, vector<1x32x384xf32>
    %9 = vector.shape_cast %8 : vector<1x32x384xf32> to vector<32x384xf32>
    %c1_13 = arith.constant 1 : index
    %c0_14 = arith.constant 0 : index
    %c0_15 = arith.constant 0 : index
    %10 = vector.load %arg2[%c1_13, %c0_14, %c0_15] : memref<4x32x384xf32, #tpu.memory_space<vmem>>, vector<1x32x384xf32>
    %11 = vector.shape_cast %10 : vector<1x32x384xf32> to vector<32x384xf32>
    %c1_16 = arith.constant 1 : index
    %c0_17 = arith.constant 0 : index
    %c0_18 = arith.constant 0 : index
    %12 = vector.load %arg3[%c1_16, %c0_17, %c0_18] : memref<4x32x384xf32, #tpu.memory_space<vmem>>, vector<1x32x384xf32>
    %13 = vector.shape_cast %12 : vector<1x32x384xf32> to vector<32x384xf32>
    %c0_19 = arith.constant 0 : index
    %c0_20 = arith.constant 0 : index
    %14 = vector.load %arg4[%c0_19, %c0_20] : memref<4x512xf32, #tpu.memory_space<vmem>>, vector<1x384xf32>
    %c0_21 = arith.constant 0 : index
    %c384 = arith.constant 384 : index
    %15 = vector.load %arg4[%c0_21, %c384] : memref<4x512xf32, #tpu.memory_space<vmem>>, vector<1x128xf32>
    %c1_22 = arith.constant 1 : index
    %c0_23 = arith.constant 0 : index
    %16 = vector.load %arg4[%c1_22, %c0_23] : memref<4x512xf32, #tpu.memory_space<vmem>>, vector<1x384xf32>
    %c1_24 = arith.constant 1 : index
    %c384_25 = arith.constant 384 : index
    %17 = vector.load %arg4[%c1_24, %c384_25] : memref<4x512xf32, #tpu.memory_space<vmem>>, vector<1x128xf32>
    %18 = vector.shape_cast %5 : vector<8x2x32xf32> to vector<16x32xf32>
    %cst_26 = arith.constant dense<0.000000e+00> : vector<16x384xf32>
    %19 = tpu.matmul %18, %7, %cst_26 {dimension_numbers = #tpu.dot_dimension_numbers<[1], [0], [0], [1], [0, 0, 1, 1], [], []>} : vector<16x32xf32>, vector<32x384xf32>, vector<16x384xf32> -> vector<16x384xf32>
    %20 = vector.broadcast %14 : vector<1x384xf32> to vector<16x384xf32>
    %21 = arith.addf %19, %20 : vector<16x384xf32>
    %22 = vector.shape_cast %21 : vector<16x384xf32> to vector<8x2x384xf32>
    %23 = vector.extract_strided_slice %22 {offsets = [0, 0, 0], sizes = [1, 2, 384], strides = [1, 1, 1]} : vector<8x2x384xf32> to vector<1x2x384xf32>
    %24 = vector.shape_cast %23 : vector<1x2x384xf32> to vector<2x384xf32>
    %25 = vector.extract_strided_slice %4 {offsets = [0, 0], sizes = [2, 32], strides = [1, 1]} : vector<2x128xf32> to vector<2x32xf32>
    %cst_27 = arith.constant dense<0.000000e+00> : vector<2x384xf32>
    %26 = tpu.matmul %25, %9, %cst_27 {dimension_numbers = #tpu.dot_dimension_numbers<[1], [0], [0], [1], [0, 0, 1, 1], [], []>} : vector<2x32xf32>, vector<32x384xf32>, vector<2x384xf32> -> vector<2x384xf32>
    %27 = arith.addf %24, %26 : vector<2x384xf32>
    %28 = vector.extract_strided_slice %27 {offsets = [0, 0], sizes = [2, 256], strides = [1, 1]} : vector<2x384xf32> to vector<2x256xf32>
    %29 = arith.negf %28 : vector<2x256xf32>
    %30 = math.exp %29 : vector<2x256xf32>
    %cst_28 = arith.constant 1.000000e+00 : f32
    %31 = vector.broadcast %cst_28 : f32 to vector<2x256xf32>
    %32 = arith.addf %31, %30 : vector<2x256xf32>
    %33 = arith.divf %31, %32 : vector<2x256xf32>
    %34 = vector.extract_strided_slice %33 {offsets = [0, 0], sizes = [2, 128], strides = [1, 1]} : vector<2x256xf32> to vector<2x128xf32>
    %35 = vector.extract_strided_slice %33 {offsets = [0, 128], sizes = [2, 128], strides = [1, 1]} : vector<2x256xf32> to vector<2x128xf32>
    %36 = vector.extract_strided_slice %24 {offsets = [0, 256], sizes = [2, 128], strides = [1, 1]} : vector<2x384xf32> to vector<2x128xf32>
    %37 = vector.extract_strided_slice %26 {offsets = [0, 256], sizes = [2, 128], strides = [1, 1]} : vector<2x384xf32> to vector<2x128xf32>
    %38 = vector.broadcast %15 : vector<1x128xf32> to vector<2x128xf32>
    %39 = arith.addf %37, %38 : vector<2x128xf32>
    %40 = arith.mulf %34, %39 : vector<2x128xf32>
    %41 = arith.addf %36, %40 : vector<2x128xf32>
    %42 = math.tanh %41 : vector<2x128xf32>
    %43 = arith.mulf %35, %4 : vector<2x128xf32>
    %cst_29 = arith.constant 1.000000e+00 : f32
    %44 = vector.broadcast %cst_29 : f32 to vector<2x128xf32>
    %45 = arith.subf %44, %35 : vector<2x128xf32>
    %46 = arith.mulf %45, %42 : vector<2x128xf32>
    %47 = arith.addf %43, %46 : vector<2x128xf32>
    %48 = vector.extract_strided_slice %47 {offsets = [0, 0], sizes = [2, 32], strides = [1, 1]} : vector<2x128xf32> to vector<2x32xf32>
    %cst_30 = arith.constant dense<0.000000e+00> : vector<2x384xf32>
    %49 = tpu.matmul %48, %11, %cst_30 {dimension_numbers = #tpu.dot_dimension_numbers<[1], [0], [0], [1], [0, 0, 1, 1], [], []>} : vector<2x32xf32>, vector<32x384xf32>, vector<2x384xf32> -> vector<2x384xf32>
    %50 = vector.broadcast %16 : vector<1x384xf32> to vector<2x384xf32>
    %51 = arith.addf %49, %50 : vector<2x384xf32>
    %52 = vector.extract_strided_slice %4 {offsets = [0, 0], sizes = [2, 32], strides = [1, 1]} : vector<2x128xf32> to vector<2x32xf32>
    %cst_31 = arith.constant dense<0.000000e+00> : vector<2x384xf32>
    %53 = tpu.matmul %52, %13, %cst_31 {dimension_numbers = #tpu.dot_dimension_numbers<[1], [0], [0], [1], [0, 0, 1, 1], [], []>} : vector<2x32xf32>, vector<32x384xf32>, vector<2x384xf32> -> vector<2x384xf32>
    %54 = arith.addf %51, %53 : vector<2x384xf32>
    %55 = vector.extract_strided_slice %54 {offsets = [0, 0], sizes = [2, 256], strides = [1, 1]} : vector<2x384xf32> to vector<2x256xf32>
    %56 = arith.negf %55 : vector<2x256xf32>
    %57 = math.exp %56 : vector<2x256xf32>
    %cst_32 = arith.constant 1.000000e+00 : f32
    %58 = vector.broadcast %cst_32 : f32 to vector<2x256xf32>
    %59 = arith.addf %58, %57 : vector<2x256xf32>
    %60 = arith.divf %58, %59 : vector<2x256xf32>
    %61 = vector.extract_strided_slice %60 {offsets = [0, 0], sizes = [2, 128], strides = [1, 1]} : vector<2x256xf32> to vector<2x128xf32>
    %62 = vector.extract_strided_slice %60 {offsets = [0, 128], sizes = [2, 128], strides = [1, 1]} : vector<2x256xf32> to vector<2x128xf32>
    %63 = vector.extract_strided_slice %51 {offsets = [0, 256], sizes = [2, 128], strides = [1, 1]} : vector<2x384xf32> to vector<2x128xf32>
    %64 = vector.extract_strided_slice %53 {offsets = [0, 256], sizes = [2, 128], strides = [1, 1]} : vector<2x384xf32> to vector<2x128xf32>
    %65 = vector.broadcast %17 : vector<1x128xf32> to vector<2x128xf32>
    %66 = arith.addf %64, %65 : vector<2x128xf32>
    %67 = arith.mulf %61, %66 : vector<2x128xf32>
    %68 = arith.addf %63, %67 : vector<2x128xf32>
    %69 = math.tanh %68 : vector<2x128xf32>
    %70 = arith.mulf %62, %4 : vector<2x128xf32>
    %cst_33 = arith.constant 1.000000e+00 : f32
    %71 = vector.broadcast %cst_33 : f32 to vector<2x128xf32>
    %72 = arith.subf %71, %62 : vector<2x128xf32>
    %73 = arith.mulf %72, %69 : vector<2x128xf32>
    %74 = arith.addf %70, %73 : vector<2x128xf32>
    %75 = vector.extract_strided_slice %22 {offsets = [1, 0, 0], sizes = [1, 2, 384], strides = [1, 1, 1]} : vector<8x2x384xf32> to vector<1x2x384xf32>
    %76 = vector.shape_cast %75 : vector<1x2x384xf32> to vector<2x384xf32>
    %77 = vector.extract_strided_slice %47 {offsets = [0, 0], sizes = [2, 32], strides = [1, 1]} : vector<2x128xf32> to vector<2x32xf32>
    %cst_34 = arith.constant dense<0.000000e+00> : vector<2x384xf32>
    %78 = tpu.matmul %77, %9, %cst_34 {dimension_numbers = #tpu.dot_dimension_numbers<[1], [0], [0], [1], [0, 0, 1, 1], [], []>} : vector<2x32xf32>, vector<32x384xf32>, vector<2x384xf32> -> vector<2x384xf32>
    %79 = arith.addf %76, %78 : vector<2x384xf32>
    %80 = vector.extract_strided_slice %79 {offsets = [0, 0], sizes = [2, 256], strides = [1, 1]} : vector<2x384xf32> to vector<2x256xf32>
    %81 = arith.negf %80 : vector<2x256xf32>
    %82 = math.exp %81 : vector<2x256xf32>
    %cst_35 = arith.constant 1.000000e+00 : f32
    %83 = vector.broadcast %cst_35 : f32 to vector<2x256xf32>
    %84 = arith.addf %83, %82 : vector<2x256xf32>
    %85 = arith.divf %83, %84 : vector<2x256xf32>
    %86 = vector.extract_strided_slice %85 {offsets = [0, 0], sizes = [2, 128], strides = [1, 1]} : vector<2x256xf32> to vector<2x128xf32>
    %87 = vector.extract_strided_slice %85 {offsets = [0, 128], sizes = [2, 128], strides = [1, 1]} : vector<2x256xf32> to vector<2x128xf32>
    %88 = vector.extract_strided_slice %76 {offsets = [0, 256], sizes = [2, 128], strides = [1, 1]} : vector<2x384xf32> to vector<2x128xf32>
    %89 = vector.extract_strided_slice %78 {offsets = [0, 256], sizes = [2, 128], strides = [1, 1]} : vector<2x384xf32> to vector<2x128xf32>
    %90 = vector.broadcast %15 : vector<1x128xf32> to vector<2x128xf32>
    %91 = arith.addf %89, %90 : vector<2x128xf32>
    %92 = arith.mulf %86, %91 : vector<2x128xf32>
    %93 = arith.addf %88, %92 : vector<2x128xf32>
    %94 = math.tanh %93 : vector<2x128xf32>
    %95 = arith.mulf %87, %47 : vector<2x128xf32>
    %cst_36 = arith.constant 1.000000e+00 : f32
    %96 = vector.broadcast %cst_36 : f32 to vector<2x128xf32>
    %97 = arith.subf %96, %87 : vector<2x128xf32>
    %98 = arith.mulf %97, %94 : vector<2x128xf32>
    %99 = arith.addf %95, %98 : vector<2x128xf32>
    %100 = vector.extract_strided_slice %99 {offsets = [0, 0], sizes = [2, 32], strides = [1, 1]} : vector<2x128xf32> to vector<2x32xf32>
    %cst_37 = arith.constant dense<0.000000e+00> : vector<2x384xf32>
    %101 = tpu.matmul %100, %11, %cst_37 {dimension_numbers = #tpu.dot_dimension_numbers<[1], [0], [0], [1], [0, 0, 1, 1], [], []>} : vector<2x32xf32>, vector<32x384xf32>, vector<2x384xf32> -> vector<2x384xf32>
    %102 = vector.broadcast %16 : vector<1x384xf32> to vector<2x384xf32>
    %103 = arith.addf %101, %102 : vector<2x384xf32>
    %104 = vector.extract_strided_slice %74 {offsets = [0, 0], sizes = [2, 32], strides = [1, 1]} : vector<2x128xf32> to vector<2x32xf32>
    %cst_38 = arith.constant dense<0.000000e+00> : vector<2x384xf32>
    %105 = tpu.matmul %104, %13, %cst_38 {dimension_numbers = #tpu.dot_dimension_numbers<[1], [0], [0], [1], [0, 0, 1, 1], [], []>} : vector<2x32xf32>, vector<32x384xf32>, vector<2x384xf32> -> vector<2x384xf32>
    %106 = arith.addf %103, %105 : vector<2x384xf32>
    %107 = vector.extract_strided_slice %106 {offsets = [0, 0], sizes = [2, 256], strides = [1, 1]} : vector<2x384xf32> to vector<2x256xf32>
    %108 = arith.negf %107 : vector<2x256xf32>
    %109 = math.exp %108 : vector<2x256xf32>
    %cst_39 = arith.constant 1.000000e+00 : f32
    %110 = vector.broadcast %cst_39 : f32 to vector<2x256xf32>
    %111 = arith.addf %110, %109 : vector<2x256xf32>
    %112 = arith.divf %110, %111 : vector<2x256xf32>
    %113 = vector.extract_strided_slice %112 {offsets = [0, 0], sizes = [2, 128], strides = [1, 1]} : vector<2x256xf32> to vector<2x128xf32>
    %114 = vector.extract_strided_slice %112 {offsets = [0, 128], sizes = [2, 128], strides = [1, 1]} : vector<2x256xf32> to vector<2x128xf32>
    %115 = vector.extract_strided_slice %103 {offsets = [0, 256], sizes = [2, 128], strides = [1, 1]} : vector<2x384xf32> to vector<2x128xf32>
    %116 = vector.extract_strided_slice %105 {offsets = [0, 256], sizes = [2, 128], strides = [1, 1]} : vector<2x384xf32> to vector<2x128xf32>
    %117 = vector.broadcast %17 : vector<1x128xf32> to vector<2x128xf32>
    %118 = arith.addf %116, %117 : vector<2x128xf32>
    %119 = arith.mulf %113, %118 : vector<2x128xf32>
    %120 = arith.addf %115, %119 : vector<2x128xf32>
    %121 = math.tanh %120 : vector<2x128xf32>
    %122 = arith.mulf %114, %74 : vector<2x128xf32>
    %cst_40 = arith.constant 1.000000e+00 : f32
    %123 = vector.broadcast %cst_40 : f32 to vector<2x128xf32>
    %124 = arith.subf %123, %114 : vector<2x128xf32>
    %125 = arith.mulf %124, %121 : vector<2x128xf32>
    %126 = arith.addf %122, %125 : vector<2x128xf32>
    %127 = vector.extract_strided_slice %22 {offsets = [2, 0, 0], sizes = [1, 2, 384], strides = [1, 1, 1]} : vector<8x2x384xf32> to vector<1x2x384xf32>
    %128 = vector.shape_cast %127 : vector<1x2x384xf32> to vector<2x384xf32>
    %129 = vector.extract_strided_slice %99 {offsets = [0, 0], sizes = [2, 32], strides = [1, 1]} : vector<2x128xf32> to vector<2x32xf32>
    %cst_41 = arith.constant dense<0.000000e+00> : vector<2x384xf32>
    %130 = tpu.matmul %129, %9, %cst_41 {dimension_numbers = #tpu.dot_dimension_numbers<[1], [0], [0], [1], [0, 0, 1, 1], [], []>} : vector<2x32xf32>, vector<32x384xf32>, vector<2x384xf32> -> vector<2x384xf32>
    %131 = arith.addf %128, %130 : vector<2x384xf32>
    %132 = vector.extract_strided_slice %131 {offsets = [0, 0], sizes = [2, 256], strides = [1, 1]} : vector<2x384xf32> to vector<2x256xf32>
    %133 = arith.negf %132 : vector<2x256xf32>
    %134 = math.exp %133 : vector<2x256xf32>
    %cst_42 = arith.constant 1.000000e+00 : f32
    %135 = vector.broadcast %cst_42 : f32 to vector<2x256xf32>
    %136 = arith.addf %135, %134 : vector<2x256xf32>
    %137 = arith.divf %135, %136 : vector<2x256xf32>
    %138 = vector.extract_strided_slice %137 {offsets = [0, 0], sizes = [2, 128], strides = [1, 1]} : vector<2x256xf32> to vector<2x128xf32>
    %139 = vector.extract_strided_slice %137 {offsets = [0, 128], sizes = [2, 128], strides = [1, 1]} : vector<2x256xf32> to vector<2x128xf32>
    %140 = vector.extract_strided_slice %128 {offsets = [0, 256], sizes = [2, 128], strides = [1, 1]} : vector<2x384xf32> to vector<2x128xf32>
    %141 = vector.extract_strided_slice %130 {offsets = [0, 256], sizes = [2, 128], strides = [1, 1]} : vector<2x384xf32> to vector<2x128xf32>
    %142 = vector.broadcast %15 : vector<1x128xf32> to vector<2x128xf32>
    %143 = arith.addf %141, %142 : vector<2x128xf32>
    %144 = arith.mulf %138, %143 : vector<2x128xf32>
    %145 = arith.addf %140, %144 : vector<2x128xf32>
    %146 = math.tanh %145 : vector<2x128xf32>
    %147 = arith.mulf %139, %99 : vector<2x128xf32>
    %cst_43 = arith.constant 1.000000e+00 : f32
    %148 = vector.broadcast %cst_43 : f32 to vector<2x128xf32>
    %149 = arith.subf %148, %139 : vector<2x128xf32>
    %150 = arith.mulf %149, %146 : vector<2x128xf32>
    %151 = arith.addf %147, %150 : vector<2x128xf32>
    %152 = vector.extract_strided_slice %151 {offsets = [0, 0], sizes = [2, 32], strides = [1, 1]} : vector<2x128xf32> to vector<2x32xf32>
    %cst_44 = arith.constant dense<0.000000e+00> : vector<2x384xf32>
    %153 = tpu.matmul %152, %11, %cst_44 {dimension_numbers = #tpu.dot_dimension_numbers<[1], [0], [0], [1], [0, 0, 1, 1], [], []>} : vector<2x32xf32>, vector<32x384xf32>, vector<2x384xf32> -> vector<2x384xf32>
    %154 = vector.broadcast %16 : vector<1x384xf32> to vector<2x384xf32>
    %155 = arith.addf %153, %154 : vector<2x384xf32>
    %156 = vector.extract_strided_slice %126 {offsets = [0, 0], sizes = [2, 32], strides = [1, 1]} : vector<2x128xf32> to vector<2x32xf32>
    %cst_45 = arith.constant dense<0.000000e+00> : vector<2x384xf32>
    %157 = tpu.matmul %156, %13, %cst_45 {dimension_numbers = #tpu.dot_dimension_numbers<[1], [0], [0], [1], [0, 0, 1, 1], [], []>} : vector<2x32xf32>, vector<32x384xf32>, vector<2x384xf32> -> vector<2x384xf32>
    %158 = arith.addf %155, %157 : vector<2x384xf32>
    %159 = vector.extract_strided_slice %158 {offsets = [0, 0], sizes = [2, 256], strides = [1, 1]} : vector<2x384xf32> to vector<2x256xf32>
    %160 = arith.negf %159 : vector<2x256xf32>
    %161 = math.exp %160 : vector<2x256xf32>
    %cst_46 = arith.constant 1.000000e+00 : f32
    %162 = vector.broadcast %cst_46 : f32 to vector<2x256xf32>
    %163 = arith.addf %162, %161 : vector<2x256xf32>
    %164 = arith.divf %162, %163 : vector<2x256xf32>
    %165 = vector.extract_strided_slice %164 {offsets = [0, 0], sizes = [2, 128], strides = [1, 1]} : vector<2x256xf32> to vector<2x128xf32>
    %166 = vector.extract_strided_slice %164 {offsets = [0, 128], sizes = [2, 128], strides = [1, 1]} : vector<2x256xf32> to vector<2x128xf32>
    %167 = vector.extract_strided_slice %155 {offsets = [0, 256], sizes = [2, 128], strides = [1, 1]} : vector<2x384xf32> to vector<2x128xf32>
    %168 = vector.extract_strided_slice %157 {offsets = [0, 256], sizes = [2, 128], strides = [1, 1]} : vector<2x384xf32> to vector<2x128xf32>
    %169 = vector.broadcast %17 : vector<1x128xf32> to vector<2x128xf32>
    %170 = arith.addf %168, %169 : vector<2x128xf32>
    %171 = arith.mulf %165, %170 : vector<2x128xf32>
    %172 = arith.addf %167, %171 : vector<2x128xf32>
    %173 = math.tanh %172 : vector<2x128xf32>
    %174 = arith.mulf %166, %126 : vector<2x128xf32>
    %cst_47 = arith.constant 1.000000e+00 : f32
    %175 = vector.broadcast %cst_47 : f32 to vector<2x128xf32>
    %176 = arith.subf %175, %166 : vector<2x128xf32>
    %177 = arith.mulf %176, %173 : vector<2x128xf32>
    %178 = arith.addf %174, %177 : vector<2x128xf32>
    %179 = vector.extract_strided_slice %22 {offsets = [3, 0, 0], sizes = [1, 2, 384], strides = [1, 1, 1]} : vector<8x2x384xf32> to vector<1x2x384xf32>
    %180 = vector.shape_cast %179 : vector<1x2x384xf32> to vector<2x384xf32>
    %181 = vector.extract_strided_slice %151 {offsets = [0, 0], sizes = [2, 32], strides = [1, 1]} : vector<2x128xf32> to vector<2x32xf32>
    %cst_48 = arith.constant dense<0.000000e+00> : vector<2x384xf32>
    %182 = tpu.matmul %181, %9, %cst_48 {dimension_numbers = #tpu.dot_dimension_numbers<[1], [0], [0], [1], [0, 0, 1, 1], [], []>} : vector<2x32xf32>, vector<32x384xf32>, vector<2x384xf32> -> vector<2x384xf32>
    %183 = arith.addf %180, %182 : vector<2x384xf32>
    %184 = vector.extract_strided_slice %183 {offsets = [0, 0], sizes = [2, 256], strides = [1, 1]} : vector<2x384xf32> to vector<2x256xf32>
    %185 = arith.negf %184 : vector<2x256xf32>
    %186 = math.exp %185 : vector<2x256xf32>
    %cst_49 = arith.constant 1.000000e+00 : f32
    %187 = vector.broadcast %cst_49 : f32 to vector<2x256xf32>
    %188 = arith.addf %187, %186 : vector<2x256xf32>
    %189 = arith.divf %187, %188 : vector<2x256xf32>
    %190 = vector.extract_strided_slice %189 {offsets = [0, 0], sizes = [2, 128], strides = [1, 1]} : vector<2x256xf32> to vector<2x128xf32>
    %191 = vector.extract_strided_slice %189 {offsets = [0, 128], sizes = [2, 128], strides = [1, 1]} : vector<2x256xf32> to vector<2x128xf32>
    %192 = vector.extract_strided_slice %180 {offsets = [0, 256], sizes = [2, 128], strides = [1, 1]} : vector<2x384xf32> to vector<2x128xf32>
    %193 = vector.extract_strided_slice %182 {offsets = [0, 256], sizes = [2, 128], strides = [1, 1]} : vector<2x384xf32> to vector<2x128xf32>
    %194 = vector.broadcast %15 : vector<1x128xf32> to vector<2x128xf32>
    %195 = arith.addf %193, %194 : vector<2x128xf32>
    %196 = arith.mulf %190, %195 : vector<2x128xf32>
    %197 = arith.addf %192, %196 : vector<2x128xf32>
    %198 = math.tanh %197 : vector<2x128xf32>
    %199 = arith.mulf %191, %151 : vector<2x128xf32>
    %cst_50 = arith.constant 1.000000e+00 : f32
    %200 = vector.broadcast %cst_50 : f32 to vector<2x128xf32>
    %201 = arith.subf %200, %191 : vector<2x128xf32>
    %202 = arith.mulf %201, %198 : vector<2x128xf32>
    %203 = arith.addf %199, %202 : vector<2x128xf32>
    %204 = vector.extract_strided_slice %203 {offsets = [0, 0], sizes = [2, 32], strides = [1, 1]} : vector<2x128xf32> to vector<2x32xf32>
    %cst_51 = arith.constant dense<0.000000e+00> : vector<2x384xf32>
    %205 = tpu.matmul %204, %11, %cst_51 {dimension_numbers = #tpu.dot_dimension_numbers<[1], [0], [0], [1], [0, 0, 1, 1], [], []>} : vector<2x32xf32>, vector<32x384xf32>, vector<2x384xf32> -> vector<2x384xf32>
    %206 = vector.broadcast %16 : vector<1x384xf32> to vector<2x384xf32>
    %207 = arith.addf %205, %206 : vector<2x384xf32>
    %208 = vector.extract_strided_slice %178 {offsets = [0, 0], sizes = [2, 32], strides = [1, 1]} : vector<2x128xf32> to vector<2x32xf32>
    %cst_52 = arith.constant dense<0.000000e+00> : vector<2x384xf32>
    %209 = tpu.matmul %208, %13, %cst_52 {dimension_numbers = #tpu.dot_dimension_numbers<[1], [0], [0], [1], [0, 0, 1, 1], [], []>} : vector<2x32xf32>, vector<32x384xf32>, vector<2x384xf32> -> vector<2x384xf32>
    %210 = arith.addf %207, %209 : vector<2x384xf32>
    %211 = vector.extract_strided_slice %210 {offsets = [0, 0], sizes = [2, 256], strides = [1, 1]} : vector<2x384xf32> to vector<2x256xf32>
    %212 = arith.negf %211 : vector<2x256xf32>
    %213 = math.exp %212 : vector<2x256xf32>
    %cst_53 = arith.constant 1.000000e+00 : f32
    %214 = vector.broadcast %cst_53 : f32 to vector<2x256xf32>
    %215 = arith.addf %214, %213 : vector<2x256xf32>
    %216 = arith.divf %214, %215 : vector<2x256xf32>
    %217 = vector.extract_strided_slice %216 {offsets = [0, 0], sizes = [2, 128], strides = [1, 1]} : vector<2x256xf32> to vector<2x128xf32>
    %218 = vector.extract_strided_slice %216 {offsets = [0, 128], sizes = [2, 128], strides = [1, 1]} : vector<2x256xf32> to vector<2x128xf32>
    %219 = vector.extract_strided_slice %207 {offsets = [0, 256], sizes = [2, 128], strides = [1, 1]} : vector<2x384xf32> to vector<2x128xf32>
    %220 = vector.extract_strided_slice %209 {offsets = [0, 256], sizes = [2, 128], strides = [1, 1]} : vector<2x384xf32> to vector<2x128xf32>
    %221 = vector.broadcast %17 : vector<1x128xf32> to vector<2x128xf32>
    %222 = arith.addf %220, %221 : vector<2x128xf32>
    %223 = arith.mulf %217, %222 : vector<2x128xf32>
    %224 = arith.addf %219, %223 : vector<2x128xf32>
    %225 = math.tanh %224 : vector<2x128xf32>
    %226 = arith.mulf %218, %178 : vector<2x128xf32>
    %cst_54 = arith.constant 1.000000e+00 : f32
    %227 = vector.broadcast %cst_54 : f32 to vector<2x128xf32>
    %228 = arith.subf %227, %218 : vector<2x128xf32>
    %229 = arith.mulf %228, %225 : vector<2x128xf32>
    %230 = arith.addf %226, %229 : vector<2x128xf32>
    %231 = vector.extract_strided_slice %22 {offsets = [4, 0, 0], sizes = [1, 2, 384], strides = [1, 1, 1]} : vector<8x2x384xf32> to vector<1x2x384xf32>
    %232 = vector.shape_cast %231 : vector<1x2x384xf32> to vector<2x384xf32>
    %233 = vector.extract_strided_slice %203 {offsets = [0, 0], sizes = [2, 32], strides = [1, 1]} : vector<2x128xf32> to vector<2x32xf32>
    %cst_55 = arith.constant dense<0.000000e+00> : vector<2x384xf32>
    %234 = tpu.matmul %233, %9, %cst_55 {dimension_numbers = #tpu.dot_dimension_numbers<[1], [0], [0], [1], [0, 0, 1, 1], [], []>} : vector<2x32xf32>, vector<32x384xf32>, vector<2x384xf32> -> vector<2x384xf32>
    %235 = arith.addf %232, %234 : vector<2x384xf32>
    %236 = vector.extract_strided_slice %235 {offsets = [0, 0], sizes = [2, 256], strides = [1, 1]} : vector<2x384xf32> to vector<2x256xf32>
    %237 = arith.negf %236 : vector<2x256xf32>
    %238 = math.exp %237 : vector<2x256xf32>
    %cst_56 = arith.constant 1.000000e+00 : f32
    %239 = vector.broadcast %cst_56 : f32 to vector<2x256xf32>
    %240 = arith.addf %239, %238 : vector<2x256xf32>
    %241 = arith.divf %239, %240 : vector<2x256xf32>
    %242 = vector.extract_strided_slice %241 {offsets = [0, 0], sizes = [2, 128], strides = [1, 1]} : vector<2x256xf32> to vector<2x128xf32>
    %243 = vector.extract_strided_slice %241 {offsets = [0, 128], sizes = [2, 128], strides = [1, 1]} : vector<2x256xf32> to vector<2x128xf32>
    %244 = vector.extract_strided_slice %232 {offsets = [0, 256], sizes = [2, 128], strides = [1, 1]} : vector<2x384xf32> to vector<2x128xf32>
    %245 = vector.extract_strided_slice %234 {offsets = [0, 256], sizes = [2, 128], strides = [1, 1]} : vector<2x384xf32> to vector<2x128xf32>
    %246 = vector.broadcast %15 : vector<1x128xf32> to vector<2x128xf32>
    %247 = arith.addf %245, %246 : vector<2x128xf32>
    %248 = arith.mulf %242, %247 : vector<2x128xf32>
    %249 = arith.addf %244, %248 : vector<2x128xf32>
    %250 = math.tanh %249 : vector<2x128xf32>
    %251 = arith.mulf %243, %203 : vector<2x128xf32>
    %cst_57 = arith.constant 1.000000e+00 : f32
    %252 = vector.broadcast %cst_57 : f32 to vector<2x128xf32>
    %253 = arith.subf %252, %243 : vector<2x128xf32>
    %254 = arith.mulf %253, %250 : vector<2x128xf32>
    %255 = arith.addf %251, %254 : vector<2x128xf32>
    %256 = vector.extract_strided_slice %255 {offsets = [0, 0], sizes = [2, 32], strides = [1, 1]} : vector<2x128xf32> to vector<2x32xf32>
    %cst_58 = arith.constant dense<0.000000e+00> : vector<2x384xf32>
    %257 = tpu.matmul %256, %11, %cst_58 {dimension_numbers = #tpu.dot_dimension_numbers<[1], [0], [0], [1], [0, 0, 1, 1], [], []>} : vector<2x32xf32>, vector<32x384xf32>, vector<2x384xf32> -> vector<2x384xf32>
    %258 = vector.broadcast %16 : vector<1x384xf32> to vector<2x384xf32>
    %259 = arith.addf %257, %258 : vector<2x384xf32>
    %260 = vector.extract_strided_slice %230 {offsets = [0, 0], sizes = [2, 32], strides = [1, 1]} : vector<2x128xf32> to vector<2x32xf32>
    %cst_59 = arith.constant dense<0.000000e+00> : vector<2x384xf32>
    %261 = tpu.matmul %260, %13, %cst_59 {dimension_numbers = #tpu.dot_dimension_numbers<[1], [0], [0], [1], [0, 0, 1, 1], [], []>} : vector<2x32xf32>, vector<32x384xf32>, vector<2x384xf32> -> vector<2x384xf32>
    %262 = arith.addf %259, %261 : vector<2x384xf32>
    %263 = vector.extract_strided_slice %262 {offsets = [0, 0], sizes = [2, 256], strides = [1, 1]} : vector<2x384xf32> to vector<2x256xf32>
    %264 = arith.negf %263 : vector<2x256xf32>
    %265 = math.exp %264 : vector<2x256xf32>
    %cst_60 = arith.constant 1.000000e+00 : f32
    %266 = vector.broadcast %cst_60 : f32 to vector<2x256xf32>
    %267 = arith.addf %266, %265 : vector<2x256xf32>
    %268 = arith.divf %266, %267 : vector<2x256xf32>
    %269 = vector.extract_strided_slice %268 {offsets = [0, 0], sizes = [2, 128], strides = [1, 1]} : vector<2x256xf32> to vector<2x128xf32>
    %270 = vector.extract_strided_slice %268 {offsets = [0, 128], sizes = [2, 128], strides = [1, 1]} : vector<2x256xf32> to vector<2x128xf32>
    %271 = vector.extract_strided_slice %259 {offsets = [0, 256], sizes = [2, 128], strides = [1, 1]} : vector<2x384xf32> to vector<2x128xf32>
    %272 = vector.extract_strided_slice %261 {offsets = [0, 256], sizes = [2, 128], strides = [1, 1]} : vector<2x384xf32> to vector<2x128xf32>
    %273 = vector.broadcast %17 : vector<1x128xf32> to vector<2x128xf32>
    %274 = arith.addf %272, %273 : vector<2x128xf32>
    %275 = arith.mulf %269, %274 : vector<2x128xf32>
    %276 = arith.addf %271, %275 : vector<2x128xf32>
    %277 = math.tanh %276 : vector<2x128xf32>
    %278 = arith.mulf %270, %230 : vector<2x128xf32>
    %cst_61 = arith.constant 1.000000e+00 : f32
    %279 = vector.broadcast %cst_61 : f32 to vector<2x128xf32>
    %280 = arith.subf %279, %270 : vector<2x128xf32>
    %281 = arith.mulf %280, %277 : vector<2x128xf32>
    %282 = arith.addf %278, %281 : vector<2x128xf32>
    %283 = vector.extract_strided_slice %22 {offsets = [5, 0, 0], sizes = [1, 2, 384], strides = [1, 1, 1]} : vector<8x2x384xf32> to vector<1x2x384xf32>
    %284 = vector.shape_cast %283 : vector<1x2x384xf32> to vector<2x384xf32>
    %285 = vector.extract_strided_slice %255 {offsets = [0, 0], sizes = [2, 32], strides = [1, 1]} : vector<2x128xf32> to vector<2x32xf32>
    %cst_62 = arith.constant dense<0.000000e+00> : vector<2x384xf32>
    %286 = tpu.matmul %285, %9, %cst_62 {dimension_numbers = #tpu.dot_dimension_numbers<[1], [0], [0], [1], [0, 0, 1, 1], [], []>} : vector<2x32xf32>, vector<32x384xf32>, vector<2x384xf32> -> vector<2x384xf32>
    %287 = arith.addf %284, %286 : vector<2x384xf32>
    %288 = vector.extract_strided_slice %287 {offsets = [0, 0], sizes = [2, 256], strides = [1, 1]} : vector<2x384xf32> to vector<2x256xf32>
    %289 = arith.negf %288 : vector<2x256xf32>
    %290 = math.exp %289 : vector<2x256xf32>
    %cst_63 = arith.constant 1.000000e+00 : f32
    %291 = vector.broadcast %cst_63 : f32 to vector<2x256xf32>
    %292 = arith.addf %291, %290 : vector<2x256xf32>
    %293 = arith.divf %291, %292 : vector<2x256xf32>
    %294 = vector.extract_strided_slice %293 {offsets = [0, 0], sizes = [2, 128], strides = [1, 1]} : vector<2x256xf32> to vector<2x128xf32>
    %295 = vector.extract_strided_slice %293 {offsets = [0, 128], sizes = [2, 128], strides = [1, 1]} : vector<2x256xf32> to vector<2x128xf32>
    %296 = vector.extract_strided_slice %284 {offsets = [0, 256], sizes = [2, 128], strides = [1, 1]} : vector<2x384xf32> to vector<2x128xf32>
    %297 = vector.extract_strided_slice %286 {offsets = [0, 256], sizes = [2, 128], strides = [1, 1]} : vector<2x384xf32> to vector<2x128xf32>
    %298 = vector.broadcast %15 : vector<1x128xf32> to vector<2x128xf32>
    %299 = arith.addf %297, %298 : vector<2x128xf32>
    %300 = arith.mulf %294, %299 : vector<2x128xf32>
    %301 = arith.addf %296, %300 : vector<2x128xf32>
    %302 = math.tanh %301 : vector<2x128xf32>
    %303 = arith.mulf %295, %255 : vector<2x128xf32>
    %cst_64 = arith.constant 1.000000e+00 : f32
    %304 = vector.broadcast %cst_64 : f32 to vector<2x128xf32>
    %305 = arith.subf %304, %295 : vector<2x128xf32>
    %306 = arith.mulf %305, %302 : vector<2x128xf32>
    %307 = arith.addf %303, %306 : vector<2x128xf32>
    %308 = vector.extract_strided_slice %307 {offsets = [0, 0], sizes = [2, 32], strides = [1, 1]} : vector<2x128xf32> to vector<2x32xf32>
    %cst_65 = arith.constant dense<0.000000e+00> : vector<2x384xf32>
    %309 = tpu.matmul %308, %11, %cst_65 {dimension_numbers = #tpu.dot_dimension_numbers<[1], [0], [0], [1], [0, 0, 1, 1], [], []>} : vector<2x32xf32>, vector<32x384xf32>, vector<2x384xf32> -> vector<2x384xf32>
    %310 = vector.broadcast %16 : vector<1x384xf32> to vector<2x384xf32>
    %311 = arith.addf %309, %310 : vector<2x384xf32>
    %312 = vector.extract_strided_slice %282 {offsets = [0, 0], sizes = [2, 32], strides = [1, 1]} : vector<2x128xf32> to vector<2x32xf32>
    %cst_66 = arith.constant dense<0.000000e+00> : vector<2x384xf32>
    %313 = tpu.matmul %312, %13, %cst_66 {dimension_numbers = #tpu.dot_dimension_numbers<[1], [0], [0], [1], [0, 0, 1, 1], [], []>} : vector<2x32xf32>, vector<32x384xf32>, vector<2x384xf32> -> vector<2x384xf32>
    %314 = arith.addf %311, %313 : vector<2x384xf32>
    %315 = vector.extract_strided_slice %314 {offsets = [0, 0], sizes = [2, 256], strides = [1, 1]} : vector<2x384xf32> to vector<2x256xf32>
    %316 = arith.negf %315 : vector<2x256xf32>
    %317 = math.exp %316 : vector<2x256xf32>
    %cst_67 = arith.constant 1.000000e+00 : f32
    %318 = vector.broadcast %cst_67 : f32 to vector<2x256xf32>
    %319 = arith.addf %318, %317 : vector<2x256xf32>
    %320 = arith.divf %318, %319 : vector<2x256xf32>
    %321 = vector.extract_strided_slice %320 {offsets = [0, 0], sizes = [2, 128], strides = [1, 1]} : vector<2x256xf32> to vector<2x128xf32>
    %322 = vector.extract_strided_slice %320 {offsets = [0, 128], sizes = [2, 128], strides = [1, 1]} : vector<2x256xf32> to vector<2x128xf32>
    %323 = vector.extract_strided_slice %311 {offsets = [0, 256], sizes = [2, 128], strides = [1, 1]} : vector<2x384xf32> to vector<2x128xf32>
    %324 = vector.extract_strided_slice %313 {offsets = [0, 256], sizes = [2, 128], strides = [1, 1]} : vector<2x384xf32> to vector<2x128xf32>
    %325 = vector.broadcast %17 : vector<1x128xf32> to vector<2x128xf32>
    %326 = arith.addf %324, %325 : vector<2x128xf32>
    %327 = arith.mulf %321, %326 : vector<2x128xf32>
    %328 = arith.addf %323, %327 : vector<2x128xf32>
    %329 = math.tanh %328 : vector<2x128xf32>
    %330 = arith.mulf %322, %282 : vector<2x128xf32>
    %cst_68 = arith.constant 1.000000e+00 : f32
    %331 = vector.broadcast %cst_68 : f32 to vector<2x128xf32>
    %332 = arith.subf %331, %322 : vector<2x128xf32>
    %333 = arith.mulf %332, %329 : vector<2x128xf32>
    %334 = arith.addf %330, %333 : vector<2x128xf32>
    %335 = vector.extract_strided_slice %22 {offsets = [6, 0, 0], sizes = [1, 2, 384], strides = [1, 1, 1]} : vector<8x2x384xf32> to vector<1x2x384xf32>
    %336 = vector.shape_cast %335 : vector<1x2x384xf32> to vector<2x384xf32>
    %337 = vector.extract_strided_slice %307 {offsets = [0, 0], sizes = [2, 32], strides = [1, 1]} : vector<2x128xf32> to vector<2x32xf32>
    %cst_69 = arith.constant dense<0.000000e+00> : vector<2x384xf32>
    %338 = tpu.matmul %337, %9, %cst_69 {dimension_numbers = #tpu.dot_dimension_numbers<[1], [0], [0], [1], [0, 0, 1, 1], [], []>} : vector<2x32xf32>, vector<32x384xf32>, vector<2x384xf32> -> vector<2x384xf32>
    %339 = arith.addf %336, %338 : vector<2x384xf32>
    %340 = vector.extract_strided_slice %339 {offsets = [0, 0], sizes = [2, 256], strides = [1, 1]} : vector<2x384xf32> to vector<2x256xf32>
    %341 = arith.negf %340 : vector<2x256xf32>
    %342 = math.exp %341 : vector<2x256xf32>
    %cst_70 = arith.constant 1.000000e+00 : f32
    %343 = vector.broadcast %cst_70 : f32 to vector<2x256xf32>
    %344 = arith.addf %343, %342 : vector<2x256xf32>
    %345 = arith.divf %343, %344 : vector<2x256xf32>
    %346 = vector.extract_strided_slice %345 {offsets = [0, 0], sizes = [2, 128], strides = [1, 1]} : vector<2x256xf32> to vector<2x128xf32>
    %347 = vector.extract_strided_slice %345 {offsets = [0, 128], sizes = [2, 128], strides = [1, 1]} : vector<2x256xf32> to vector<2x128xf32>
    %348 = vector.extract_strided_slice %336 {offsets = [0, 256], sizes = [2, 128], strides = [1, 1]} : vector<2x384xf32> to vector<2x128xf32>
    %349 = vector.extract_strided_slice %338 {offsets = [0, 256], sizes = [2, 128], strides = [1, 1]} : vector<2x384xf32> to vector<2x128xf32>
    %350 = vector.broadcast %15 : vector<1x128xf32> to vector<2x128xf32>
    %351 = arith.addf %349, %350 : vector<2x128xf32>
    %352 = arith.mulf %346, %351 : vector<2x128xf32>
    %353 = arith.addf %348, %352 : vector<2x128xf32>
    %354 = math.tanh %353 : vector<2x128xf32>
    %355 = arith.mulf %347, %307 : vector<2x128xf32>
    %cst_71 = arith.constant 1.000000e+00 : f32
    %356 = vector.broadcast %cst_71 : f32 to vector<2x128xf32>
    %357 = arith.subf %356, %347 : vector<2x128xf32>
    %358 = arith.mulf %357, %354 : vector<2x128xf32>
    %359 = arith.addf %355, %358 : vector<2x128xf32>
    %360 = vector.extract_strided_slice %359 {offsets = [0, 0], sizes = [2, 32], strides = [1, 1]} : vector<2x128xf32> to vector<2x32xf32>
    %cst_72 = arith.constant dense<0.000000e+00> : vector<2x384xf32>
    %361 = tpu.matmul %360, %11, %cst_72 {dimension_numbers = #tpu.dot_dimension_numbers<[1], [0], [0], [1], [0, 0, 1, 1], [], []>} : vector<2x32xf32>, vector<32x384xf32>, vector<2x384xf32> -> vector<2x384xf32>
    %362 = vector.broadcast %16 : vector<1x384xf32> to vector<2x384xf32>
    %363 = arith.addf %361, %362 : vector<2x384xf32>
    %364 = vector.extract_strided_slice %334 {offsets = [0, 0], sizes = [2, 32], strides = [1, 1]} : vector<2x128xf32> to vector<2x32xf32>
    %cst_73 = arith.constant dense<0.000000e+00> : vector<2x384xf32>
    %365 = tpu.matmul %364, %13, %cst_73 {dimension_numbers = #tpu.dot_dimension_numbers<[1], [0], [0], [1], [0, 0, 1, 1], [], []>} : vector<2x32xf32>, vector<32x384xf32>, vector<2x384xf32> -> vector<2x384xf32>
    %366 = arith.addf %363, %365 : vector<2x384xf32>
    %367 = vector.extract_strided_slice %366 {offsets = [0, 0], sizes = [2, 256], strides = [1, 1]} : vector<2x384xf32> to vector<2x256xf32>
    %368 = arith.negf %367 : vector<2x256xf32>
    %369 = math.exp %368 : vector<2x256xf32>
    %cst_74 = arith.constant 1.000000e+00 : f32
    %370 = vector.broadcast %cst_74 : f32 to vector<2x256xf32>
    %371 = arith.addf %370, %369 : vector<2x256xf32>
    %372 = arith.divf %370, %371 : vector<2x256xf32>
    %373 = vector.extract_strided_slice %372 {offsets = [0, 0], sizes = [2, 128], strides = [1, 1]} : vector<2x256xf32> to vector<2x128xf32>
    %374 = vector.extract_strided_slice %372 {offsets = [0, 128], sizes = [2, 128], strides = [1, 1]} : vector<2x256xf32> to vector<2x128xf32>
    %375 = vector.extract_strided_slice %363 {offsets = [0, 256], sizes = [2, 128], strides = [1, 1]} : vector<2x384xf32> to vector<2x128xf32>
    %376 = vector.extract_strided_slice %365 {offsets = [0, 256], sizes = [2, 128], strides = [1, 1]} : vector<2x384xf32> to vector<2x128xf32>
    %377 = vector.broadcast %17 : vector<1x128xf32> to vector<2x128xf32>
    %378 = arith.addf %376, %377 : vector<2x128xf32>
    %379 = arith.mulf %373, %378 : vector<2x128xf32>
    %380 = arith.addf %375, %379 : vector<2x128xf32>
    %381 = math.tanh %380 : vector<2x128xf32>
    %382 = arith.mulf %374, %334 : vector<2x128xf32>
    %cst_75 = arith.constant 1.000000e+00 : f32
    %383 = vector.broadcast %cst_75 : f32 to vector<2x128xf32>
    %384 = arith.subf %383, %374 : vector<2x128xf32>
    %385 = arith.mulf %384, %381 : vector<2x128xf32>
    %386 = arith.addf %382, %385 : vector<2x128xf32>
    %387 = vector.extract_strided_slice %22 {offsets = [7, 0, 0], sizes = [1, 2, 384], strides = [1, 1, 1]} : vector<8x2x384xf32> to vector<1x2x384xf32>
    %388 = vector.shape_cast %387 : vector<1x2x384xf32> to vector<2x384xf32>
    %389 = vector.extract_strided_slice %359 {offsets = [0, 0], sizes = [2, 32], strides = [1, 1]} : vector<2x128xf32> to vector<2x32xf32>
    %cst_76 = arith.constant dense<0.000000e+00> : vector<2x384xf32>
    %390 = tpu.matmul %389, %9, %cst_76 {dimension_numbers = #tpu.dot_dimension_numbers<[1], [0], [0], [1], [0, 0, 1, 1], [], []>} : vector<2x32xf32>, vector<32x384xf32>, vector<2x384xf32> -> vector<2x384xf32>
    %391 = arith.addf %388, %390 : vector<2x384xf32>
    %392 = vector.extract_strided_slice %391 {offsets = [0, 0], sizes = [2, 256], strides = [1, 1]} : vector<2x384xf32> to vector<2x256xf32>
    %393 = arith.negf %392 : vector<2x256xf32>
    %394 = math.exp %393 : vector<2x256xf32>
    %cst_77 = arith.constant 1.000000e+00 : f32
    %395 = vector.broadcast %cst_77 : f32 to vector<2x256xf32>
    %396 = arith.addf %395, %394 : vector<2x256xf32>
    %397 = arith.divf %395, %396 : vector<2x256xf32>
    %398 = vector.extract_strided_slice %397 {offsets = [0, 0], sizes = [2, 128], strides = [1, 1]} : vector<2x256xf32> to vector<2x128xf32>
    %399 = vector.extract_strided_slice %397 {offsets = [0, 128], sizes = [2, 128], strides = [1, 1]} : vector<2x256xf32> to vector<2x128xf32>
    %400 = vector.extract_strided_slice %388 {offsets = [0, 256], sizes = [2, 128], strides = [1, 1]} : vector<2x384xf32> to vector<2x128xf32>
    %401 = vector.extract_strided_slice %390 {offsets = [0, 256], sizes = [2, 128], strides = [1, 1]} : vector<2x384xf32> to vector<2x128xf32>
    %402 = vector.broadcast %15 : vector<1x128xf32> to vector<2x128xf32>
    %403 = arith.addf %401, %402 : vector<2x128xf32>
    %404 = arith.mulf %398, %403 : vector<2x128xf32>
    %405 = arith.addf %400, %404 : vector<2x128xf32>
    %406 = math.tanh %405 : vector<2x128xf32>
    %407 = arith.mulf %399, %359 : vector<2x128xf32>
    %cst_78 = arith.constant 1.000000e+00 : f32
    %408 = vector.broadcast %cst_78 : f32 to vector<2x128xf32>
    %409 = arith.subf %408, %399 : vector<2x128xf32>
    %410 = arith.mulf %409, %406 : vector<2x128xf32>
    %411 = arith.addf %407, %410 : vector<2x128xf32>
    %412 = vector.extract_strided_slice %411 {offsets = [0, 0], sizes = [2, 32], strides = [1, 1]} : vector<2x128xf32> to vector<2x32xf32>
    %cst_79 = arith.constant dense<0.000000e+00> : vector<2x384xf32>
    %413 = tpu.matmul %412, %11, %cst_79 {dimension_numbers = #tpu.dot_dimension_numbers<[1], [0], [0], [1], [0, 0, 1, 1], [], []>} : vector<2x32xf32>, vector<32x384xf32>, vector<2x384xf32> -> vector<2x384xf32>
    %414 = vector.broadcast %16 : vector<1x384xf32> to vector<2x384xf32>
    %415 = arith.addf %413, %414 : vector<2x384xf32>
    %416 = vector.extract_strided_slice %386 {offsets = [0, 0], sizes = [2, 32], strides = [1, 1]} : vector<2x128xf32> to vector<2x32xf32>
    %cst_80 = arith.constant dense<0.000000e+00> : vector<2x384xf32>
    %417 = tpu.matmul %416, %13, %cst_80 {dimension_numbers = #tpu.dot_dimension_numbers<[1], [0], [0], [1], [0, 0, 1, 1], [], []>} : vector<2x32xf32>, vector<32x384xf32>, vector<2x384xf32> -> vector<2x384xf32>
    %418 = arith.addf %415, %417 : vector<2x384xf32>
    %419 = vector.extract_strided_slice %418 {offsets = [0, 0], sizes = [2, 256], strides = [1, 1]} : vector<2x384xf32> to vector<2x256xf32>
    %420 = arith.negf %419 : vector<2x256xf32>
    %421 = math.exp %420 : vector<2x256xf32>
    %cst_81 = arith.constant 1.000000e+00 : f32
    %422 = vector.broadcast %cst_81 : f32 to vector<2x256xf32>
    %423 = arith.addf %422, %421 : vector<2x256xf32>
    %424 = arith.divf %422, %423 : vector<2x256xf32>
    %425 = vector.extract_strided_slice %424 {offsets = [0, 0], sizes = [2, 128], strides = [1, 1]} : vector<2x256xf32> to vector<2x128xf32>
    %426 = vector.extract_strided_slice %424 {offsets = [0, 128], sizes = [2, 128], strides = [1, 1]} : vector<2x256xf32> to vector<2x128xf32>
    %427 = vector.extract_strided_slice %415 {offsets = [0, 256], sizes = [2, 128], strides = [1, 1]} : vector<2x384xf32> to vector<2x128xf32>
    %428 = vector.extract_strided_slice %417 {offsets = [0, 256], sizes = [2, 128], strides = [1, 1]} : vector<2x384xf32> to vector<2x128xf32>
    %429 = vector.broadcast %17 : vector<1x128xf32> to vector<2x128xf32>
    %430 = arith.addf %428, %429 : vector<2x128xf32>
    %431 = arith.mulf %425, %430 : vector<2x128xf32>
    %432 = arith.addf %427, %431 : vector<2x128xf32>
    %433 = math.tanh %432 : vector<2x128xf32>
    %434 = arith.mulf %426, %386 : vector<2x128xf32>
    %cst_82 = arith.constant 1.000000e+00 : f32
    %435 = vector.broadcast %cst_82 : f32 to vector<2x128xf32>
    %436 = arith.subf %435, %426 : vector<2x128xf32>
    %437 = arith.mulf %436, %433 : vector<2x128xf32>
    %438 = arith.addf %434, %437 : vector<2x128xf32>
    %c0_83 = arith.constant 0 : index
    %c0_84 = arith.constant 0 : index
    %c0_85 = arith.constant 0 : index
    %439 = vector.load %arg1[%c0_83, %c0_84, %c0_85] : memref<8x2x32xf32, #tpu.memory_space<vmem>>, vector<8x2x32xf32>
    %cst_86 = arith.constant dense<0.000000e+00> : vector<2xf32>
    %440 = vector.multi_reduction <add>, %411, %cst_86 [1] : vector<2x128xf32> to vector<2xf32>
    %441 = vector.shape_cast %440 : vector<2xf32> to vector<2x1xf32>
    %cst_87 = arith.constant 3.125000e-02 : f32
    %442 = vector.broadcast %cst_87 : f32 to vector<2x1xf32>
    %443 = arith.mulf %441, %442 : vector<2x1xf32>
    %444 = arith.mulf %411, %411 : vector<2x128xf32>
    %cst_88 = arith.constant dense<0.000000e+00> : vector<2xf32>
    %445 = vector.multi_reduction <add>, %444, %cst_88 [1] : vector<2x128xf32> to vector<2xf32>
    %446 = vector.shape_cast %445 : vector<2xf32> to vector<2x1xf32>
    %cst_89 = arith.constant 3.125000e-02 : f32
    %447 = vector.broadcast %cst_89 : f32 to vector<2x1xf32>
    %448 = arith.mulf %446, %447 : vector<2x1xf32>
    %449 = arith.mulf %443, %443 : vector<2x1xf32>
    %450 = arith.subf %448, %449 : vector<2x1xf32>
    %451 = vector.broadcast %443 : vector<2x1xf32> to vector<2x128xf32>
    %452 = arith.subf %411, %451 : vector<2x128xf32>
    %cst_90 = arith.constant 9.99999974E-6 : f32
    %453 = vector.broadcast %cst_90 : f32 to vector<2x1xf32>
    %454 = arith.addf %450, %453 : vector<2x1xf32>
    %455 = math.rsqrt %454 : vector<2x1xf32>
    %456 = vector.broadcast %455 : vector<2x1xf32> to vector<2x128xf32>
    %457 = arith.mulf %452, %456 : vector<2x128xf32>
    %458 = vector.broadcast %1 : vector<1x128xf32> to vector<2x128xf32>
    %459 = arith.mulf %457, %458 : vector<2x128xf32>
    %460 = vector.broadcast %2 : vector<1x128xf32> to vector<2x128xf32>
    %461 = arith.addf %459, %460 : vector<2x128xf32>
    %cst_91 = arith.constant dense<0.000000e+00> : vector<2xf32>
    %462 = vector.multi_reduction <add>, %438, %cst_91 [1] : vector<2x128xf32> to vector<2xf32>
    %463 = vector.shape_cast %462 : vector<2xf32> to vector<2x1xf32>
    %cst_92 = arith.constant 3.125000e-02 : f32
    %464 = vector.broadcast %cst_92 : f32 to vector<2x1xf32>
    %465 = arith.mulf %463, %464 : vector<2x1xf32>
    %466 = arith.mulf %438, %438 : vector<2x128xf32>
    %cst_93 = arith.constant dense<0.000000e+00> : vector<2xf32>
    %467 = vector.multi_reduction <add>, %466, %cst_93 [1] : vector<2x128xf32> to vector<2xf32>
    %468 = vector.shape_cast %467 : vector<2xf32> to vector<2x1xf32>
    %cst_94 = arith.constant 3.125000e-02 : f32
    %469 = vector.broadcast %cst_94 : f32 to vector<2x1xf32>
    %470 = arith.mulf %468, %469 : vector<2x1xf32>
    %471 = arith.mulf %465, %465 : vector<2x1xf32>
    %472 = arith.subf %470, %471 : vector<2x1xf32>
    %473 = vector.broadcast %465 : vector<2x1xf32> to vector<2x128xf32>
    %474 = arith.subf %438, %473 : vector<2x128xf32>
    %cst_95 = arith.constant 9.99999974E-6 : f32
    %475 = vector.broadcast %cst_95 : f32 to vector<2x1xf32>
    %476 = arith.addf %472, %475 : vector<2x1xf32>
    %477 = math.rsqrt %476 : vector<2x1xf32>
    %478 = vector.broadcast %477 : vector<2x1xf32> to vector<2x128xf32>
    %479 = arith.mulf %474, %478 : vector<2x128xf32>
    %480 = vector.broadcast %1 : vector<1x128xf32> to vector<2x128xf32>
    %481 = arith.mulf %479, %480 : vector<2x128xf32>
    %482 = vector.broadcast %2 : vector<1x128xf32> to vector<2x128xf32>
    %483 = arith.addf %481, %482 : vector<2x128xf32>
    %c2_96 = arith.constant 2 : index
    %c0_97 = arith.constant 0 : index
    %c0_98 = arith.constant 0 : index
    %484 = vector.load %arg2[%c2_96, %c0_97, %c0_98] : memref<4x32x384xf32, #tpu.memory_space<vmem>>, vector<1x32x384xf32>
    %485 = vector.shape_cast %484 : vector<1x32x384xf32> to vector<32x384xf32>
    %c2_99 = arith.constant 2 : index
    %c0_100 = arith.constant 0 : index
    %c0_101 = arith.constant 0 : index
    %486 = vector.load %arg3[%c2_99, %c0_100, %c0_101] : memref<4x32x384xf32, #tpu.memory_space<vmem>>, vector<1x32x384xf32>
    %487 = vector.shape_cast %486 : vector<1x32x384xf32> to vector<32x384xf32>
    %c3 = arith.constant 3 : index
    %c0_102 = arith.constant 0 : index
    %c0_103 = arith.constant 0 : index
    %488 = vector.load %arg2[%c3, %c0_102, %c0_103] : memref<4x32x384xf32, #tpu.memory_space<vmem>>, vector<1x32x384xf32>
    %489 = vector.shape_cast %488 : vector<1x32x384xf32> to vector<32x384xf32>
    %c3_104 = arith.constant 3 : index
    %c0_105 = arith.constant 0 : index
    %c0_106 = arith.constant 0 : index
    %490 = vector.load %arg3[%c3_104, %c0_105, %c0_106] : memref<4x32x384xf32, #tpu.memory_space<vmem>>, vector<1x32x384xf32>
    %491 = vector.shape_cast %490 : vector<1x32x384xf32> to vector<32x384xf32>
    %c2_107 = arith.constant 2 : index
    %c0_108 = arith.constant 0 : index
    %492 = vector.load %arg4[%c2_107, %c0_108] : memref<4x512xf32, #tpu.memory_space<vmem>>, vector<1x384xf32>
    %c2_109 = arith.constant 2 : index
    %c384_110 = arith.constant 384 : index
    %493 = vector.load %arg4[%c2_109, %c384_110] : memref<4x512xf32, #tpu.memory_space<vmem>>, vector<1x128xf32>
    %c3_111 = arith.constant 3 : index
    %c0_112 = arith.constant 0 : index
    %494 = vector.load %arg4[%c3_111, %c0_112] : memref<4x512xf32, #tpu.memory_space<vmem>>, vector<1x384xf32>
    %c3_113 = arith.constant 3 : index
    %c384_114 = arith.constant 384 : index
    %495 = vector.load %arg4[%c3_113, %c384_114] : memref<4x512xf32, #tpu.memory_space<vmem>>, vector<1x128xf32>
    %496 = vector.shape_cast %439 : vector<8x2x32xf32> to vector<16x32xf32>
    %cst_115 = arith.constant dense<0.000000e+00> : vector<16x384xf32>
    %497 = tpu.matmul %496, %485, %cst_115 {dimension_numbers = #tpu.dot_dimension_numbers<[1], [0], [0], [1], [0, 0, 1, 1], [], []>} : vector<16x32xf32>, vector<32x384xf32>, vector<16x384xf32> -> vector<16x384xf32>
    %498 = vector.broadcast %492 : vector<1x384xf32> to vector<16x384xf32>
    %499 = arith.addf %497, %498 : vector<16x384xf32>
    %500 = vector.shape_cast %499 : vector<16x384xf32> to vector<8x2x384xf32>
    %501 = vector.extract_strided_slice %500 {offsets = [0, 0, 0], sizes = [1, 2, 384], strides = [1, 1, 1]} : vector<8x2x384xf32> to vector<1x2x384xf32>
    %502 = vector.shape_cast %501 : vector<1x2x384xf32> to vector<2x384xf32>
    %503 = vector.extract_strided_slice %461 {offsets = [0, 0], sizes = [2, 32], strides = [1, 1]} : vector<2x128xf32> to vector<2x32xf32>
    %cst_116 = arith.constant dense<0.000000e+00> : vector<2x384xf32>
    %504 = tpu.matmul %503, %487, %cst_116 {dimension_numbers = #tpu.dot_dimension_numbers<[1], [0], [0], [1], [0, 0, 1, 1], [], []>} : vector<2x32xf32>, vector<32x384xf32>, vector<2x384xf32> -> vector<2x384xf32>
    %505 = arith.addf %502, %504 : vector<2x384xf32>
    %506 = vector.extract_strided_slice %505 {offsets = [0, 0], sizes = [2, 256], strides = [1, 1]} : vector<2x384xf32> to vector<2x256xf32>
    %507 = arith.negf %506 : vector<2x256xf32>
    %508 = math.exp %507 : vector<2x256xf32>
    %cst_117 = arith.constant 1.000000e+00 : f32
    %509 = vector.broadcast %cst_117 : f32 to vector<2x256xf32>
    %510 = arith.addf %509, %508 : vector<2x256xf32>
    %511 = arith.divf %509, %510 : vector<2x256xf32>
    %512 = vector.extract_strided_slice %511 {offsets = [0, 0], sizes = [2, 128], strides = [1, 1]} : vector<2x256xf32> to vector<2x128xf32>
    %513 = vector.extract_strided_slice %511 {offsets = [0, 128], sizes = [2, 128], strides = [1, 1]} : vector<2x256xf32> to vector<2x128xf32>
    %514 = vector.extract_strided_slice %502 {offsets = [0, 256], sizes = [2, 128], strides = [1, 1]} : vector<2x384xf32> to vector<2x128xf32>
    %515 = vector.extract_strided_slice %504 {offsets = [0, 256], sizes = [2, 128], strides = [1, 1]} : vector<2x384xf32> to vector<2x128xf32>
    %516 = vector.broadcast %493 : vector<1x128xf32> to vector<2x128xf32>
    %517 = arith.addf %515, %516 : vector<2x128xf32>
    %518 = arith.mulf %512, %517 : vector<2x128xf32>
    %519 = arith.addf %514, %518 : vector<2x128xf32>
    %520 = math.tanh %519 : vector<2x128xf32>
    %521 = arith.mulf %513, %461 : vector<2x128xf32>
    %cst_118 = arith.constant 1.000000e+00 : f32
    %522 = vector.broadcast %cst_118 : f32 to vector<2x128xf32>
    %523 = arith.subf %522, %513 : vector<2x128xf32>
    %524 = arith.mulf %523, %520 : vector<2x128xf32>
    %525 = arith.addf %521, %524 : vector<2x128xf32>
    %526 = vector.extract_strided_slice %525 {offsets = [0, 0], sizes = [2, 32], strides = [1, 1]} : vector<2x128xf32> to vector<2x32xf32>
    %cst_119 = arith.constant dense<0.000000e+00> : vector<2x384xf32>
    %527 = tpu.matmul %526, %489, %cst_119 {dimension_numbers = #tpu.dot_dimension_numbers<[1], [0], [0], [1], [0, 0, 1, 1], [], []>} : vector<2x32xf32>, vector<32x384xf32>, vector<2x384xf32> -> vector<2x384xf32>
    %528 = vector.broadcast %494 : vector<1x384xf32> to vector<2x384xf32>
    %529 = arith.addf %527, %528 : vector<2x384xf32>
    %530 = vector.extract_strided_slice %483 {offsets = [0, 0], sizes = [2, 32], strides = [1, 1]} : vector<2x128xf32> to vector<2x32xf32>
    %cst_120 = arith.constant dense<0.000000e+00> : vector<2x384xf32>
    %531 = tpu.matmul %530, %491, %cst_120 {dimension_numbers = #tpu.dot_dimension_numbers<[1], [0], [0], [1], [0, 0, 1, 1], [], []>} : vector<2x32xf32>, vector<32x384xf32>, vector<2x384xf32> -> vector<2x384xf32>
    %532 = arith.addf %529, %531 : vector<2x384xf32>
    %533 = vector.extract_strided_slice %532 {offsets = [0, 0], sizes = [2, 256], strides = [1, 1]} : vector<2x384xf32> to vector<2x256xf32>
    %534 = arith.negf %533 : vector<2x256xf32>
    %535 = math.exp %534 : vector<2x256xf32>
    %cst_121 = arith.constant 1.000000e+00 : f32
    %536 = vector.broadcast %cst_121 : f32 to vector<2x256xf32>
    %537 = arith.addf %536, %535 : vector<2x256xf32>
    %538 = arith.divf %536, %537 : vector<2x256xf32>
    %539 = vector.extract_strided_slice %538 {offsets = [0, 0], sizes = [2, 128], strides = [1, 1]} : vector<2x256xf32> to vector<2x128xf32>
    %540 = vector.extract_strided_slice %538 {offsets = [0, 128], sizes = [2, 128], strides = [1, 1]} : vector<2x256xf32> to vector<2x128xf32>
    %541 = vector.extract_strided_slice %529 {offsets = [0, 256], sizes = [2, 128], strides = [1, 1]} : vector<2x384xf32> to vector<2x128xf32>
    %542 = vector.extract_strided_slice %531 {offsets = [0, 256], sizes = [2, 128], strides = [1, 1]} : vector<2x384xf32> to vector<2x128xf32>
    %543 = vector.broadcast %495 : vector<1x128xf32> to vector<2x128xf32>
    %544 = arith.addf %542, %543 : vector<2x128xf32>
    %545 = arith.mulf %539, %544 : vector<2x128xf32>
    %546 = arith.addf %541, %545 : vector<2x128xf32>
    %547 = math.tanh %546 : vector<2x128xf32>
    %548 = arith.mulf %540, %483 : vector<2x128xf32>
    %cst_122 = arith.constant 1.000000e+00 : f32
    %549 = vector.broadcast %cst_122 : f32 to vector<2x128xf32>
    %550 = arith.subf %549, %540 : vector<2x128xf32>
    %551 = arith.mulf %550, %547 : vector<2x128xf32>
    %552 = arith.addf %548, %551 : vector<2x128xf32>
    %553 = vector.extract_strided_slice %500 {offsets = [1, 0, 0], sizes = [1, 2, 384], strides = [1, 1, 1]} : vector<8x2x384xf32> to vector<1x2x384xf32>
    %554 = vector.shape_cast %553 : vector<1x2x384xf32> to vector<2x384xf32>
    %555 = vector.extract_strided_slice %525 {offsets = [0, 0], sizes = [2, 32], strides = [1, 1]} : vector<2x128xf32> to vector<2x32xf32>
    %cst_123 = arith.constant dense<0.000000e+00> : vector<2x384xf32>
    %556 = tpu.matmul %555, %487, %cst_123 {dimension_numbers = #tpu.dot_dimension_numbers<[1], [0], [0], [1], [0, 0, 1, 1], [], []>} : vector<2x32xf32>, vector<32x384xf32>, vector<2x384xf32> -> vector<2x384xf32>
    %557 = arith.addf %554, %556 : vector<2x384xf32>
    %558 = vector.extract_strided_slice %557 {offsets = [0, 0], sizes = [2, 256], strides = [1, 1]} : vector<2x384xf32> to vector<2x256xf32>
    %559 = arith.negf %558 : vector<2x256xf32>
    %560 = math.exp %559 : vector<2x256xf32>
    %cst_124 = arith.constant 1.000000e+00 : f32
    %561 = vector.broadcast %cst_124 : f32 to vector<2x256xf32>
    %562 = arith.addf %561, %560 : vector<2x256xf32>
    %563 = arith.divf %561, %562 : vector<2x256xf32>
    %564 = vector.extract_strided_slice %563 {offsets = [0, 0], sizes = [2, 128], strides = [1, 1]} : vector<2x256xf32> to vector<2x128xf32>
    %565 = vector.extract_strided_slice %563 {offsets = [0, 128], sizes = [2, 128], strides = [1, 1]} : vector<2x256xf32> to vector<2x128xf32>
    %566 = vector.extract_strided_slice %554 {offsets = [0, 256], sizes = [2, 128], strides = [1, 1]} : vector<2x384xf32> to vector<2x128xf32>
    %567 = vector.extract_strided_slice %556 {offsets = [0, 256], sizes = [2, 128], strides = [1, 1]} : vector<2x384xf32> to vector<2x128xf32>
    %568 = vector.broadcast %493 : vector<1x128xf32> to vector<2x128xf32>
    %569 = arith.addf %567, %568 : vector<2x128xf32>
    %570 = arith.mulf %564, %569 : vector<2x128xf32>
    %571 = arith.addf %566, %570 : vector<2x128xf32>
    %572 = math.tanh %571 : vector<2x128xf32>
    %573 = arith.mulf %565, %525 : vector<2x128xf32>
    %cst_125 = arith.constant 1.000000e+00 : f32
    %574 = vector.broadcast %cst_125 : f32 to vector<2x128xf32>
    %575 = arith.subf %574, %565 : vector<2x128xf32>
    %576 = arith.mulf %575, %572 : vector<2x128xf32>
    %577 = arith.addf %573, %576 : vector<2x128xf32>
    %578 = vector.extract_strided_slice %577 {offsets = [0, 0], sizes = [2, 32], strides = [1, 1]} : vector<2x128xf32> to vector<2x32xf32>
    %cst_126 = arith.constant dense<0.000000e+00> : vector<2x384xf32>
    %579 = tpu.matmul %578, %489, %cst_126 {dimension_numbers = #tpu.dot_dimension_numbers<[1], [0], [0], [1], [0, 0, 1, 1], [], []>} : vector<2x32xf32>, vector<32x384xf32>, vector<2x384xf32> -> vector<2x384xf32>
    %580 = vector.broadcast %494 : vector<1x384xf32> to vector<2x384xf32>
    %581 = arith.addf %579, %580 : vector<2x384xf32>
    %582 = vector.extract_strided_slice %552 {offsets = [0, 0], sizes = [2, 32], strides = [1, 1]} : vector<2x128xf32> to vector<2x32xf32>
    %cst_127 = arith.constant dense<0.000000e+00> : vector<2x384xf32>
    %583 = tpu.matmul %582, %491, %cst_127 {dimension_numbers = #tpu.dot_dimension_numbers<[1], [0], [0], [1], [0, 0, 1, 1], [], []>} : vector<2x32xf32>, vector<32x384xf32>, vector<2x384xf32> -> vector<2x384xf32>
    %584 = arith.addf %581, %583 : vector<2x384xf32>
    %585 = vector.extract_strided_slice %584 {offsets = [0, 0], sizes = [2, 256], strides = [1, 1]} : vector<2x384xf32> to vector<2x256xf32>
    %586 = arith.negf %585 : vector<2x256xf32>
    %587 = math.exp %586 : vector<2x256xf32>
    %cst_128 = arith.constant 1.000000e+00 : f32
    %588 = vector.broadcast %cst_128 : f32 to vector<2x256xf32>
    %589 = arith.addf %588, %587 : vector<2x256xf32>
    %590 = arith.divf %588, %589 : vector<2x256xf32>
    %591 = vector.extract_strided_slice %590 {offsets = [0, 0], sizes = [2, 128], strides = [1, 1]} : vector<2x256xf32> to vector<2x128xf32>
    %592 = vector.extract_strided_slice %590 {offsets = [0, 128], sizes = [2, 128], strides = [1, 1]} : vector<2x256xf32> to vector<2x128xf32>
    %593 = vector.extract_strided_slice %581 {offsets = [0, 256], sizes = [2, 128], strides = [1, 1]} : vector<2x384xf32> to vector<2x128xf32>
    %594 = vector.extract_strided_slice %583 {offsets = [0, 256], sizes = [2, 128], strides = [1, 1]} : vector<2x384xf32> to vector<2x128xf32>
    %595 = vector.broadcast %495 : vector<1x128xf32> to vector<2x128xf32>
    %596 = arith.addf %594, %595 : vector<2x128xf32>
    %597 = arith.mulf %591, %596 : vector<2x128xf32>
    %598 = arith.addf %593, %597 : vector<2x128xf32>
    %599 = math.tanh %598 : vector<2x128xf32>
    %600 = arith.mulf %592, %552 : vector<2x128xf32>
    %cst_129 = arith.constant 1.000000e+00 : f32
    %601 = vector.broadcast %cst_129 : f32 to vector<2x128xf32>
    %602 = arith.subf %601, %592 : vector<2x128xf32>
    %603 = arith.mulf %602, %599 : vector<2x128xf32>
    %604 = arith.addf %600, %603 : vector<2x128xf32>
    %605 = vector.extract_strided_slice %500 {offsets = [2, 0, 0], sizes = [1, 2, 384], strides = [1, 1, 1]} : vector<8x2x384xf32> to vector<1x2x384xf32>
    %606 = vector.shape_cast %605 : vector<1x2x384xf32> to vector<2x384xf32>
    %607 = vector.extract_strided_slice %577 {offsets = [0, 0], sizes = [2, 32], strides = [1, 1]} : vector<2x128xf32> to vector<2x32xf32>
    %cst_130 = arith.constant dense<0.000000e+00> : vector<2x384xf32>
    %608 = tpu.matmul %607, %487, %cst_130 {dimension_numbers = #tpu.dot_dimension_numbers<[1], [0], [0], [1], [0, 0, 1, 1], [], []>} : vector<2x32xf32>, vector<32x384xf32>, vector<2x384xf32> -> vector<2x384xf32>
    %609 = arith.addf %606, %608 : vector<2x384xf32>
    %610 = vector.extract_strided_slice %609 {offsets = [0, 0], sizes = [2, 256], strides = [1, 1]} : vector<2x384xf32> to vector<2x256xf32>
    %611 = arith.negf %610 : vector<2x256xf32>
    %612 = math.exp %611 : vector<2x256xf32>
    %cst_131 = arith.constant 1.000000e+00 : f32
    %613 = vector.broadcast %cst_131 : f32 to vector<2x256xf32>
    %614 = arith.addf %613, %612 : vector<2x256xf32>
    %615 = arith.divf %613, %614 : vector<2x256xf32>
    %616 = vector.extract_strided_slice %615 {offsets = [0, 0], sizes = [2, 128], strides = [1, 1]} : vector<2x256xf32> to vector<2x128xf32>
    %617 = vector.extract_strided_slice %615 {offsets = [0, 128], sizes = [2, 128], strides = [1, 1]} : vector<2x256xf32> to vector<2x128xf32>
    %618 = vector.extract_strided_slice %606 {offsets = [0, 256], sizes = [2, 128], strides = [1, 1]} : vector<2x384xf32> to vector<2x128xf32>
    %619 = vector.extract_strided_slice %608 {offsets = [0, 256], sizes = [2, 128], strides = [1, 1]} : vector<2x384xf32> to vector<2x128xf32>
    %620 = vector.broadcast %493 : vector<1x128xf32> to vector<2x128xf32>
    %621 = arith.addf %619, %620 : vector<2x128xf32>
    %622 = arith.mulf %616, %621 : vector<2x128xf32>
    %623 = arith.addf %618, %622 : vector<2x128xf32>
    %624 = math.tanh %623 : vector<2x128xf32>
    %625 = arith.mulf %617, %577 : vector<2x128xf32>
    %cst_132 = arith.constant 1.000000e+00 : f32
    %626 = vector.broadcast %cst_132 : f32 to vector<2x128xf32>
    %627 = arith.subf %626, %617 : vector<2x128xf32>
    %628 = arith.mulf %627, %624 : vector<2x128xf32>
    %629 = arith.addf %625, %628 : vector<2x128xf32>
    %630 = vector.extract_strided_slice %629 {offsets = [0, 0], sizes = [2, 32], strides = [1, 1]} : vector<2x128xf32> to vector<2x32xf32>
    %cst_133 = arith.constant dense<0.000000e+00> : vector<2x384xf32>
    %631 = tpu.matmul %630, %489, %cst_133 {dimension_numbers = #tpu.dot_dimension_numbers<[1], [0], [0], [1], [0, 0, 1, 1], [], []>} : vector<2x32xf32>, vector<32x384xf32>, vector<2x384xf32> -> vector<2x384xf32>
    %632 = vector.broadcast %494 : vector<1x384xf32> to vector<2x384xf32>
    %633 = arith.addf %631, %632 : vector<2x384xf32>
    %634 = vector.extract_strided_slice %604 {offsets = [0, 0], sizes = [2, 32], strides = [1, 1]} : vector<2x128xf32> to vector<2x32xf32>
    %cst_134 = arith.constant dense<0.000000e+00> : vector<2x384xf32>
    %635 = tpu.matmul %634, %491, %cst_134 {dimension_numbers = #tpu.dot_dimension_numbers<[1], [0], [0], [1], [0, 0, 1, 1], [], []>} : vector<2x32xf32>, vector<32x384xf32>, vector<2x384xf32> -> vector<2x384xf32>
    %636 = arith.addf %633, %635 : vector<2x384xf32>
    %637 = vector.extract_strided_slice %636 {offsets = [0, 0], sizes = [2, 256], strides = [1, 1]} : vector<2x384xf32> to vector<2x256xf32>
    %638 = arith.negf %637 : vector<2x256xf32>
    %639 = math.exp %638 : vector<2x256xf32>
    %cst_135 = arith.constant 1.000000e+00 : f32
    %640 = vector.broadcast %cst_135 : f32 to vector<2x256xf32>
    %641 = arith.addf %640, %639 : vector<2x256xf32>
    %642 = arith.divf %640, %641 : vector<2x256xf32>
    %643 = vector.extract_strided_slice %642 {offsets = [0, 0], sizes = [2, 128], strides = [1, 1]} : vector<2x256xf32> to vector<2x128xf32>
    %644 = vector.extract_strided_slice %642 {offsets = [0, 128], sizes = [2, 128], strides = [1, 1]} : vector<2x256xf32> to vector<2x128xf32>
    %645 = vector.extract_strided_slice %633 {offsets = [0, 256], sizes = [2, 128], strides = [1, 1]} : vector<2x384xf32> to vector<2x128xf32>
    %646 = vector.extract_strided_slice %635 {offsets = [0, 256], sizes = [2, 128], strides = [1, 1]} : vector<2x384xf32> to vector<2x128xf32>
    %647 = vector.broadcast %495 : vector<1x128xf32> to vector<2x128xf32>
    %648 = arith.addf %646, %647 : vector<2x128xf32>
    %649 = arith.mulf %643, %648 : vector<2x128xf32>
    %650 = arith.addf %645, %649 : vector<2x128xf32>
    %651 = math.tanh %650 : vector<2x128xf32>
    %652 = arith.mulf %644, %604 : vector<2x128xf32>
    %cst_136 = arith.constant 1.000000e+00 : f32
    %653 = vector.broadcast %cst_136 : f32 to vector<2x128xf32>
    %654 = arith.subf %653, %644 : vector<2x128xf32>
    %655 = arith.mulf %654, %651 : vector<2x128xf32>
    %656 = arith.addf %652, %655 : vector<2x128xf32>
    %657 = vector.extract_strided_slice %500 {offsets = [3, 0, 0], sizes = [1, 2, 384], strides = [1, 1, 1]} : vector<8x2x384xf32> to vector<1x2x384xf32>
    %658 = vector.shape_cast %657 : vector<1x2x384xf32> to vector<2x384xf32>
    %659 = vector.extract_strided_slice %629 {offsets = [0, 0], sizes = [2, 32], strides = [1, 1]} : vector<2x128xf32> to vector<2x32xf32>
    %cst_137 = arith.constant dense<0.000000e+00> : vector<2x384xf32>
    %660 = tpu.matmul %659, %487, %cst_137 {dimension_numbers = #tpu.dot_dimension_numbers<[1], [0], [0], [1], [0, 0, 1, 1], [], []>} : vector<2x32xf32>, vector<32x384xf32>, vector<2x384xf32> -> vector<2x384xf32>
    %661 = arith.addf %658, %660 : vector<2x384xf32>
    %662 = vector.extract_strided_slice %661 {offsets = [0, 0], sizes = [2, 256], strides = [1, 1]} : vector<2x384xf32> to vector<2x256xf32>
    %663 = arith.negf %662 : vector<2x256xf32>
    %664 = math.exp %663 : vector<2x256xf32>
    %cst_138 = arith.constant 1.000000e+00 : f32
    %665 = vector.broadcast %cst_138 : f32 to vector<2x256xf32>
    %666 = arith.addf %665, %664 : vector<2x256xf32>
    %667 = arith.divf %665, %666 : vector<2x256xf32>
    %668 = vector.extract_strided_slice %667 {offsets = [0, 0], sizes = [2, 128], strides = [1, 1]} : vector<2x256xf32> to vector<2x128xf32>
    %669 = vector.extract_strided_slice %667 {offsets = [0, 128], sizes = [2, 128], strides = [1, 1]} : vector<2x256xf32> to vector<2x128xf32>
    %670 = vector.extract_strided_slice %658 {offsets = [0, 256], sizes = [2, 128], strides = [1, 1]} : vector<2x384xf32> to vector<2x128xf32>
    %671 = vector.extract_strided_slice %660 {offsets = [0, 256], sizes = [2, 128], strides = [1, 1]} : vector<2x384xf32> to vector<2x128xf32>
    %672 = vector.broadcast %493 : vector<1x128xf32> to vector<2x128xf32>
    %673 = arith.addf %671, %672 : vector<2x128xf32>
    %674 = arith.mulf %668, %673 : vector<2x128xf32>
    %675 = arith.addf %670, %674 : vector<2x128xf32>
    %676 = math.tanh %675 : vector<2x128xf32>
    %677 = arith.mulf %669, %629 : vector<2x128xf32>
    %cst_139 = arith.constant 1.000000e+00 : f32
    %678 = vector.broadcast %cst_139 : f32 to vector<2x128xf32>
    %679 = arith.subf %678, %669 : vector<2x128xf32>
    %680 = arith.mulf %679, %676 : vector<2x128xf32>
    %681 = arith.addf %677, %680 : vector<2x128xf32>
    %682 = vector.extract_strided_slice %681 {offsets = [0, 0], sizes = [2, 32], strides = [1, 1]} : vector<2x128xf32> to vector<2x32xf32>
    %cst_140 = arith.constant dense<0.000000e+00> : vector<2x384xf32>
    %683 = tpu.matmul %682, %489, %cst_140 {dimension_numbers = #tpu.dot_dimension_numbers<[1], [0], [0], [1], [0, 0, 1, 1], [], []>} : vector<2x32xf32>, vector<32x384xf32>, vector<2x384xf32> -> vector<2x384xf32>
    %684 = vector.broadcast %494 : vector<1x384xf32> to vector<2x384xf32>
    %685 = arith.addf %683, %684 : vector<2x384xf32>
    %686 = vector.extract_strided_slice %656 {offsets = [0, 0], sizes = [2, 32], strides = [1, 1]} : vector<2x128xf32> to vector<2x32xf32>
    %cst_141 = arith.constant dense<0.000000e+00> : vector<2x384xf32>
    %687 = tpu.matmul %686, %491, %cst_141 {dimension_numbers = #tpu.dot_dimension_numbers<[1], [0], [0], [1], [0, 0, 1, 1], [], []>} : vector<2x32xf32>, vector<32x384xf32>, vector<2x384xf32> -> vector<2x384xf32>
    %688 = arith.addf %685, %687 : vector<2x384xf32>
    %689 = vector.extract_strided_slice %688 {offsets = [0, 0], sizes = [2, 256], strides = [1, 1]} : vector<2x384xf32> to vector<2x256xf32>
    %690 = arith.negf %689 : vector<2x256xf32>
    %691 = math.exp %690 : vector<2x256xf32>
    %cst_142 = arith.constant 1.000000e+00 : f32
    %692 = vector.broadcast %cst_142 : f32 to vector<2x256xf32>
    %693 = arith.addf %692, %691 : vector<2x256xf32>
    %694 = arith.divf %692, %693 : vector<2x256xf32>
    %695 = vector.extract_strided_slice %694 {offsets = [0, 0], sizes = [2, 128], strides = [1, 1]} : vector<2x256xf32> to vector<2x128xf32>
    %696 = vector.extract_strided_slice %694 {offsets = [0, 128], sizes = [2, 128], strides = [1, 1]} : vector<2x256xf32> to vector<2x128xf32>
    %697 = vector.extract_strided_slice %685 {offsets = [0, 256], sizes = [2, 128], strides = [1, 1]} : vector<2x384xf32> to vector<2x128xf32>
    %698 = vector.extract_strided_slice %687 {offsets = [0, 256], sizes = [2, 128], strides = [1, 1]} : vector<2x384xf32> to vector<2x128xf32>
    %699 = vector.broadcast %495 : vector<1x128xf32> to vector<2x128xf32>
    %700 = arith.addf %698, %699 : vector<2x128xf32>
    %701 = arith.mulf %695, %700 : vector<2x128xf32>
    %702 = arith.addf %697, %701 : vector<2x128xf32>
    %703 = math.tanh %702 : vector<2x128xf32>
    %704 = arith.mulf %696, %656 : vector<2x128xf32>
    %cst_143 = arith.constant 1.000000e+00 : f32
    %705 = vector.broadcast %cst_143 : f32 to vector<2x128xf32>
    %706 = arith.subf %705, %696 : vector<2x128xf32>
    %707 = arith.mulf %706, %703 : vector<2x128xf32>
    %708 = arith.addf %704, %707 : vector<2x128xf32>
    %709 = vector.extract_strided_slice %500 {offsets = [4, 0, 0], sizes = [1, 2, 384], strides = [1, 1, 1]} : vector<8x2x384xf32> to vector<1x2x384xf32>
    %710 = vector.shape_cast %709 : vector<1x2x384xf32> to vector<2x384xf32>
    %711 = vector.extract_strided_slice %681 {offsets = [0, 0], sizes = [2, 32], strides = [1, 1]} : vector<2x128xf32> to vector<2x32xf32>
    %cst_144 = arith.constant dense<0.000000e+00> : vector<2x384xf32>
    %712 = tpu.matmul %711, %487, %cst_144 {dimension_numbers = #tpu.dot_dimension_numbers<[1], [0], [0], [1], [0, 0, 1, 1], [], []>} : vector<2x32xf32>, vector<32x384xf32>, vector<2x384xf32> -> vector<2x384xf32>
    %713 = arith.addf %710, %712 : vector<2x384xf32>
    %714 = vector.extract_strided_slice %713 {offsets = [0, 0], sizes = [2, 256], strides = [1, 1]} : vector<2x384xf32> to vector<2x256xf32>
    %715 = arith.negf %714 : vector<2x256xf32>
    %716 = math.exp %715 : vector<2x256xf32>
    %cst_145 = arith.constant 1.000000e+00 : f32
    %717 = vector.broadcast %cst_145 : f32 to vector<2x256xf32>
    %718 = arith.addf %717, %716 : vector<2x256xf32>
    %719 = arith.divf %717, %718 : vector<2x256xf32>
    %720 = vector.extract_strided_slice %719 {offsets = [0, 0], sizes = [2, 128], strides = [1, 1]} : vector<2x256xf32> to vector<2x128xf32>
    %721 = vector.extract_strided_slice %719 {offsets = [0, 128], sizes = [2, 128], strides = [1, 1]} : vector<2x256xf32> to vector<2x128xf32>
    %722 = vector.extract_strided_slice %710 {offsets = [0, 256], sizes = [2, 128], strides = [1, 1]} : vector<2x384xf32> to vector<2x128xf32>
    %723 = vector.extract_strided_slice %712 {offsets = [0, 256], sizes = [2, 128], strides = [1, 1]} : vector<2x384xf32> to vector<2x128xf32>
    %724 = vector.broadcast %493 : vector<1x128xf32> to vector<2x128xf32>
    %725 = arith.addf %723, %724 : vector<2x128xf32>
    %726 = arith.mulf %720, %725 : vector<2x128xf32>
    %727 = arith.addf %722, %726 : vector<2x128xf32>
    %728 = math.tanh %727 : vector<2x128xf32>
    %729 = arith.mulf %721, %681 : vector<2x128xf32>
    %cst_146 = arith.constant 1.000000e+00 : f32
    %730 = vector.broadcast %cst_146 : f32 to vector<2x128xf32>
    %731 = arith.subf %730, %721 : vector<2x128xf32>
    %732 = arith.mulf %731, %728 : vector<2x128xf32>
    %733 = arith.addf %729, %732 : vector<2x128xf32>
    %734 = vector.extract_strided_slice %733 {offsets = [0, 0], sizes = [2, 32], strides = [1, 1]} : vector<2x128xf32> to vector<2x32xf32>
    %cst_147 = arith.constant dense<0.000000e+00> : vector<2x384xf32>
    %735 = tpu.matmul %734, %489, %cst_147 {dimension_numbers = #tpu.dot_dimension_numbers<[1], [0], [0], [1], [0, 0, 1, 1], [], []>} : vector<2x32xf32>, vector<32x384xf32>, vector<2x384xf32> -> vector<2x384xf32>
    %736 = vector.broadcast %494 : vector<1x384xf32> to vector<2x384xf32>
    %737 = arith.addf %735, %736 : vector<2x384xf32>
    %738 = vector.extract_strided_slice %708 {offsets = [0, 0], sizes = [2, 32], strides = [1, 1]} : vector<2x128xf32> to vector<2x32xf32>
    %cst_148 = arith.constant dense<0.000000e+00> : vector<2x384xf32>
    %739 = tpu.matmul %738, %491, %cst_148 {dimension_numbers = #tpu.dot_dimension_numbers<[1], [0], [0], [1], [0, 0, 1, 1], [], []>} : vector<2x32xf32>, vector<32x384xf32>, vector<2x384xf32> -> vector<2x384xf32>
    %740 = arith.addf %737, %739 : vector<2x384xf32>
    %741 = vector.extract_strided_slice %740 {offsets = [0, 0], sizes = [2, 256], strides = [1, 1]} : vector<2x384xf32> to vector<2x256xf32>
    %742 = arith.negf %741 : vector<2x256xf32>
    %743 = math.exp %742 : vector<2x256xf32>
    %cst_149 = arith.constant 1.000000e+00 : f32
    %744 = vector.broadcast %cst_149 : f32 to vector<2x256xf32>
    %745 = arith.addf %744, %743 : vector<2x256xf32>
    %746 = arith.divf %744, %745 : vector<2x256xf32>
    %747 = vector.extract_strided_slice %746 {offsets = [0, 0], sizes = [2, 128], strides = [1, 1]} : vector<2x256xf32> to vector<2x128xf32>
    %748 = vector.extract_strided_slice %746 {offsets = [0, 128], sizes = [2, 128], strides = [1, 1]} : vector<2x256xf32> to vector<2x128xf32>
    %749 = vector.extract_strided_slice %737 {offsets = [0, 256], sizes = [2, 128], strides = [1, 1]} : vector<2x384xf32> to vector<2x128xf32>
    %750 = vector.extract_strided_slice %739 {offsets = [0, 256], sizes = [2, 128], strides = [1, 1]} : vector<2x384xf32> to vector<2x128xf32>
    %751 = vector.broadcast %495 : vector<1x128xf32> to vector<2x128xf32>
    %752 = arith.addf %750, %751 : vector<2x128xf32>
    %753 = arith.mulf %747, %752 : vector<2x128xf32>
    %754 = arith.addf %749, %753 : vector<2x128xf32>
    %755 = math.tanh %754 : vector<2x128xf32>
    %756 = arith.mulf %748, %708 : vector<2x128xf32>
    %cst_150 = arith.constant 1.000000e+00 : f32
    %757 = vector.broadcast %cst_150 : f32 to vector<2x128xf32>
    %758 = arith.subf %757, %748 : vector<2x128xf32>
    %759 = arith.mulf %758, %755 : vector<2x128xf32>
    %760 = arith.addf %756, %759 : vector<2x128xf32>
    %761 = vector.extract_strided_slice %500 {offsets = [5, 0, 0], sizes = [1, 2, 384], strides = [1, 1, 1]} : vector<8x2x384xf32> to vector<1x2x384xf32>
    %762 = vector.shape_cast %761 : vector<1x2x384xf32> to vector<2x384xf32>
    %763 = vector.extract_strided_slice %733 {offsets = [0, 0], sizes = [2, 32], strides = [1, 1]} : vector<2x128xf32> to vector<2x32xf32>
    %cst_151 = arith.constant dense<0.000000e+00> : vector<2x384xf32>
    %764 = tpu.matmul %763, %487, %cst_151 {dimension_numbers = #tpu.dot_dimension_numbers<[1], [0], [0], [1], [0, 0, 1, 1], [], []>} : vector<2x32xf32>, vector<32x384xf32>, vector<2x384xf32> -> vector<2x384xf32>
    %765 = arith.addf %762, %764 : vector<2x384xf32>
    %766 = vector.extract_strided_slice %765 {offsets = [0, 0], sizes = [2, 256], strides = [1, 1]} : vector<2x384xf32> to vector<2x256xf32>
    %767 = arith.negf %766 : vector<2x256xf32>
    %768 = math.exp %767 : vector<2x256xf32>
    %cst_152 = arith.constant 1.000000e+00 : f32
    %769 = vector.broadcast %cst_152 : f32 to vector<2x256xf32>
    %770 = arith.addf %769, %768 : vector<2x256xf32>
    %771 = arith.divf %769, %770 : vector<2x256xf32>
    %772 = vector.extract_strided_slice %771 {offsets = [0, 0], sizes = [2, 128], strides = [1, 1]} : vector<2x256xf32> to vector<2x128xf32>
    %773 = vector.extract_strided_slice %771 {offsets = [0, 128], sizes = [2, 128], strides = [1, 1]} : vector<2x256xf32> to vector<2x128xf32>
    %774 = vector.extract_strided_slice %762 {offsets = [0, 256], sizes = [2, 128], strides = [1, 1]} : vector<2x384xf32> to vector<2x128xf32>
    %775 = vector.extract_strided_slice %764 {offsets = [0, 256], sizes = [2, 128], strides = [1, 1]} : vector<2x384xf32> to vector<2x128xf32>
    %776 = vector.broadcast %493 : vector<1x128xf32> to vector<2x128xf32>
    %777 = arith.addf %775, %776 : vector<2x128xf32>
    %778 = arith.mulf %772, %777 : vector<2x128xf32>
    %779 = arith.addf %774, %778 : vector<2x128xf32>
    %780 = math.tanh %779 : vector<2x128xf32>
    %781 = arith.mulf %773, %733 : vector<2x128xf32>
    %cst_153 = arith.constant 1.000000e+00 : f32
    %782 = vector.broadcast %cst_153 : f32 to vector<2x128xf32>
    %783 = arith.subf %782, %773 : vector<2x128xf32>
    %784 = arith.mulf %783, %780 : vector<2x128xf32>
    %785 = arith.addf %781, %784 : vector<2x128xf32>
    %786 = vector.extract_strided_slice %785 {offsets = [0, 0], sizes = [2, 32], strides = [1, 1]} : vector<2x128xf32> to vector<2x32xf32>
    %cst_154 = arith.constant dense<0.000000e+00> : vector<2x384xf32>
    %787 = tpu.matmul %786, %489, %cst_154 {dimension_numbers = #tpu.dot_dimension_numbers<[1], [0], [0], [1], [0, 0, 1, 1], [], []>} : vector<2x32xf32>, vector<32x384xf32>, vector<2x384xf32> -> vector<2x384xf32>
    %788 = vector.broadcast %494 : vector<1x384xf32> to vector<2x384xf32>
    %789 = arith.addf %787, %788 : vector<2x384xf32>
    %790 = vector.extract_strided_slice %760 {offsets = [0, 0], sizes = [2, 32], strides = [1, 1]} : vector<2x128xf32> to vector<2x32xf32>
    %cst_155 = arith.constant dense<0.000000e+00> : vector<2x384xf32>
    %791 = tpu.matmul %790, %491, %cst_155 {dimension_numbers = #tpu.dot_dimension_numbers<[1], [0], [0], [1], [0, 0, 1, 1], [], []>} : vector<2x32xf32>, vector<32x384xf32>, vector<2x384xf32> -> vector<2x384xf32>
    %792 = arith.addf %789, %791 : vector<2x384xf32>
    %793 = vector.extract_strided_slice %792 {offsets = [0, 0], sizes = [2, 256], strides = [1, 1]} : vector<2x384xf32> to vector<2x256xf32>
    %794 = arith.negf %793 : vector<2x256xf32>
    %795 = math.exp %794 : vector<2x256xf32>
    %cst_156 = arith.constant 1.000000e+00 : f32
    %796 = vector.broadcast %cst_156 : f32 to vector<2x256xf32>
    %797 = arith.addf %796, %795 : vector<2x256xf32>
    %798 = arith.divf %796, %797 : vector<2x256xf32>
    %799 = vector.extract_strided_slice %798 {offsets = [0, 0], sizes = [2, 128], strides = [1, 1]} : vector<2x256xf32> to vector<2x128xf32>
    %800 = vector.extract_strided_slice %798 {offsets = [0, 128], sizes = [2, 128], strides = [1, 1]} : vector<2x256xf32> to vector<2x128xf32>
    %801 = vector.extract_strided_slice %789 {offsets = [0, 256], sizes = [2, 128], strides = [1, 1]} : vector<2x384xf32> to vector<2x128xf32>
    %802 = vector.extract_strided_slice %791 {offsets = [0, 256], sizes = [2, 128], strides = [1, 1]} : vector<2x384xf32> to vector<2x128xf32>
    %803 = vector.broadcast %495 : vector<1x128xf32> to vector<2x128xf32>
    %804 = arith.addf %802, %803 : vector<2x128xf32>
    %805 = arith.mulf %799, %804 : vector<2x128xf32>
    %806 = arith.addf %801, %805 : vector<2x128xf32>
    %807 = math.tanh %806 : vector<2x128xf32>
    %808 = arith.mulf %800, %760 : vector<2x128xf32>
    %cst_157 = arith.constant 1.000000e+00 : f32
    %809 = vector.broadcast %cst_157 : f32 to vector<2x128xf32>
    %810 = arith.subf %809, %800 : vector<2x128xf32>
    %811 = arith.mulf %810, %807 : vector<2x128xf32>
    %812 = arith.addf %808, %811 : vector<2x128xf32>
    %813 = vector.extract_strided_slice %500 {offsets = [6, 0, 0], sizes = [1, 2, 384], strides = [1, 1, 1]} : vector<8x2x384xf32> to vector<1x2x384xf32>
    %814 = vector.shape_cast %813 : vector<1x2x384xf32> to vector<2x384xf32>
    %815 = vector.extract_strided_slice %785 {offsets = [0, 0], sizes = [2, 32], strides = [1, 1]} : vector<2x128xf32> to vector<2x32xf32>
    %cst_158 = arith.constant dense<0.000000e+00> : vector<2x384xf32>
    %816 = tpu.matmul %815, %487, %cst_158 {dimension_numbers = #tpu.dot_dimension_numbers<[1], [0], [0], [1], [0, 0, 1, 1], [], []>} : vector<2x32xf32>, vector<32x384xf32>, vector<2x384xf32> -> vector<2x384xf32>
    %817 = arith.addf %814, %816 : vector<2x384xf32>
    %818 = vector.extract_strided_slice %817 {offsets = [0, 0], sizes = [2, 256], strides = [1, 1]} : vector<2x384xf32> to vector<2x256xf32>
    %819 = arith.negf %818 : vector<2x256xf32>
    %820 = math.exp %819 : vector<2x256xf32>
    %cst_159 = arith.constant 1.000000e+00 : f32
    %821 = vector.broadcast %cst_159 : f32 to vector<2x256xf32>
    %822 = arith.addf %821, %820 : vector<2x256xf32>
    %823 = arith.divf %821, %822 : vector<2x256xf32>
    %824 = vector.extract_strided_slice %823 {offsets = [0, 0], sizes = [2, 128], strides = [1, 1]} : vector<2x256xf32> to vector<2x128xf32>
    %825 = vector.extract_strided_slice %823 {offsets = [0, 128], sizes = [2, 128], strides = [1, 1]} : vector<2x256xf32> to vector<2x128xf32>
    %826 = vector.extract_strided_slice %814 {offsets = [0, 256], sizes = [2, 128], strides = [1, 1]} : vector<2x384xf32> to vector<2x128xf32>
    %827 = vector.extract_strided_slice %816 {offsets = [0, 256], sizes = [2, 128], strides = [1, 1]} : vector<2x384xf32> to vector<2x128xf32>
    %828 = vector.broadcast %493 : vector<1x128xf32> to vector<2x128xf32>
    %829 = arith.addf %827, %828 : vector<2x128xf32>
    %830 = arith.mulf %824, %829 : vector<2x128xf32>
    %831 = arith.addf %826, %830 : vector<2x128xf32>
    %832 = math.tanh %831 : vector<2x128xf32>
    %833 = arith.mulf %825, %785 : vector<2x128xf32>
    %cst_160 = arith.constant 1.000000e+00 : f32
    %834 = vector.broadcast %cst_160 : f32 to vector<2x128xf32>
    %835 = arith.subf %834, %825 : vector<2x128xf32>
    %836 = arith.mulf %835, %832 : vector<2x128xf32>
    %837 = arith.addf %833, %836 : vector<2x128xf32>
    %838 = vector.extract_strided_slice %837 {offsets = [0, 0], sizes = [2, 32], strides = [1, 1]} : vector<2x128xf32> to vector<2x32xf32>
    %cst_161 = arith.constant dense<0.000000e+00> : vector<2x384xf32>
    %839 = tpu.matmul %838, %489, %cst_161 {dimension_numbers = #tpu.dot_dimension_numbers<[1], [0], [0], [1], [0, 0, 1, 1], [], []>} : vector<2x32xf32>, vector<32x384xf32>, vector<2x384xf32> -> vector<2x384xf32>
    %840 = vector.broadcast %494 : vector<1x384xf32> to vector<2x384xf32>
    %841 = arith.addf %839, %840 : vector<2x384xf32>
    %842 = vector.extract_strided_slice %812 {offsets = [0, 0], sizes = [2, 32], strides = [1, 1]} : vector<2x128xf32> to vector<2x32xf32>
    %cst_162 = arith.constant dense<0.000000e+00> : vector<2x384xf32>
    %843 = tpu.matmul %842, %491, %cst_162 {dimension_numbers = #tpu.dot_dimension_numbers<[1], [0], [0], [1], [0, 0, 1, 1], [], []>} : vector<2x32xf32>, vector<32x384xf32>, vector<2x384xf32> -> vector<2x384xf32>
    %844 = arith.addf %841, %843 : vector<2x384xf32>
    %845 = vector.extract_strided_slice %844 {offsets = [0, 0], sizes = [2, 256], strides = [1, 1]} : vector<2x384xf32> to vector<2x256xf32>
    %846 = arith.negf %845 : vector<2x256xf32>
    %847 = math.exp %846 : vector<2x256xf32>
    %cst_163 = arith.constant 1.000000e+00 : f32
    %848 = vector.broadcast %cst_163 : f32 to vector<2x256xf32>
    %849 = arith.addf %848, %847 : vector<2x256xf32>
    %850 = arith.divf %848, %849 : vector<2x256xf32>
    %851 = vector.extract_strided_slice %850 {offsets = [0, 0], sizes = [2, 128], strides = [1, 1]} : vector<2x256xf32> to vector<2x128xf32>
    %852 = vector.extract_strided_slice %850 {offsets = [0, 128], sizes = [2, 128], strides = [1, 1]} : vector<2x256xf32> to vector<2x128xf32>
    %853 = vector.extract_strided_slice %841 {offsets = [0, 256], sizes = [2, 128], strides = [1, 1]} : vector<2x384xf32> to vector<2x128xf32>
    %854 = vector.extract_strided_slice %843 {offsets = [0, 256], sizes = [2, 128], strides = [1, 1]} : vector<2x384xf32> to vector<2x128xf32>
    %855 = vector.broadcast %495 : vector<1x128xf32> to vector<2x128xf32>
    %856 = arith.addf %854, %855 : vector<2x128xf32>
    %857 = arith.mulf %851, %856 : vector<2x128xf32>
    %858 = arith.addf %853, %857 : vector<2x128xf32>
    %859 = math.tanh %858 : vector<2x128xf32>
    %860 = arith.mulf %852, %812 : vector<2x128xf32>
    %cst_164 = arith.constant 1.000000e+00 : f32
    %861 = vector.broadcast %cst_164 : f32 to vector<2x128xf32>
    %862 = arith.subf %861, %852 : vector<2x128xf32>
    %863 = arith.mulf %862, %859 : vector<2x128xf32>
    %864 = arith.addf %860, %863 : vector<2x128xf32>
    %865 = vector.extract_strided_slice %500 {offsets = [7, 0, 0], sizes = [1, 2, 384], strides = [1, 1, 1]} : vector<8x2x384xf32> to vector<1x2x384xf32>
    %866 = vector.shape_cast %865 : vector<1x2x384xf32> to vector<2x384xf32>
    %867 = vector.extract_strided_slice %837 {offsets = [0, 0], sizes = [2, 32], strides = [1, 1]} : vector<2x128xf32> to vector<2x32xf32>
    %cst_165 = arith.constant dense<0.000000e+00> : vector<2x384xf32>
    %868 = tpu.matmul %867, %487, %cst_165 {dimension_numbers = #tpu.dot_dimension_numbers<[1], [0], [0], [1], [0, 0, 1, 1], [], []>} : vector<2x32xf32>, vector<32x384xf32>, vector<2x384xf32> -> vector<2x384xf32>
    %869 = arith.addf %866, %868 : vector<2x384xf32>
    %870 = vector.extract_strided_slice %869 {offsets = [0, 0], sizes = [2, 256], strides = [1, 1]} : vector<2x384xf32> to vector<2x256xf32>
    %871 = arith.negf %870 : vector<2x256xf32>
    %872 = math.exp %871 : vector<2x256xf32>
    %cst_166 = arith.constant 1.000000e+00 : f32
    %873 = vector.broadcast %cst_166 : f32 to vector<2x256xf32>
    %874 = arith.addf %873, %872 : vector<2x256xf32>
    %875 = arith.divf %873, %874 : vector<2x256xf32>
    %876 = vector.extract_strided_slice %875 {offsets = [0, 0], sizes = [2, 128], strides = [1, 1]} : vector<2x256xf32> to vector<2x128xf32>
    %877 = vector.extract_strided_slice %875 {offsets = [0, 128], sizes = [2, 128], strides = [1, 1]} : vector<2x256xf32> to vector<2x128xf32>
    %878 = vector.extract_strided_slice %866 {offsets = [0, 256], sizes = [2, 128], strides = [1, 1]} : vector<2x384xf32> to vector<2x128xf32>
    %879 = vector.extract_strided_slice %868 {offsets = [0, 256], sizes = [2, 128], strides = [1, 1]} : vector<2x384xf32> to vector<2x128xf32>
    %880 = vector.broadcast %493 : vector<1x128xf32> to vector<2x128xf32>
    %881 = arith.addf %879, %880 : vector<2x128xf32>
    %882 = arith.mulf %876, %881 : vector<2x128xf32>
    %883 = arith.addf %878, %882 : vector<2x128xf32>
    %884 = math.tanh %883 : vector<2x128xf32>
    %885 = arith.mulf %877, %837 : vector<2x128xf32>
    %cst_167 = arith.constant 1.000000e+00 : f32
    %886 = vector.broadcast %cst_167 : f32 to vector<2x128xf32>
    %887 = arith.subf %886, %877 : vector<2x128xf32>
    %888 = arith.mulf %887, %884 : vector<2x128xf32>
    %889 = arith.addf %885, %888 : vector<2x128xf32>
    %890 = vector.extract_strided_slice %889 {offsets = [0, 0], sizes = [2, 32], strides = [1, 1]} : vector<2x128xf32> to vector<2x32xf32>
    %cst_168 = arith.constant dense<0.000000e+00> : vector<2x384xf32>
    %891 = tpu.matmul %890, %489, %cst_168 {dimension_numbers = #tpu.dot_dimension_numbers<[1], [0], [0], [1], [0, 0, 1, 1], [], []>} : vector<2x32xf32>, vector<32x384xf32>, vector<2x384xf32> -> vector<2x384xf32>
    %892 = vector.broadcast %494 : vector<1x384xf32> to vector<2x384xf32>
    %893 = arith.addf %891, %892 : vector<2x384xf32>
    %894 = vector.extract_strided_slice %864 {offsets = [0, 0], sizes = [2, 32], strides = [1, 1]} : vector<2x128xf32> to vector<2x32xf32>
    %cst_169 = arith.constant dense<0.000000e+00> : vector<2x384xf32>
    %895 = tpu.matmul %894, %491, %cst_169 {dimension_numbers = #tpu.dot_dimension_numbers<[1], [0], [0], [1], [0, 0, 1, 1], [], []>} : vector<2x32xf32>, vector<32x384xf32>, vector<2x384xf32> -> vector<2x384xf32>
    %896 = arith.addf %893, %895 : vector<2x384xf32>
    %897 = vector.extract_strided_slice %896 {offsets = [0, 0], sizes = [2, 256], strides = [1, 1]} : vector<2x384xf32> to vector<2x256xf32>
    %898 = arith.negf %897 : vector<2x256xf32>
    %899 = math.exp %898 : vector<2x256xf32>
    %cst_170 = arith.constant 1.000000e+00 : f32
    %900 = vector.broadcast %cst_170 : f32 to vector<2x256xf32>
    %901 = arith.addf %900, %899 : vector<2x256xf32>
    %902 = arith.divf %900, %901 : vector<2x256xf32>
    %903 = vector.extract_strided_slice %902 {offsets = [0, 0], sizes = [2, 128], strides = [1, 1]} : vector<2x256xf32> to vector<2x128xf32>
    %904 = vector.extract_strided_slice %902 {offsets = [0, 128], sizes = [2, 128], strides = [1, 1]} : vector<2x256xf32> to vector<2x128xf32>
    %905 = vector.extract_strided_slice %893 {offsets = [0, 256], sizes = [2, 128], strides = [1, 1]} : vector<2x384xf32> to vector<2x128xf32>
    %906 = vector.extract_strided_slice %895 {offsets = [0, 256], sizes = [2, 128], strides = [1, 1]} : vector<2x384xf32> to vector<2x128xf32>
    %907 = vector.broadcast %495 : vector<1x128xf32> to vector<2x128xf32>
    %908 = arith.addf %906, %907 : vector<2x128xf32>
    %909 = arith.mulf %903, %908 : vector<2x128xf32>
    %910 = arith.addf %905, %909 : vector<2x128xf32>
    %911 = math.tanh %910 : vector<2x128xf32>
    %912 = arith.mulf %904, %864 : vector<2x128xf32>
    %cst_171 = arith.constant 1.000000e+00 : f32
    %913 = vector.broadcast %cst_171 : f32 to vector<2x128xf32>
    %914 = arith.subf %913, %904 : vector<2x128xf32>
    %915 = arith.mulf %914, %911 : vector<2x128xf32>
    %916 = arith.addf %912, %915 : vector<2x128xf32>
    %917 = vector.shape_cast %552 : vector<2x128xf32> to vector<1x2x128xf32>
    %918 = vector.shape_cast %604 : vector<2x128xf32> to vector<1x2x128xf32>
    %919 = vector.shape_cast %656 : vector<2x128xf32> to vector<1x2x128xf32>
    %920 = vector.shape_cast %708 : vector<2x128xf32> to vector<1x2x128xf32>
    %921 = vector.shape_cast %760 : vector<2x128xf32> to vector<1x2x128xf32>
    %922 = vector.shape_cast %812 : vector<2x128xf32> to vector<1x2x128xf32>
    %923 = vector.shape_cast %864 : vector<2x128xf32> to vector<1x2x128xf32>
    %924 = vector.shape_cast %916 : vector<2x128xf32> to vector<1x2x128xf32>
    %925 = tpu.concatenate %917, %918, %919, %920, %921, %922, %923, %924 in 0 : vector<1x2x128xf32>, vector<1x2x128xf32>, vector<1x2x128xf32>, vector<1x2x128xf32>, vector<1x2x128xf32>, vector<1x2x128xf32>, vector<1x2x128xf32>, vector<1x2x128xf32> -> vector<8x2x128xf32>
    %926 = vector.shape_cast %925 : vector<8x2x128xf32> to vector<16x128xf32>
    %927 = vector.extract_strided_slice %926 {offsets = [0, 0], sizes = [16, 32], strides = [1, 1]} : vector<16x128xf32> to vector<16x32xf32>
    %cst_172 = arith.constant dense<0.000000e+00> : vector<16x128xf32>
    %928 = tpu.matmul %927, %3, %cst_172 {dimension_numbers = #tpu.dot_dimension_numbers<[1], [0], [0], [1], [0, 0, 1, 1], [], []>} : vector<16x32xf32>, vector<32x128xf32>, vector<16x128xf32> -> vector<16x128xf32>
    %929 = vector.broadcast %0 : vector<1x128xf32> to vector<16x128xf32>
    %930 = arith.addf %928, %929 : vector<16x128xf32>
    %931 = vector.shape_cast %930 : vector<16x128xf32> to vector<8x2x128xf32>
    %c0_173 = arith.constant 0 : index
    %c0_174 = arith.constant 0 : index
    %c0_175 = arith.constant 0 : index
    %932 = vector.load %arg6[%c0_173, %c0_174, %c0_175] : memref<8x2x128xf32, #tpu.memory_space<vmem>>, vector<8x2x128xf32>
    tpu.vector_store %arg6[%c0_173, %c0_174, %c0_175], %931 {strides = array<i32>} : memref<8x2x128xf32, #tpu.memory_space<vmem>>, vector<8x2x128xf32>,
    return
  }
}

</mosaic_0001>

<llo_original>
// kernel: translation_rnn_forward.1
$region0: #{translation_rnn_forward.1}
  #allocation0 [shape = 'u32[]', space=smem, size = 0x4, offset = 0x4, fixed_abs, tag = 'smem constant byte address 0x4 - core index']
  #allocation1 [shape = 'u32[144,128]{1,0:T(1,128)}', space=vmem, size = 0x12000, scoped, tag = 'internal scratch']
  %s0 = inlined_call_operand.vmem [shape: f32[8,2,32], index: 0, kind: input, shape index: {}]
  %s1 = inlined_call_operand.vmem [shape: f32[8,2,32], index: 1, kind: input, shape index: {}]
  %s2 = inlined_call_operand.vmem [shape: f32[4,32,384], index: 2, kind: input, shape index: {}]
  %s3 = inlined_call_operand.hbm [shape: f32[4,32,384], index: 3, kind: input, shape index: {}]
  %s4 = inlined_call_operand.vmem [shape: f32[4,512], index: 4, kind: input, shape index: {}]
  %s5 = inlined_call_operand.vmem [shape: f32[40,128], index: 5, kind: input, shape index: {}]
  %s6 = inlined_call_operand.vmem [shape: f32[8,2,128], index: 6, kind: output, shape index: {}]
  %s7 = sld [smem:[#allocation0]]
  $region38: #{translation_rnn_forward.1} parent=0
    _
  %s9 = ssub.s32 1, %s7
  %s10 = scalar_select 0, %s9, %s7
  $region1: #{translation_rnn_forward.1} parent=0
    #allocation2 [shape = 'u8[196608]{0}', space=vmem, size = 0x30000, scoped, tag = 'input window, operand 3, single buffered']
    #allocation3 [shape = 's32[1]{0}', space=sflag, size = 0x4, scoped, tag = 'scoped memory for translation_rnn_forward.1']
    %11 = vsyncpa [#allocation3], 0
    // Predicated region
    $region2: #{translation_rnn_forward.1} parent=1 // pred_check
      _
    $region3: #{translation_rnn_forward.1} parent=1 // pred_check_branch
      %13 = sbr.rel (0) target = $region5
    $region4: #{translation_rnn_forward.1} parent=1 // pred_region
      _
    $region5: #{translation_rnn_forward.1} parent=1 // pred_fallthru
      _
    // Predicated region
    $region6: #{translation_rnn_forward.1} parent=1 // pred_check
      _
    $region7: #{translation_rnn_forward.1} parent=1 // pred_check_branch
      %15 = sbr.rel (0) target = $region9
    $region8: #{translation_rnn_forward.1} parent=1 // pred_region
      _
    $region9: #{translation_rnn_forward.1} parent=1 // pred_fallthru
      _
    // Predicated region
    $region10: #{translation_rnn_forward.1} parent=1 // pred_check
      _
    $region11: #{translation_rnn_forward.1} parent=1 // pred_check_branch
      %17 = sbr.rel (0) target = $region13
    $region12: #{translation_rnn_forward.1} parent=1 // pred_region
      _
    $region13: #{translation_rnn_forward.1} parent=1 // pred_fallthru
      _
    // Predicated region
    $region14: #{translation_rnn_forward.1} parent=1 // pred_check
      _
    $region15: #{translation_rnn_forward.1} parent=1 // pred_check_branch
      %19 = sbr.rel (0) target = $region17
    $region16: #{translation_rnn_forward.1} parent=1 // pred_region
      %s21 = ssub.s32 6144, 6144
      %22 = vsyncadd [#allocation3], %s21
      %s23 = sshll.u32 [#allocation2], 4
      %s24 = int_to_ptr.vmem [resolvable:$true] %s23
      %29 = dma.hbm_to_vmem [thread:$0]  %s3, 6144, %s24, [#allocation3], 384, 384, 24
    $region17: #{translation_rnn_forward.1} parent=1 // pred_fallthru
      _
    // Predicated region
    $region18: #{translation_rnn_forward.1} parent=1 // pred_check
      _
    $region19: #{translation_rnn_forward.1} parent=1 // pred_check_branch
      %31 = sbr.rel (0) target = $region21
    $region20: #{translation_rnn_forward.1} parent=1 // pred_region
      _
    $region21: #{translation_rnn_forward.1} parent=1 // pred_fallthru
      _
    // Predicated region
    $region22: #{translation_rnn_forward.1} parent=1 // pred_check
      _
    $region23: #{translation_rnn_forward.1} parent=1 // pred_check_branch
      %33 = sbr.rel (0) target = $region25
    $region24: #{translation_rnn_forward.1} parent=1 // pred_region
      _
    $region25: #{translation_rnn_forward.1} parent=1 // pred_fallthru
      _
    // Predicated region
    $region26: #{translation_rnn_forward.1} parent=1 // pred_check
      _
    $region27: #{translation_rnn_forward.1} parent=1 // pred_check_branch
      %35 = sbr.rel (0) target = $region29
    $region28: #{translation_rnn_forward.1} parent=1 // pred_region
      %36 = dma.done [#allocation3], 6144
    $region29: #{translation_rnn_forward.1} parent=1 // pred_fallthru
      _
    %v37 = vld [vmem:[%s5] sm:$0x1]
    %v38 = vld [vmem:[%s5 + $0x1] sm:$0x1]
    %v39 = vld [vmem:[%s5 + $0x2] sm:$0x1]
    %v40 = vld [vmem:[%s5 + $0x8] sm:$0xff]
    %v41 = vld [vmem:[%s5 + $0x10] sm:$0xff]
    %v42 = vld [vmem:[%s5 + $0x18] sm:$0xff]
    %v43 = vld [vmem:[%s5 + $0x20] sm:$0xff]
    %v44 = vld [vmem:[%s0] sm:$0x3]
    %v45 = vld [vmem:[%s0 + $0x2] sm:$0x3]
    %v46 = vld [vmem:[%s0 + $0x4] sm:$0x3]
    %v47 = vld [vmem:[%s0 + $0x6] sm:$0x3]
    %v48 = vld [vmem:[%s0 + $0x8] sm:$0x3]
    %v49 = vld [vmem:[%s0 + $0xa] sm:$0x3]
    %v50 = vld [vmem:[%s0 + $0xc] sm:$0x3]
    %v51 = vld [vmem:[%s0 + $0xe] sm:$0x3]
    %v52 = vld [vmem:[%s2] sm:$0xff]
    %v53 = vld [vmem:[%s2 + $0x8] sm:$0xff]
    %v54 = vld [vmem:[%s2 + $0x10] sm:$0xff]
    %v55 = vld [vmem:[%s2 + $0x18] sm:$0xff]
    %v56 = vld [vmem:[%s2 + $0x20] sm:$0xff]
    %v57 = vld [vmem:[%s2 + $0x28] sm:$0xff]
    %v58 = vld [vmem:[%s2 + $0x30] sm:$0xff]
    %v59 = vld [vmem:[%s2 + $0x38] sm:$0xff]
    %v60 = vld [vmem:[%s2 + $0x40] sm:$0xff]
    %v61 = vld [vmem:[%s2 + $0x48] sm:$0xff]
    %v62 = vld [vmem:[%s2 + $0x50] sm:$0xff]
    %v63 = vld [vmem:[%s2 + $0x58] sm:$0xff]
    %v64 = vld [vmem:[#allocation2] sm:$0xff]
    %v65 = vld [vmem:[#allocation2 + $0x8] sm:$0xff]
    %v66 = vld [vmem:[#allocation2 + $0x10] sm:$0xff]
    %v67 = vld [vmem:[#allocation2 + $0x18] sm:$0xff]
    %v68 = vld [vmem:[#allocation2 + $0x20] sm:$0xff]
    %v69 = vld [vmem:[#allocation2 + $0x28] sm:$0xff]
    %v70 = vld [vmem:[#allocation2 + $0x30] sm:$0xff]
    %v71 = vld [vmem:[#allocation2 + $0x38] sm:$0xff]
    %v72 = vld [vmem:[#allocation2 + $0x40] sm:$0xff]
    %v73 = vld [vmem:[#allocation2 + $0x48] sm:$0xff]
    %v74 = vld [vmem:[#allocation2 + $0x50] sm:$0xff]
    %v75 = vld [vmem:[#allocation2 + $0x58] sm:$0xff]
    %s76 = scalar_lea.vmem %s2, 96
    %v77 = vld [vmem:[%s76] sm:$0xff]
    %v78 = vld [vmem:[%s76 + $0x8] sm:$0xff]
    %v79 = vld [vmem:[%s76 + $0x10] sm:$0xff]
    %v80 = vld [vmem:[%s76 + $0x18] sm:$0xff]
    %v81 = vld [vmem:[%s76 + $0x20] sm:$0xff]
    %v82 = vld [vmem:[%s76 + $0x28] sm:$0xff]
    %v83 = vld [vmem:[%s76 + $0x30] sm:$0xff]
    %v84 = vld [vmem:[%s76 + $0x38] sm:$0xff]
    %v85 = vld [vmem:[%s76 + $0x40] sm:$0xff]
    %v86 = vld [vmem:[%s76 + $0x48] sm:$0xff]
    %v87 = vld [vmem:[%s76 + $0x50] sm:$0xff]
    %v88 = vld [vmem:[%s76 + $0x58] sm:$0xff]
    %s89 = scalar_lea.vmem [#allocation2], 96
    %v90 = vld [vmem:[%s89] sm:$0xff]
    %v91 = vld [vmem:[%s89 + $0x8] sm:$0xff]
    %v92 = vld [vmem:[%s89 + $0x10] sm:$0xff]
    %v93 = vld [vmem:[%s89 + $0x18] sm:$0xff]
    %v94 = vld [vmem:[%s89 + $0x20] sm:$0xff]
    %v95 = vld [vmem:[%s89 + $0x28] sm:$0xff]
    %v96 = vld [vmem:[%s89 + $0x30] sm:$0xff]
    %v97 = vld [vmem:[%s89 + $0x38] sm:$0xff]
    %v98 = vld [vmem:[%s89 + $0x40] sm:$0xff]
    %v99 = vld [vmem:[%s89 + $0x48] sm:$0xff]
    %v100 = vld [vmem:[%s89 + $0x50] sm:$0xff]
    %v101 = vld [vmem:[%s89 + $0x58] sm:$0xff]
    %v102 = vld [vmem:[%s4] ss:$4 sm:$0x7]
    %v103 = vld [vmem:[%s4 + $0xc] sm:$0x1]
    %s104 = scalar_lea.vmem %s4, 1
    %v105 = vld [vmem:[%s104] ss:$4 sm:$0x7]
    %v106 = vld [vmem:[%s4 + $0xd] sm:$0x1]
    %v108 = vlaneseq
    %v109 = vshrl.u32 %v108, 7
    %v110 = vsub.s32 0, %v109
    %v111 = vrot.slane %v102, %v110
    %v112 = vlaneseq
    %v113 = vshrl.u32 %v112, 7
    %v114 = vsub.s32 1, %v113
    %v115 = vrot.slane %v102, %v114
    %v116 = vlaneseq
    %v117 = vshrl.u32 %v116, 7
    %v118 = vsub.s32 2, %v117
    %v119 = vrot.slane %v102, %v118
    %v131 = vcombine.low %v44, %v45
    %v132 = vcombine.low %v46, %v47
    %v134 = vunpack.c.l.s4 1983009808
    %v135 = vunpack.c.0.s8 %v134
    %v136 = vlaneseq
    %v137 = vshrl.u32 %v136, 7
    %v138 = vsub.s32 %v135, %v137
    %v139 = vrot.slane %v131, %v138
    %v141 = vunpack.c.l.s4 1983009808
    %v142 = vunpack.c.0.s8 %v141
    %v143 = vlaneseq
    %v144 = vshrl.u32 %v143, 7
    %v145 = vsub.s32 %v142, %v144
    %v146 = vrot.slane %v132, %v145
    %v147 = vcombine.low %v139, %v146
    %v148 = vcombine.low %v48, %v49
    %v149 = vcombine.low %v50, %v51
    %v151 = vunpack.c.l.s4 1983009808
    %v152 = vunpack.c.0.s8 %v151
    %v153 = vlaneseq
    %v154 = vshrl.u32 %v153, 7
    %v155 = vsub.s32 %v152, %v154
    %v156 = vrot.slane %v148, %v155
    %v158 = vunpack.c.l.s4 1983009808
    %v159 = vunpack.c.0.s8 %v158
    %v160 = vlaneseq
    %v161 = vshrl.u32 %v160, 7
    %v162 = vsub.s32 %v159, %v161
    %v163 = vrot.slane %v149, %v162
    %v164 = vcombine.low %v156, %v163
    %vm165 = vcmask 261120
    %v166 = vsel %vm165, %v147, 0
    %v168 = vsel %vm165, %v164, 0
    %170 = vmatprep.subr.mxu0 0.0
    %171 = vmatpush1.msra.mxu0 0.0
    %172 = vmatprep.subr.mxu0 0.0
    %173 = vmatpush1.msra.mxu0 0.0
    %174 = vmatprep.subr.mxu0 0.0
    %175 = vmatpush1.msra.mxu0 0.0
    %176 = vmatprep.subr.mxu0 0.0
    %177 = vmatpush1.msra.mxu0 0.0
    %178 = vmatprep.subr.mxu0 0.0
    %179 = vmatpush1.msra.mxu0 0.0
    %180 = vmatprep.subr.mxu0 0.0
    %181 = vmatpush1.msra.mxu0 0.0
    %182 = vmatprep.subr.mxu0 0.0
    %183 = vmatpush1.msra.mxu0 0.0
    %184 = vmatprep.subr.mxu0 0.0
    %185 = vmatpush1.msra.mxu0 0.0
    %186 = vmatprep.subr.mxu0 0.0
    %187 = vmatpush1.msra.mxu0 0.0
    %188 = vmatprep.subr.mxu0 0.0
    %189 = vmatpush1.msra.mxu0 0.0
    %190 = vmatprep.subr.mxu0 0.0
    %191 = vmatpush1.msra.mxu0 0.0
    %192 = vmatprep.subr.mxu0 0.0
    %193 = vmatpush1.msra.mxu0 0.0
    %194 = vmatprep.subr.mxu0 %v62
    %195 = vmatpush1.msra.mxu0 %v61
    %196 = vmatprep.subr.mxu0 %v59
    %197 = vmatpush1.msra.mxu0 %v58
    %198 = vmatprep.subr.mxu0 %v56
    %199 = vmatpush1.msra.mxu0 %v55
    %200 = vmatprep.subr.mxu0 %v53
    %201 = vmatpush1.msra.mxu0 %v52
    %202 = vmatprep.subr.mxu0 0.0
    %203 = vmatpush2.msra.mxu0 0.0
    %204 = vmatprep.subr.mxu0 0.0
    %205 = vmatpush2.msra.mxu0 0.0
    %206 = vmatprep.subr.mxu0 0.0
    %207 = vmatpush2.msra.mxu0 0.0
    %208 = vmatprep.subr.mxu0 0.0
    %209 = vmatpush2.msra.mxu0 0.0
    %210 = vmatprep.subr.mxu0 0.0
    %211 = vmatpush2.msra.mxu0 0.0
    %212 = vmatprep.subr.mxu0 0.0
    %213 = vmatpush2.msra.mxu0 0.0
    %214 = vmatprep.subr.mxu0 0.0
    %215 = vmatpush2.msra.mxu0 0.0
    %216 = vmatprep.subr.mxu0 0.0
    %217 = vmatpush2.msra.mxu0 0.0
    %218 = vmatprep.subr.mxu0 0.0
    %219 = vmatpush2.msra.mxu0 0.0
    %220 = vmatprep.subr.mxu0 0.0
    %221 = vmatpush2.msra.mxu0 0.0
    %222 = vmatprep.subr.mxu0 0.0
    %223 = vmatpush2.msra.mxu0 0.0
    %224 = vmatprep.subr.mxu0 0.0
    %225 = vmatpush2.msra.mxu0 0.0
    %226 = vmatprep.subr.mxu0 0.0
    %227 = vmatpush2.msra.mxu0 0.0
    %228 = vmatprep.subr.mxu0 0.0
    %229 = vmatpush2.msra.mxu0 0.0
    %230 = vmatprep.subr.mxu0 0.0
    %231 = vmatpush2.msra.mxu0 0.0
    %232 = vmatprep.subr.mxu0 0.0
    %233 = vmatpush2.msra.mxu0 0.0
    %234 = vmatprep.mubr.f32.mxu0 0.0
    %235 = vmatmul.mubr.f32.gmra.mxu0 %v166
    %v236 = vpop.f32.mrf.mxu0
    %v237 = vadd.f32 %v111, %v236
    %v238 = vpop.f32.mrf.mxu0
    %v239 = vadd.f32 %v115, %v238
    %240 = vmatprep.mubr.f32.mxu0 0.0
    %241 = vmatmul.mubr.f32.gmra.mxu0 %v168
    %v242 = vpop.f32.mrf.mxu0
    %v243 = vadd.f32 %v111, %v242
    %v244 = vpop.f32.mrf.mxu0
    %v245 = vadd.f32 %v115, %v244
    %246 = vdwg.mxu0
    %247 = vmatprep.subr.mxu0 0.0
    %248 = vmatpush1.msra.mxu0 0.0
    %249 = vmatprep.subr.mxu0 0.0
    %250 = vmatpush1.msra.mxu0 0.0
    %251 = vmatprep.subr.mxu0 0.0
    %252 = vmatpush1.msra.mxu0 0.0
    %253 = vmatprep.subr.mxu0 0.0
    %254 = vmatpush1.msra.mxu0 0.0
    %255 = vmatprep.subr.mxu0 0.0
    %256 = vmatpush1.msra.mxu0 0.0
    %257 = vmatprep.subr.mxu0 0.0
    %258 = vmatpush1.msra.mxu0 0.0
    %259 = vmatprep.subr.mxu0 0.0
    %260 = vmatpush1.msra.mxu0 0.0
    %261 = vmatprep.subr.mxu0 0.0
    %262 = vmatpush1.msra.mxu0 0.0
    %263 = vmatprep.subr.mxu0 0.0
    %264 = vmatpush1.msra.mxu0 0.0
    %265 = vmatprep.subr.mxu0 0.0
    %266 = vmatpush1.msra.mxu0 0.0
    %267 = vmatprep.subr.mxu0 0.0
    %268 = vmatpush1.msra.mxu0 0.0
    %269 = vmatprep.subr.mxu0 0.0
    %270 = vmatpush1.msra.mxu0 0.0
    %271 = vmatprep.subr.mxu0 0.0
    %272 = vmatpush1.msra.mxu0 %v63
    %273 = vmatprep.subr.mxu0 0.0
    %274 = vmatpush1.msra.mxu0 %v60
    %275 = vmatprep.subr.mxu0 0.0
    %276 = vmatpush1.msra.mxu0 %v57
    %277 = vmatprep.subr.mxu0 0.0
    %278 = vmatpush1.msra.mxu0 %v54
    %279 = vmatprep.subr.mxu0 0.0
    %280 = vmatpush2.msra.mxu0 0.0
    %281 = vmatprep.subr.mxu0 0.0
    %282 = vmatpush2.msra.mxu0 0.0
    %283 = vmatprep.subr.mxu0 0.0
    %284 = vmatpush2.msra.mxu0 0.0
    %285 = vmatprep.subr.mxu0 0.0
    %286 = vmatpush2.msra.mxu0 0.0
    %287 = vmatprep.subr.mxu0 0.0
    %288 = vmatpush2.msra.mxu0 0.0
    %289 = vmatprep.subr.mxu0 0.0
    %290 = vmatpush2.msra.mxu0 0.0
    %291 = vmatprep.subr.mxu0 0.0
    %292 = vmatpush2.msra.mxu0 0.0
    %293 = vmatprep.subr.mxu0 0.0
    %294 = vmatpush2.msra.mxu0 0.0
    %295 = vmatprep.subr.mxu0 0.0
    %296 = vmatpush2.msra.mxu0 0.0
    %297 = vmatprep.subr.mxu0 0.0
    %298 = vmatpush2.msra.mxu0 0.0
    %299 = vmatprep.subr.mxu0 0.0
    %300 = vmatpush2.msra.mxu0 0.0
    %301 = vmatprep.subr.mxu0 0.0
    %302 = vmatpush2.msra.mxu0 0.0
    %303 = vmatprep.subr.mxu0 0.0
    %304 = vmatpush2.msra.mxu0 0.0
    %305 = vmatprep.subr.mxu0 0.0
    %306 = vmatpush2.msra.mxu0 0.0
    %307 = vmatprep.subr.mxu0 0.0
    %308 = vmatpush2.msra.mxu0 0.0
    %309 = vmatprep.subr.mxu0 0.0
    %310 = vmatpush2.msra.mxu0 0.0
    %311 = vmatprep.mubr.f32.mxu0 0.0
    %312 = vmatmul.mubr.f32.gmra.mxu0 %v166
    %v313 = vpop.f32.mrf.mxu0
    %v314 = vadd.f32 %v119, %v313
    %v315 = vpop.f32.mrf.mxu0
    %316 = vmatprep.mubr.f32.mxu0 0.0
    %317 = vmatmul.mubr.f32.gmra.mxu0 %v168
    %v318 = vpop.f32.mrf.mxu0
    %v319 = vadd.f32 %v119, %v318
    %v320 = vpop.f32.mrf.mxu0
    %321 = vdwg.mxu0
    %v328 = vcombine.low %v237, %v239
    %v329 = vcombine.high %v237, %v239
    %v330 = vcombine.high %v314, %v314
    %v332 = vunpack.c.l.s4 1983009808
    %v333 = vunpack.c.0.s8 %v332
    %v334 = vlaneseq
    %v335 = vshrl.u32 %v334, 7
    %v336 = vsub.s32 %v333, %v335
    %v337 = vrot.slane %v328, %v336
    %v339 = vunpack.c.l.s4 1983009808
    %v340 = vunpack.c.0.s8 %v339
    %v341 = vlaneseq
    %v342 = vshrl.u32 %v341, 7
    %v343 = vsub.s32 %v340, %v342
    %v344 = vrot.slane %v329, %v343
    %v346 = vunpack.c.l.s4 1983009808
    %v347 = vunpack.c.0.s8 %v346
    %v348 = vlaneseq
    %v349 = vshrl.u32 %v348, 7
    %v350 = vsub.s32 %v347, %v349
    %v351 = vrot.slane %v314, %v350
    %v353 = vunpack.c.l.s4 1983009808
    %v354 = vunpack.c.0.s8 %v353
    %v355 = vlaneseq
    %v356 = vshrl.u32 %v355, 7
    %v357 = vsub.s32 %v354, %v356
    %v358 = vrot.slane %v330, %v357
    %v359 = vcombine.low %v337, %v351
    %v360 = vcombine.high %v337, %v351
    %v361 = vcombine.low %v344, %v358
    %v362 = vcombine.high %v344, %v358
    %v363 = vcombine.low %v243, %v245
    %v364 = vcombine.high %v243, %v245
    %v365 = vcombine.high %v319, %v319
    %v367 = vunpack.c.l.s4 1983009808
    %v368 = vunpack.c.0.s8 %v367
    %v369 = vlaneseq
    %v370 = vshrl.u32 %v369, 7
    %v371 = vsub.s32 %v368, %v370
    %v372 = vrot.slane %v363, %v371
    %v374 = vunpack.c.l.s4 1983009808
    %v375 = vunpack.c.0.s8 %v374
    %v376 = vlaneseq
    %v377 = vshrl.u32 %v376, 7
    %v378 = vsub.s32 %v375, %v377
    %v379 = vrot.slane %v364, %v378
    %v381 = vunpack.c.l.s4 1983009808
    %v382 = vunpack.c.0.s8 %v381
    %v383 = vlaneseq
    %v384 = vshrl.u32 %v383, 7
    %v385 = vsub.s32 %v382, %v384
    %v386 = vrot.slane %v319, %v385
    %v388 = vunpack.c.l.s4 1983009808
    %v389 = vunpack.c.0.s8 %v388
    %v390 = vlaneseq
    %v391 = vshrl.u32 %v390, 7
    %v392 = vsub.s32 %v389, %v391
    %v393 = vrot.slane %v365, %v392
    %v394 = vcombine.low %v372, %v386
    %v395 = vcombine.high %v372, %v386
    %v396 = vcombine.low %v379, %v393
    %v397 = vcombine.high %v379, %v393
    %v407 = vsel %vm165, 0.0, 0
    %409 = vmatprep.subr.mxu0 0.0
    %410 = vmatpush1.msra.mxu0 0.0
    %411 = vmatprep.subr.mxu0 0.0
    %412 = vmatpush1.msra.mxu0 0.0
    %413 = vmatprep.subr.mxu0 0.0
    %414 = vmatpush1.msra.mxu0 0.0
    %415 = vmatprep.subr.mxu0 0.0
    %416 = vmatpush1.msra.mxu0 0.0
    %417 = vmatprep.subr.mxu0 0.0
    %418 = vmatpush1.msra.mxu0 0.0
    %419 = vmatprep.subr.mxu0 0.0
    %420 = vmatpush1.msra.mxu0 0.0
    %421 = vmatprep.subr.mxu0 0.0
    %422 = vmatpush1.msra.mxu0 0.0
    %423 = vmatprep.subr.mxu0 0.0
    %424 = vmatpush1.msra.mxu0 0.0
    %425 = vmatprep.subr.mxu0 0.0
    %426 = vmatpush1.msra.mxu0 0.0
    %427 = vmatprep.subr.mxu0 0.0
    %428 = vmatpush1.msra.mxu0 0.0
    %429 = vmatprep.subr.mxu0 0.0
    %430 = vmatpush1.msra.mxu0 0.0
    %431 = vmatprep.subr.mxu0 0.0
    %432 = vmatpush1.msra.mxu0 0.0
    %433 = vmatprep.subr.mxu0 %v74
    %434 = vmatpush1.msra.mxu0 %v73
    %435 = vmatprep.subr.mxu0 %v71
    %436 = vmatpush1.msra.mxu0 %v70
    %437 = vmatprep.subr.mxu0 %v68
    %438 = vmatpush1.msra.mxu0 %v67
    %439 = vmatprep.subr.mxu0 %v65
    %440 = vmatpush1.msra.mxu0 %v64
    %441 = vmatprep.subr.mxu0 0.0
    %442 = vmatpush2.msra.mxu0 0.0
    %443 = vmatprep.subr.mxu0 0.0
    %444 = vmatpush2.msra.mxu0 0.0
    %445 = vmatprep.subr.mxu0 0.0
    %446 = vmatpush2.msra.mxu0 0.0
    %447 = vmatprep.subr.mxu0 0.0
    %448 = vmatpush2.msra.mxu0 0.0
    %449 = vmatprep.subr.mxu0 0.0
    %450 = vmatpush2.msra.mxu0 0.0
    %451 = vmatprep.subr.mxu0 0.0
    %452 = vmatpush2.msra.mxu0 0.0
    %453 = vmatprep.subr.mxu0 0.0
    %454 = vmatpush2.msra.mxu0 0.0
    %455 = vmatprep.subr.mxu0 0.0
    %456 = vmatpush2.msra.mxu0 0.0
    %457 = vmatprep.subr.mxu0 0.0
    %458 = vmatpush2.msra.mxu0 0.0
    %459 = vmatprep.subr.mxu0 0.0
    %460 = vmatpush2.msra.mxu0 0.0
    %461 = vmatprep.subr.mxu0 0.0
    %462 = vmatpush2.msra.mxu0 0.0
    %463 = vmatprep.subr.mxu0 0.0
    %464 = vmatpush2.msra.mxu0 0.0
    %465 = vmatprep.subr.mxu0 0.0
    %466 = vmatpush2.msra.mxu0 0.0
    %467 = vmatprep.subr.mxu0 0.0
    %468 = vmatpush2.msra.mxu0 0.0
    %469 = vmatprep.subr.mxu0 0.0
    %470 = vmatpush2.msra.mxu0 0.0
    %471 = vmatprep.subr.mxu0 0.0
    %472 = vmatpush2.msra.mxu0 0.0
    %473 = vmatprep.mubr.f32.mxu0 0.0
    %474 = vmatmul.mubr.f32.gmra.mxu0 %v407
    %v475 = vpop.f32.mrf.mxu0
    %v476 = vadd.f32 0.0, %v475
    %v477 = vpop.f32.mrf.mxu0
    %v478 = vadd.f32 0.0, %v477
    %479 = vdwg.mxu0
    %480 = vmatprep.subr.mxu0 0.0
    %481 = vmatpush1.msra.mxu0 0.0
    %482 = vmatprep.subr.mxu0 0.0
    %483 = vmatpush1.msra.mxu0 0.0
    %484 = vmatprep.subr.mxu0 0.0
    %485 = vmatpush1.msra.mxu0 0.0
    %486 = vmatprep.subr.mxu0 0.0
    %487 = vmatpush1.msra.mxu0 0.0
    %488 = vmatprep.subr.mxu0 0.0
    %489 = vmatpush1.msra.mxu0 0.0
    %490 = vmatprep.subr.mxu0 0.0
    %491 = vmatpush1.msra.mxu0 0.0
    %492 = vmatprep.subr.mxu0 0.0
    %493 = vmatpush1.msra.mxu0 0.0
    %494 = vmatprep.subr.mxu0 0.0
    %495 = vmatpush1.msra.mxu0 0.0
    %496 = vmatprep.subr.mxu0 0.0
    %497 = vmatpush1.msra.mxu0 0.0
    %498 = vmatprep.subr.mxu0 0.0
    %499 = vmatpush1.msra.mxu0 0.0
    %500 = vmatprep.subr.mxu0 0.0
    %501 = vmatpush1.msra.mxu0 0.0
    %502 = vmatprep.subr.mxu0 0.0
    %503 = vmatpush1.msra.mxu0 0.0
    %504 = vmatprep.subr.mxu0 0.0
    %505 = vmatpush1.msra.mxu0 %v75
    %506 = vmatprep.subr.mxu0 0.0
    %507 = vmatpush1.msra.mxu0 %v72
    %508 = vmatprep.subr.mxu0 0.0
    %509 = vmatpush1.msra.mxu0 %v69
    %510 = vmatprep.subr.mxu0 0.0
    %511 = vmatpush1.msra.mxu0 %v66
    %512 = vmatprep.subr.mxu0 0.0
    %513 = vmatpush2.msra.mxu0 0.0
    %514 = vmatprep.subr.mxu0 0.0
    %515 = vmatpush2.msra.mxu0 0.0
    %516 = vmatprep.subr.mxu0 0.0
    %517 = vmatpush2.msra.mxu0 0.0
    %518 = vmatprep.subr.mxu0 0.0
    %519 = vmatpush2.msra.mxu0 0.0
    %520 = vmatprep.subr.mxu0 0.0
    %521 = vmatpush2.msra.mxu0 0.0
    %522 = vmatprep.subr.mxu0 0.0
    %523 = vmatpush2.msra.mxu0 0.0
    %524 = vmatprep.subr.mxu0 0.0
    %525 = vmatpush2.msra.mxu0 0.0
    %526 = vmatprep.subr.mxu0 0.0
    %527 = vmatpush2.msra.mxu0 0.0
    %528 = vmatprep.subr.mxu0 0.0
    %529 = vmatpush2.msra.mxu0 0.0
    %530 = vmatprep.subr.mxu0 0.0
    %531 = vmatpush2.msra.mxu0 0.0
    %532 = vmatprep.subr.mxu0 0.0
    %533 = vmatpush2.msra.mxu0 0.0
    %534 = vmatprep.subr.mxu0 0.0
    %535 = vmatpush2.msra.mxu0 0.0
    %536 = vmatprep.subr.mxu0 0.0
    %537 = vmatpush2.msra.mxu0 0.0
    %538 = vmatprep.subr.mxu0 0.0
    %539 = vmatpush2.msra.mxu0 0.0
    %540 = vmatprep.subr.mxu0 0.0
    %541 = vmatpush2.msra.mxu0 0.0
    %542 = vmatprep.subr.mxu0 0.0
    %543 = vmatpush2.msra.mxu0 0.0
    %544 = vmatprep.mubr.f32.mxu0 0.0
    %545 = vmatmul.mubr.f32.gmra.mxu0 %v407
    %v546 = vpop.f32.mrf.mxu0
    %v547 = vadd.f32 0.0, %v546
    %v548 = vpop.f32.mrf.mxu0
    %549 = vdwg.mxu0
    %v553 = vcombine.low %v476, %v478
    %v555 = vunpack.c.l.s4 1983009808
    %v556 = vunpack.c.0.s8 %v555
    %v557 = vlaneseq
    %v558 = vshrl.u32 %v557, 7
    %v559 = vsub.s32 %v556, %v558
    %v560 = vrot.slane %v553, %v559
    %v562 = vunpack.c.l.s4 1983009808
    %v563 = vunpack.c.0.s8 %v562
    %v564 = vlaneseq
    %v565 = vshrl.u32 %v564, 7
    %v566 = vsub.s32 %v563, %v565
    %v567 = vrot.slane %v547, %v566
    %v568 = vcombine.low %v560, %v567
    %v570 = vadd.f32 %v359, %v568
    %v571 = vxor.u32 %v570, 2147483648
    %v572 = vmul.f32 %v571, 1.442695
    %v573 = vpow.pop %v572
    %v574 = vadd.f32 %v573, 1.0
    %v575 = vrcp.pop %v574
    %v576 = vmul.f32 1.0, %v575
    %v577 = vlaneseq
    %v578 = vshrl.u32 %v577, 7
    %v579 = vsub.s32 0, %v578
    %v580 = vrot.slane %v103, %v579
    %v581 = vadd.f32 %v547, %v580
    %v582 = vmul.f32 %v576, %v581
    %v583 = vrot.slane %v359, 4
    %v585 = vadd.f32 %v583, %v582
    %v586 = vtanh.pop %v585
    %v588 = vrot.slane %v576, 2
    %v590 = vmul.f32 %v588, 0.0
    %v591 = vsub.f32 1.0, %v588
    %v592 = vmul.f32 %v591, %v586
    %v593 = vadd.f32 %v590, %v592
    %v595 = vlaneseq
    %v596 = vshrl.u32 %v595, 7
    %v597 = vsub.s32 0, %v596
    %v598 = vrot.slane %v105, %v597
    %v599 = vlaneseq
    %v600 = vshrl.u32 %v599, 7
    %v601 = vsub.s32 1, %v600
    %v602 = vrot.slane %v105, %v601
    %v603 = vlaneseq
    %v604 = vshrl.u32 %v603, 7
    %v605 = vsub.s32 2, %v604
    %v606 = vrot.slane %v105, %v605
    %v611 = vsel %vm165, %v593, 0
    %613 = vmatprep.subr.mxu0 0.0
    %614 = vmatpush1.msra.mxu0 0.0
    %615 = vmatprep.subr.mxu0 0.0
    %616 = vmatpush1.msra.mxu0 0.0
    %617 = vmatprep.subr.mxu0 0.0
    %618 = vmatpush1.msra.mxu0 0.0
    %619 = vmatprep.subr.mxu0 0.0
    %620 = vmatpush1.msra.mxu0 0.0
    %621 = vmatprep.subr.mxu0 0.0
    %622 = vmatpush1.msra.mxu0 0.0
    %623 = vmatprep.subr.mxu0 0.0
    %624 = vmatpush1.msra.mxu0 0.0
    %625 = vmatprep.subr.mxu0 0.0
    %626 = vmatpush1.msra.mxu0 0.0
    %627 = vmatprep.subr.mxu0 0.0
    %628 = vmatpush1.msra.mxu0 0.0
    %629 = vmatprep.subr.mxu0 0.0
    %630 = vmatpush1.msra.mxu0 0.0
    %631 = vmatprep.subr.mxu0 0.0
    %632 = vmatpush1.msra.mxu0 0.0
    %633 = vmatprep.subr.mxu0 0.0
    %634 = vmatpush1.msra.mxu0 0.0
    %635 = vmatprep.subr.mxu0 0.0
    %636 = vmatpush1.msra.mxu0 0.0
    %637 = vmatprep.subr.mxu0 %v87
    %638 = vmatpush1.msra.mxu0 %v86
    %639 = vmatprep.subr.mxu0 %v84
    %640 = vmatpush1.msra.mxu0 %v83
    %641 = vmatprep.subr.mxu0 %v81
    %642 = vmatpush1.msra.mxu0 %v80
    %643 = vmatprep.subr.mxu0 %v78
    %644 = vmatpush1.msra.mxu0 %v77
    %645 = vmatprep.subr.mxu0 0.0
    %646 = vmatpush2.msra.mxu0 0.0
    %647 = vmatprep.subr.mxu0 0.0
    %648 = vmatpush2.msra.mxu0 0.0
    %649 = vmatprep.subr.mxu0 0.0
    %650 = vmatpush2.msra.mxu0 0.0
    %651 = vmatprep.subr.mxu0 0.0
    %652 = vmatpush2.msra.mxu0 0.0
    %653 = vmatprep.subr.mxu0 0.0
    %654 = vmatpush2.msra.mxu0 0.0
    %655 = vmatprep.subr.mxu0 0.0
    %656 = vmatpush2.msra.mxu0 0.0
    %657 = vmatprep.subr.mxu0 0.0
    %658 = vmatpush2.msra.mxu0 0.0
    %659 = vmatprep.subr.mxu0 0.0
    %660 = vmatpush2.msra.mxu0 0.0
    %661 = vmatprep.subr.mxu0 0.0
    %662 = vmatpush2.msra.mxu0 0.0
    %663 = vmatprep.subr.mxu0 0.0
    %664 = vmatpush2.msra.mxu0 0.0
    %665 = vmatprep.subr.mxu0 0.0
    %666 = vmatpush2.msra.mxu0 0.0
    %667 = vmatprep.subr.mxu0 0.0
    %668 = vmatpush2.msra.mxu0 0.0
    %669 = vmatprep.subr.mxu0 0.0
    %670 = vmatpush2.msra.mxu0 0.0
    %671 = vmatprep.subr.mxu0 0.0
    %672 = vmatpush2.msra.mxu0 0.0
    %673 = vmatprep.subr.mxu0 0.0
    %674 = vmatpush2.msra.mxu0 0.0
    %675 = vmatprep.subr.mxu0 0.0
    %676 = vmatpush2.msra.mxu0 0.0
    %677 = vmatprep.mubr.f32.mxu0 0.0
    %678 = vmatmul.mubr.f32.gmra.mxu0 %v611
    %v679 = vpop.f32.mrf.mxu0
    %v680 = vadd.f32 %v598, %v679
    %v681 = vpop.f32.mrf.mxu0
    %v682 = vadd.f32 %v602, %v681
    %683 = vdwg.mxu0
    %684 = vmatprep.subr.mxu0 0.0
    %685 = vmatpush1.msra.mxu0 0.0
    %686 = vmatprep.subr.mxu0 0.0
    %687 = vmatpush1.msra.mxu0 0.0
    %688 = vmatprep.subr.mxu0 0.0
    %689 = vmatpush1.msra.mxu0 0.0
    %690 = vmatprep.subr.mxu0 0.0
    %691 = vmatpush1.msra.mxu0 0.0
    %692 = vmatprep.subr.mxu0 0.0
    %693 = vmatpush1.msra.mxu0 0.0
    %694 = vmatprep.subr.mxu0 0.0
    %695 = vmatpush1.msra.mxu0 0.0
    %696 = vmatprep.subr.mxu0 0.0
    %697 = vmatpush1.msra.mxu0 0.0
    %698 = vmatprep.subr.mxu0 0.0
    %699 = vmatpush1.msra.mxu0 0.0
    %700 = vmatprep.subr.mxu0 0.0
    %701 = vmatpush1.msra.mxu0 0.0
    %702 = vmatprep.subr.mxu0 0.0
    %703 = vmatpush1.msra.mxu0 0.0
    %704 = vmatprep.subr.mxu0 0.0
    %705 = vmatpush1.msra.mxu0 0.0
    %706 = vmatprep.subr.mxu0 0.0
    %707 = vmatpush1.msra.mxu0 0.0
    %708 = vmatprep.subr.mxu0 0.0
    %709 = vmatpush1.msra.mxu0 %v88
    %710 = vmatprep.subr.mxu0 0.0
    %711 = vmatpush1.msra.mxu0 %v85
    %712 = vmatprep.subr.mxu0 0.0
    %713 = vmatpush1.msra.mxu0 %v82
    %714 = vmatprep.subr.mxu0 0.0
    %715 = vmatpush1.msra.mxu0 %v79
    %716 = vmatprep.subr.mxu0 0.0
    %717 = vmatpush2.msra.mxu0 0.0
    %718 = vmatprep.subr.mxu0 0.0
    %719 = vmatpush2.msra.mxu0 0.0
    %720 = vmatprep.subr.mxu0 0.0
    %721 = vmatpush2.msra.mxu0 0.0
    %722 = vmatprep.subr.mxu0 0.0
    %723 = vmatpush2.msra.mxu0 0.0
    %724 = vmatprep.subr.mxu0 0.0
    %725 = vmatpush2.msra.mxu0 0.0
    %726 = vmatprep.subr.mxu0 0.0
    %727 = vmatpush2.msra.mxu0 0.0
    %728 = vmatprep.subr.mxu0 0.0
    %729 = vmatpush2.msra.mxu0 0.0
    %730 = vmatprep.subr.mxu0 0.0
    %731 = vmatpush2.msra.mxu0 0.0
    %732 = vmatprep.subr.mxu0 0.0
    %733 = vmatpush2.msra.mxu0 0.0
    %734 = vmatprep.subr.mxu0 0.0
    %735 = vmatpush2.msra.mxu0 0.0
    %736 = vmatprep.subr.mxu0 0.0
    %737 = vmatpush2.msra.mxu0 0.0
    %738 = vmatprep.subr.mxu0 0.0
    %739 = vmatpush2.msra.mxu0 0.0
    %740 = vmatprep.subr.mxu0 0.0
    %741 = vmatpush2.msra.mxu0 0.0
    %742 = vmatprep.subr.mxu0 0.0
    %743 = vmatpush2.msra.mxu0 0.0
    %744 = vmatprep.subr.mxu0 0.0
    %745 = vmatpush2.msra.mxu0 0.0
    %746 = vmatprep.subr.mxu0 0.0
    %747 = vmatpush2.msra.mxu0 0.0
    %748 = vmatprep.mubr.f32.mxu0 0.0
    %749 = vmatmul.mubr.f32.gmra.mxu0 %v611
    %v750 = vpop.f32.mrf.mxu0
    %v751 = vadd.f32 %v606, %v750
    %v752 = vpop.f32.mrf.mxu0
    %753 = vdwg.mxu0
    %754 = vmatprep.subr.mxu0 0.0
    %755 = vmatpush1.msra.mxu0 0.0
    %756 = vmatprep.subr.mxu0 0.0
    %757 = vmatpush1.msra.mxu0 0.0
    %758 = vmatprep.subr.mxu0 0.0
    %759 = vmatpush1.msra.mxu0 0.0
    %760 = vmatprep.subr.mxu0 0.0
    %761 = vmatpush1.msra.mxu0 0.0
    %762 = vmatprep.subr.mxu0 0.0
    %763 = vmatpush1.msra.mxu0 0.0
    %764 = vmatprep.subr.mxu0 0.0
    %765 = vmatpush1.msra.mxu0 0.0
    %766 = vmatprep.subr.mxu0 0.0
    %767 = vmatpush1.msra.mxu0 0.0
    %768 = vmatprep.subr.mxu0 0.0
    %769 = vmatpush1.msra.mxu0 0.0
    %770 = vmatprep.subr.mxu0 0.0
    %771 = vmatpush1.msra.mxu0 0.0
    %772 = vmatprep.subr.mxu0 0.0
    %773 = vmatpush1.msra.mxu0 0.0
    %774 = vmatprep.subr.mxu0 0.0
    %775 = vmatpush1.msra.mxu0 0.0
    %776 = vmatprep.subr.mxu0 0.0
    %777 = vmatpush1.msra.mxu0 0.0
    %778 = vmatprep.subr.mxu0 %v100
    %779 = vmatpush1.msra.mxu0 %v99
    %780 = vmatprep.subr.mxu0 %v97
    %781 = vmatpush1.msra.mxu0 %v96
    %782 = vmatprep.subr.mxu0 %v94
    %783 = vmatpush1.msra.mxu0 %v93
    %784 = vmatprep.subr.mxu0 %v91
    %785 = vmatpush1.msra.mxu0 %v90
    %786 = vmatprep.subr.mxu0 0.0
    %787 = vmatpush2.msra.mxu0 0.0
    %788 = vmatprep.subr.mxu0 0.0
    %789 = vmatpush2.msra.mxu0 0.0
    %790 = vmatprep.subr.mxu0 0.0
    %791 = vmatpush2.msra.mxu0 0.0
    %792 = vmatprep.subr.mxu0 0.0
    %793 = vmatpush2.msra.mxu0 0.0
    %794 = vmatprep.subr.mxu0 0.0
    %795 = vmatpush2.msra.mxu0 0.0
    %796 = vmatprep.subr.mxu0 0.0
    %797 = vmatpush2.msra.mxu0 0.0
    %798 = vmatprep.subr.mxu0 0.0
    %799 = vmatpush2.msra.mxu0 0.0
    %800 = vmatprep.subr.mxu0 0.0
    %801 = vmatpush2.msra.mxu0 0.0
    %802 = vmatprep.subr.mxu0 0.0
    %803 = vmatpush2.msra.mxu0 0.0
    %804 = vmatprep.subr.mxu0 0.0
    %805 = vmatpush2.msra.mxu0 0.0
    %806 = vmatprep.subr.mxu0 0.0
    %807 = vmatpush2.msra.mxu0 0.0
    %808 = vmatprep.subr.mxu0 0.0
    %809 = vmatpush2.msra.mxu0 0.0
    %810 = vmatprep.subr.mxu0 0.0
    %811 = vmatpush2.msra.mxu0 0.0
    %812 = vmatprep.subr.mxu0 0.0
    %813 = vmatpush2.msra.mxu0 0.0
    %814 = vmatprep.subr.mxu0 0.0
    %815 = vmatpush2.msra.mxu0 0.0
    %816 = vmatprep.subr.mxu0 0.0
    %817 = vmatpush2.msra.mxu0 0.0
    %818 = vmatprep.mubr.f32.mxu0 0.0
    %819 = vmatmul.mubr.f32.gmra.mxu0 %v407
    %v820 = vpop.f32.mrf.mxu0
    %v821 = vadd.f32 0.0, %v820
    %v822 = vpop.f32.mrf.mxu0
    %v823 = vadd.f32 0.0, %v822
    %824 = vdwg.mxu0
    %825 = vmatprep.subr.mxu0 0.0
    %826 = vmatpush1.msra.mxu0 0.0
    %827 = vmatprep.subr.mxu0 0.0
    %828 = vmatpush1.msra.mxu0 0.0
    %829 = vmatprep.subr.mxu0 0.0
    %830 = vmatpush1.msra.mxu0 0.0
    %831 = vmatprep.subr.mxu0 0.0
    %832 = vmatpush1.msra.mxu0 0.0
    %833 = vmatprep.subr.mxu0 0.0
    %834 = vmatpush1.msra.mxu0 0.0
    %835 = vmatprep.subr.mxu0 0.0
    %836 = vmatpush1.msra.mxu0 0.0
    %837 = vmatprep.subr.mxu0 0.0
    %838 = vmatpush1.msra.mxu0 0.0
    %839 = vmatprep.subr.mxu0 0.0
    %840 = vmatpush1.msra.mxu0 0.0
    %841 = vmatprep.subr.mxu0 0.0
    %842 = vmatpush1.msra.mxu0 0.0
    %843 = vmatprep.subr.mxu0 0.0
    %844 = vmatpush1.msra.mxu0 0.0
    %845 = vmatprep.subr.mxu0 0.0
    %846 = vmatpush1.msra.mxu0 0.0
    %847 = vmatprep.subr.mxu0 0.0
    %848 = vmatpush1.msra.mxu0 0.0
    %849 = vmatprep.subr.mxu0 0.0
    %850 = vmatpush1.msra.mxu0 %v101
    %851 = vmatprep.subr.mxu0 0.0
    %852 = vmatpush1.msra.mxu0 %v98
    %853 = vmatprep.subr.mxu0 0.0
    %854 = vmatpush1.msra.mxu0 %v95
    %855 = vmatprep.subr.mxu0 0.0
    %856 = vmatpush1.msra.mxu0 %v92
    %857 = vmatprep.subr.mxu0 0.0
    %858 = vmatpush2.msra.mxu0 0.0
    %859 = vmatprep.subr.mxu0 0.0
    %860 = vmatpush2.msra.mxu0 0.0
    %861 = vmatprep.subr.mxu0 0.0
    %862 = vmatpush2.msra.mxu0 0.0
    %863 = vmatprep.subr.mxu0 0.0
    %864 = vmatpush2.msra.mxu0 0.0
    %865 = vmatprep.subr.mxu0 0.0
    %866 = vmatpush2.msra.mxu0 0.0
    %867 = vmatprep.subr.mxu0 0.0
    %868 = vmatpush2.msra.mxu0 0.0
    %869 = vmatprep.subr.mxu0 0.0
    %870 = vmatpush2.msra.mxu0 0.0
    %871 = vmatprep.subr.mxu0 0.0
    %872 = vmatpush2.msra.mxu0 0.0
    %873 = vmatprep.subr.mxu0 0.0
    %874 = vmatpush2.msra.mxu0 0.0
    %875 = vmatprep.subr.mxu0 0.0
    %876 = vmatpush2.msra.mxu0 0.0
    %877 = vmatprep.subr.mxu0 0.0
    %878 = vmatpush2.msra.mxu0 0.0
    %879 = vmatprep.subr.mxu0 0.0
    %880 = vmatpush2.msra.mxu0 0.0
    %881 = vmatprep.subr.mxu0 0.0
    %882 = vmatpush2.msra.mxu0 0.0
    %883 = vmatprep.subr.mxu0 0.0
    %884 = vmatpush2.msra.mxu0 0.0
    %885 = vmatprep.subr.mxu0 0.0
    %886 = vmatpush2.msra.mxu0 0.0
    %887 = vmatprep.subr.mxu0 0.0
    %888 = vmatpush2.msra.mxu0 0.0
    %889 = vmatprep.mubr.f32.mxu0 0.0
    %890 = vmatmul.mubr.f32.gmra.mxu0 %v407
    %v891 = vpop.f32.mrf.mxu0
    %v892 = vadd.f32 0.0, %v891
    %v893 = vpop.f32.mrf.mxu0
    %894 = vdwg.mxu0
    %v895 = vadd.f32 %v680, %v821
    %v896 = vadd.f32 %v682, %v823
    %v897 = vxor.u32 %v895, 2147483648
    %v898 = vxor.u32 %v896, 2147483648
    %v899 = vmul.f32 %v897, 1.442695
    %v900 = vpow.pop %v899
    %v901 = vmul.f32 %v898, 1.442695
    %v902 = vpow.pop %v901
    %v903 = vadd.f32 %v900, 1.0
    %v904 = vadd.f32 %v902, 1.0
    %v905 = vrcp.pop %v903
    %v906 = vmul.f32 1.0, %v905
    %v907 = vrcp.pop %v904
    %v908 = vmul.f32 1.0, %v907
    %v909 = vlaneseq
    %v910 = vshrl.u32 %v909, 7
    %v911 = vsub.s32 0, %v910
    %v912 = vrot.slane %v106, %v911
    %v913 = vadd.f32 %v892, %v912
    %v914 = vmul.f32 %v906, %v913
    %v915 = vadd.f32 %v751, %v914
    %v916 = vtanh.pop %v915
    %v917 = vmul.f32 %v908, 0.0
    %v918 = vsub.f32 1.0, %v908
    %v919 = vmul.f32 %v918, %v916
    %v920 = vadd.f32 %v917, %v919
    %921 = vmatprep.subr.mxu0 0.0
    %922 = vmatpush1.msra.mxu0 0.0
    %923 = vmatprep.subr.mxu0 0.0
    %924 = vmatpush1.msra.mxu0 0.0
    %925 = vmatprep.subr.mxu0 0.0
    %926 = vmatpush1.msra.mxu0 0.0
    %927 = vmatprep.subr.mxu0 0.0
    %928 = vmatpush1.msra.mxu0 0.0
    %929 = vmatprep.subr.mxu0 0.0
    %930 = vmatpush1.msra.mxu0 0.0
    %931 = vmatprep.subr.mxu0 0.0
    %932 = vmatpush1.msra.mxu0 0.0
    %933 = vmatprep.subr.mxu0 0.0
    %934 = vmatpush1.msra.mxu0 0.0
    %935 = vmatprep.subr.mxu0 0.0
    %936 = vmatpush1.msra.mxu0 0.0
    %937 = vmatprep.subr.mxu0 0.0
    %938 = vmatpush1.msra.mxu0 0.0
    %939 = vmatprep.subr.mxu0 0.0
    %940 = vmatpush1.msra.mxu0 0.0
    %941 = vmatprep.subr.mxu0 0.0
    %942 = vmatpush1.msra.mxu0 0.0
    %943 = vmatprep.subr.mxu0 0.0
    %944 = vmatpush1.msra.mxu0 0.0
    %945 = vmatprep.subr.mxu0 %v74
    %946 = vmatpush1.msra.mxu0 %v73
    %947 = vmatprep.subr.mxu0 %v71
    %948 = vmatpush1.msra.mxu0 %v70
    %949 = vmatprep.subr.mxu0 %v68
    %950 = vmatpush1.msra.mxu0 %v67
    %951 = vmatprep.subr.mxu0 %v65
    %952 = vmatpush1.msra.mxu0 %v64
    %953 = vmatprep.subr.mxu0 0.0
    %954 = vmatpush2.msra.mxu0 0.0
    %955 = vmatprep.subr.mxu0 0.0
    %956 = vmatpush2.msra.mxu0 0.0
    %957 = vmatprep.subr.mxu0 0.0
    %958 = vmatpush2.msra.mxu0 0.0
    %959 = vmatprep.subr.mxu0 0.0
    %960 = vmatpush2.msra.mxu0 0.0
    %961 = vmatprep.subr.mxu0 0.0
    %962 = vmatpush2.msra.mxu0 0.0
    %963 = vmatprep.subr.mxu0 0.0
    %964 = vmatpush2.msra.mxu0 0.0
    %965 = vmatprep.subr.mxu0 0.0
    %966 = vmatpush2.msra.mxu0 0.0
    %967 = vmatprep.subr.mxu0 0.0
    %968 = vmatpush2.msra.mxu0 0.0
    %969 = vmatprep.subr.mxu0 0.0
    %970 = vmatpush2.msra.mxu0 0.0
    %971 = vmatprep.subr.mxu0 0.0
    %972 = vmatpush2.msra.mxu0 0.0
    %973 = vmatprep.subr.mxu0 0.0
    %974 = vmatpush2.msra.mxu0 0.0
    %975 = vmatprep.subr.mxu0 0.0
    %976 = vmatpush2.msra.mxu0 0.0
    %977 = vmatprep.subr.mxu0 0.0
    %978 = vmatpush2.msra.mxu0 0.0
    %979 = vmatprep.subr.mxu0 0.0
    %980 = vmatpush2.msra.mxu0 0.0
    %981 = vmatprep.subr.mxu0 0.0
    %982 = vmatpush2.msra.mxu0 0.0
    %983 = vmatprep.subr.mxu0 0.0
    %984 = vmatpush2.msra.mxu0 0.0
    %985 = vmatprep.mubr.f32.mxu0 0.0
    %986 = vmatmul.mubr.f32.gmra.mxu0 %v611
    %v987 = vpop.f32.mrf.mxu0
    %v988 = vadd.f32 0.0, %v987
    %v989 = vpop.f32.mrf.mxu0
    %v990 = vadd.f32 0.0, %v989
    %991 = vdwg.mxu0
    %992 = vmatprep.subr.mxu0 0.0
    %993 = vmatpush1.msra.mxu0 0.0
    %994 = vmatprep.subr.mxu0 0.0
    %995 = vmatpush1.msra.mxu0 0.0
    %996 = vmatprep.subr.mxu0 0.0
    %997 = vmatpush1.msra.mxu0 0.0
    %998 = vmatprep.subr.mxu0 0.0
    %999 = vmatpush1.msra.mxu0 0.0
    %1000 = vmatprep.subr.mxu0 0.0
    %1001 = vmatpush1.msra.mxu0 0.0
    %1002 = vmatprep.subr.mxu0 0.0
    %1003 = vmatpush1.msra.mxu0 0.0
    %1004 = vmatprep.subr.mxu0 0.0
    %1005 = vmatpush1.msra.mxu0 0.0
    %1006 = vmatprep.subr.mxu0 0.0
    %1007 = vmatpush1.msra.mxu0 0.0
    %1008 = vmatprep.subr.mxu0 0.0
    %1009 = vmatpush1.msra.mxu0 0.0
    %1010 = vmatprep.subr.mxu0 0.0
    %1011 = vmatpush1.msra.mxu0 0.0
    %1012 = vmatprep.subr.mxu0 0.0
    %1013 = vmatpush1.msra.mxu0 0.0
    %1014 = vmatprep.subr.mxu0 0.0
    %1015 = vmatpush1.msra.mxu0 0.0
    %1016 = vmatprep.subr.mxu0 0.0
    %1017 = vmatpush1.msra.mxu0 %v75
    %1018 = vmatprep.subr.mxu0 0.0
    %1019 = vmatpush1.msra.mxu0 %v72
    %1020 = vmatprep.subr.mxu0 0.0
    %1021 = vmatpush1.msra.mxu0 %v69
    %1022 = vmatprep.subr.mxu0 0.0
    %1023 = vmatpush1.msra.mxu0 %v66
    %1024 = vmatprep.subr.mxu0 0.0
    %1025 = vmatpush2.msra.mxu0 0.0
    %1026 = vmatprep.subr.mxu0 0.0
    %1027 = vmatpush2.msra.mxu0 0.0
    %1028 = vmatprep.subr.mxu0 0.0
    %1029 = vmatpush2.msra.mxu0 0.0
    %1030 = vmatprep.subr.mxu0 0.0
    %1031 = vmatpush2.msra.mxu0 0.0
    %1032 = vmatprep.subr.mxu0 0.0
    %1033 = vmatpush2.msra.mxu0 0.0
    %1034 = vmatprep.subr.mxu0 0.0
    %1035 = vmatpush2.msra.mxu0 0.0
    %1036 = vmatprep.subr.mxu0 0.0
    %1037 = vmatpush2.msra.mxu0 0.0
    %1038 = vmatprep.subr.mxu0 0.0
    %1039 = vmatpush2.msra.mxu0 0.0
    %1040 = vmatprep.subr.mxu0 0.0
    %1041 = vmatpush2.msra.mxu0 0.0
    %1042 = vmatprep.subr.mxu0 0.0
    %1043 = vmatpush2.msra.mxu0 0.0
    %1044 = vmatprep.subr.mxu0 0.0
    %1045 = vmatpush2.msra.mxu0 0.0
    %1046 = vmatprep.subr.mxu0 0.0
    %1047 = vmatpush2.msra.mxu0 0.0
    %1048 = vmatprep.subr.mxu0 0.0
    %1049 = vmatpush2.msra.mxu0 0.0
    %1050 = vmatprep.subr.mxu0 0.0
    %1051 = vmatpush2.msra.mxu0 0.0
    %1052 = vmatprep.subr.mxu0 0.0
    %1053 = vmatpush2.msra.mxu0 0.0
    %1054 = vmatprep.subr.mxu0 0.0
    %1055 = vmatpush2.msra.mxu0 0.0
    %1056 = vmatprep.mubr.f32.mxu0 0.0
    %1057 = vmatmul.mubr.f32.gmra.mxu0 %v611
    %v1058 = vpop.f32.mrf.mxu0
    %v1059 = vadd.f32 0.0, %v1058
    %v1060 = vpop.f32.mrf.mxu0
    %1061 = vdwg.mxu0
    %v1065 = vcombine.low %v988, %v990
    %v1067 = vunpack.c.l.s4 1983009808
    %v1068 = vunpack.c.0.s8 %v1067
    %v1069 = vlaneseq
    %v1070 = vshrl.u32 %v1069, 7
    %v1071 = vsub.s32 %v1068, %v1070
    %v1072 = vrot.slane %v1065, %v1071
    %v1074 = vunpack.c.l.s4 1983009808
    %v1075 = vunpack.c.0.s8 %v1074
    %v1076 = vlaneseq
    %v1077 = vshrl.u32 %v1076, 7
    %v1078 = vsub.s32 %v1075, %v1077
    %v1079 = vrot.slane %v1059, %v1078
    %v1080 = vcombine.low %v1072, %v1079
    %v1082 = vadd.f32 %v360, %v1080
    %v1083 = vxor.u32 %v1082, 2147483648
    %v1084 = vmul.f32 %v1083, 1.442695
    %v1085 = vpow.pop %v1084
    %v1086 = vadd.f32 %v1085, 1.0
    %v1087 = vrcp.pop %v1086
    %v1088 = vmul.f32 1.0, %v1087
    %v1089 = vadd.f32 %v1059, %v580
    %v1090 = vmul.f32 %v1088, %v1089
    %v1091 = vrot.slane %v360, 4
    %v1093 = vadd.f32 %v1091, %v1090
    %v1094 = vtanh.pop %v1093
    %v1096 = vrot.slane %v1088, 2
    %v1098 = vmul.f32 %v1096, %v593
    %v1099 = vsub.f32 1.0, %v1096
    %v1100 = vmul.f32 %v1099, %v1094
    %v1101 = vadd.f32 %v1098, %v1100
    %v1103 = vsel %vm165, %v1101, 0
    %1105 = vmatprep.subr.mxu0 0.0
    %1106 = vmatpush1.msra.mxu0 0.0
    %1107 = vmatprep.subr.mxu0 0.0
    %1108 = vmatpush1.msra.mxu0 0.0
    %1109 = vmatprep.subr.mxu0 0.0
    %1110 = vmatpush1.msra.mxu0 0.0
    %1111 = vmatprep.subr.mxu0 0.0
    %1112 = vmatpush1.msra.mxu0 0.0
    %1113 = vmatprep.subr.mxu0 0.0
    %1114 = vmatpush1.msra.mxu0 0.0
    %1115 = vmatprep.subr.mxu0 0.0
    %1116 = vmatpush1.msra.mxu0 0.0
    %1117 = vmatprep.subr.mxu0 0.0
    %1118 = vmatpush1.msra.mxu0 0.0
    %1119 = vmatprep.subr.mxu0 0.0
    %1120 = vmatpush1.msra.mxu0 0.0
    %1121 = vmatprep.subr.mxu0 0.0
    %1122 = vmatpush1.msra.mxu0 0.0
    %1123 = vmatprep.subr.mxu0 0.0
    %1124 = vmatpush1.msra.mxu0 0.0
    %1125 = vmatprep.subr.mxu0 0.0
    %1126 = vmatpush1.msra.mxu0 0.0
    %1127 = vmatprep.subr.mxu0 0.0
    %1128 = vmatpush1.msra.mxu0 0.0
    %1129 = vmatprep.subr.mxu0 %v87
    %1130 = vmatpush1.msra.mxu0 %v86
    %1131 = vmatprep.subr.mxu0 %v84
    %1132 = vmatpush1.msra.mxu0 %v83
    %1133 = vmatprep.subr.mxu0 %v81
    %1134 = vmatpush1.msra.mxu0 %v80
    %1135 = vmatprep.subr.mxu0 %v78
    %1136 = vmatpush1.msra.mxu0 %v77
    %1137 = vmatprep.subr.mxu0 0.0
    %1138 = vmatpush2.msra.mxu0 0.0
    %1139 = vmatprep.subr.mxu0 0.0
    %1140 = vmatpush2.msra.mxu0 0.0
    %1141 = vmatprep.subr.mxu0 0.0
    %1142 = vmatpush2.msra.mxu0 0.0
    %1143 = vmatprep.subr.mxu0 0.0
    %1144 = vmatpush2.msra.mxu0 0.0
    %1145 = vmatprep.subr.mxu0 0.0
    %1146 = vmatpush2.msra.mxu0 0.0
    %1147 = vmatprep.subr.mxu0 0.0
    %1148 = vmatpush2.msra.mxu0 0.0
    %1149 = vmatprep.subr.mxu0 0.0
    %1150 = vmatpush2.msra.mxu0 0.0
    %1151 = vmatprep.subr.mxu0 0.0
    %1152 = vmatpush2.msra.mxu0 0.0
    %1153 = vmatprep.subr.mxu0 0.0
    %1154 = vmatpush2.msra.mxu0 0.0
    %1155 = vmatprep.subr.mxu0 0.0
    %1156 = vmatpush2.msra.mxu0 0.0
    %1157 = vmatprep.subr.mxu0 0.0
    %1158 = vmatpush2.msra.mxu0 0.0
    %1159 = vmatprep.subr.mxu0 0.0
    %1160 = vmatpush2.msra.mxu0 0.0
    %1161 = vmatprep.subr.mxu0 0.0
    %1162 = vmatpush2.msra.mxu0 0.0
    %1163 = vmatprep.subr.mxu0 0.0
    %1164 = vmatpush2.msra.mxu0 0.0
    %1165 = vmatprep.subr.mxu0 0.0
    %1166 = vmatpush2.msra.mxu0 0.0
    %1167 = vmatprep.subr.mxu0 0.0
    %1168 = vmatpush2.msra.mxu0 0.0
    %1169 = vmatprep.mubr.f32.mxu0 0.0
    %1170 = vmatmul.mubr.f32.gmra.mxu0 %v1103
    %v1171 = vpop.f32.mrf.mxu0
    %v1172 = vadd.f32 %v598, %v1171
    %v1173 = vpop.f32.mrf.mxu0
    %v1174 = vadd.f32 %v602, %v1173
    %1175 = vdwg.mxu0
    %1176 = vmatprep.subr.mxu0 0.0
    %1177 = vmatpush1.msra.mxu0 0.0
    %1178 = vmatprep.subr.mxu0 0.0
    %1179 = vmatpush1.msra.mxu0 0.0
    %1180 = vmatprep.subr.mxu0 0.0
    %1181 = vmatpush1.msra.mxu0 0.0
    %1182 = vmatprep.subr.mxu0 0.0
    %1183 = vmatpush1.msra.mxu0 0.0
    %1184 = vmatprep.subr.mxu0 0.0
    %1185 = vmatpush1.msra.mxu0 0.0
    %1186 = vmatprep.subr.mxu0 0.0
    %1187 = vmatpush1.msra.mxu0 0.0
    %1188 = vmatprep.subr.mxu0 0.0
    %1189 = vmatpush1.msra.mxu0 0.0
    %1190 = vmatprep.subr.mxu0 0.0
    %1191 = vmatpush1.msra.mxu0 0.0
    %1192 = vmatprep.subr.mxu0 0.0
    %1193 = vmatpush1.msra.mxu0 0.0
    %1194 = vmatprep.subr.mxu0 0.0
    %1195 = vmatpush1.msra.mxu0 0.0
    %1196 = vmatprep.subr.mxu0 0.0
    %1197 = vmatpush1.msra.mxu0 0.0
    %1198 = vmatprep.subr.mxu0 0.0
    %1199 = vmatpush1.msra.mxu0 0.0
    %1200 = vmatprep.subr.mxu0 0.0
    %1201 = vmatpush1.msra.mxu0 %v88
    %1202 = vmatprep.subr.mxu0 0.0
    %1203 = vmatpush1.msra.mxu0 %v85
    %1204 = vmatprep.subr.mxu0 0.0
    %1205 = vmatpush1.msra.mxu0 %v82
    %1206 = vmatprep.subr.mxu0 0.0
    %1207 = vmatpush1.msra.mxu0 %v79
    %1208 = vmatprep.subr.mxu0 0.0
    %1209 = vmatpush2.msra.mxu0 0.0
    %1210 = vmatprep.subr.mxu0 0.0
    %1211 = vmatpush2.msra.mxu0 0.0
    %1212 = vmatprep.subr.mxu0 0.0
    %1213 = vmatpush2.msra.mxu0 0.0
    %1214 = vmatprep.subr.mxu0 0.0
    %1215 = vmatpush2.msra.mxu0 0.0
    %1216 = vmatprep.subr.mxu0 0.0
    %1217 = vmatpush2.msra.mxu0 0.0
    %1218 = vmatprep.subr.mxu0 0.0
    %1219 = vmatpush2.msra.mxu0 0.0
    %1220 = vmatprep.subr.mxu0 0.0
    %1221 = vmatpush2.msra.mxu0 0.0
    %1222 = vmatprep.subr.mxu0 0.0
    %1223 = vmatpush2.msra.mxu0 0.0
    %1224 = vmatprep.subr.mxu0 0.0
    %1225 = vmatpush2.msra.mxu0 0.0
    %1226 = vmatprep.subr.mxu0 0.0
    %1227 = vmatpush2.msra.mxu0 0.0
    %1228 = vmatprep.subr.mxu0 0.0
    %1229 = vmatpush2.msra.mxu0 0.0
    %1230 = vmatprep.subr.mxu0 0.0
    %1231 = vmatpush2.msra.mxu0 0.0
    %1232 = vmatprep.subr.mxu0 0.0
    %1233 = vmatpush2.msra.mxu0 0.0
    %1234 = vmatprep.subr.mxu0 0.0
    %1235 = vmatpush2.msra.mxu0 0.0
    %1236 = vmatprep.subr.mxu0 0.0
    %1237 = vmatpush2.msra.mxu0 0.0
    %1238 = vmatprep.subr.mxu0 0.0
    %1239 = vmatpush2.msra.mxu0 0.0
    %1240 = vmatprep.mubr.f32.mxu0 0.0
    %1241 = vmatmul.mubr.f32.gmra.mxu0 %v1103
    %v1242 = vpop.f32.mrf.mxu0
    %v1243 = vadd.f32 %v606, %v1242
    %v1244 = vpop.f32.mrf.mxu0
    %1245 = vdwg.mxu0
    %v1247 = vsel %vm165, %v920, 0
    %1249 = vmatprep.subr.mxu0 0.0
    %1250 = vmatpush1.msra.mxu0 0.0
    %1251 = vmatprep.subr.mxu0 0.0
    %1252 = vmatpush1.msra.mxu0 0.0
    %1253 = vmatprep.subr.mxu0 0.0
    %1254 = vmatpush1.msra.mxu0 0.0
    %1255 = vmatprep.subr.mxu0 0.0
    %1256 = vmatpush1.msra.mxu0 0.0
    %1257 = vmatprep.subr.mxu0 0.0
    %1258 = vmatpush1.msra.mxu0 0.0
    %1259 = vmatprep.subr.mxu0 0.0
    %1260 = vmatpush1.msra.mxu0 0.0
    %1261 = vmatprep.subr.mxu0 0.0
    %1262 = vmatpush1.msra.mxu0 0.0
    %1263 = vmatprep.subr.mxu0 0.0
    %1264 = vmatpush1.msra.mxu0 0.0
    %1265 = vmatprep.subr.mxu0 0.0
    %1266 = vmatpush1.msra.mxu0 0.0
    %1267 = vmatprep.subr.mxu0 0.0
    %1268 = vmatpush1.msra.mxu0 0.0
    %1269 = vmatprep.subr.mxu0 0.0
    %1270 = vmatpush1.msra.mxu0 0.0
    %1271 = vmatprep.subr.mxu0 0.0
    %1272 = vmatpush1.msra.mxu0 0.0
    %1273 = vmatprep.subr.mxu0 %v100
    %1274 = vmatpush1.msra.mxu0 %v99
    %1275 = vmatprep.subr.mxu0 %v97
    %1276 = vmatpush1.msra.mxu0 %v96
    %1277 = vmatprep.subr.mxu0 %v94
    %1278 = vmatpush1.msra.mxu0 %v93
    %1279 = vmatprep.subr.mxu0 %v91
    %1280 = vmatpush1.msra.mxu0 %v90
    %1281 = vmatprep.subr.mxu0 0.0
    %1282 = vmatpush2.msra.mxu0 0.0
    %1283 = vmatprep.subr.mxu0 0.0
    %1284 = vmatpush2.msra.mxu0 0.0
    %1285 = vmatprep.subr.mxu0 0.0
    %1286 = vmatpush2.msra.mxu0 0.0
    %1287 = vmatprep.subr.mxu0 0.0
    %1288 = vmatpush2.msra.mxu0 0.0
    %1289 = vmatprep.subr.mxu0 0.0
    %1290 = vmatpush2.msra.mxu0 0.0
    %1291 = vmatprep.subr.mxu0 0.0
    %1292 = vmatpush2.msra.mxu0 0.0
    %1293 = vmatprep.subr.mxu0 0.0
    %1294 = vmatpush2.msra.mxu0 0.0
    %1295 = vmatprep.subr.mxu0 0.0
    %1296 = vmatpush2.msra.mxu0 0.0
    %1297 = vmatprep.subr.mxu0 0.0
    %1298 = vmatpush2.msra.mxu0 0.0
    %1299 = vmatprep.subr.mxu0 0.0
    %1300 = vmatpush2.msra.mxu0 0.0
    %1301 = vmatprep.subr.mxu0 0.0
    %1302 = vmatpush2.msra.mxu0 0.0
    %1303 = vmatprep.subr.mxu0 0.0
    %1304 = vmatpush2.msra.mxu0 0.0
    %1305 = vmatprep.subr.mxu0 0.0
    %1306 = vmatpush2.msra.mxu0 0.0
    %1307 = vmatprep.subr.mxu0 0.0
    %1308 = vmatpush2.msra.mxu0 0.0
    %1309 = vmatprep.subr.mxu0 0.0
    %1310 = vmatpush2.msra.mxu0 0.0
    %1311 = vmatprep.subr.mxu0 0.0
    %1312 = vmatpush2.msra.mxu0 0.0
    %1313 = vmatprep.mubr.f32.mxu0 0.0
    %1314 = vmatmul.mubr.f32.gmra.mxu0 %v1247
    %v1315 = vpop.f32.mrf.mxu0
    %v1316 = vadd.f32 0.0, %v1315
    %v1317 = vpop.f32.mrf.mxu0
    %v1318 = vadd.f32 0.0, %v1317
    %1319 = vdwg.mxu0
    %1320 = vmatprep.subr.mxu0 0.0
    %1321 = vmatpush1.msra.mxu0 0.0
    %1322 = vmatprep.subr.mxu0 0.0
    %1323 = vmatpush1.msra.mxu0 0.0
    %1324 = vmatprep.subr.mxu0 0.0
    %1325 = vmatpush1.msra.mxu0 0.0
    %1326 = vmatprep.subr.mxu0 0.0
    %1327 = vmatpush1.msra.mxu0 0.0
    %1328 = vmatprep.subr.mxu0 0.0
    %1329 = vmatpush1.msra.mxu0 0.0
    %1330 = vmatprep.subr.mxu0 0.0
    %1331 = vmatpush1.msra.mxu0 0.0
    %1332 = vmatprep.subr.mxu0 0.0
    %1333 = vmatpush1.msra.mxu0 0.0
    %1334 = vmatprep.subr.mxu0 0.0
    %1335 = vmatpush1.msra.mxu0 0.0
    %1336 = vmatprep.subr.mxu0 0.0
    %1337 = vmatpush1.msra.mxu0 0.0
    %1338 = vmatprep.subr.mxu0 0.0
    %1339 = vmatpush1.msra.mxu0 0.0
    %1340 = vmatprep.subr.mxu0 0.0
    %1341 = vmatpush1.msra.mxu0 0.0
    %1342 = vmatprep.subr.mxu0 0.0
    %1343 = vmatpush1.msra.mxu0 0.0
    %1344 = vmatprep.subr.mxu0 0.0
    %1345 = vmatpush1.msra.mxu0 %v101
    %1346 = vmatprep.subr.mxu0 0.0
    %1347 = vmatpush1.msra.mxu0 %v98
    %1348 = vmatprep.subr.mxu0 0.0
    %1349 = vmatpush1.msra.mxu0 %v95
    %1350 = vmatprep.subr.mxu0 0.0
    %1351 = vmatpush1.msra.mxu0 %v92
    %1352 = vmatprep.subr.mxu0 0.0
    %1353 = vmatpush2.msra.mxu0 0.0
    %1354 = vmatprep.subr.mxu0 0.0
    %1355 = vmatpush2.msra.mxu0 0.0
    %1356 = vmatprep.subr.mxu0 0.0
    %1357 = vmatpush2.msra.mxu0 0.0
    %1358 = vmatprep.subr.mxu0 0.0
    %1359 = vmatpush2.msra.mxu0 0.0
    %1360 = vmatprep.subr.mxu0 0.0
    %1361 = vmatpush2.msra.mxu0 0.0
    %1362 = vmatprep.subr.mxu0 0.0
    %1363 = vmatpush2.msra.mxu0 0.0
    %1364 = vmatprep.subr.mxu0 0.0
    %1365 = vmatpush2.msra.mxu0 0.0
    %1366 = vmatprep.subr.mxu0 0.0
    %1367 = vmatpush2.msra.mxu0 0.0
    %1368 = vmatprep.subr.mxu0 0.0
    %1369 = vmatpush2.msra.mxu0 0.0
    %1370 = vmatprep.subr.mxu0 0.0
    %1371 = vmatpush2.msra.mxu0 0.0
    %1372 = vmatprep.subr.mxu0 0.0
    %1373 = vmatpush2.msra.mxu0 0.0
    %1374 = vmatprep.subr.mxu0 0.0
    %1375 = vmatpush2.msra.mxu0 0.0
    %1376 = vmatprep.subr.mxu0 0.0
    %1377 = vmatpush2.msra.mxu0 0.0
    %1378 = vmatprep.subr.mxu0 0.0
    %1379 = vmatpush2.msra.mxu0 0.0
    %1380 = vmatprep.subr.mxu0 0.0
    %1381 = vmatpush2.msra.mxu0 0.0
    %1382 = vmatprep.subr.mxu0 0.0
    %1383 = vmatpush2.msra.mxu0 0.0
    %1384 = vmatprep.mubr.f32.mxu0 0.0
    %1385 = vmatmul.mubr.f32.gmra.mxu0 %v1247
    %v1386 = vpop.f32.mrf.mxu0
    %v1387 = vadd.f32 0.0, %v1386
    %v1388 = vpop.f32.mrf.mxu0
    %1389 = vdwg.mxu0
    %v1390 = vadd.f32 %v1172, %v1316
    %v1391 = vadd.f32 %v1174, %v1318
    %v1392 = vxor.u32 %v1390, 2147483648
    %v1393 = vxor.u32 %v1391, 2147483648
    %v1394 = vmul.f32 %v1392, 1.442695
    %v1395 = vpow.pop %v1394
    %v1396 = vmul.f32 %v1393, 1.442695
    %v1397 = vpow.pop %v1396
    %v1398 = vadd.f32 %v1395, 1.0
    %v1399 = vadd.f32 %v1397, 1.0
    %v1400 = vrcp.pop %v1398
    %v1401 = vmul.f32 1.0, %v1400
    %v1402 = vrcp.pop %v1399
    %v1403 = vmul.f32 1.0, %v1402
    %v1404 = vadd.f32 %v1387, %v912
    %v1405 = vmul.f32 %v1401, %v1404
    %v1406 = vadd.f32 %v1243, %v1405
    %v1407 = vtanh.pop %v1406
    %v1408 = vmul.f32 %v1403, %v920
    %v1409 = vsub.f32 1.0, %v1403
    %v1410 = vmul.f32 %v1409, %v1407
    %v1411 = vadd.f32 %v1408, %v1410
    %1412 = vmatprep.subr.mxu0 0.0
    %1413 = vmatpush1.msra.mxu0 0.0
    %1414 = vmatprep.subr.mxu0 0.0
    %1415 = vmatpush1.msra.mxu0 0.0
    %1416 = vmatprep.subr.mxu0 0.0
    %1417 = vmatpush1.msra.mxu0 0.0
    %1418 = vmatprep.subr.mxu0 0.0
    %1419 = vmatpush1.msra.mxu0 0.0
    %1420 = vmatprep.subr.mxu0 0.0
    %1421 = vmatpush1.msra.mxu0 0.0
    %1422 = vmatprep.subr.mxu0 0.0
    %1423 = vmatpush1.msra.mxu0 0.0
    %1424 = vmatprep.subr.mxu0 0.0
    %1425 = vmatpush1.msra.mxu0 0.0
    %1426 = vmatprep.subr.mxu0 0.0
    %1427 = vmatpush1.msra.mxu0 0.0
    %1428 = vmatprep.subr.mxu0 0.0
    %1429 = vmatpush1.msra.mxu0 0.0
    %1430 = vmatprep.subr.mxu0 0.0
    %1431 = vmatpush1.msra.mxu0 0.0
    %1432 = vmatprep.subr.mxu0 0.0
    %1433 = vmatpush1.msra.mxu0 0.0
    %1434 = vmatprep.subr.mxu0 0.0
    %1435 = vmatpush1.msra.mxu0 0.0
    %1436 = vmatprep.subr.mxu0 %v74
    %1437 = vmatpush1.msra.mxu0 %v73
    %1438 = vmatprep.subr.mxu0 %v71
    %1439 = vmatpush1.msra.mxu0 %v70
    %1440 = vmatprep.subr.mxu0 %v68
    %1441 = vmatpush1.msra.mxu0 %v67
    %1442 = vmatprep.subr.mxu0 %v65
    %1443 = vmatpush1.msra.mxu0 %v64
    %1444 = vmatprep.subr.mxu0 0.0
    %1445 = vmatpush2.msra.mxu0 0.0
    %1446 = vmatprep.subr.mxu0 0.0
    %1447 = vmatpush2.msra.mxu0 0.0
    %1448 = vmatprep.subr.mxu0 0.0
    %1449 = vmatpush2.msra.mxu0 0.0
    %1450 = vmatprep.subr.mxu0 0.0
    %1451 = vmatpush2.msra.mxu0 0.0
    %1452 = vmatprep.subr.mxu0 0.0
    %1453 = vmatpush2.msra.mxu0 0.0
    %1454 = vmatprep.subr.mxu0 0.0
    %1455 = vmatpush2.msra.mxu0 0.0
    %1456 = vmatprep.subr.mxu0 0.0
    %1457 = vmatpush2.msra.mxu0 0.0
    %1458 = vmatprep.subr.mxu0 0.0
    %1459 = vmatpush2.msra.mxu0 0.0
    %1460 = vmatprep.subr.mxu0 0.0
    %1461 = vmatpush2.msra.mxu0 0.0
    %1462 = vmatprep.subr.mxu0 0.0
    %1463 = vmatpush2.msra.mxu0 0.0
    %1464 = vmatprep.subr.mxu0 0.0
    %1465 = vmatpush2.msra.mxu0 0.0
    %1466 = vmatprep.subr.mxu0 0.0
    %1467 = vmatpush2.msra.mxu0 0.0
    %1468 = vmatprep.subr.mxu0 0.0
    %1469 = vmatpush2.msra.mxu0 0.0
    %1470 = vmatprep.subr.mxu0 0.0
    %1471 = vmatpush2.msra.mxu0 0.0
    %1472 = vmatprep.subr.mxu0 0.0
    %1473 = vmatpush2.msra.mxu0 0.0
    %1474 = vmatprep.subr.mxu0 0.0
    %1475 = vmatpush2.msra.mxu0 0.0
    %1476 = vmatprep.mubr.f32.mxu0 0.0
    %1477 = vmatmul.mubr.f32.gmra.mxu0 %v1103
    %v1478 = vpop.f32.mrf.mxu0
    %v1479 = vadd.f32 0.0, %v1478
    %v1480 = vpop.f32.mrf.mxu0
    %v1481 = vadd.f32 0.0, %v1480
    %1482 = vdwg.mxu0
    %1483 = vmatprep.subr.mxu0 0.0
    %1484 = vmatpush1.msra.mxu0 0.0
    %1485 = vmatprep.subr.mxu0 0.0
    %1486 = vmatpush1.msra.mxu0 0.0
    %1487 = vmatprep.subr.mxu0 0.0
    %1488 = vmatpush1.msra.mxu0 0.0
    %1489 = vmatprep.subr.mxu0 0.0
    %1490 = vmatpush1.msra.mxu0 0.0
    %1491 = vmatprep.subr.mxu0 0.0
    %1492 = vmatpush1.msra.mxu0 0.0
    %1493 = vmatprep.subr.mxu0 0.0
    %1494 = vmatpush1.msra.mxu0 0.0
    %1495 = vmatprep.subr.mxu0 0.0
    %1496 = vmatpush1.msra.mxu0 0.0
    %1497 = vmatprep.subr.mxu0 0.0
    %1498 = vmatpush1.msra.mxu0 0.0
    %1499 = vmatprep.subr.mxu0 0.0
    %1500 = vmatpush1.msra.mxu0 0.0
    %1501 = vmatprep.subr.mxu0 0.0
    %1502 = vmatpush1.msra.mxu0 0.0
    %1503 = vmatprep.subr.mxu0 0.0
    %1504 = vmatpush1.msra.mxu0 0.0
    %1505 = vmatprep.subr.mxu0 0.0
    %1506 = vmatpush1.msra.mxu0 0.0
    %1507 = vmatprep.subr.mxu0 0.0
    %1508 = vmatpush1.msra.mxu0 %v75
    %1509 = vmatprep.subr.mxu0 0.0
    %1510 = vmatpush1.msra.mxu0 %v72
    %1511 = vmatprep.subr.mxu0 0.0
    %1512 = vmatpush1.msra.mxu0 %v69
    %1513 = vmatprep.subr.mxu0 0.0
    %1514 = vmatpush1.msra.mxu0 %v66
    %1515 = vmatprep.subr.mxu0 0.0
    %1516 = vmatpush2.msra.mxu0 0.0
    %1517 = vmatprep.subr.mxu0 0.0
    %1518 = vmatpush2.msra.mxu0 0.0
    %1519 = vmatprep.subr.mxu0 0.0
    %1520 = vmatpush2.msra.mxu0 0.0
    %1521 = vmatprep.subr.mxu0 0.0
    %1522 = vmatpush2.msra.mxu0 0.0
    %1523 = vmatprep.subr.mxu0 0.0
    %1524 = vmatpush2.msra.mxu0 0.0
    %1525 = vmatprep.subr.mxu0 0.0
    %1526 = vmatpush2.msra.mxu0 0.0
    %1527 = vmatprep.subr.mxu0 0.0
    %1528 = vmatpush2.msra.mxu0 0.0
    %1529 = vmatprep.subr.mxu0 0.0
    %1530 = vmatpush2.msra.mxu0 0.0
    %1531 = vmatprep.subr.mxu0 0.0
    %1532 = vmatpush2.msra.mxu0 0.0
    %1533 = vmatprep.subr.mxu0 0.0
    %1534 = vmatpush2.msra.mxu0 0.0
    %1535 = vmatprep.subr.mxu0 0.0
    %1536 = vmatpush2.msra.mxu0 0.0
    %1537 = vmatprep.subr.mxu0 0.0
    %1538 = vmatpush2.msra.mxu0 0.0
    %1539 = vmatprep.subr.mxu0 0.0
    %1540 = vmatpush2.msra.mxu0 0.0
    %1541 = vmatprep.subr.mxu0 0.0
    %1542 = vmatpush2.msra.mxu0 0.0
    %1543 = vmatprep.subr.mxu0 0.0
    %1544 = vmatpush2.msra.mxu0 0.0
    %1545 = vmatprep.subr.mxu0 0.0
    %1546 = vmatpush2.msra.mxu0 0.0
    %1547 = vmatprep.mubr.f32.mxu0 0.0
    %1548 = vmatmul.mubr.f32.gmra.mxu0 %v1103
    %v1549 = vpop.f32.mrf.mxu0
    %v1550 = vadd.f32 0.0, %v1549
    %v1551 = vpop.f32.mrf.mxu0
    %1552 = vdwg.mxu0
    %v1556 = vcombine.low %v1479, %v1481
    %v1558 = vunpack.c.l.s4 1983009808
    %v1559 = vunpack.c.0.s8 %v1558
    %v1560 = vlaneseq
    %v1561 = vshrl.u32 %v1560, 7
    %v1562 = vsub.s32 %v1559, %v1561
    %v1563 = vrot.slane %v1556, %v1562
    %v1565 = vunpack.c.l.s4 1983009808
    %v1566 = vunpack.c.0.s8 %v1565
    %v1567 = vlaneseq
    %v1568 = vshrl.u32 %v1567, 7
    %v1569 = vsub.s32 %v1566, %v1568
    %v1570 = vrot.slane %v1550, %v1569
    %v1571 = vcombine.low %v1563, %v1570
    %v1573 = vadd.f32 %v361, %v1571
    %v1574 = vxor.u32 %v1573, 2147483648
    %v1575 = vmul.f32 %v1574, 1.442695
    %v1576 = vpow.pop %v1575
    %v1577 = vadd.f32 %v1576, 1.0
    %v1578 = vrcp.pop %v1577
    %v1579 = vmul.f32 1.0, %v1578
    %v1580 = vadd.f32 %v1550, %v580
    %v1581 = vmul.f32 %v1579, %v1580
    %v1582 = vrot.slane %v361, 4
    %v1584 = vadd.f32 %v1582, %v1581
    %v1585 = vtanh.pop %v1584
    %v1587 = vrot.slane %v1579, 2
    %v1589 = vmul.f32 %v1587, %v1101
    %v1590 = vsub.f32 1.0, %v1587
    %v1591 = vmul.f32 %v1590, %v1585
    %v1592 = vadd.f32 %v1589, %v1591
    %v1594 = vsel %vm165, %v1592, 0
    %1596 = vmatprep.subr.mxu0 0.0
    %1597 = vmatpush1.msra.mxu0 0.0
    %1598 = vmatprep.subr.mxu0 0.0
    %1599 = vmatpush1.msra.mxu0 0.0
    %1600 = vmatprep.subr.mxu0 0.0
    %1601 = vmatpush1.msra.mxu0 0.0
    %1602 = vmatprep.subr.mxu0 0.0
    %1603 = vmatpush1.msra.mxu0 0.0
    %1604 = vmatprep.subr.mxu0 0.0
    %1605 = vmatpush1.msra.mxu0 0.0
    %1606 = vmatprep.subr.mxu0 0.0
    %1607 = vmatpush1.msra.mxu0 0.0
    %1608 = vmatprep.subr.mxu0 0.0
    %1609 = vmatpush1.msra.mxu0 0.0
    %1610 = vmatprep.subr.mxu0 0.0
    %1611 = vmatpush1.msra.mxu0 0.0
    %1612 = vmatprep.subr.mxu0 0.0
    %1613 = vmatpush1.msra.mxu0 0.0
    %1614 = vmatprep.subr.mxu0 0.0
    %1615 = vmatpush1.msra.mxu0 0.0
    %1616 = vmatprep.subr.mxu0 0.0
    %1617 = vmatpush1.msra.mxu0 0.0
    %1618 = vmatprep.subr.mxu0 0.0
    %1619 = vmatpush1.msra.mxu0 0.0
    %1620 = vmatprep.subr.mxu0 %v87
    %1621 = vmatpush1.msra.mxu0 %v86
    %1622 = vmatprep.subr.mxu0 %v84
    %1623 = vmatpush1.msra.mxu0 %v83
    %1624 = vmatprep.subr.mxu0 %v81
    %1625 = vmatpush1.msra.mxu0 %v80
    %1626 = vmatprep.subr.mxu0 %v78
    %1627 = vmatpush1.msra.mxu0 %v77
    %1628 = vmatprep.subr.mxu0 0.0
    %1629 = vmatpush2.msra.mxu0 0.0
    %1630 = vmatprep.subr.mxu0 0.0
    %1631 = vmatpush2.msra.mxu0 0.0
    %1632 = vmatprep.subr.mxu0 0.0
    %1633 = vmatpush2.msra.mxu0 0.0
    %1634 = vmatprep.subr.mxu0 0.0
    %1635 = vmatpush2.msra.mxu0 0.0
    %1636 = vmatprep.subr.mxu0 0.0
    %1637 = vmatpush2.msra.mxu0 0.0
    %1638 = vmatprep.subr.mxu0 0.0
    %1639 = vmatpush2.msra.mxu0 0.0
    %1640 = vmatprep.subr.mxu0 0.0
    %1641 = vmatpush2.msra.mxu0 0.0
    %1642 = vmatprep.subr.mxu0 0.0
    %1643 = vmatpush2.msra.mxu0 0.0
    %1644 = vmatprep.subr.mxu0 0.0
    %1645 = vmatpush2.msra.mxu0 0.0
    %1646 = vmatprep.subr.mxu0 0.0
    %1647 = vmatpush2.msra.mxu0 0.0
    %1648 = vmatprep.subr.mxu0 0.0
    %1649 = vmatpush2.msra.mxu0 0.0
    %1650 = vmatprep.subr.mxu0 0.0
    %1651 = vmatpush2.msra.mxu0 0.0
    %1652 = vmatprep.subr.mxu0 0.0
    %1653 = vmatpush2.msra.mxu0 0.0
    %1654 = vmatprep.subr.mxu0 0.0
    %1655 = vmatpush2.msra.mxu0 0.0
    %1656 = vmatprep.subr.mxu0 0.0
    %1657 = vmatpush2.msra.mxu0 0.0
    %1658 = vmatprep.subr.mxu0 0.0
    %1659 = vmatpush2.msra.mxu0 0.0
    %1660 = vmatprep.mubr.f32.mxu0 0.0
    %1661 = vmatmul.mubr.f32.gmra.mxu0 %v1594
    %v1662 = vpop.f32.mrf.mxu0
    %v1663 = vadd.f32 %v598, %v1662
    %v1664 = vpop.f32.mrf.mxu0
    %v1665 = vadd.f32 %v602, %v1664
    %1666 = vdwg.mxu0
    %1667 = vmatprep.subr.mxu0 0.0
    %1668 = vmatpush1.msra.mxu0 0.0
    %1669 = vmatprep.subr.mxu0 0.0
    %1670 = vmatpush1.msra.mxu0 0.0
    %1671 = vmatprep.subr.mxu0 0.0
    %1672 = vmatpush1.msra.mxu0 0.0
    %1673 = vmatprep.subr.mxu0 0.0
    %1674 = vmatpush1.msra.mxu0 0.0
    %1675 = vmatprep.subr.mxu0 0.0
    %1676 = vmatpush1.msra.mxu0 0.0
    %1677 = vmatprep.subr.mxu0 0.0
    %1678 = vmatpush1.msra.mxu0 0.0
    %1679 = vmatprep.subr.mxu0 0.0
    %1680 = vmatpush1.msra.mxu0 0.0
    %1681 = vmatprep.subr.mxu0 0.0
    %1682 = vmatpush1.msra.mxu0 0.0
    %1683 = vmatprep.subr.mxu0 0.0
    %1684 = vmatpush1.msra.mxu0 0.0
    %1685 = vmatprep.subr.mxu0 0.0
    %1686 = vmatpush1.msra.mxu0 0.0
    %1687 = vmatprep.subr.mxu0 0.0
    %1688 = vmatpush1.msra.mxu0 0.0
    %1689 = vmatprep.subr.mxu0 0.0
    %1690 = vmatpush1.msra.mxu0 0.0
    %1691 = vmatprep.subr.mxu0 0.0
    %1692 = vmatpush1.msra.mxu0 %v88
    %1693 = vmatprep.subr.mxu0 0.0
    %1694 = vmatpush1.msra.mxu0 %v85
    %1695 = vmatprep.subr.mxu0 0.0
    %1696 = vmatpush1.msra.mxu0 %v82
    %1697 = vmatprep.subr.mxu0 0.0
    %1698 = vmatpush1.msra.mxu0 %v79
    %1699 = vmatprep.subr.mxu0 0.0
    %1700 = vmatpush2.msra.mxu0 0.0
    %1701 = vmatprep.subr.mxu0 0.0
    %1702 = vmatpush2.msra.mxu0 0.0
    %1703 = vmatprep.subr.mxu0 0.0
    %1704 = vmatpush2.msra.mxu0 0.0
    %1705 = vmatprep.subr.mxu0 0.0
    %1706 = vmatpush2.msra.mxu0 0.0
    %1707 = vmatprep.subr.mxu0 0.0
    %1708 = vmatpush2.msra.mxu0 0.0
    %1709 = vmatprep.subr.mxu0 0.0
    %1710 = vmatpush2.msra.mxu0 0.0
    %1711 = vmatprep.subr.mxu0 0.0
    %1712 = vmatpush2.msra.mxu0 0.0
    %1713 = vmatprep.subr.mxu0 0.0
    %1714 = vmatpush2.msra.mxu0 0.0
    %1715 = vmatprep.subr.mxu0 0.0
    %1716 = vmatpush2.msra.mxu0 0.0
    %1717 = vmatprep.subr.mxu0 0.0
    %1718 = vmatpush2.msra.mxu0 0.0
    %1719 = vmatprep.subr.mxu0 0.0
    %1720 = vmatpush2.msra.mxu0 0.0
    %1721 = vmatprep.subr.mxu0 0.0
    %1722 = vmatpush2.msra.mxu0 0.0
    %1723 = vmatprep.subr.mxu0 0.0
    %1724 = vmatpush2.msra.mxu0 0.0
    %1725 = vmatprep.subr.mxu0 0.0
    %1726 = vmatpush2.msra.mxu0 0.0
    %1727 = vmatprep.subr.mxu0 0.0
    %1728 = vmatpush2.msra.mxu0 0.0
    %1729 = vmatprep.subr.mxu0 0.0
    %1730 = vmatpush2.msra.mxu0 0.0
    %1731 = vmatprep.mubr.f32.mxu0 0.0
    %1732 = vmatmul.mubr.f32.gmra.mxu0 %v1594
    %v1733 = vpop.f32.mrf.mxu0
    %v1734 = vadd.f32 %v606, %v1733
    %v1735 = vpop.f32.mrf.mxu0
    %1736 = vdwg.mxu0
    %v1738 = vsel %vm165, %v1411, 0
    %1740 = vmatprep.subr.mxu0 0.0
    %1741 = vmatpush1.msra.mxu0 0.0
    %1742 = vmatprep.subr.mxu0 0.0
    %1743 = vmatpush1.msra.mxu0 0.0
    %1744 = vmatprep.subr.mxu0 0.0
    %1745 = vmatpush1.msra.mxu0 0.0
    %1746 = vmatprep.subr.mxu0 0.0
    %1747 = vmatpush1.msra.mxu0 0.0
    %1748 = vmatprep.subr.mxu0 0.0
    %1749 = vmatpush1.msra.mxu0 0.0
    %1750 = vmatprep.subr.mxu0 0.0
    %1751 = vmatpush1.msra.mxu0 0.0
    %1752 = vmatprep.subr.mxu0 0.0
    %1753 = vmatpush1.msra.mxu0 0.0
    %1754 = vmatprep.subr.mxu0 0.0
    %1755 = vmatpush1.msra.mxu0 0.0
    %1756 = vmatprep.subr.mxu0 0.0
    %1757 = vmatpush1.msra.mxu0 0.0
    %1758 = vmatprep.subr.mxu0 0.0
    %1759 = vmatpush1.msra.mxu0 0.0
    %1760 = vmatprep.subr.mxu0 0.0
    %1761 = vmatpush1.msra.mxu0 0.0
    %1762 = vmatprep.subr.mxu0 0.0
    %1763 = vmatpush1.msra.mxu0 0.0
    %1764 = vmatprep.subr.mxu0 %v100
    %1765 = vmatpush1.msra.mxu0 %v99
    %1766 = vmatprep.subr.mxu0 %v97
    %1767 = vmatpush1.msra.mxu0 %v96
    %1768 = vmatprep.subr.mxu0 %v94
    %1769 = vmatpush1.msra.mxu0 %v93
    %1770 = vmatprep.subr.mxu0 %v91
    %1771 = vmatpush1.msra.mxu0 %v90
    %1772 = vmatprep.subr.mxu0 0.0
    %1773 = vmatpush2.msra.mxu0 0.0
    %1774 = vmatprep.subr.mxu0 0.0
    %1775 = vmatpush2.msra.mxu0 0.0
    %1776 = vmatprep.subr.mxu0 0.0
    %1777 = vmatpush2.msra.mxu0 0.0
    %1778 = vmatprep.subr.mxu0 0.0
    %1779 = vmatpush2.msra.mxu0 0.0
    %1780 = vmatprep.subr.mxu0 0.0
    %1781 = vmatpush2.msra.mxu0 0.0
    %1782 = vmatprep.subr.mxu0 0.0
    %1783 = vmatpush2.msra.mxu0 0.0
    %1784 = vmatprep.subr.mxu0 0.0
    %1785 = vmatpush2.msra.mxu0 0.0
    %1786 = vmatprep.subr.mxu0 0.0
    %1787 = vmatpush2.msra.mxu0 0.0
    %1788 = vmatprep.subr.mxu0 0.0
    %1789 = vmatpush2.msra.mxu0 0.0
    %1790 = vmatprep.subr.mxu0 0.0
    %1791 = vmatpush2.msra.mxu0 0.0
    %1792 = vmatprep.subr.mxu0 0.0
    %1793 = vmatpush2.msra.mxu0 0.0
    %1794 = vmatprep.subr.mxu0 0.0
    %1795 = vmatpush2.msra.mxu0 0.0
    %1796 = vmatprep.subr.mxu0 0.0
    %1797 = vmatpush2.msra.mxu0 0.0
    %1798 = vmatprep.subr.mxu0 0.0
    %1799 = vmatpush2.msra.mxu0 0.0
    %1800 = vmatprep.subr.mxu0 0.0
    %1801 = vmatpush2.msra.mxu0 0.0
    %1802 = vmatprep.subr.mxu0 0.0
    %1803 = vmatpush2.msra.mxu0 0.0
    %1804 = vmatprep.mubr.f32.mxu0 0.0
    %1805 = vmatmul.mubr.f32.gmra.mxu0 %v1738
    %v1806 = vpop.f32.mrf.mxu0
    %v1807 = vadd.f32 0.0, %v1806
    %v1808 = vpop.f32.mrf.mxu0
    %v1809 = vadd.f32 0.0, %v1808
    %1810 = vdwg.mxu0
    %1811 = vmatprep.subr.mxu0 0.0
    %1812 = vmatpush1.msra.mxu0 0.0
    %1813 = vmatprep.subr.mxu0 0.0
    %1814 = vmatpush1.msra.mxu0 0.0
    %1815 = vmatprep.subr.mxu0 0.0
    %1816 = vmatpush1.msra.mxu0 0.0
    %1817 = vmatprep.subr.mxu0 0.0
    %1818 = vmatpush1.msra.mxu0 0.0
    %1819 = vmatprep.subr.mxu0 0.0
    %1820 = vmatpush1.msra.mxu0 0.0
    %1821 = vmatprep.subr.mxu0 0.0
    %1822 = vmatpush1.msra.mxu0 0.0
    %1823 = vmatprep.subr.mxu0 0.0
    %1824 = vmatpush1.msra.mxu0 0.0
    %1825 = vmatprep.subr.mxu0 0.0
    %1826 = vmatpush1.msra.mxu0 0.0
    %1827 = vmatprep.subr.mxu0 0.0
    %1828 = vmatpush1.msra.mxu0 0.0
    %1829 = vmatprep.subr.mxu0 0.0
    %1830 = vmatpush1.msra.mxu0 0.0
    %1831 = vmatprep.subr.mxu0 0.0
    %1832 = vmatpush1.msra.mxu0 0.0
    %1833 = vmatprep.subr.mxu0 0.0
    %1834 = vmatpush1.msra.mxu0 0.0
    %1835 = vmatprep.subr.mxu0 0.0
    %1836 = vmatpush1.msra.mxu0 %v101
    %1837 = vmatprep.subr.mxu0 0.0
    %1838 = vmatpush1.msra.mxu0 %v98
    %1839 = vmatprep.subr.mxu0 0.0
    %1840 = vmatpush1.msra.mxu0 %v95
    %1841 = vmatprep.subr.mxu0 0.0
    %1842 = vmatpush1.msra.mxu0 %v92
    %1843 = vmatprep.subr.mxu0 0.0
    %1844 = vmatpush2.msra.mxu0 0.0
    %1845 = vmatprep.subr.mxu0 0.0
    %1846 = vmatpush2.msra.mxu0 0.0
    %1847 = vmatprep.subr.mxu0 0.0
    %1848 = vmatpush2.msra.mxu0 0.0
    %1849 = vmatprep.subr.mxu0 0.0
    %1850 = vmatpush2.msra.mxu0 0.0
    %1851 = vmatprep.subr.mxu0 0.0
    %1852 = vmatpush2.msra.mxu0 0.0
    %1853 = vmatprep.subr.mxu0 0.0
    %1854 = vmatpush2.msra.mxu0 0.0
    %1855 = vmatprep.subr.mxu0 0.0
    %1856 = vmatpush2.msra.mxu0 0.0
    %1857 = vmatprep.subr.mxu0 0.0
    %1858 = vmatpush2.msra.mxu0 0.0
    %1859 = vmatprep.subr.mxu0 0.0
    %1860 = vmatpush2.msra.mxu0 0.0
    %1861 = vmatprep.subr.mxu0 0.0
    %1862 = vmatpush2.msra.mxu0 0.0
    %1863 = vmatprep.subr.mxu0 0.0
    %1864 = vmatpush2.msra.mxu0 0.0
    %1865 = vmatprep.subr.mxu0 0.0
    %1866 = vmatpush2.msra.mxu0 0.0
    %1867 = vmatprep.subr.mxu0 0.0
    %1868 = vmatpush2.msra.mxu0 0.0
    %1869 = vmatprep.subr.mxu0 0.0
    %1870 = vmatpush2.msra.mxu0 0.0
    %1871 = vmatprep.subr.mxu0 0.0
    %1872 = vmatpush2.msra.mxu0 0.0
    %1873 = vmatprep.subr.mxu0 0.0
    %1874 = vmatpush2.msra.mxu0 0.0
    %1875 = vmatprep.mubr.f32.mxu0 0.0
    %1876 = vmatmul.mubr.f32.gmra.mxu0 %v1738
    %v1877 = vpop.f32.mrf.mxu0
    %v1878 = vadd.f32 0.0, %v1877
    %v1879 = vpop.f32.mrf.mxu0
    %1880 = vdwg.mxu0
    %v1881 = vadd.f32 %v1663, %v1807
    %v1882 = vadd.f32 %v1665, %v1809
    %v1883 = vxor.u32 %v1881, 2147483648
    %v1884 = vxor.u32 %v1882, 2147483648
    %v1885 = vmul.f32 %v1883, 1.442695
    %v1886 = vpow.pop %v1885
    %v1887 = vmul.f32 %v1884, 1.442695
    %v1888 = vpow.pop %v1887
    %v1889 = vadd.f32 %v1886, 1.0
    %v1890 = vadd.f32 %v1888, 1.0
    %v1891 = vrcp.pop %v1889
    %v1892 = vmul.f32 1.0, %v1891
    %v1893 = vrcp.pop %v1890
    %v1894 = vmul.f32 1.0, %v1893
    %v1895 = vadd.f32 %v1878, %v912
    %v1896 = vmul.f32 %v1892, %v1895
    %v1897 = vadd.f32 %v1734, %v1896
    %v1898 = vtanh.pop %v1897
    %v1899 = vmul.f32 %v1894, %v1411
    %v1900 = vsub.f32 1.0, %v1894
    %v1901 = vmul.f32 %v1900, %v1898
    %v1902 = vadd.f32 %v1899, %v1901
    %1903 = vmatprep.subr.mxu0 0.0
    %1904 = vmatpush1.msra.mxu0 0.0
    %1905 = vmatprep.subr.mxu0 0.0
    %1906 = vmatpush1.msra.mxu0 0.0
    %1907 = vmatprep.subr.mxu0 0.0
    %1908 = vmatpush1.msra.mxu0 0.0
    %1909 = vmatprep.subr.mxu0 0.0
    %1910 = vmatpush1.msra.mxu0 0.0
    %1911 = vmatprep.subr.mxu0 0.0
    %1912 = vmatpush1.msra.mxu0 0.0
    %1913 = vmatprep.subr.mxu0 0.0
    %1914 = vmatpush1.msra.mxu0 0.0
    %1915 = vmatprep.subr.mxu0 0.0
    %1916 = vmatpush1.msra.mxu0 0.0
    %1917 = vmatprep.subr.mxu0 0.0
    %1918 = vmatpush1.msra.mxu0 0.0
    %1919 = vmatprep.subr.mxu0 0.0
    %1920 = vmatpush1.msra.mxu0 0.0
    %1921 = vmatprep.subr.mxu0 0.0
    %1922 = vmatpush1.msra.mxu0 0.0
    %1923 = vmatprep.subr.mxu0 0.0
    %1924 = vmatpush1.msra.mxu0 0.0
    %1925 = vmatprep.subr.mxu0 0.0
    %1926 = vmatpush1.msra.mxu0 0.0
    %1927 = vmatprep.subr.mxu0 %v74
    %1928 = vmatpush1.msra.mxu0 %v73
    %1929 = vmatprep.subr.mxu0 %v71
    %1930 = vmatpush1.msra.mxu0 %v70
    %1931 = vmatprep.subr.mxu0 %v68
    %1932 = vmatpush1.msra.mxu0 %v67
    %1933 = vmatprep.subr.mxu0 %v65
    %1934 = vmatpush1.msra.mxu0 %v64
    %1935 = vmatprep.subr.mxu0 0.0
    %1936 = vmatpush2.msra.mxu0 0.0
    %1937 = vmatprep.subr.mxu0 0.0
    %1938 = vmatpush2.msra.mxu0 0.0
    %1939 = vmatprep.subr.mxu0 0.0
    %1940 = vmatpush2.msra.mxu0 0.0
    %1941 = vmatprep.subr.mxu0 0.0
    %1942 = vmatpush2.msra.mxu0 0.0
    %1943 = vmatprep.subr.mxu0 0.0
    %1944 = vmatpush2.msra.mxu0 0.0
    %1945 = vmatprep.subr.mxu0 0.0
    %1946 = vmatpush2.msra.mxu0 0.0
    %1947 = vmatprep.subr.mxu0 0.0
    %1948 = vmatpush2.msra.mxu0 0.0
    %1949 = vmatprep.subr.mxu0 0.0
    %1950 = vmatpush2.msra.mxu0 0.0
    %1951 = vmatprep.subr.mxu0 0.0
    %1952 = vmatpush2.msra.mxu0 0.0
    %1953 = vmatprep.subr.mxu0 0.0
    %1954 = vmatpush2.msra.mxu0 0.0
    %1955 = vmatprep.subr.mxu0 0.0
    %1956 = vmatpush2.msra.mxu0 0.0
    %1957 = vmatprep.subr.mxu0 0.0
    %1958 = vmatpush2.msra.mxu0 0.0
    %1959 = vmatprep.subr.mxu0 0.0
    %1960 = vmatpush2.msra.mxu0 0.0
    %1961 = vmatprep.subr.mxu0 0.0
    %1962 = vmatpush2.msra.mxu0 0.0
    %1963 = vmatprep.subr.mxu0 0.0
    %1964 = vmatpush2.msra.mxu0 0.0
    %1965 = vmatprep.subr.mxu0 0.0
    %1966 = vmatpush2.msra.mxu0 0.0
    %1967 = vmatprep.mubr.f32.mxu0 0.0
    %1968 = vmatmul.mubr.f32.gmra.mxu0 %v1594
    %v1969 = vpop.f32.mrf.mxu0
    %v1970 = vadd.f32 0.0, %v1969
    %v1971 = vpop.f32.mrf.mxu0
    %v1972 = vadd.f32 0.0, %v1971
    %1973 = vdwg.mxu0
    %1974 = vmatprep.subr.mxu0 0.0
    %1975 = vmatpush1.msra.mxu0 0.0
    %1976 = vmatprep.subr.mxu0 0.0
    %1977 = vmatpush1.msra.mxu0 0.0
    %1978 = vmatprep.subr.mxu0 0.0
    %1979 = vmatpush1.msra.mxu0 0.0
    %1980 = vmatprep.subr.mxu0 0.0
    %1981 = vmatpush1.msra.mxu0 0.0
    %1982 = vmatprep.subr.mxu0 0.0
    %1983 = vmatpush1.msra.mxu0 0.0
    %1984 = vmatprep.subr.mxu0 0.0
    %1985 = vmatpush1.msra.mxu0 0.0
    %1986 = vmatprep.subr.mxu0 0.0
    %1987 = vmatpush1.msra.mxu0 0.0
    %1988 = vmatprep.subr.mxu0 0.0
    %1989 = vmatpush1.msra.mxu0 0.0
    %1990 = vmatprep.subr.mxu0 0.0
    %1991 = vmatpush1.msra.mxu0 0.0
    %1992 = vmatprep.subr.mxu0 0.0
    %1993 = vmatpush1.msra.mxu0 0.0
    %1994 = vmatprep.subr.mxu0 0.0
    %1995 = vmatpush1.msra.mxu0 0.0
    %1996 = vmatprep.subr.mxu0 0.0
    %1997 = vmatpush1.msra.mxu0 0.0
    %1998 = vmatprep.subr.mxu0 0.0
    %1999 = vmatpush1.msra.mxu0 %v75
    %2000 = vmatprep.subr.mxu0 0.0
    %2001 = vmatpush1.msra.mxu0 %v72
    %2002 = vmatprep.subr.mxu0 0.0
    %2003 = vmatpush1.msra.mxu0 %v69
    %2004 = vmatprep.subr.mxu0 0.0
    %2005 = vmatpush1.msra.mxu0 %v66
    %2006 = vmatprep.subr.mxu0 0.0
    %2007 = vmatpush2.msra.mxu0 0.0
    %2008 = vmatprep.subr.mxu0 0.0
    %2009 = vmatpush2.msra.mxu0 0.0
    %2010 = vmatprep.subr.mxu0 0.0
    %2011 = vmatpush2.msra.mxu0 0.0
    %2012 = vmatprep.subr.mxu0 0.0
    %2013 = vmatpush2.msra.mxu0 0.0
    %2014 = vmatprep.subr.mxu0 0.0
    %2015 = vmatpush2.msra.mxu0 0.0
    %2016 = vmatprep.subr.mxu0 0.0
    %2017 = vmatpush2.msra.mxu0 0.0
    %2018 = vmatprep.subr.mxu0 0.0
    %2019 = vmatpush2.msra.mxu0 0.0
    %2020 = vmatprep.subr.mxu0 0.0
    %2021 = vmatpush2.msra.mxu0 0.0
    %2022 = vmatprep.subr.mxu0 0.0
    %2023 = vmatpush2.msra.mxu0 0.0
    %2024 = vmatprep.subr.mxu0 0.0
    %2025 = vmatpush2.msra.mxu0 0.0
    %2026 = vmatprep.subr.mxu0 0.0
    %2027 = vmatpush2.msra.mxu0 0.0
    %2028 = vmatprep.subr.mxu0 0.0
    %2029 = vmatpush2.msra.mxu0 0.0
    %2030 = vmatprep.subr.mxu0 0.0
    %2031 = vmatpush2.msra.mxu0 0.0
    %2032 = vmatprep.subr.mxu0 0.0
    %2033 = vmatpush2.msra.mxu0 0.0
    %2034 = vmatprep.subr.mxu0 0.0
    %2035 = vmatpush2.msra.mxu0 0.0
    %2036 = vmatprep.subr.mxu0 0.0
    %2037 = vmatpush2.msra.mxu0 0.0
    %2038 = vmatprep.mubr.f32.mxu0 0.0
    %2039 = vmatmul.mubr.f32.gmra.mxu0 %v1594
    %v2040 = vpop.f32.mrf.mxu0
    %v2041 = vadd.f32 0.0, %v2040
    %v2042 = vpop.f32.mrf.mxu0
    %2043 = vdwg.mxu0
    %v2047 = vcombine.low %v1970, %v1972
    %v2049 = vunpack.c.l.s4 1983009808
    %v2050 = vunpack.c.0.s8 %v2049
    %v2051 = vlaneseq
    %v2052 = vshrl.u32 %v2051, 7
    %v2053 = vsub.s32 %v2050, %v2052
    %v2054 = vrot.slane %v2047, %v2053
    %v2056 = vunpack.c.l.s4 1983009808
    %v2057 = vunpack.c.0.s8 %v2056
    %v2058 = vlaneseq
    %v2059 = vshrl.u32 %v2058, 7
    %v2060 = vsub.s32 %v2057, %v2059
    %v2061 = vrot.slane %v2041, %v2060
    %v2062 = vcombine.low %v2054, %v2061
    %v2064 = vadd.f32 %v362, %v2062
    %v2065 = vxor.u32 %v2064, 2147483648
    %v2066 = vmul.f32 %v2065, 1.442695
    %v2067 = vpow.pop %v2066
    %v2068 = vadd.f32 %v2067, 1.0
    %v2069 = vrcp.pop %v2068
    %v2070 = vmul.f32 1.0, %v2069
    %v2071 = vadd.f32 %v2041, %v580
    %v2072 = vmul.f32 %v2070, %v2071
    %v2073 = vrot.slane %v362, 4
    %v2075 = vadd.f32 %v2073, %v2072
    %v2076 = vtanh.pop %v2075
    %v2078 = vrot.slane %v2070, 2
    %v2080 = vmul.f32 %v2078, %v1592
    %v2081 = vsub.f32 1.0, %v2078
    %v2082 = vmul.f32 %v2081, %v2076
    %v2083 = vadd.f32 %v2080, %v2082
    %v2085 = vsel %vm165, %v2083, 0
    %2087 = vmatprep.subr.mxu0 0.0
    %2088 = vmatpush1.msra.mxu0 0.0
    %2089 = vmatprep.subr.mxu0 0.0
    %2090 = vmatpush1.msra.mxu0 0.0
    %2091 = vmatprep.subr.mxu0 0.0
    %2092 = vmatpush1.msra.mxu0 0.0
    %2093 = vmatprep.subr.mxu0 0.0
    %2094 = vmatpush1.msra.mxu0 0.0
    %2095 = vmatprep.subr.mxu0 0.0
    %2096 = vmatpush1.msra.mxu0 0.0
    %2097 = vmatprep.subr.mxu0 0.0
    %2098 = vmatpush1.msra.mxu0 0.0
    %2099 = vmatprep.subr.mxu0 0.0
    %2100 = vmatpush1.msra.mxu0 0.0
    %2101 = vmatprep.subr.mxu0 0.0
    %2102 = vmatpush1.msra.mxu0 0.0
    %2103 = vmatprep.subr.mxu0 0.0
    %2104 = vmatpush1.msra.mxu0 0.0
    %2105 = vmatprep.subr.mxu0 0.0
    %2106 = vmatpush1.msra.mxu0 0.0
    %2107 = vmatprep.subr.mxu0 0.0
    %2108 = vmatpush1.msra.mxu0 0.0
    %2109 = vmatprep.subr.mxu0 0.0
    %2110 = vmatpush1.msra.mxu0 0.0
    %2111 = vmatprep.subr.mxu0 %v87
    %2112 = vmatpush1.msra.mxu0 %v86
    %2113 = vmatprep.subr.mxu0 %v84
    %2114 = vmatpush1.msra.mxu0 %v83
    %2115 = vmatprep.subr.mxu0 %v81
    %2116 = vmatpush1.msra.mxu0 %v80
    %2117 = vmatprep.subr.mxu0 %v78
    %2118 = vmatpush1.msra.mxu0 %v77
    %2119 = vmatprep.subr.mxu0 0.0
    %2120 = vmatpush2.msra.mxu0 0.0
    %2121 = vmatprep.subr.mxu0 0.0
    %2122 = vmatpush2.msra.mxu0 0.0
    %2123 = vmatprep.subr.mxu0 0.0
    %2124 = vmatpush2.msra.mxu0 0.0
    %2125 = vmatprep.subr.mxu0 0.0
    %2126 = vmatpush2.msra.mxu0 0.0
    %2127 = vmatprep.subr.mxu0 0.0
    %2128 = vmatpush2.msra.mxu0 0.0
    %2129 = vmatprep.subr.mxu0 0.0
    %2130 = vmatpush2.msra.mxu0 0.0
    %2131 = vmatprep.subr.mxu0 0.0
    %2132 = vmatpush2.msra.mxu0 0.0
    %2133 = vmatprep.subr.mxu0 0.0
    %2134 = vmatpush2.msra.mxu0 0.0
    %2135 = vmatprep.subr.mxu0 0.0
    %2136 = vmatpush2.msra.mxu0 0.0
    %2137 = vmatprep.subr.mxu0 0.0
    %2138 = vmatpush2.msra.mxu0 0.0
    %2139 = vmatprep.subr.mxu0 0.0
    %2140 = vmatpush2.msra.mxu0 0.0
    %2141 = vmatprep.subr.mxu0 0.0
    %2142 = vmatpush2.msra.mxu0 0.0
    %2143 = vmatprep.subr.mxu0 0.0
    %2144 = vmatpush2.msra.mxu0 0.0
    %2145 = vmatprep.subr.mxu0 0.0
    %2146 = vmatpush2.msra.mxu0 0.0
    %2147 = vmatprep.subr.mxu0 0.0
    %2148 = vmatpush2.msra.mxu0 0.0
    %2149 = vmatprep.subr.mxu0 0.0
    %2150 = vmatpush2.msra.mxu0 0.0
    %2151 = vmatprep.mubr.f32.mxu0 0.0
    %2152 = vmatmul.mubr.f32.gmra.mxu0 %v2085
    %v2153 = vpop.f32.mrf.mxu0
    %v2154 = vadd.f32 %v598, %v2153
    %v2155 = vpop.f32.mrf.mxu0
    %v2156 = vadd.f32 %v602, %v2155
    %2157 = vdwg.mxu0
    %2158 = vmatprep.subr.mxu0 0.0
    %2159 = vmatpush1.msra.mxu0 0.0
    %2160 = vmatprep.subr.mxu0 0.0
    %2161 = vmatpush1.msra.mxu0 0.0
    %2162 = vmatprep.subr.mxu0 0.0
    %2163 = vmatpush1.msra.mxu0 0.0
    %2164 = vmatprep.subr.mxu0 0.0
    %2165 = vmatpush1.msra.mxu0 0.0
    %2166 = vmatprep.subr.mxu0 0.0
    %2167 = vmatpush1.msra.mxu0 0.0
    %2168 = vmatprep.subr.mxu0 0.0
    %2169 = vmatpush1.msra.mxu0 0.0
    %2170 = vmatprep.subr.mxu0 0.0
    %2171 = vmatpush1.msra.mxu0 0.0
    %2172 = vmatprep.subr.mxu0 0.0
    %2173 = vmatpush1.msra.mxu0 0.0
    %2174 = vmatprep.subr.mxu0 0.0
    %2175 = vmatpush1.msra.mxu0 0.0
    %2176 = vmatprep.subr.mxu0 0.0
    %2177 = vmatpush1.msra.mxu0 0.0
    %2178 = vmatprep.subr.mxu0 0.0
    %2179 = vmatpush1.msra.mxu0 0.0
    %2180 = vmatprep.subr.mxu0 0.0
    %2181 = vmatpush1.msra.mxu0 0.0
    %2182 = vmatprep.subr.mxu0 0.0
    %2183 = vmatpush1.msra.mxu0 %v88
    %2184 = vmatprep.subr.mxu0 0.0
    %2185 = vmatpush1.msra.mxu0 %v85
    %2186 = vmatprep.subr.mxu0 0.0
    %2187 = vmatpush1.msra.mxu0 %v82
    %2188 = vmatprep.subr.mxu0 0.0
    %2189 = vmatpush1.msra.mxu0 %v79
    %2190 = vmatprep.subr.mxu0 0.0
    %2191 = vmatpush2.msra.mxu0 0.0
    %2192 = vmatprep.subr.mxu0 0.0
    %2193 = vmatpush2.msra.mxu0 0.0
    %2194 = vmatprep.subr.mxu0 0.0
    %2195 = vmatpush2.msra.mxu0 0.0
    %2196 = vmatprep.subr.mxu0 0.0
    %2197 = vmatpush2.msra.mxu0 0.0
    %2198 = vmatprep.subr.mxu0 0.0
    %2199 = vmatpush2.msra.mxu0 0.0
    %2200 = vmatprep.subr.mxu0 0.0
    %2201 = vmatpush2.msra.mxu0 0.0
    %2202 = vmatprep.subr.mxu0 0.0
    %2203 = vmatpush2.msra.mxu0 0.0
    %2204 = vmatprep.subr.mxu0 0.0
    %2205 = vmatpush2.msra.mxu0 0.0
    %2206 = vmatprep.subr.mxu0 0.0
    %2207 = vmatpush2.msra.mxu0 0.0
    %2208 = vmatprep.subr.mxu0 0.0
    %2209 = vmatpush2.msra.mxu0 0.0
    %2210 = vmatprep.subr.mxu0 0.0
    %2211 = vmatpush2.msra.mxu0 0.0
    %2212 = vmatprep.subr.mxu0 0.0
    %2213 = vmatpush2.msra.mxu0 0.0
    %2214 = vmatprep.subr.mxu0 0.0
    %2215 = vmatpush2.msra.mxu0 0.0
    %2216 = vmatprep.subr.mxu0 0.0
    %2217 = vmatpush2.msra.mxu0 0.0
    %2218 = vmatprep.subr.mxu0 0.0
    %2219 = vmatpush2.msra.mxu0 0.0
    %2220 = vmatprep.subr.mxu0 0.0
    %2221 = vmatpush2.msra.mxu0 0.0
    %2222 = vmatprep.mubr.f32.mxu0 0.0
    %2223 = vmatmul.mubr.f32.gmra.mxu0 %v2085
    %v2224 = vpop.f32.mrf.mxu0
    %v2225 = vadd.f32 %v606, %v2224
    %v2226 = vpop.f32.mrf.mxu0
    %2227 = vdwg.mxu0
    %v2229 = vsel %vm165, %v1902, 0
    %2231 = vmatprep.subr.mxu0 0.0
    %2232 = vmatpush1.msra.mxu0 0.0
    %2233 = vmatprep.subr.mxu0 0.0
    %2234 = vmatpush1.msra.mxu0 0.0
    %2235 = vmatprep.subr.mxu0 0.0
    %2236 = vmatpush1.msra.mxu0 0.0
    %2237 = vmatprep.subr.mxu0 0.0
    %2238 = vmatpush1.msra.mxu0 0.0
    %2239 = vmatprep.subr.mxu0 0.0
    %2240 = vmatpush1.msra.mxu0 0.0
    %2241 = vmatprep.subr.mxu0 0.0
    %2242 = vmatpush1.msra.mxu0 0.0
    %2243 = vmatprep.subr.mxu0 0.0
    %2244 = vmatpush1.msra.mxu0 0.0
    %2245 = vmatprep.subr.mxu0 0.0
    %2246 = vmatpush1.msra.mxu0 0.0
    %2247 = vmatprep.subr.mxu0 0.0
    %2248 = vmatpush1.msra.mxu0 0.0
    %2249 = vmatprep.subr.mxu0 0.0
    %2250 = vmatpush1.msra.mxu0 0.0
    %2251 = vmatprep.subr.mxu0 0.0
    %2252 = vmatpush1.msra.mxu0 0.0
    %2253 = vmatprep.subr.mxu0 0.0
    %2254 = vmatpush1.msra.mxu0 0.0
    %2255 = vmatprep.subr.mxu0 %v100
    %2256 = vmatpush1.msra.mxu0 %v99
    %2257 = vmatprep.subr.mxu0 %v97
    %2258 = vmatpush1.msra.mxu0 %v96
    %2259 = vmatprep.subr.mxu0 %v94
    %2260 = vmatpush1.msra.mxu0 %v93
    %2261 = vmatprep.subr.mxu0 %v91
    %2262 = vmatpush1.msra.mxu0 %v90
    %2263 = vmatprep.subr.mxu0 0.0
    %2264 = vmatpush2.msra.mxu0 0.0
    %2265 = vmatprep.subr.mxu0 0.0
    %2266 = vmatpush2.msra.mxu0 0.0
    %2267 = vmatprep.subr.mxu0 0.0
    %2268 = vmatpush2.msra.mxu0 0.0
    %2269 = vmatprep.subr.mxu0 0.0
    %2270 = vmatpush2.msra.mxu0 0.0
    %2271 = vmatprep.subr.mxu0 0.0
    %2272 = vmatpush2.msra.mxu0 0.0
    %2273 = vmatprep.subr.mxu0 0.0
    %2274 = vmatpush2.msra.mxu0 0.0
    %2275 = vmatprep.subr.mxu0 0.0
    %2276 = vmatpush2.msra.mxu0 0.0
    %2277 = vmatprep.subr.mxu0 0.0
    %2278 = vmatpush2.msra.mxu0 0.0
    %2279 = vmatprep.subr.mxu0 0.0
    %2280 = vmatpush2.msra.mxu0 0.0
    %2281 = vmatprep.subr.mxu0 0.0
    %2282 = vmatpush2.msra.mxu0 0.0
    %2283 = vmatprep.subr.mxu0 0.0
    %2284 = vmatpush2.msra.mxu0 0.0
    %2285 = vmatprep.subr.mxu0 0.0
    %2286 = vmatpush2.msra.mxu0 0.0
    %2287 = vmatprep.subr.mxu0 0.0
    %2288 = vmatpush2.msra.mxu0 0.0
    %2289 = vmatprep.subr.mxu0 0.0
    %2290 = vmatpush2.msra.mxu0 0.0
    %2291 = vmatprep.subr.mxu0 0.0
    %2292 = vmatpush2.msra.mxu0 0.0
    %2293 = vmatprep.subr.mxu0 0.0
    %2294 = vmatpush2.msra.mxu0 0.0
    %2295 = vmatprep.mubr.f32.mxu0 0.0
    %2296 = vmatmul.mubr.f32.gmra.mxu0 %v2229
    %v2297 = vpop.f32.mrf.mxu0
    %v2298 = vadd.f32 0.0, %v2297
    %v2299 = vpop.f32.mrf.mxu0
    %v2300 = vadd.f32 0.0, %v2299
    %2301 = vdwg.mxu0
    %2302 = vmatprep.subr.mxu0 0.0
    %2303 = vmatpush1.msra.mxu0 0.0
    %2304 = vmatprep.subr.mxu0 0.0
    %2305 = vmatpush1.msra.mxu0 0.0
    %2306 = vmatprep.subr.mxu0 0.0
    %2307 = vmatpush1.msra.mxu0 0.0
    %2308 = vmatprep.subr.mxu0 0.0
    %2309 = vmatpush1.msra.mxu0 0.0
    %2310 = vmatprep.subr.mxu0 0.0
    %2311 = vmatpush1.msra.mxu0 0.0
    %2312 = vmatprep.subr.mxu0 0.0
    %2313 = vmatpush1.msra.mxu0 0.0
    %2314 = vmatprep.subr.mxu0 0.0
    %2315 = vmatpush1.msra.mxu0 0.0
    %2316 = vmatprep.subr.mxu0 0.0
    %2317 = vmatpush1.msra.mxu0 0.0
    %2318 = vmatprep.subr.mxu0 0.0
    %2319 = vmatpush1.msra.mxu0 0.0
    %2320 = vmatprep.subr.mxu0 0.0
    %2321 = vmatpush1.msra.mxu0 0.0
    %2322 = vmatprep.subr.mxu0 0.0
    %2323 = vmatpush1.msra.mxu0 0.0
    %2324 = vmatprep.subr.mxu0 0.0
    %2325 = vmatpush1.msra.mxu0 0.0
    %2326 = vmatprep.subr.mxu0 0.0
    %2327 = vmatpush1.msra.mxu0 %v101
    %2328 = vmatprep.subr.mxu0 0.0
    %2329 = vmatpush1.msra.mxu0 %v98
    %2330 = vmatprep.subr.mxu0 0.0
    %2331 = vmatpush1.msra.mxu0 %v95
    %2332 = vmatprep.subr.mxu0 0.0
    %2333 = vmatpush1.msra.mxu0 %v92
    %2334 = vmatprep.subr.mxu0 0.0
    %2335 = vmatpush2.msra.mxu0 0.0
    %2336 = vmatprep.subr.mxu0 0.0
    %2337 = vmatpush2.msra.mxu0 0.0
    %2338 = vmatprep.subr.mxu0 0.0
    %2339 = vmatpush2.msra.mxu0 0.0
    %2340 = vmatprep.subr.mxu0 0.0
    %2341 = vmatpush2.msra.mxu0 0.0
    %2342 = vmatprep.subr.mxu0 0.0
    %2343 = vmatpush2.msra.mxu0 0.0
    %2344 = vmatprep.subr.mxu0 0.0
    %2345 = vmatpush2.msra.mxu0 0.0
    %2346 = vmatprep.subr.mxu0 0.0
    %2347 = vmatpush2.msra.mxu0 0.0
    %2348 = vmatprep.subr.mxu0 0.0
    %2349 = vmatpush2.msra.mxu0 0.0
    %2350 = vmatprep.subr.mxu0 0.0
    %2351 = vmatpush2.msra.mxu0 0.0
    %2352 = vmatprep.subr.mxu0 0.0
    %2353 = vmatpush2.msra.mxu0 0.0
    %2354 = vmatprep.subr.mxu0 0.0
    %2355 = vmatpush2.msra.mxu0 0.0
    %2356 = vmatprep.subr.mxu0 0.0
    %2357 = vmatpush2.msra.mxu0 0.0
    %2358 = vmatprep.subr.mxu0 0.0
    %2359 = vmatpush2.msra.mxu0 0.0
    %2360 = vmatprep.subr.mxu0 0.0
    %2361 = vmatpush2.msra.mxu0 0.0
    %2362 = vmatprep.subr.mxu0 0.0
    %2363 = vmatpush2.msra.mxu0 0.0
    %2364 = vmatprep.subr.mxu0 0.0
    %2365 = vmatpush2.msra.mxu0 0.0
    %2366 = vmatprep.mubr.f32.mxu0 0.0
    %2367 = vmatmul.mubr.f32.gmra.mxu0 %v2229
    %v2368 = vpop.f32.mrf.mxu0
    %v2369 = vadd.f32 0.0, %v2368
    %v2370 = vpop.f32.mrf.mxu0
    %2371 = vdwg.mxu0
    %v2372 = vadd.f32 %v2154, %v2298
    %v2373 = vadd.f32 %v2156, %v2300
    %v2374 = vxor.u32 %v2372, 2147483648
    %v2375 = vxor.u32 %v2373, 2147483648
    %v2376 = vmul.f32 %v2374, 1.442695
    %v2377 = vpow.pop %v2376
    %v2378 = vmul.f32 %v2375, 1.442695
    %v2379 = vpow.pop %v2378
    %v2380 = vadd.f32 %v2377, 1.0
    %v2381 = vadd.f32 %v2379, 1.0
    %v2382 = vrcp.pop %v2380
    %v2383 = vmul.f32 1.0, %v2382
    %v2384 = vrcp.pop %v2381
    %v2385 = vmul.f32 1.0, %v2384
    %v2386 = vadd.f32 %v2369, %v912
    %v2387 = vmul.f32 %v2383, %v2386
    %v2388 = vadd.f32 %v2225, %v2387
    %v2389 = vtanh.pop %v2388
    %v2390 = vmul.f32 %v2385, %v1902
    %v2391 = vsub.f32 1.0, %v2385
    %v2392 = vmul.f32 %v2391, %v2389
    %v2393 = vadd.f32 %v2390, %v2392
    %2394 = vmatprep.subr.mxu0 0.0
    %2395 = vmatpush1.msra.mxu0 0.0
    %2396 = vmatprep.subr.mxu0 0.0
    %2397 = vmatpush1.msra.mxu0 0.0
    %2398 = vmatprep.subr.mxu0 0.0
    %2399 = vmatpush1.msra.mxu0 0.0
    %2400 = vmatprep.subr.mxu0 0.0
    %2401 = vmatpush1.msra.mxu0 0.0
    %2402 = vmatprep.subr.mxu0 0.0
    %2403 = vmatpush1.msra.mxu0 0.0
    %2404 = vmatprep.subr.mxu0 0.0
    %2405 = vmatpush1.msra.mxu0 0.0
    %2406 = vmatprep.subr.mxu0 0.0
    %2407 = vmatpush1.msra.mxu0 0.0
    %2408 = vmatprep.subr.mxu0 0.0
    %2409 = vmatpush1.msra.mxu0 0.0
    %2410 = vmatprep.subr.mxu0 0.0
    %2411 = vmatpush1.msra.mxu0 0.0
    %2412 = vmatprep.subr.mxu0 0.0
    %2413 = vmatpush1.msra.mxu0 0.0
    %2414 = vmatprep.subr.mxu0 0.0
    %2415 = vmatpush1.msra.mxu0 0.0
    %2416 = vmatprep.subr.mxu0 0.0
    %2417 = vmatpush1.msra.mxu0 0.0
    %2418 = vmatprep.subr.mxu0 %v74
    %2419 = vmatpush1.msra.mxu0 %v73
    %2420 = vmatprep.subr.mxu0 %v71
    %2421 = vmatpush1.msra.mxu0 %v70
    %2422 = vmatprep.subr.mxu0 %v68
    %2423 = vmatpush1.msra.mxu0 %v67
    %2424 = vmatprep.subr.mxu0 %v65
    %2425 = vmatpush1.msra.mxu0 %v64
    %2426 = vmatprep.subr.mxu0 0.0
    %2427 = vmatpush2.msra.mxu0 0.0
    %2428 = vmatprep.subr.mxu0 0.0
    %2429 = vmatpush2.msra.mxu0 0.0
    %2430 = vmatprep.subr.mxu0 0.0
    %2431 = vmatpush2.msra.mxu0 0.0
    %2432 = vmatprep.subr.mxu0 0.0
    %2433 = vmatpush2.msra.mxu0 0.0
    %2434 = vmatprep.subr.mxu0 0.0
    %2435 = vmatpush2.msra.mxu0 0.0
    %2436 = vmatprep.subr.mxu0 0.0
    %2437 = vmatpush2.msra.mxu0 0.0
    %2438 = vmatprep.subr.mxu0 0.0
    %2439 = vmatpush2.msra.mxu0 0.0
    %2440 = vmatprep.subr.mxu0 0.0
    %2441 = vmatpush2.msra.mxu0 0.0
    %2442 = vmatprep.subr.mxu0 0.0
    %2443 = vmatpush2.msra.mxu0 0.0
    %2444 = vmatprep.subr.mxu0 0.0
    %2445 = vmatpush2.msra.mxu0 0.0
    %2446 = vmatprep.subr.mxu0 0.0
    %2447 = vmatpush2.msra.mxu0 0.0
    %2448 = vmatprep.subr.mxu0 0.0
    %2449 = vmatpush2.msra.mxu0 0.0
    %2450 = vmatprep.subr.mxu0 0.0
    %2451 = vmatpush2.msra.mxu0 0.0
    %2452 = vmatprep.subr.mxu0 0.0
    %2453 = vmatpush2.msra.mxu0 0.0
    %2454 = vmatprep.subr.mxu0 0.0
    %2455 = vmatpush2.msra.mxu0 0.0
    %2456 = vmatprep.subr.mxu0 0.0
    %2457 = vmatpush2.msra.mxu0 0.0
    %2458 = vmatprep.mubr.f32.mxu0 0.0
    %2459 = vmatmul.mubr.f32.gmra.mxu0 %v2085
    %v2460 = vpop.f32.mrf.mxu0
    %v2461 = vadd.f32 0.0, %v2460
    %v2462 = vpop.f32.mrf.mxu0
    %v2463 = vadd.f32 0.0, %v2462
    %2464 = vdwg.mxu0
    %2465 = vmatprep.subr.mxu0 0.0
    %2466 = vmatpush1.msra.mxu0 0.0
    %2467 = vmatprep.subr.mxu0 0.0
    %2468 = vmatpush1.msra.mxu0 0.0
    %2469 = vmatprep.subr.mxu0 0.0
    %2470 = vmatpush1.msra.mxu0 0.0
    %2471 = vmatprep.subr.mxu0 0.0
    %2472 = vmatpush1.msra.mxu0 0.0
    %2473 = vmatprep.subr.mxu0 0.0
    %2474 = vmatpush1.msra.mxu0 0.0
    %2475 = vmatprep.subr.mxu0 0.0
    %2476 = vmatpush1.msra.mxu0 0.0
    %2477 = vmatprep.subr.mxu0 0.0
    %2478 = vmatpush1.msra.mxu0 0.0
    %2479 = vmatprep.subr.mxu0 0.0
    %2480 = vmatpush1.msra.mxu0 0.0
    %2481 = vmatprep.subr.mxu0 0.0
    %2482 = vmatpush1.msra.mxu0 0.0
    %2483 = vmatprep.subr.mxu0 0.0
    %2484 = vmatpush1.msra.mxu0 0.0
    %2485 = vmatprep.subr.mxu0 0.0
    %2486 = vmatpush1.msra.mxu0 0.0
    %2487 = vmatprep.subr.mxu0 0.0
    %2488 = vmatpush1.msra.mxu0 0.0
    %2489 = vmatprep.subr.mxu0 0.0
    %2490 = vmatpush1.msra.mxu0 %v75
    %2491 = vmatprep.subr.mxu0 0.0
    %2492 = vmatpush1.msra.mxu0 %v72
    %2493 = vmatprep.subr.mxu0 0.0
    %2494 = vmatpush1.msra.mxu0 %v69
    %2495 = vmatprep.subr.mxu0 0.0
    %2496 = vmatpush1.msra.mxu0 %v66
    %2497 = vmatprep.subr.mxu0 0.0
    %2498 = vmatpush2.msra.mxu0 0.0
    %2499 = vmatprep.subr.mxu0 0.0
    %2500 = vmatpush2.msra.mxu0 0.0
    %2501 = vmatprep.subr.mxu0 0.0
    %2502 = vmatpush2.msra.mxu0 0.0
    %2503 = vmatprep.subr.mxu0 0.0
    %2504 = vmatpush2.msra.mxu0 0.0
    %2505 = vmatprep.subr.mxu0 0.0
    %2506 = vmatpush2.msra.mxu0 0.0
    %2507 = vmatprep.subr.mxu0 0.0
    %2508 = vmatpush2.msra.mxu0 0.0
    %2509 = vmatprep.subr.mxu0 0.0
    %2510 = vmatpush2.msra.mxu0 0.0
    %2511 = vmatprep.subr.mxu0 0.0
    %2512 = vmatpush2.msra.mxu0 0.0
    %2513 = vmatprep.subr.mxu0 0.0
    %2514 = vmatpush2.msra.mxu0 0.0
    %2515 = vmatprep.subr.mxu0 0.0
    %2516 = vmatpush2.msra.mxu0 0.0
    %2517 = vmatprep.subr.mxu0 0.0
    %2518 = vmatpush2.msra.mxu0 0.0
    %2519 = vmatprep.subr.mxu0 0.0
    %2520 = vmatpush2.msra.mxu0 0.0
    %2521 = vmatprep.subr.mxu0 0.0
    %2522 = vmatpush2.msra.mxu0 0.0
    %2523 = vmatprep.subr.mxu0 0.0
    %2524 = vmatpush2.msra.mxu0 0.0
    %2525 = vmatprep.subr.mxu0 0.0
    %2526 = vmatpush2.msra.mxu0 0.0
    %2527 = vmatprep.subr.mxu0 0.0
    %2528 = vmatpush2.msra.mxu0 0.0
    %2529 = vmatprep.mubr.f32.mxu0 0.0
    %2530 = vmatmul.mubr.f32.gmra.mxu0 %v2085
    %v2531 = vpop.f32.mrf.mxu0
    %v2532 = vadd.f32 0.0, %v2531
    %v2533 = vpop.f32.mrf.mxu0
    %2534 = vdwg.mxu0
    %v2538 = vcombine.low %v2461, %v2463
    %v2540 = vunpack.c.l.s4 1983009808
    %v2541 = vunpack.c.0.s8 %v2540
    %v2542 = vlaneseq
    %v2543 = vshrl.u32 %v2542, 7
    %v2544 = vsub.s32 %v2541, %v2543
    %v2545 = vrot.slane %v2538, %v2544
    %v2547 = vunpack.c.l.s4 1983009808
    %v2548 = vunpack.c.0.s8 %v2547
    %v2549 = vlaneseq
    %v2550 = vshrl.u32 %v2549, 7
    %v2551 = vsub.s32 %v2548, %v2550
    %v2552 = vrot.slane %v2532, %v2551
    %v2553 = vcombine.low %v2545, %v2552
    %v2555 = vadd.f32 %v394, %v2553
    %v2556 = vxor.u32 %v2555, 2147483648
    %v2557 = vmul.f32 %v2556, 1.442695
    %v2558 = vpow.pop %v2557
    %v2559 = vadd.f32 %v2558, 1.0
    %v2560 = vrcp.pop %v2559
    %v2561 = vmul.f32 1.0, %v2560
    %v2562 = vadd.f32 %v2532, %v580
    %v2563 = vmul.f32 %v2561, %v2562
    %v2564 = vrot.slane %v394, 4
    %v2566 = vadd.f32 %v2564, %v2563
    %v2567 = vtanh.pop %v2566
    %v2569 = vrot.slane %v2561, 2
    %v2571 = vmul.f32 %v2569, %v2083
    %v2572 = vsub.f32 1.0, %v2569
    %v2573 = vmul.f32 %v2572, %v2567
    %v2574 = vadd.f32 %v2571, %v2573
    %v2576 = vsel %vm165, %v2574, 0
    %2578 = vmatprep.subr.mxu0 0.0
    %2579 = vmatpush1.msra.mxu0 0.0
    %2580 = vmatprep.subr.mxu0 0.0
    %2581 = vmatpush1.msra.mxu0 0.0
    %2582 = vmatprep.subr.mxu0 0.0
    %2583 = vmatpush1.msra.mxu0 0.0
    %2584 = vmatprep.subr.mxu0 0.0
    %2585 = vmatpush1.msra.mxu0 0.0
    %2586 = vmatprep.subr.mxu0 0.0
    %2587 = vmatpush1.msra.mxu0 0.0
    %2588 = vmatprep.subr.mxu0 0.0
    %2589 = vmatpush1.msra.mxu0 0.0
    %2590 = vmatprep.subr.mxu0 0.0
    %2591 = vmatpush1.msra.mxu0 0.0
    %2592 = vmatprep.subr.mxu0 0.0
    %2593 = vmatpush1.msra.mxu0 0.0
    %2594 = vmatprep.subr.mxu0 0.0
    %2595 = vmatpush1.msra.mxu0 0.0
    %2596 = vmatprep.subr.mxu0 0.0
    %2597 = vmatpush1.msra.mxu0 0.0
    %2598 = vmatprep.subr.mxu0 0.0
    %2599 = vmatpush1.msra.mxu0 0.0
    %2600 = vmatprep.subr.mxu0 0.0
    %2601 = vmatpush1.msra.mxu0 0.0
    %2602 = vmatprep.subr.mxu0 %v87
    %2603 = vmatpush1.msra.mxu0 %v86
    %2604 = vmatprep.subr.mxu0 %v84
    %2605 = vmatpush1.msra.mxu0 %v83
    %2606 = vmatprep.subr.mxu0 %v81
    %2607 = vmatpush1.msra.mxu0 %v80
    %2608 = vmatprep.subr.mxu0 %v78
    %2609 = vmatpush1.msra.mxu0 %v77
    %2610 = vmatprep.subr.mxu0 0.0
    %2611 = vmatpush2.msra.mxu0 0.0
    %2612 = vmatprep.subr.mxu0 0.0
    %2613 = vmatpush2.msra.mxu0 0.0
    %2614 = vmatprep.subr.mxu0 0.0
    %2615 = vmatpush2.msra.mxu0 0.0
    %2616 = vmatprep.subr.mxu0 0.0
    %2617 = vmatpush2.msra.mxu0 0.0
    %2618 = vmatprep.subr.mxu0 0.0
    %2619 = vmatpush2.msra.mxu0 0.0
    %2620 = vmatprep.subr.mxu0 0.0
    %2621 = vmatpush2.msra.mxu0 0.0
    %2622 = vmatprep.subr.mxu0 0.0
    %2623 = vmatpush2.msra.mxu0 0.0
    %2624 = vmatprep.subr.mxu0 0.0
    %2625 = vmatpush2.msra.mxu0 0.0
    %2626 = vmatprep.subr.mxu0 0.0
    %2627 = vmatpush2.msra.mxu0 0.0
    %2628 = vmatprep.subr.mxu0 0.0
    %2629 = vmatpush2.msra.mxu0 0.0
    %2630 = vmatprep.subr.mxu0 0.0
    %2631 = vmatpush2.msra.mxu0 0.0
    %2632 = vmatprep.subr.mxu0 0.0
    %2633 = vmatpush2.msra.mxu0 0.0
    %2634 = vmatprep.subr.mxu0 0.0
    %2635 = vmatpush2.msra.mxu0 0.0
    %2636 = vmatprep.subr.mxu0 0.0
    %2637 = vmatpush2.msra.mxu0 0.0
    %2638 = vmatprep.subr.mxu0 0.0
    %2639 = vmatpush2.msra.mxu0 0.0
    %2640 = vmatprep.subr.mxu0 0.0
    %2641 = vmatpush2.msra.mxu0 0.0
    %2642 = vmatprep.mubr.f32.mxu0 0.0
    %2643 = vmatmul.mubr.f32.gmra.mxu0 %v2576
    %v2644 = vpop.f32.mrf.mxu0
    %v2645 = vadd.f32 %v598, %v2644
    %v2646 = vpop.f32.mrf.mxu0
    %v2647 = vadd.f32 %v602, %v2646
    %2648 = vdwg.mxu0
    %2649 = vmatprep.subr.mxu0 0.0
    %2650 = vmatpush1.msra.mxu0 0.0
    %2651 = vmatprep.subr.mxu0 0.0
    %2652 = vmatpush1.msra.mxu0 0.0
    %2653 = vmatprep.subr.mxu0 0.0
    %2654 = vmatpush1.msra.mxu0 0.0
    %2655 = vmatprep.subr.mxu0 0.0
    %2656 = vmatpush1.msra.mxu0 0.0
    %2657 = vmatprep.subr.mxu0 0.0
    %2658 = vmatpush1.msra.mxu0 0.0
    %2659 = vmatprep.subr.mxu0 0.0
    %2660 = vmatpush1.msra.mxu0 0.0
    %2661 = vmatprep.subr.mxu0 0.0
    %2662 = vmatpush1.msra.mxu0 0.0
    %2663 = vmatprep.subr.mxu0 0.0
    %2664 = vmatpush1.msra.mxu0 0.0
    %2665 = vmatprep.subr.mxu0 0.0
    %2666 = vmatpush1.msra.mxu0 0.0
    %2667 = vmatprep.subr.mxu0 0.0
    %2668 = vmatpush1.msra.mxu0 0.0
    %2669 = vmatprep.subr.mxu0 0.0
    %2670 = vmatpush1.msra.mxu0 0.0
    %2671 = vmatprep.subr.mxu0 0.0
    %2672 = vmatpush1.msra.mxu0 0.0
    %2673 = vmatprep.subr.mxu0 0.0
    %2674 = vmatpush1.msra.mxu0 %v88
    %2675 = vmatprep.subr.mxu0 0.0
    %2676 = vmatpush1.msra.mxu0 %v85
    %2677 = vmatprep.subr.mxu0 0.0
    %2678 = vmatpush1.msra.mxu0 %v82
    %2679 = vmatprep.subr.mxu0 0.0
    %2680 = vmatpush1.msra.mxu0 %v79
    %2681 = vmatprep.subr.mxu0 0.0
    %2682 = vmatpush2.msra.mxu0 0.0
    %2683 = vmatprep.subr.mxu0 0.0
    %2684 = vmatpush2.msra.mxu0 0.0
    %2685 = vmatprep.subr.mxu0 0.0
    %2686 = vmatpush2.msra.mxu0 0.0
    %2687 = vmatprep.subr.mxu0 0.0
    %2688 = vmatpush2.msra.mxu0 0.0
    %2689 = vmatprep.subr.mxu0 0.0
    %2690 = vmatpush2.msra.mxu0 0.0
    %2691 = vmatprep.subr.mxu0 0.0
    %2692 = vmatpush2.msra.mxu0 0.0
    %2693 = vmatprep.subr.mxu0 0.0
    %2694 = vmatpush2.msra.mxu0 0.0
    %2695 = vmatprep.subr.mxu0 0.0
    %2696 = vmatpush2.msra.mxu0 0.0
    %2697 = vmatprep.subr.mxu0 0.0
    %2698 = vmatpush2.msra.mxu0 0.0
    %2699 = vmatprep.subr.mxu0 0.0
    %2700 = vmatpush2.msra.mxu0 0.0
    %2701 = vmatprep.subr.mxu0 0.0
    %2702 = vmatpush2.msra.mxu0 0.0
    %2703 = vmatprep.subr.mxu0 0.0
    %2704 = vmatpush2.msra.mxu0 0.0
    %2705 = vmatprep.subr.mxu0 0.0
    %2706 = vmatpush2.msra.mxu0 0.0
    %2707 = vmatprep.subr.mxu0 0.0
    %2708 = vmatpush2.msra.mxu0 0.0
    %2709 = vmatprep.subr.mxu0 0.0
    %2710 = vmatpush2.msra.mxu0 0.0
    %2711 = vmatprep.subr.mxu0 0.0
    %2712 = vmatpush2.msra.mxu0 0.0
    %2713 = vmatprep.mubr.f32.mxu0 0.0
    %2714 = vmatmul.mubr.f32.gmra.mxu0 %v2576
    %v2715 = vpop.f32.mrf.mxu0
    %v2716 = vadd.f32 %v606, %v2715
    %v2717 = vpop.f32.mrf.mxu0
    %2718 = vdwg.mxu0
    %v2720 = vsel %vm165, %v2393, 0
    %2722 = vmatprep.subr.mxu0 0.0
    %2723 = vmatpush1.msra.mxu0 0.0
    %2724 = vmatprep.subr.mxu0 0.0
    %2725 = vmatpush1.msra.mxu0 0.0
    %2726 = vmatprep.subr.mxu0 0.0
    %2727 = vmatpush1.msra.mxu0 0.0
    %2728 = vmatprep.subr.mxu0 0.0
    %2729 = vmatpush1.msra.mxu0 0.0
    %2730 = vmatprep.subr.mxu0 0.0
    %2731 = vmatpush1.msra.mxu0 0.0
    %2732 = vmatprep.subr.mxu0 0.0
    %2733 = vmatpush1.msra.mxu0 0.0
    %2734 = vmatprep.subr.mxu0 0.0
    %2735 = vmatpush1.msra.mxu0 0.0
    %2736 = vmatprep.subr.mxu0 0.0
    %2737 = vmatpush1.msra.mxu0 0.0
    %2738 = vmatprep.subr.mxu0 0.0
    %2739 = vmatpush1.msra.mxu0 0.0
    %2740 = vmatprep.subr.mxu0 0.0
    %2741 = vmatpush1.msra.mxu0 0.0
    %2742 = vmatprep.subr.mxu0 0.0
    %2743 = vmatpush1.msra.mxu0 0.0
    %2744 = vmatprep.subr.mxu0 0.0
    %2745 = vmatpush1.msra.mxu0 0.0
    %2746 = vmatprep.subr.mxu0 %v100
    %2747 = vmatpush1.msra.mxu0 %v99
    %2748 = vmatprep.subr.mxu0 %v97
    %2749 = vmatpush1.msra.mxu0 %v96
    %2750 = vmatprep.subr.mxu0 %v94
    %2751 = vmatpush1.msra.mxu0 %v93
    %2752 = vmatprep.subr.mxu0 %v91
    %2753 = vmatpush1.msra.mxu0 %v90
    %2754 = vmatprep.subr.mxu0 0.0
    %2755 = vmatpush2.msra.mxu0 0.0
    %2756 = vmatprep.subr.mxu0 0.0
    %2757 = vmatpush2.msra.mxu0 0.0
    %2758 = vmatprep.subr.mxu0 0.0
    %2759 = vmatpush2.msra.mxu0 0.0
    %2760 = vmatprep.subr.mxu0 0.0
    %2761 = vmatpush2.msra.mxu0 0.0
    %2762 = vmatprep.subr.mxu0 0.0
    %2763 = vmatpush2.msra.mxu0 0.0
    %2764 = vmatprep.subr.mxu0 0.0
    %2765 = vmatpush2.msra.mxu0 0.0
    %2766 = vmatprep.subr.mxu0 0.0
    %2767 = vmatpush2.msra.mxu0 0.0
    %2768 = vmatprep.subr.mxu0 0.0
    %2769 = vmatpush2.msra.mxu0 0.0
    %2770 = vmatprep.subr.mxu0 0.0
    %2771 = vmatpush2.msra.mxu0 0.0
    %2772 = vmatprep.subr.mxu0 0.0
    %2773 = vmatpush2.msra.mxu0 0.0
    %2774 = vmatprep.subr.mxu0 0.0
    %2775 = vmatpush2.msra.mxu0 0.0
    %2776 = vmatprep.subr.mxu0 0.0
    %2777 = vmatpush2.msra.mxu0 0.0
    %2778 = vmatprep.subr.mxu0 0.0
    %2779 = vmatpush2.msra.mxu0 0.0
    %2780 = vmatprep.subr.mxu0 0.0
    %2781 = vmatpush2.msra.mxu0 0.0
    %2782 = vmatprep.subr.mxu0 0.0
    %2783 = vmatpush2.msra.mxu0 0.0
    %2784 = vmatprep.subr.mxu0 0.0
    %2785 = vmatpush2.msra.mxu0 0.0
    %2786 = vmatprep.mubr.f32.mxu0 0.0
    %2787 = vmatmul.mubr.f32.gmra.mxu0 %v2720
    %v2788 = vpop.f32.mrf.mxu0
    %v2789 = vadd.f32 0.0, %v2788
    %v2790 = vpop.f32.mrf.mxu0
    %v2791 = vadd.f32 0.0, %v2790
    %2792 = vdwg.mxu0
    %2793 = vmatprep.subr.mxu0 0.0
    %2794 = vmatpush1.msra.mxu0 0.0
    %2795 = vmatprep.subr.mxu0 0.0
    %2796 = vmatpush1.msra.mxu0 0.0
    %2797 = vmatprep.subr.mxu0 0.0
    %2798 = vmatpush1.msra.mxu0 0.0
    %2799 = vmatprep.subr.mxu0 0.0
    %2800 = vmatpush1.msra.mxu0 0.0
    %2801 = vmatprep.subr.mxu0 0.0
    %2802 = vmatpush1.msra.mxu0 0.0
    %2803 = vmatprep.subr.mxu0 0.0
    %2804 = vmatpush1.msra.mxu0 0.0
    %2805 = vmatprep.subr.mxu0 0.0
    %2806 = vmatpush1.msra.mxu0 0.0
    %2807 = vmatprep.subr.mxu0 0.0
    %2808 = vmatpush1.msra.mxu0 0.0
    %2809 = vmatprep.subr.mxu0 0.0
    %2810 = vmatpush1.msra.mxu0 0.0
    %2811 = vmatprep.subr.mxu0 0.0
    %2812 = vmatpush1.msra.mxu0 0.0
    %2813 = vmatprep.subr.mxu0 0.0
    %2814 = vmatpush1.msra.mxu0 0.0
    %2815 = vmatprep.subr.mxu0 0.0
    %2816 = vmatpush1.msra.mxu0 0.0
    %2817 = vmatprep.subr.mxu0 0.0
    %2818 = vmatpush1.msra.mxu0 %v101
    %2819 = vmatprep.subr.mxu0 0.0
    %2820 = vmatpush1.msra.mxu0 %v98
    %2821 = vmatprep.subr.mxu0 0.0
    %2822 = vmatpush1.msra.mxu0 %v95
    %2823 = vmatprep.subr.mxu0 0.0
    %2824 = vmatpush1.msra.mxu0 %v92
    %2825 = vmatprep.subr.mxu0 0.0
    %2826 = vmatpush2.msra.mxu0 0.0
    %2827 = vmatprep.subr.mxu0 0.0
    %2828 = vmatpush2.msra.mxu0 0.0
    %2829 = vmatprep.subr.mxu0 0.0
    %2830 = vmatpush2.msra.mxu0 0.0
    %2831 = vmatprep.subr.mxu0 0.0
    %2832 = vmatpush2.msra.mxu0 0.0
    %2833 = vmatprep.subr.mxu0 0.0
    %2834 = vmatpush2.msra.mxu0 0.0
    %2835 = vmatprep.subr.mxu0 0.0
    %2836 = vmatpush2.msra.mxu0 0.0
    %2837 = vmatprep.subr.mxu0 0.0
    %2838 = vmatpush2.msra.mxu0 0.0
    %2839 = vmatprep.subr.mxu0 0.0
    %2840 = vmatpush2.msra.mxu0 0.0
    %2841 = vmatprep.subr.mxu0 0.0
    %2842 = vmatpush2.msra.mxu0 0.0
    %2843 = vmatprep.subr.mxu0 0.0
    %2844 = vmatpush2.msra.mxu0 0.0
    %2845 = vmatprep.subr.mxu0 0.0
    %2846 = vmatpush2.msra.mxu0 0.0
    %2847 = vmatprep.subr.mxu0 0.0
    %2848 = vmatpush2.msra.mxu0 0.0
    %2849 = vmatprep.subr.mxu0 0.0
    %2850 = vmatpush2.msra.mxu0 0.0
    %2851 = vmatprep.subr.mxu0 0.0
    %2852 = vmatpush2.msra.mxu0 0.0
    %2853 = vmatprep.subr.mxu0 0.0
    %2854 = vmatpush2.msra.mxu0 0.0
    %2855 = vmatprep.subr.mxu0 0.0
    %2856 = vmatpush2.msra.mxu0 0.0
    %2857 = vmatprep.mubr.f32.mxu0 0.0
    %2858 = vmatmul.mubr.f32.gmra.mxu0 %v2720
    %v2859 = vpop.f32.mrf.mxu0
    %v2860 = vadd.f32 0.0, %v2859
    %v2861 = vpop.f32.mrf.mxu0
    %2862 = vdwg.mxu0
    %v2863 = vadd.f32 %v2645, %v2789
    %v2864 = vadd.f32 %v2647, %v2791
    %v2865 = vxor.u32 %v2863, 2147483648
    %v2866 = vxor.u32 %v2864, 2147483648
    %v2867 = vmul.f32 %v2865, 1.442695
    %v2868 = vpow.pop %v2867
    %v2869 = vmul.f32 %v2866, 1.442695
    %v2870 = vpow.pop %v2869
    %v2871 = vadd.f32 %v2868, 1.0
    %v2872 = vadd.f32 %v2870, 1.0
    %v2873 = vrcp.pop %v2871
    %v2874 = vmul.f32 1.0, %v2873
    %v2875 = vrcp.pop %v2872
    %v2876 = vmul.f32 1.0, %v2875
    %v2877 = vadd.f32 %v2860, %v912
    %v2878 = vmul.f32 %v2874, %v2877
    %v2879 = vadd.f32 %v2716, %v2878
    %v2880 = vtanh.pop %v2879
    %v2881 = vmul.f32 %v2876, %v2393
    %v2882 = vsub.f32 1.0, %v2876
    %v2883 = vmul.f32 %v2882, %v2880
    %v2884 = vadd.f32 %v2881, %v2883
    %2885 = vmatprep.subr.mxu0 0.0
    %2886 = vmatpush1.msra.mxu0 0.0
    %2887 = vmatprep.subr.mxu0 0.0
    %2888 = vmatpush1.msra.mxu0 0.0
    %2889 = vmatprep.subr.mxu0 0.0
    %2890 = vmatpush1.msra.mxu0 0.0
    %2891 = vmatprep.subr.mxu0 0.0
    %2892 = vmatpush1.msra.mxu0 0.0
    %2893 = vmatprep.subr.mxu0 0.0
    %2894 = vmatpush1.msra.mxu0 0.0
    %2895 = vmatprep.subr.mxu0 0.0
    %2896 = vmatpush1.msra.mxu0 0.0
    %2897 = vmatprep.subr.mxu0 0.0
    %2898 = vmatpush1.msra.mxu0 0.0
    %2899 = vmatprep.subr.mxu0 0.0
    %2900 = vmatpush1.msra.mxu0 0.0
    %2901 = vmatprep.subr.mxu0 0.0
    %2902 = vmatpush1.msra.mxu0 0.0
    %2903 = vmatprep.subr.mxu0 0.0
    %2904 = vmatpush1.msra.mxu0 0.0
    %2905 = vmatprep.subr.mxu0 0.0
    %2906 = vmatpush1.msra.mxu0 0.0
    %2907 = vmatprep.subr.mxu0 0.0
    %2908 = vmatpush1.msra.mxu0 0.0
    %2909 = vmatprep.subr.mxu0 %v74
    %2910 = vmatpush1.msra.mxu0 %v73
    %2911 = vmatprep.subr.mxu0 %v71
    %2912 = vmatpush1.msra.mxu0 %v70
    %2913 = vmatprep.subr.mxu0 %v68
    %2914 = vmatpush1.msra.mxu0 %v67
    %2915 = vmatprep.subr.mxu0 %v65
    %2916 = vmatpush1.msra.mxu0 %v64
    %2917 = vmatprep.subr.mxu0 0.0
    %2918 = vmatpush2.msra.mxu0 0.0
    %2919 = vmatprep.subr.mxu0 0.0
    %2920 = vmatpush2.msra.mxu0 0.0
    %2921 = vmatprep.subr.mxu0 0.0
    %2922 = vmatpush2.msra.mxu0 0.0
    %2923 = vmatprep.subr.mxu0 0.0
    %2924 = vmatpush2.msra.mxu0 0.0
    %2925 = vmatprep.subr.mxu0 0.0
    %2926 = vmatpush2.msra.mxu0 0.0
    %2927 = vmatprep.subr.mxu0 0.0
    %2928 = vmatpush2.msra.mxu0 0.0
    %2929 = vmatprep.subr.mxu0 0.0
    %2930 = vmatpush2.msra.mxu0 0.0
    %2931 = vmatprep.subr.mxu0 0.0
    %2932 = vmatpush2.msra.mxu0 0.0
    %2933 = vmatprep.subr.mxu0 0.0
    %2934 = vmatpush2.msra.mxu0 0.0
    %2935 = vmatprep.subr.mxu0 0.0
    %2936 = vmatpush2.msra.mxu0 0.0
    %2937 = vmatprep.subr.mxu0 0.0
    %2938 = vmatpush2.msra.mxu0 0.0
    %2939 = vmatprep.subr.mxu0 0.0
    %2940 = vmatpush2.msra.mxu0 0.0
    %2941 = vmatprep.subr.mxu0 0.0
    %2942 = vmatpush2.msra.mxu0 0.0
    %2943 = vmatprep.subr.mxu0 0.0
    %2944 = vmatpush2.msra.mxu0 0.0
    %2945 = vmatprep.subr.mxu0 0.0
    %2946 = vmatpush2.msra.mxu0 0.0
    %2947 = vmatprep.subr.mxu0 0.0
    %2948 = vmatpush2.msra.mxu0 0.0
    %2949 = vmatprep.mubr.f32.mxu0 0.0
    %2950 = vmatmul.mubr.f32.gmra.mxu0 %v2576
    %v2951 = vpop.f32.mrf.mxu0
    %v2952 = vadd.f32 0.0, %v2951
    %v2953 = vpop.f32.mrf.mxu0
    %v2954 = vadd.f32 0.0, %v2953
    %2955 = vdwg.mxu0
    %2956 = vmatprep.subr.mxu0 0.0
    %2957 = vmatpush1.msra.mxu0 0.0
    %2958 = vmatprep.subr.mxu0 0.0
    %2959 = vmatpush1.msra.mxu0 0.0
    %2960 = vmatprep.subr.mxu0 0.0
    %2961 = vmatpush1.msra.mxu0 0.0
    %2962 = vmatprep.subr.mxu0 0.0
    %2963 = vmatpush1.msra.mxu0 0.0
    %2964 = vmatprep.subr.mxu0 0.0
    %2965 = vmatpush1.msra.mxu0 0.0
    %2966 = vmatprep.subr.mxu0 0.0
    %2967 = vmatpush1.msra.mxu0 0.0
    %2968 = vmatprep.subr.mxu0 0.0
    %2969 = vmatpush1.msra.mxu0 0.0
    %2970 = vmatprep.subr.mxu0 0.0
    %2971 = vmatpush1.msra.mxu0 0.0
    %2972 = vmatprep.subr.mxu0 0.0
    %2973 = vmatpush1.msra.mxu0 0.0
    %2974 = vmatprep.subr.mxu0 0.0
    %2975 = vmatpush1.msra.mxu0 0.0
    %2976 = vmatprep.subr.mxu0 0.0
    %2977 = vmatpush1.msra.mxu0 0.0
    %2978 = vmatprep.subr.mxu0 0.0
    %2979 = vmatpush1.msra.mxu0 0.0
    %2980 = vmatprep.subr.mxu0 0.0
    %2981 = vmatpush1.msra.mxu0 %v75
    %2982 = vmatprep.subr.mxu0 0.0
    %2983 = vmatpush1.msra.mxu0 %v72
    %2984 = vmatprep.subr.mxu0 0.0
    %2985 = vmatpush1.msra.mxu0 %v69
    %2986 = vmatprep.subr.mxu0 0.0
    %2987 = vmatpush1.msra.mxu0 %v66
    %2988 = vmatprep.subr.mxu0 0.0
    %2989 = vmatpush2.msra.mxu0 0.0
    %2990 = vmatprep.subr.mxu0 0.0
    %2991 = vmatpush2.msra.mxu0 0.0
    %2992 = vmatprep.subr.mxu0 0.0
    %2993 = vmatpush2.msra.mxu0 0.0
    %2994 = vmatprep.subr.mxu0 0.0
    %2995 = vmatpush2.msra.mxu0 0.0
    %2996 = vmatprep.subr.mxu0 0.0
    %2997 = vmatpush2.msra.mxu0 0.0
    %2998 = vmatprep.subr.mxu0 0.0
    %2999 = vmatpush2.msra.mxu0 0.0
    %3000 = vmatprep.subr.mxu0 0.0
    %3001 = vmatpush2.msra.mxu0 0.0
    %3002 = vmatprep.subr.mxu0 0.0
    %3003 = vmatpush2.msra.mxu0 0.0
    %3004 = vmatprep.subr.mxu0 0.0
    %3005 = vmatpush2.msra.mxu0 0.0
    %3006 = vmatprep.subr.mxu0 0.0
    %3007 = vmatpush2.msra.mxu0 0.0
    %3008 = vmatprep.subr.mxu0 0.0
    %3009 = vmatpush2.msra.mxu0 0.0
    %3010 = vmatprep.subr.mxu0 0.0
    %3011 = vmatpush2.msra.mxu0 0.0
    %3012 = vmatprep.subr.mxu0 0.0
    %3013 = vmatpush2.msra.mxu0 0.0
    %3014 = vmatprep.subr.mxu0 0.0
    %3015 = vmatpush2.msra.mxu0 0.0
    %3016 = vmatprep.subr.mxu0 0.0
    %3017 = vmatpush2.msra.mxu0 0.0
    %3018 = vmatprep.subr.mxu0 0.0
    %3019 = vmatpush2.msra.mxu0 0.0
    %3020 = vmatprep.mubr.f32.mxu0 0.0
    %3021 = vmatmul.mubr.f32.gmra.mxu0 %v2576
    %v3022 = vpop.f32.mrf.mxu0
    %v3023 = vadd.f32 0.0, %v3022
    %v3024 = vpop.f32.mrf.mxu0
    %3025 = vdwg.mxu0
    %v3029 = vcombine.low %v2952, %v2954
    %v3031 = vunpack.c.l.s4 1983009808
    %v3032 = vunpack.c.0.s8 %v3031
    %v3033 = vlaneseq
    %v3034 = vshrl.u32 %v3033, 7
    %v3035 = vsub.s32 %v3032, %v3034
    %v3036 = vrot.slane %v3029, %v3035
    %v3038 = vunpack.c.l.s4 1983009808
    %v3039 = vunpack.c.0.s8 %v3038
    %v3040 = vlaneseq
    %v3041 = vshrl.u32 %v3040, 7
    %v3042 = vsub.s32 %v3039, %v3041
    %v3043 = vrot.slane %v3023, %v3042
    %v3044 = vcombine.low %v3036, %v3043
    %v3046 = vadd.f32 %v395, %v3044
    %v3047 = vxor.u32 %v3046, 2147483648
    %v3048 = vmul.f32 %v3047, 1.442695
    %v3049 = vpow.pop %v3048
    %v3050 = vadd.f32 %v3049, 1.0
    %v3051 = vrcp.pop %v3050
    %v3052 = vmul.f32 1.0, %v3051
    %v3053 = vadd.f32 %v3023, %v580
    %v3054 = vmul.f32 %v3052, %v3053
    %v3055 = vrot.slane %v395, 4
    %v3057 = vadd.f32 %v3055, %v3054
    %v3058 = vtanh.pop %v3057
    %v3060 = vrot.slane %v3052, 2
    %v3062 = vmul.f32 %v3060, %v2574
    %v3063 = vsub.f32 1.0, %v3060
    %v3064 = vmul.f32 %v3063, %v3058
    %v3065 = vadd.f32 %v3062, %v3064
    %v3067 = vsel %vm165, %v3065, 0
    %3069 = vmatprep.subr.mxu0 0.0
    %3070 = vmatpush1.msra.mxu0 0.0
    %3071 = vmatprep.subr.mxu0 0.0
    %3072 = vmatpush1.msra.mxu0 0.0
    %3073 = vmatprep.subr.mxu0 0.0
    %3074 = vmatpush1.msra.mxu0 0.0
    %3075 = vmatprep.subr.mxu0 0.0
    %3076 = vmatpush1.msra.mxu0 0.0
    %3077 = vmatprep.subr.mxu0 0.0
    %3078 = vmatpush1.msra.mxu0 0.0
    %3079 = vmatprep.subr.mxu0 0.0
    %3080 = vmatpush1.msra.mxu0 0.0
    %3081 = vmatprep.subr.mxu0 0.0
    %3082 = vmatpush1.msra.mxu0 0.0
    %3083 = vmatprep.subr.mxu0 0.0
    %3084 = vmatpush1.msra.mxu0 0.0
    %3085 = vmatprep.subr.mxu0 0.0
    %3086 = vmatpush1.msra.mxu0 0.0
    %3087 = vmatprep.subr.mxu0 0.0
    %3088 = vmatpush1.msra.mxu0 0.0
    %3089 = vmatprep.subr.mxu0 0.0
    %3090 = vmatpush1.msra.mxu0 0.0
    %3091 = vmatprep.subr.mxu0 0.0
    %3092 = vmatpush1.msra.mxu0 0.0
    %3093 = vmatprep.subr.mxu0 %v87
    %3094 = vmatpush1.msra.mxu0 %v86
    %3095 = vmatprep.subr.mxu0 %v84
    %3096 = vmatpush1.msra.mxu0 %v83
    %3097 = vmatprep.subr.mxu0 %v81
    %3098 = vmatpush1.msra.mxu0 %v80
    %3099 = vmatprep.subr.mxu0 %v78
    %3100 = vmatpush1.msra.mxu0 %v77
    %3101 = vmatprep.subr.mxu0 0.0
    %3102 = vmatpush2.msra.mxu0 0.0
    %3103 = vmatprep.subr.mxu0 0.0
    %3104 = vmatpush2.msra.mxu0 0.0
    %3105 = vmatprep.subr.mxu0 0.0
    %3106 = vmatpush2.msra.mxu0 0.0
    %3107 = vmatprep.subr.mxu0 0.0
    %3108 = vmatpush2.msra.mxu0 0.0
    %3109 = vmatprep.subr.mxu0 0.0
    %3110 = vmatpush2.msra.mxu0 0.0
    %3111 = vmatprep.subr.mxu0 0.0
    %3112 = vmatpush2.msra.mxu0 0.0
    %3113 = vmatprep.subr.mxu0 0.0
    %3114 = vmatpush2.msra.mxu0 0.0
    %3115 = vmatprep.subr.mxu0 0.0
    %3116 = vmatpush2.msra.mxu0 0.0
    %3117 = vmatprep.subr.mxu0 0.0
    %3118 = vmatpush2.msra.mxu0 0.0
    %3119 = vmatprep.subr.mxu0 0.0
    %3120 = vmatpush2.msra.mxu0 0.0
    %3121 = vmatprep.subr.mxu0 0.0
    %3122 = vmatpush2.msra.mxu0 0.0
    %3123 = vmatprep.subr.mxu0 0.0
    %3124 = vmatpush2.msra.mxu0 0.0
    %3125 = vmatprep.subr.mxu0 0.0
    %3126 = vmatpush2.msra.mxu0 0.0
    %3127 = vmatprep.subr.mxu0 0.0
    %3128 = vmatpush2.msra.mxu0 0.0
    %3129 = vmatprep.subr.mxu0 0.0
    %3130 = vmatpush2.msra.mxu0 0.0
    %3131 = vmatprep.subr.mxu0 0.0
    %3132 = vmatpush2.msra.mxu0 0.0
    %3133 = vmatprep.mubr.f32.mxu0 0.0
    %3134 = vmatmul.mubr.f32.gmra.mxu0 %v3067
    %v3135 = vpop.f32.mrf.mxu0
    %v3136 = vadd.f32 %v598, %v3135
    %v3137 = vpop.f32.mrf.mxu0
    %v3138 = vadd.f32 %v602, %v3137
    %3139 = vdwg.mxu0
    %3140 = vmatprep.subr.mxu0 0.0
    %3141 = vmatpush1.msra.mxu0 0.0
    %3142 = vmatprep.subr.mxu0 0.0
    %3143 = vmatpush1.msra.mxu0 0.0
    %3144 = vmatprep.subr.mxu0 0.0
    %3145 = vmatpush1.msra.mxu0 0.0
    %3146 = vmatprep.subr.mxu0 0.0
    %3147 = vmatpush1.msra.mxu0 0.0
    %3148 = vmatprep.subr.mxu0 0.0
    %3149 = vmatpush1.msra.mxu0 0.0
    %3150 = vmatprep.subr.mxu0 0.0
    %3151 = vmatpush1.msra.mxu0 0.0
    %3152 = vmatprep.subr.mxu0 0.0
    %3153 = vmatpush1.msra.mxu0 0.0
    %3154 = vmatprep.subr.mxu0 0.0
    %3155 = vmatpush1.msra.mxu0 0.0
    %3156 = vmatprep.subr.mxu0 0.0
    %3157 = vmatpush1.msra.mxu0 0.0
    %3158 = vmatprep.subr.mxu0 0.0
    %3159 = vmatpush1.msra.mxu0 0.0
    %3160 = vmatprep.subr.mxu0 0.0
    %3161 = vmatpush1.msra.mxu0 0.0
    %3162 = vmatprep.subr.mxu0 0.0
    %3163 = vmatpush1.msra.mxu0 0.0
    %3164 = vmatprep.subr.mxu0 0.0
    %3165 = vmatpush1.msra.mxu0 %v88
    %3166 = vmatprep.subr.mxu0 0.0
    %3167 = vmatpush1.msra.mxu0 %v85
    %3168 = vmatprep.subr.mxu0 0.0
    %3169 = vmatpush1.msra.mxu0 %v82
    %3170 = vmatprep.subr.mxu0 0.0
    %3171 = vmatpush1.msra.mxu0 %v79
    %3172 = vmatprep.subr.mxu0 0.0
    %3173 = vmatpush2.msra.mxu0 0.0
    %3174 = vmatprep.subr.mxu0 0.0
    %3175 = vmatpush2.msra.mxu0 0.0
    %3176 = vmatprep.subr.mxu0 0.0
    %3177 = vmatpush2.msra.mxu0 0.0
    %3178 = vmatprep.subr.mxu0 0.0
    %3179 = vmatpush2.msra.mxu0 0.0
    %3180 = vmatprep.subr.mxu0 0.0
    %3181 = vmatpush2.msra.mxu0 0.0
    %3182 = vmatprep.subr.mxu0 0.0
    %3183 = vmatpush2.msra.mxu0 0.0
    %3184 = vmatprep.subr.mxu0 0.0
    %3185 = vmatpush2.msra.mxu0 0.0
    %3186 = vmatprep.subr.mxu0 0.0
    %3187 = vmatpush2.msra.mxu0 0.0
    %3188 = vmatprep.subr.mxu0 0.0
    %3189 = vmatpush2.msra.mxu0 0.0
    %3190 = vmatprep.subr.mxu0 0.0
    %3191 = vmatpush2.msra.mxu0 0.0
    %3192 = vmatprep.subr.mxu0 0.0
    %3193 = vmatpush2.msra.mxu0 0.0
    %3194 = vmatprep.subr.mxu0 0.0
    %3195 = vmatpush2.msra.mxu0 0.0
    %3196 = vmatprep.subr.mxu0 0.0
    %3197 = vmatpush2.msra.mxu0 0.0
    %3198 = vmatprep.subr.mxu0 0.0
    %3199 = vmatpush2.msra.mxu0 0.0
    %3200 = vmatprep.subr.mxu0 0.0
    %3201 = vmatpush2.msra.mxu0 0.0
    %3202 = vmatprep.subr.mxu0 0.0
    %3203 = vmatpush2.msra.mxu0 0.0
    %3204 = vmatprep.mubr.f32.mxu0 0.0
    %3205 = vmatmul.mubr.f32.gmra.mxu0 %v3067
    %v3206 = vpop.f32.mrf.mxu0
    %v3207 = vadd.f32 %v606, %v3206
    %v3208 = vpop.f32.mrf.mxu0
    %3209 = vdwg.mxu0
    %v3211 = vsel %vm165, %v2884, 0
    %3213 = vmatprep.subr.mxu0 0.0
    %3214 = vmatpush1.msra.mxu0 0.0
    %3215 = vmatprep.subr.mxu0 0.0
    %3216 = vmatpush1.msra.mxu0 0.0
    %3217 = vmatprep.subr.mxu0 0.0
    %3218 = vmatpush1.msra.mxu0 0.0
    %3219 = vmatprep.subr.mxu0 0.0
    %3220 = vmatpush1.msra.mxu0 0.0
    %3221 = vmatprep.subr.mxu0 0.0
    %3222 = vmatpush1.msra.mxu0 0.0
    %3223 = vmatprep.subr.mxu0 0.0
    %3224 = vmatpush1.msra.mxu0 0.0
    %3225 = vmatprep.subr.mxu0 0.0
    %3226 = vmatpush1.msra.mxu0 0.0
    %3227 = vmatprep.subr.mxu0 0.0
    %3228 = vmatpush1.msra.mxu0 0.0
    %3229 = vmatprep.subr.mxu0 0.0
    %3230 = vmatpush1.msra.mxu0 0.0
    %3231 = vmatprep.subr.mxu0 0.0
    %3232 = vmatpush1.msra.mxu0 0.0
    %3233 = vmatprep.subr.mxu0 0.0
    %3234 = vmatpush1.msra.mxu0 0.0
    %3235 = vmatprep.subr.mxu0 0.0
    %3236 = vmatpush1.msra.mxu0 0.0
    %3237 = vmatprep.subr.mxu0 %v100
    %3238 = vmatpush1.msra.mxu0 %v99
    %3239 = vmatprep.subr.mxu0 %v97
    %3240 = vmatpush1.msra.mxu0 %v96
    %3241 = vmatprep.subr.mxu0 %v94
    %3242 = vmatpush1.msra.mxu0 %v93
    %3243 = vmatprep.subr.mxu0 %v91
    %3244 = vmatpush1.msra.mxu0 %v90
    %3245 = vmatprep.subr.mxu0 0.0
    %3246 = vmatpush2.msra.mxu0 0.0
    %3247 = vmatprep.subr.mxu0 0.0
    %3248 = vmatpush2.msra.mxu0 0.0
    %3249 = vmatprep.subr.mxu0 0.0
    %3250 = vmatpush2.msra.mxu0 0.0
    %3251 = vmatprep.subr.mxu0 0.0
    %3252 = vmatpush2.msra.mxu0 0.0
    %3253 = vmatprep.subr.mxu0 0.0
    %3254 = vmatpush2.msra.mxu0 0.0
    %3255 = vmatprep.subr.mxu0 0.0
    %3256 = vmatpush2.msra.mxu0 0.0
    %3257 = vmatprep.subr.mxu0 0.0
    %3258 = vmatpush2.msra.mxu0 0.0
    %3259 = vmatprep.subr.mxu0 0.0
    %3260 = vmatpush2.msra.mxu0 0.0
    %3261 = vmatprep.subr.mxu0 0.0
    %3262 = vmatpush2.msra.mxu0 0.0
    %3263 = vmatprep.subr.mxu0 0.0
    %3264 = vmatpush2.msra.mxu0 0.0
    %3265 = vmatprep.subr.mxu0 0.0
    %3266 = vmatpush2.msra.mxu0 0.0
    %3267 = vmatprep.subr.mxu0 0.0
    %3268 = vmatpush2.msra.mxu0 0.0
    %3269 = vmatprep.subr.mxu0 0.0
    %3270 = vmatpush2.msra.mxu0 0.0
    %3271 = vmatprep.subr.mxu0 0.0
    %3272 = vmatpush2.msra.mxu0 0.0
    %3273 = vmatprep.subr.mxu0 0.0
    %3274 = vmatpush2.msra.mxu0 0.0
    %3275 = vmatprep.subr.mxu0 0.0
    %3276 = vmatpush2.msra.mxu0 0.0
    %3277 = vmatprep.mubr.f32.mxu0 0.0
    %3278 = vmatmul.mubr.f32.gmra.mxu0 %v3211
    %v3279 = vpop.f32.mrf.mxu0
    %v3280 = vadd.f32 0.0, %v3279
    %v3281 = vpop.f32.mrf.mxu0
    %v3282 = vadd.f32 0.0, %v3281
    %3283 = vdwg.mxu0
    %3284 = vmatprep.subr.mxu0 0.0
    %3285 = vmatpush1.msra.mxu0 0.0
    %3286 = vmatprep.subr.mxu0 0.0
    %3287 = vmatpush1.msra.mxu0 0.0
    %3288 = vmatprep.subr.mxu0 0.0
    %3289 = vmatpush1.msra.mxu0 0.0
    %3290 = vmatprep.subr.mxu0 0.0
    %3291 = vmatpush1.msra.mxu0 0.0
    %3292 = vmatprep.subr.mxu0 0.0
    %3293 = vmatpush1.msra.mxu0 0.0
    %3294 = vmatprep.subr.mxu0 0.0
    %3295 = vmatpush1.msra.mxu0 0.0
    %3296 = vmatprep.subr.mxu0 0.0
    %3297 = vmatpush1.msra.mxu0 0.0
    %3298 = vmatprep.subr.mxu0 0.0
    %3299 = vmatpush1.msra.mxu0 0.0
    %3300 = vmatprep.subr.mxu0 0.0
    %3301 = vmatpush1.msra.mxu0 0.0
    %3302 = vmatprep.subr.mxu0 0.0
    %3303 = vmatpush1.msra.mxu0 0.0
    %3304 = vmatprep.subr.mxu0 0.0
    %3305 = vmatpush1.msra.mxu0 0.0
    %3306 = vmatprep.subr.mxu0 0.0
    %3307 = vmatpush1.msra.mxu0 0.0
    %3308 = vmatprep.subr.mxu0 0.0
    %3309 = vmatpush1.msra.mxu0 %v101
    %3310 = vmatprep.subr.mxu0 0.0
    %3311 = vmatpush1.msra.mxu0 %v98
    %3312 = vmatprep.subr.mxu0 0.0
    %3313 = vmatpush1.msra.mxu0 %v95
    %3314 = vmatprep.subr.mxu0 0.0
    %3315 = vmatpush1.msra.mxu0 %v92
    %3316 = vmatprep.subr.mxu0 0.0
    %3317 = vmatpush2.msra.mxu0 0.0
    %3318 = vmatprep.subr.mxu0 0.0
    %3319 = vmatpush2.msra.mxu0 0.0
    %3320 = vmatprep.subr.mxu0 0.0
    %3321 = vmatpush2.msra.mxu0 0.0
    %3322 = vmatprep.subr.mxu0 0.0
    %3323 = vmatpush2.msra.mxu0 0.0
    %3324 = vmatprep.subr.mxu0 0.0
    %3325 = vmatpush2.msra.mxu0 0.0
    %3326 = vmatprep.subr.mxu0 0.0
    %3327 = vmatpush2.msra.mxu0 0.0
    %3328 = vmatprep.subr.mxu0 0.0
    %3329 = vmatpush2.msra.mxu0 0.0
    %3330 = vmatprep.subr.mxu0 0.0
    %3331 = vmatpush2.msra.mxu0 0.0
    %3332 = vmatprep.subr.mxu0 0.0
    %3333 = vmatpush2.msra.mxu0 0.0
    %3334 = vmatprep.subr.mxu0 0.0
    %3335 = vmatpush2.msra.mxu0 0.0
    %3336 = vmatprep.subr.mxu0 0.0
    %3337 = vmatpush2.msra.mxu0 0.0
    %3338 = vmatprep.subr.mxu0 0.0
    %3339 = vmatpush2.msra.mxu0 0.0
    %3340 = vmatprep.subr.mxu0 0.0
    %3341 = vmatpush2.msra.mxu0 0.0
    %3342 = vmatprep.subr.mxu0 0.0
    %3343 = vmatpush2.msra.mxu0 0.0
    %3344 = vmatprep.subr.mxu0 0.0
    %3345 = vmatpush2.msra.mxu0 0.0
    %3346 = vmatprep.subr.mxu0 0.0
    %3347 = vmatpush2.msra.mxu0 0.0
    %3348 = vmatprep.mubr.f32.mxu0 0.0
    %3349 = vmatmul.mubr.f32.gmra.mxu0 %v3211
    %v3350 = vpop.f32.mrf.mxu0
    %v3351 = vadd.f32 0.0, %v3350
    %v3352 = vpop.f32.mrf.mxu0
    %3353 = vdwg.mxu0
    %v3354 = vadd.f32 %v3136, %v3280
    %v3355 = vadd.f32 %v3138, %v3282
    %v3356 = vxor.u32 %v3354, 2147483648
    %v3357 = vxor.u32 %v3355, 2147483648
    %v3358 = vmul.f32 %v3356, 1.442695
    %v3359 = vpow.pop %v3358
    %v3360 = vmul.f32 %v3357, 1.442695
    %v3361 = vpow.pop %v3360
    %v3362 = vadd.f32 %v3359, 1.0
    %v3363 = vadd.f32 %v3361, 1.0
    %v3364 = vrcp.pop %v3362
    %v3365 = vmul.f32 1.0, %v3364
    %v3366 = vrcp.pop %v3363
    %v3367 = vmul.f32 1.0, %v3366
    %v3368 = vadd.f32 %v3351, %v912
    %v3369 = vmul.f32 %v3365, %v3368
    %v3370 = vadd.f32 %v3207, %v3369
    %v3371 = vtanh.pop %v3370
    %v3372 = vmul.f32 %v3367, %v2884
    %v3373 = vsub.f32 1.0, %v3367
    %v3374 = vmul.f32 %v3373, %v3371
    %v3375 = vadd.f32 %v3372, %v3374
    %3376 = vmatprep.subr.mxu0 0.0
    %3377 = vmatpush1.msra.mxu0 0.0
    %3378 = vmatprep.subr.mxu0 0.0
    %3379 = vmatpush1.msra.mxu0 0.0
    %3380 = vmatprep.subr.mxu0 0.0
    %3381 = vmatpush1.msra.mxu0 0.0
    %3382 = vmatprep.subr.mxu0 0.0
    %3383 = vmatpush1.msra.mxu0 0.0
    %3384 = vmatprep.subr.mxu0 0.0
    %3385 = vmatpush1.msra.mxu0 0.0
    %3386 = vmatprep.subr.mxu0 0.0
    %3387 = vmatpush1.msra.mxu0 0.0
    %3388 = vmatprep.subr.mxu0 0.0
    %3389 = vmatpush1.msra.mxu0 0.0
    %3390 = vmatprep.subr.mxu0 0.0
    %3391 = vmatpush1.msra.mxu0 0.0
    %3392 = vmatprep.subr.mxu0 0.0
    %3393 = vmatpush1.msra.mxu0 0.0
    %3394 = vmatprep.subr.mxu0 0.0
    %3395 = vmatpush1.msra.mxu0 0.0
    %3396 = vmatprep.subr.mxu0 0.0
    %3397 = vmatpush1.msra.mxu0 0.0
    %3398 = vmatprep.subr.mxu0 0.0
    %3399 = vmatpush1.msra.mxu0 0.0
    %3400 = vmatprep.subr.mxu0 %v74
    %3401 = vmatpush1.msra.mxu0 %v73
    %3402 = vmatprep.subr.mxu0 %v71
    %3403 = vmatpush1.msra.mxu0 %v70
    %3404 = vmatprep.subr.mxu0 %v68
    %3405 = vmatpush1.msra.mxu0 %v67
    %3406 = vmatprep.subr.mxu0 %v65
    %3407 = vmatpush1.msra.mxu0 %v64
    %3408 = vmatprep.subr.mxu0 0.0
    %3409 = vmatpush2.msra.mxu0 0.0
    %3410 = vmatprep.subr.mxu0 0.0
    %3411 = vmatpush2.msra.mxu0 0.0
    %3412 = vmatprep.subr.mxu0 0.0
    %3413 = vmatpush2.msra.mxu0 0.0
    %3414 = vmatprep.subr.mxu0 0.0
    %3415 = vmatpush2.msra.mxu0 0.0
    %3416 = vmatprep.subr.mxu0 0.0
    %3417 = vmatpush2.msra.mxu0 0.0
    %3418 = vmatprep.subr.mxu0 0.0
    %3419 = vmatpush2.msra.mxu0 0.0
    %3420 = vmatprep.subr.mxu0 0.0
    %3421 = vmatpush2.msra.mxu0 0.0
    %3422 = vmatprep.subr.mxu0 0.0
    %3423 = vmatpush2.msra.mxu0 0.0
    %3424 = vmatprep.subr.mxu0 0.0
    %3425 = vmatpush2.msra.mxu0 0.0
    %3426 = vmatprep.subr.mxu0 0.0
    %3427 = vmatpush2.msra.mxu0 0.0
    %3428 = vmatprep.subr.mxu0 0.0
    %3429 = vmatpush2.msra.mxu0 0.0
    %3430 = vmatprep.subr.mxu0 0.0
    %3431 = vmatpush2.msra.mxu0 0.0
    %3432 = vmatprep.subr.mxu0 0.0
    %3433 = vmatpush2.msra.mxu0 0.0
    %3434 = vmatprep.subr.mxu0 0.0
    %3435 = vmatpush2.msra.mxu0 0.0
    %3436 = vmatprep.subr.mxu0 0.0
    %3437 = vmatpush2.msra.mxu0 0.0
    %3438 = vmatprep.subr.mxu0 0.0
    %3439 = vmatpush2.msra.mxu0 0.0
    %3440 = vmatprep.mubr.f32.mxu0 0.0
    %3441 = vmatmul.mubr.f32.gmra.mxu0 %v3067
    %v3442 = vpop.f32.mrf.mxu0
    %v3443 = vadd.f32 0.0, %v3442
    %v3444 = vpop.f32.mrf.mxu0
    %v3445 = vadd.f32 0.0, %v3444
    %3446 = vdwg.mxu0
    %3447 = vmatprep.subr.mxu0 0.0
    %3448 = vmatpush1.msra.mxu0 0.0
    %3449 = vmatprep.subr.mxu0 0.0
    %3450 = vmatpush1.msra.mxu0 0.0
    %3451 = vmatprep.subr.mxu0 0.0
    %3452 = vmatpush1.msra.mxu0 0.0
    %3453 = vmatprep.subr.mxu0 0.0
    %3454 = vmatpush1.msra.mxu0 0.0
    %3455 = vmatprep.subr.mxu0 0.0
    %3456 = vmatpush1.msra.mxu0 0.0
    %3457 = vmatprep.subr.mxu0 0.0
    %3458 = vmatpush1.msra.mxu0 0.0
    %3459 = vmatprep.subr.mxu0 0.0
    %3460 = vmatpush1.msra.mxu0 0.0
    %3461 = vmatprep.subr.mxu0 0.0
    %3462 = vmatpush1.msra.mxu0 0.0
    %3463 = vmatprep.subr.mxu0 0.0
    %3464 = vmatpush1.msra.mxu0 0.0
    %3465 = vmatprep.subr.mxu0 0.0
    %3466 = vmatpush1.msra.mxu0 0.0
    %3467 = vmatprep.subr.mxu0 0.0
    %3468 = vmatpush1.msra.mxu0 0.0
    %3469 = vmatprep.subr.mxu0 0.0
    %3470 = vmatpush1.msra.mxu0 0.0
    %3471 = vmatprep.subr.mxu0 0.0
    %3472 = vmatpush1.msra.mxu0 %v75
    %3473 = vmatprep.subr.mxu0 0.0
    %3474 = vmatpush1.msra.mxu0 %v72
    %3475 = vmatprep.subr.mxu0 0.0
    %3476 = vmatpush1.msra.mxu0 %v69
    %3477 = vmatprep.subr.mxu0 0.0
    %3478 = vmatpush1.msra.mxu0 %v66
    %3479 = vmatprep.subr.mxu0 0.0
    %3480 = vmatpush2.msra.mxu0 0.0
    %3481 = vmatprep.subr.mxu0 0.0
    %3482 = vmatpush2.msra.mxu0 0.0
    %3483 = vmatprep.subr.mxu0 0.0
    %3484 = vmatpush2.msra.mxu0 0.0
    %3485 = vmatprep.subr.mxu0 0.0
    %3486 = vmatpush2.msra.mxu0 0.0
    %3487 = vmatprep.subr.mxu0 0.0
    %3488 = vmatpush2.msra.mxu0 0.0
    %3489 = vmatprep.subr.mxu0 0.0
    %3490 = vmatpush2.msra.mxu0 0.0
    %3491 = vmatprep.subr.mxu0 0.0
    %3492 = vmatpush2.msra.mxu0 0.0
    %3493 = vmatprep.subr.mxu0 0.0
    %3494 = vmatpush2.msra.mxu0 0.0
    %3495 = vmatprep.subr.mxu0 0.0
    %3496 = vmatpush2.msra.mxu0 0.0
    %3497 = vmatprep.subr.mxu0 0.0
    %3498 = vmatpush2.msra.mxu0 0.0
    %3499 = vmatprep.subr.mxu0 0.0
    %3500 = vmatpush2.msra.mxu0 0.0
    %3501 = vmatprep.subr.mxu0 0.0
    %3502 = vmatpush2.msra.mxu0 0.0
    %3503 = vmatprep.subr.mxu0 0.0
    %3504 = vmatpush2.msra.mxu0 0.0
    %3505 = vmatprep.subr.mxu0 0.0
    %3506 = vmatpush2.msra.mxu0 0.0
    %3507 = vmatprep.subr.mxu0 0.0
    %3508 = vmatpush2.msra.mxu0 0.0
    %3509 = vmatprep.subr.mxu0 0.0
    %3510 = vmatpush2.msra.mxu0 0.0
    %3511 = vmatprep.mubr.f32.mxu0 0.0
    %3512 = vmatmul.mubr.f32.gmra.mxu0 %v3067
    %v3513 = vpop.f32.mrf.mxu0
    %v3514 = vadd.f32 0.0, %v3513
    %v3515 = vpop.f32.mrf.mxu0
    %3516 = vdwg.mxu0
    %v3520 = vcombine.low %v3443, %v3445
    %v3522 = vunpack.c.l.s4 1983009808
    %v3523 = vunpack.c.0.s8 %v3522
    %v3524 = vlaneseq
    %v3525 = vshrl.u32 %v3524, 7
    %v3526 = vsub.s32 %v3523, %v3525
    %v3527 = vrot.slane %v3520, %v3526
    %v3529 = vunpack.c.l.s4 1983009808
    %v3530 = vunpack.c.0.s8 %v3529
    %v3531 = vlaneseq
    %v3532 = vshrl.u32 %v3531, 7
    %v3533 = vsub.s32 %v3530, %v3532
    %v3534 = vrot.slane %v3514, %v3533
    %v3535 = vcombine.low %v3527, %v3534
    %v3537 = vadd.f32 %v396, %v3535
    %v3538 = vxor.u32 %v3537, 2147483648
    %v3539 = vmul.f32 %v3538, 1.442695
    %v3540 = vpow.pop %v3539
    %v3541 = vadd.f32 %v3540, 1.0
    %v3542 = vrcp.pop %v3541
    %v3543 = vmul.f32 1.0, %v3542
    %v3544 = vadd.f32 %v3514, %v580
    %v3545 = vmul.f32 %v3543, %v3544
    %v3546 = vrot.slane %v396, 4
    %v3548 = vadd.f32 %v3546, %v3545
    %v3549 = vtanh.pop %v3548
    %v3551 = vrot.slane %v3543, 2
    %v3553 = vmul.f32 %v3551, %v3065
    %v3554 = vsub.f32 1.0, %v3551
    %v3555 = vmul.f32 %v3554, %v3549
    %v3556 = vadd.f32 %v3553, %v3555
    %v3558 = vsel %vm165, %v3556, 0
    %3560 = vmatprep.subr.mxu0 0.0
    %3561 = vmatpush1.msra.mxu0 0.0
    %3562 = vmatprep.subr.mxu0 0.0
    %3563 = vmatpush1.msra.mxu0 0.0
    %3564 = vmatprep.subr.mxu0 0.0
    %3565 = vmatpush1.msra.mxu0 0.0
    %3566 = vmatprep.subr.mxu0 0.0
    %3567 = vmatpush1.msra.mxu0 0.0
    %3568 = vmatprep.subr.mxu0 0.0
    %3569 = vmatpush1.msra.mxu0 0.0
    %3570 = vmatprep.subr.mxu0 0.0
    %3571 = vmatpush1.msra.mxu0 0.0
    %3572 = vmatprep.subr.mxu0 0.0
    %3573 = vmatpush1.msra.mxu0 0.0
    %3574 = vmatprep.subr.mxu0 0.0
    %3575 = vmatpush1.msra.mxu0 0.0
    %3576 = vmatprep.subr.mxu0 0.0
    %3577 = vmatpush1.msra.mxu0 0.0
    %3578 = vmatprep.subr.mxu0 0.0
    %3579 = vmatpush1.msra.mxu0 0.0
    %3580 = vmatprep.subr.mxu0 0.0
    %3581 = vmatpush1.msra.mxu0 0.0
    %3582 = vmatprep.subr.mxu0 0.0
    %3583 = vmatpush1.msra.mxu0 0.0
    %3584 = vmatprep.subr.mxu0 %v87
    %3585 = vmatpush1.msra.mxu0 %v86
    %3586 = vmatprep.subr.mxu0 %v84
    %3587 = vmatpush1.msra.mxu0 %v83
    %3588 = vmatprep.subr.mxu0 %v81
    %3589 = vmatpush1.msra.mxu0 %v80
    %3590 = vmatprep.subr.mxu0 %v78
    %3591 = vmatpush1.msra.mxu0 %v77
    %3592 = vmatprep.subr.mxu0 0.0
    %3593 = vmatpush2.msra.mxu0 0.0
    %3594 = vmatprep.subr.mxu0 0.0
    %3595 = vmatpush2.msra.mxu0 0.0
    %3596 = vmatprep.subr.mxu0 0.0
    %3597 = vmatpush2.msra.mxu0 0.0
    %3598 = vmatprep.subr.mxu0 0.0
    %3599 = vmatpush2.msra.mxu0 0.0
    %3600 = vmatprep.subr.mxu0 0.0
    %3601 = vmatpush2.msra.mxu0 0.0
    %3602 = vmatprep.subr.mxu0 0.0
    %3603 = vmatpush2.msra.mxu0 0.0
    %3604 = vmatprep.subr.mxu0 0.0
    %3605 = vmatpush2.msra.mxu0 0.0
    %3606 = vmatprep.subr.mxu0 0.0
    %3607 = vmatpush2.msra.mxu0 0.0
    %3608 = vmatprep.subr.mxu0 0.0
    %3609 = vmatpush2.msra.mxu0 0.0
    %3610 = vmatprep.subr.mxu0 0.0
    %3611 = vmatpush2.msra.mxu0 0.0
    %3612 = vmatprep.subr.mxu0 0.0
    %3613 = vmatpush2.msra.mxu0 0.0
    %3614 = vmatprep.subr.mxu0 0.0
    %3615 = vmatpush2.msra.mxu0 0.0
    %3616 = vmatprep.subr.mxu0 0.0
    %3617 = vmatpush2.msra.mxu0 0.0
    %3618 = vmatprep.subr.mxu0 0.0
    %3619 = vmatpush2.msra.mxu0 0.0
    %3620 = vmatprep.subr.mxu0 0.0
    %3621 = vmatpush2.msra.mxu0 0.0
    %3622 = vmatprep.subr.mxu0 0.0
    %3623 = vmatpush2.msra.mxu0 0.0
    %3624 = vmatprep.mubr.f32.mxu0 0.0
    %3625 = vmatmul.mubr.f32.gmra.mxu0 %v3558
    %v3626 = vpop.f32.mrf.mxu0
    %v3627 = vadd.f32 %v598, %v3626
    %v3628 = vpop.f32.mrf.mxu0
    %v3629 = vadd.f32 %v602, %v3628
    %3630 = vdwg.mxu0
    %3631 = vmatprep.subr.mxu0 0.0
    %3632 = vmatpush1.msra.mxu0 0.0
    %3633 = vmatprep.subr.mxu0 0.0
    %3634 = vmatpush1.msra.mxu0 0.0
    %3635 = vmatprep.subr.mxu0 0.0
    %3636 = vmatpush1.msra.mxu0 0.0
    %3637 = vmatprep.subr.mxu0 0.0
    %3638 = vmatpush1.msra.mxu0 0.0
    %3639 = vmatprep.subr.mxu0 0.0
    %3640 = vmatpush1.msra.mxu0 0.0
    %3641 = vmatprep.subr.mxu0 0.0
    %3642 = vmatpush1.msra.mxu0 0.0
    %3643 = vmatprep.subr.mxu0 0.0
    %3644 = vmatpush1.msra.mxu0 0.0
    %3645 = vmatprep.subr.mxu0 0.0
    %3646 = vmatpush1.msra.mxu0 0.0
    %3647 = vmatprep.subr.mxu0 0.0
    %3648 = vmatpush1.msra.mxu0 0.0
    %3649 = vmatprep.subr.mxu0 0.0
    %3650 = vmatpush1.msra.mxu0 0.0
    %3651 = vmatprep.subr.mxu0 0.0
    %3652 = vmatpush1.msra.mxu0 0.0
    %3653 = vmatprep.subr.mxu0 0.0
    %3654 = vmatpush1.msra.mxu0 0.0
    %3655 = vmatprep.subr.mxu0 0.0
    %3656 = vmatpush1.msra.mxu0 %v88
    %3657 = vmatprep.subr.mxu0 0.0
    %3658 = vmatpush1.msra.mxu0 %v85
    %3659 = vmatprep.subr.mxu0 0.0
    %3660 = vmatpush1.msra.mxu0 %v82
    %3661 = vmatprep.subr.mxu0 0.0
    %3662 = vmatpush1.msra.mxu0 %v79
    %3663 = vmatprep.subr.mxu0 0.0
    %3664 = vmatpush2.msra.mxu0 0.0
    %3665 = vmatprep.subr.mxu0 0.0
    %3666 = vmatpush2.msra.mxu0 0.0
    %3667 = vmatprep.subr.mxu0 0.0
    %3668 = vmatpush2.msra.mxu0 0.0
    %3669 = vmatprep.subr.mxu0 0.0
    %3670 = vmatpush2.msra.mxu0 0.0
    %3671 = vmatprep.subr.mxu0 0.0
    %3672 = vmatpush2.msra.mxu0 0.0
    %3673 = vmatprep.subr.mxu0 0.0
    %3674 = vmatpush2.msra.mxu0 0.0
    %3675 = vmatprep.subr.mxu0 0.0
    %3676 = vmatpush2.msra.mxu0 0.0
    %3677 = vmatprep.subr.mxu0 0.0
    %3678 = vmatpush2.msra.mxu0 0.0
    %3679 = vmatprep.subr.mxu0 0.0
    %3680 = vmatpush2.msra.mxu0 0.0
    %3681 = vmatprep.subr.mxu0 0.0
    %3682 = vmatpush2.msra.mxu0 0.0
    %3683 = vmatprep.subr.mxu0 0.0
    %3684 = vmatpush2.msra.mxu0 0.0
    %3685 = vmatprep.subr.mxu0 0.0
    %3686 = vmatpush2.msra.mxu0 0.0
    %3687 = vmatprep.subr.mxu0 0.0
    %3688 = vmatpush2.msra.mxu0 0.0
    %3689 = vmatprep.subr.mxu0 0.0
    %3690 = vmatpush2.msra.mxu0 0.0
    %3691 = vmatprep.subr.mxu0 0.0
    %3692 = vmatpush2.msra.mxu0 0.0
    %3693 = vmatprep.subr.mxu0 0.0
    %3694 = vmatpush2.msra.mxu0 0.0
    %3695 = vmatprep.mubr.f32.mxu0 0.0
    %3696 = vmatmul.mubr.f32.gmra.mxu0 %v3558
    %v3697 = vpop.f32.mrf.mxu0
    %v3698 = vadd.f32 %v606, %v3697
    %v3699 = vpop.f32.mrf.mxu0
    %3700 = vdwg.mxu0
    %v3702 = vsel %vm165, %v3375, 0
    %3704 = vmatprep.subr.mxu0 0.0
    %3705 = vmatpush1.msra.mxu0 0.0
    %3706 = vmatprep.subr.mxu0 0.0
    %3707 = vmatpush1.msra.mxu0 0.0
    %3708 = vmatprep.subr.mxu0 0.0
    %3709 = vmatpush1.msra.mxu0 0.0
    %3710 = vmatprep.subr.mxu0 0.0
    %3711 = vmatpush1.msra.mxu0 0.0
    %3712 = vmatprep.subr.mxu0 0.0
    %3713 = vmatpush1.msra.mxu0 0.0
    %3714 = vmatprep.subr.mxu0 0.0
    %3715 = vmatpush1.msra.mxu0 0.0
    %3716 = vmatprep.subr.mxu0 0.0
    %3717 = vmatpush1.msra.mxu0 0.0
    %3718 = vmatprep.subr.mxu0 0.0
    %3719 = vmatpush1.msra.mxu0 0.0
    %3720 = vmatprep.subr.mxu0 0.0
    %3721 = vmatpush1.msra.mxu0 0.0
    %3722 = vmatprep.subr.mxu0 0.0
    %3723 = vmatpush1.msra.mxu0 0.0
    %3724 = vmatprep.subr.mxu0 0.0
    %3725 = vmatpush1.msra.mxu0 0.0
    %3726 = vmatprep.subr.mxu0 0.0
    %3727 = vmatpush1.msra.mxu0 0.0
    %3728 = vmatprep.subr.mxu0 %v100
    %3729 = vmatpush1.msra.mxu0 %v99
    %3730 = vmatprep.subr.mxu0 %v97
    %3731 = vmatpush1.msra.mxu0 %v96
    %3732 = vmatprep.subr.mxu0 %v94
    %3733 = vmatpush1.msra.mxu0 %v93
    %3734 = vmatprep.subr.mxu0 %v91
    %3735 = vmatpush1.msra.mxu0 %v90
    %3736 = vmatprep.subr.mxu0 0.0
    %3737 = vmatpush2.msra.mxu0 0.0
    %3738 = vmatprep.subr.mxu0 0.0
    %3739 = vmatpush2.msra.mxu0 0.0
    %3740 = vmatprep.subr.mxu0 0.0
    %3741 = vmatpush2.msra.mxu0 0.0
    %3742 = vmatprep.subr.mxu0 0.0
    %3743 = vmatpush2.msra.mxu0 0.0
    %3744 = vmatprep.subr.mxu0 0.0
    %3745 = vmatpush2.msra.mxu0 0.0
    %3746 = vmatprep.subr.mxu0 0.0
    %3747 = vmatpush2.msra.mxu0 0.0
    %3748 = vmatprep.subr.mxu0 0.0
    %3749 = vmatpush2.msra.mxu0 0.0
    %3750 = vmatprep.subr.mxu0 0.0
    %3751 = vmatpush2.msra.mxu0 0.0
    %3752 = vmatprep.subr.mxu0 0.0
    %3753 = vmatpush2.msra.mxu0 0.0
    %3754 = vmatprep.subr.mxu0 0.0
    %3755 = vmatpush2.msra.mxu0 0.0
    %3756 = vmatprep.subr.mxu0 0.0
    %3757 = vmatpush2.msra.mxu0 0.0
    %3758 = vmatprep.subr.mxu0 0.0
    %3759 = vmatpush2.msra.mxu0 0.0
    %3760 = vmatprep.subr.mxu0 0.0
    %3761 = vmatpush2.msra.mxu0 0.0
    %3762 = vmatprep.subr.mxu0 0.0
    %3763 = vmatpush2.msra.mxu0 0.0
    %3764 = vmatprep.subr.mxu0 0.0
    %3765 = vmatpush2.msra.mxu0 0.0
    %3766 = vmatprep.subr.mxu0 0.0
    %3767 = vmatpush2.msra.mxu0 0.0
    %3768 = vmatprep.mubr.f32.mxu0 0.0
    %3769 = vmatmul.mubr.f32.gmra.mxu0 %v3702
    %v3770 = vpop.f32.mrf.mxu0
    %v3771 = vadd.f32 0.0, %v3770
    %v3772 = vpop.f32.mrf.mxu0
    %v3773 = vadd.f32 0.0, %v3772
    %3774 = vdwg.mxu0
    %3775 = vmatprep.subr.mxu0 0.0
    %3776 = vmatpush1.msra.mxu0 0.0
    %3777 = vmatprep.subr.mxu0 0.0
    %3778 = vmatpush1.msra.mxu0 0.0
    %3779 = vmatprep.subr.mxu0 0.0
    %3780 = vmatpush1.msra.mxu0 0.0
    %3781 = vmatprep.subr.mxu0 0.0
    %3782 = vmatpush1.msra.mxu0 0.0
    %3783 = vmatprep.subr.mxu0 0.0
    %3784 = vmatpush1.msra.mxu0 0.0
    %3785 = vmatprep.subr.mxu0 0.0
    %3786 = vmatpush1.msra.mxu0 0.0
    %3787 = vmatprep.subr.mxu0 0.0
    %3788 = vmatpush1.msra.mxu0 0.0
    %3789 = vmatprep.subr.mxu0 0.0
    %3790 = vmatpush1.msra.mxu0 0.0
    %3791 = vmatprep.subr.mxu0 0.0
    %3792 = vmatpush1.msra.mxu0 0.0
    %3793 = vmatprep.subr.mxu0 0.0
    %3794 = vmatpush1.msra.mxu0 0.0
    %3795 = vmatprep.subr.mxu0 0.0
    %3796 = vmatpush1.msra.mxu0 0.0
    %3797 = vmatprep.subr.mxu0 0.0
    %3798 = vmatpush1.msra.mxu0 0.0
    %3799 = vmatprep.subr.mxu0 0.0
    %3800 = vmatpush1.msra.mxu0 %v101
    %3801 = vmatprep.subr.mxu0 0.0
    %3802 = vmatpush1.msra.mxu0 %v98
    %3803 = vmatprep.subr.mxu0 0.0
    %3804 = vmatpush1.msra.mxu0 %v95
    %3805 = vmatprep.subr.mxu0 0.0
    %3806 = vmatpush1.msra.mxu0 %v92
    %3807 = vmatprep.subr.mxu0 0.0
    %3808 = vmatpush2.msra.mxu0 0.0
    %3809 = vmatprep.subr.mxu0 0.0
    %3810 = vmatpush2.msra.mxu0 0.0
    %3811 = vmatprep.subr.mxu0 0.0
    %3812 = vmatpush2.msra.mxu0 0.0
    %3813 = vmatprep.subr.mxu0 0.0
    %3814 = vmatpush2.msra.mxu0 0.0
    %3815 = vmatprep.subr.mxu0 0.0
    %3816 = vmatpush2.msra.mxu0 0.0
    %3817 = vmatprep.subr.mxu0 0.0
    %3818 = vmatpush2.msra.mxu0 0.0
    %3819 = vmatprep.subr.mxu0 0.0
    %3820 = vmatpush2.msra.mxu0 0.0
    %3821 = vmatprep.subr.mxu0 0.0
    %3822 = vmatpush2.msra.mxu0 0.0
    %3823 = vmatprep.subr.mxu0 0.0
    %3824 = vmatpush2.msra.mxu0 0.0
    %3825 = vmatprep.subr.mxu0 0.0
    %3826 = vmatpush2.msra.mxu0 0.0
    %3827 = vmatprep.subr.mxu0 0.0
    %3828 = vmatpush2.msra.mxu0 0.0
    %3829 = vmatprep.subr.mxu0 0.0
    %3830 = vmatpush2.msra.mxu0 0.0
    %3831 = vmatprep.subr.mxu0 0.0
    %3832 = vmatpush2.msra.mxu0 0.0
    %3833 = vmatprep.subr.mxu0 0.0
    %3834 = vmatpush2.msra.mxu0 0.0
    %3835 = vmatprep.subr.mxu0 0.0
    %3836 = vmatpush2.msra.mxu0 0.0
    %3837 = vmatprep.subr.mxu0 0.0
    %3838 = vmatpush2.msra.mxu0 0.0
    %3839 = vmatprep.mubr.f32.mxu0 0.0
    %3840 = vmatmul.mubr.f32.gmra.mxu0 %v3702
    %v3841 = vpop.f32.mrf.mxu0
    %v3842 = vadd.f32 0.0, %v3841
    %v3843 = vpop.f32.mrf.mxu0
    %3844 = vdwg.mxu0
    %v3845 = vadd.f32 %v3627, %v3771
    %v3846 = vadd.f32 %v3629, %v3773
    %v3847 = vxor.u32 %v3845, 2147483648
    %v3848 = vxor.u32 %v3846, 2147483648
    %v3849 = vmul.f32 %v3847, 1.442695
    %v3850 = vpow.pop %v3849
    %v3851 = vmul.f32 %v3848, 1.442695
    %v3852 = vpow.pop %v3851
    %v3853 = vadd.f32 %v3850, 1.0
    %v3854 = vadd.f32 %v3852, 1.0
    %v3855 = vrcp.pop %v3853
    %v3856 = vmul.f32 1.0, %v3855
    %v3857 = vrcp.pop %v3854
    %v3858 = vmul.f32 1.0, %v3857
    %v3859 = vadd.f32 %v3842, %v912
    %v3860 = vmul.f32 %v3856, %v3859
    %v3861 = vadd.f32 %v3698, %v3860
    %v3862 = vtanh.pop %v3861
    %v3863 = vmul.f32 %v3858, %v3375
    %v3864 = vsub.f32 1.0, %v3858
    %v3865 = vmul.f32 %v3864, %v3862
    %v3866 = vadd.f32 %v3863, %v3865
    %3867 = vmatprep.subr.mxu0 0.0
    %3868 = vmatpush1.msra.mxu0 0.0
    %3869 = vmatprep.subr.mxu0 0.0
    %3870 = vmatpush1.msra.mxu0 0.0
    %3871 = vmatprep.subr.mxu0 0.0
    %3872 = vmatpush1.msra.mxu0 0.0
    %3873 = vmatprep.subr.mxu0 0.0
    %3874 = vmatpush1.msra.mxu0 0.0
    %3875 = vmatprep.subr.mxu0 0.0
    %3876 = vmatpush1.msra.mxu0 0.0
    %3877 = vmatprep.subr.mxu0 0.0
    %3878 = vmatpush1.msra.mxu0 0.0
    %3879 = vmatprep.subr.mxu0 0.0
    %3880 = vmatpush1.msra.mxu0 0.0
    %3881 = vmatprep.subr.mxu0 0.0
    %3882 = vmatpush1.msra.mxu0 0.0
    %3883 = vmatprep.subr.mxu0 0.0
    %3884 = vmatpush1.msra.mxu0 0.0
    %3885 = vmatprep.subr.mxu0 0.0
    %3886 = vmatpush1.msra.mxu0 0.0
    %3887 = vmatprep.subr.mxu0 0.0
    %3888 = vmatpush1.msra.mxu0 0.0
    %3889 = vmatprep.subr.mxu0 0.0
    %3890 = vmatpush1.msra.mxu0 0.0
    %3891 = vmatprep.subr.mxu0 %v74
    %3892 = vmatpush1.msra.mxu0 %v73
    %3893 = vmatprep.subr.mxu0 %v71
    %3894 = vmatpush1.msra.mxu0 %v70
    %3895 = vmatprep.subr.mxu0 %v68
    %3896 = vmatpush1.msra.mxu0 %v67
    %3897 = vmatprep.subr.mxu0 %v65
    %3898 = vmatpush1.msra.mxu0 %v64
    %3899 = vmatprep.subr.mxu0 0.0
    %3900 = vmatpush2.msra.mxu0 0.0
    %3901 = vmatprep.subr.mxu0 0.0
    %3902 = vmatpush2.msra.mxu0 0.0
    %3903 = vmatprep.subr.mxu0 0.0
    %3904 = vmatpush2.msra.mxu0 0.0
    %3905 = vmatprep.subr.mxu0 0.0
    %3906 = vmatpush2.msra.mxu0 0.0
    %3907 = vmatprep.subr.mxu0 0.0
    %3908 = vmatpush2.msra.mxu0 0.0
    %3909 = vmatprep.subr.mxu0 0.0
    %3910 = vmatpush2.msra.mxu0 0.0
    %3911 = vmatprep.subr.mxu0 0.0
    %3912 = vmatpush2.msra.mxu0 0.0
    %3913 = vmatprep.subr.mxu0 0.0
    %3914 = vmatpush2.msra.mxu0 0.0
    %3915 = vmatprep.subr.mxu0 0.0
    %3916 = vmatpush2.msra.mxu0 0.0
    %3917 = vmatprep.subr.mxu0 0.0
    %3918 = vmatpush2.msra.mxu0 0.0
    %3919 = vmatprep.subr.mxu0 0.0
    %3920 = vmatpush2.msra.mxu0 0.0
    %3921 = vmatprep.subr.mxu0 0.0
    %3922 = vmatpush2.msra.mxu0 0.0
    %3923 = vmatprep.subr.mxu0 0.0
    %3924 = vmatpush2.msra.mxu0 0.0
    %3925 = vmatprep.subr.mxu0 0.0
    %3926 = vmatpush2.msra.mxu0 0.0
    %3927 = vmatprep.subr.mxu0 0.0
    %3928 = vmatpush2.msra.mxu0 0.0
    %3929 = vmatprep.subr.mxu0 0.0
    %3930 = vmatpush2.msra.mxu0 0.0
    %3931 = vmatprep.mubr.f32.mxu0 0.0
    %3932 = vmatmul.mubr.f32.gmra.mxu0 %v3558
    %v3933 = vpop.f32.mrf.mxu0
    %v3934 = vadd.f32 0.0, %v3933
    %v3935 = vpop.f32.mrf.mxu0
    %v3936 = vadd.f32 0.0, %v3935
    %3937 = vdwg.mxu0
    %3938 = vmatprep.subr.mxu0 0.0
    %3939 = vmatpush1.msra.mxu0 0.0
    %3940 = vmatprep.subr.mxu0 0.0
    %3941 = vmatpush1.msra.mxu0 0.0
    %3942 = vmatprep.subr.mxu0 0.0
    %3943 = vmatpush1.msra.mxu0 0.0
    %3944 = vmatprep.subr.mxu0 0.0
    %3945 = vmatpush1.msra.mxu0 0.0
    %3946 = vmatprep.subr.mxu0 0.0
    %3947 = vmatpush1.msra.mxu0 0.0
    %3948 = vmatprep.subr.mxu0 0.0
    %3949 = vmatpush1.msra.mxu0 0.0
    %3950 = vmatprep.subr.mxu0 0.0
    %3951 = vmatpush1.msra.mxu0 0.0
    %3952 = vmatprep.subr.mxu0 0.0
    %3953 = vmatpush1.msra.mxu0 0.0
    %3954 = vmatprep.subr.mxu0 0.0
    %3955 = vmatpush1.msra.mxu0 0.0
    %3956 = vmatprep.subr.mxu0 0.0
    %3957 = vmatpush1.msra.mxu0 0.0
    %3958 = vmatprep.subr.mxu0 0.0
    %3959 = vmatpush1.msra.mxu0 0.0
    %3960 = vmatprep.subr.mxu0 0.0
    %3961 = vmatpush1.msra.mxu0 0.0
    %3962 = vmatprep.subr.mxu0 0.0
    %3963 = vmatpush1.msra.mxu0 %v75
    %3964 = vmatprep.subr.mxu0 0.0
    %3965 = vmatpush1.msra.mxu0 %v72
    %3966 = vmatprep.subr.mxu0 0.0
    %3967 = vmatpush1.msra.mxu0 %v69
    %3968 = vmatprep.subr.mxu0 0.0
    %3969 = vmatpush1.msra.mxu0 %v66
    %3970 = vmatprep.subr.mxu0 0.0
    %3971 = vmatpush2.msra.mxu0 0.0
    %3972 = vmatprep.subr.mxu0 0.0
    %3973 = vmatpush2.msra.mxu0 0.0
    %3974 = vmatprep.subr.mxu0 0.0
    %3975 = vmatpush2.msra.mxu0 0.0
    %3976 = vmatprep.subr.mxu0 0.0
    %3977 = vmatpush2.msra.mxu0 0.0
    %3978 = vmatprep.subr.mxu0 0.0
    %3979 = vmatpush2.msra.mxu0 0.0
    %3980 = vmatprep.subr.mxu0 0.0
    %3981 = vmatpush2.msra.mxu0 0.0
    %3982 = vmatprep.subr.mxu0 0.0
    %3983 = vmatpush2.msra.mxu0 0.0
    %3984 = vmatprep.subr.mxu0 0.0
    %3985 = vmatpush2.msra.mxu0 0.0
    %3986 = vmatprep.subr.mxu0 0.0
    %3987 = vmatpush2.msra.mxu0 0.0
    %3988 = vmatprep.subr.mxu0 0.0
    %3989 = vmatpush2.msra.mxu0 0.0
    %3990 = vmatprep.subr.mxu0 0.0
    %3991 = vmatpush2.msra.mxu0 0.0
    %3992 = vmatprep.subr.mxu0 0.0
    %3993 = vmatpush2.msra.mxu0 0.0
    %3994 = vmatprep.subr.mxu0 0.0
    %3995 = vmatpush2.msra.mxu0 0.0
    %3996 = vmatprep.subr.mxu0 0.0
    %3997 = vmatpush2.msra.mxu0 0.0
    %3998 = vmatprep.subr.mxu0 0.0
    %3999 = vmatpush2.msra.mxu0 0.0
    %4000 = vmatprep.subr.mxu0 0.0
    %4001 = vmatpush2.msra.mxu0 0.0
    %4002 = vmatprep.mubr.f32.mxu0 0.0
    %4003 = vmatmul.mubr.f32.gmra.mxu0 %v3558
    %v4004 = vpop.f32.mrf.mxu0
    %v4005 = vadd.f32 0.0, %v4004
    %v4006 = vpop.f32.mrf.mxu0
    %4007 = vdwg.mxu0
    %v4011 = vcombine.low %v3934, %v3936
    %v4013 = vunpack.c.l.s4 1983009808
    %v4014 = vunpack.c.0.s8 %v4013
    %v4015 = vlaneseq
    %v4016 = vshrl.u32 %v4015, 7
    %v4017 = vsub.s32 %v4014, %v4016
    %v4018 = vrot.slane %v4011, %v4017
    %v4020 = vunpack.c.l.s4 1983009808
    %v4021 = vunpack.c.0.s8 %v4020
    %v4022 = vlaneseq
    %v4023 = vshrl.u32 %v4022, 7
    %v4024 = vsub.s32 %v4021, %v4023
    %v4025 = vrot.slane %v4005, %v4024
    %v4026 = vcombine.low %v4018, %v4025
    %v4028 = vadd.f32 %v397, %v4026
    %v4029 = vxor.u32 %v4028, 2147483648
    %v4030 = vmul.f32 %v4029, 1.442695
    %v4031 = vpow.pop %v4030
    %v4032 = vadd.f32 %v4031, 1.0
    %v4033 = vrcp.pop %v4032
    %v4034 = vmul.f32 1.0, %v4033
    %v4035 = vadd.f32 %v4005, %v580
    %v4036 = vmul.f32 %v4034, %v4035
    %v4037 = vrot.slane %v397, 4
    %v4039 = vadd.f32 %v4037, %v4036
    %v4040 = vtanh.pop %v4039
    %v4042 = vrot.slane %v4034, 2
    %v4044 = vmul.f32 %v4042, %v3556
    %v4045 = vsub.f32 1.0, %v4042
    %v4046 = vmul.f32 %v4045, %v4040
    %v4047 = vadd.f32 %v4044, %v4046
    %v4049 = vsel %vm165, %v4047, 0
    %4051 = vmatprep.subr.mxu0 0.0
    %4052 = vmatpush1.msra.mxu0 0.0
    %4053 = vmatprep.subr.mxu0 0.0
    %4054 = vmatpush1.msra.mxu0 0.0
    %4055 = vmatprep.subr.mxu0 0.0
    %4056 = vmatpush1.msra.mxu0 0.0
    %4057 = vmatprep.subr.mxu0 0.0
    %4058 = vmatpush1.msra.mxu0 0.0
    %4059 = vmatprep.subr.mxu0 0.0
    %4060 = vmatpush1.msra.mxu0 0.0
    %4061 = vmatprep.subr.mxu0 0.0
    %4062 = vmatpush1.msra.mxu0 0.0
    %4063 = vmatprep.subr.mxu0 0.0
    %4064 = vmatpush1.msra.mxu0 0.0
    %4065 = vmatprep.subr.mxu0 0.0
    %4066 = vmatpush1.msra.mxu0 0.0
    %4067 = vmatprep.subr.mxu0 0.0
    %4068 = vmatpush1.msra.mxu0 0.0
    %4069 = vmatprep.subr.mxu0 0.0
    %4070 = vmatpush1.msra.mxu0 0.0
    %4071 = vmatprep.subr.mxu0 0.0
    %4072 = vmatpush1.msra.mxu0 0.0
    %4073 = vmatprep.subr.mxu0 0.0
    %4074 = vmatpush1.msra.mxu0 0.0
    %4075 = vmatprep.subr.mxu0 %v87
    %4076 = vmatpush1.msra.mxu0 %v86
    %4077 = vmatprep.subr.mxu0 %v84
    %4078 = vmatpush1.msra.mxu0 %v83
    %4079 = vmatprep.subr.mxu0 %v81
    %4080 = vmatpush1.msra.mxu0 %v80
    %4081 = vmatprep.subr.mxu0 %v78
    %4082 = vmatpush1.msra.mxu0 %v77
    %4083 = vmatprep.subr.mxu0 0.0
    %4084 = vmatpush2.msra.mxu0 0.0
    %4085 = vmatprep.subr.mxu0 0.0
    %4086 = vmatpush2.msra.mxu0 0.0
    %4087 = vmatprep.subr.mxu0 0.0
    %4088 = vmatpush2.msra.mxu0 0.0
    %4089 = vmatprep.subr.mxu0 0.0
    %4090 = vmatpush2.msra.mxu0 0.0
    %4091 = vmatprep.subr.mxu0 0.0
    %4092 = vmatpush2.msra.mxu0 0.0
    %4093 = vmatprep.subr.mxu0 0.0
    %4094 = vmatpush2.msra.mxu0 0.0
    %4095 = vmatprep.subr.mxu0 0.0
    %4096 = vmatpush2.msra.mxu0 0.0
    %4097 = vmatprep.subr.mxu0 0.0
    %4098 = vmatpush2.msra.mxu0 0.0
    %4099 = vmatprep.subr.mxu0 0.0
    %4100 = vmatpush2.msra.mxu0 0.0
    %4101 = vmatprep.subr.mxu0 0.0
    %4102 = vmatpush2.msra.mxu0 0.0
    %4103 = vmatprep.subr.mxu0 0.0
    %4104 = vmatpush2.msra.mxu0 0.0
    %4105 = vmatprep.subr.mxu0 0.0
    %4106 = vmatpush2.msra.mxu0 0.0
    %4107 = vmatprep.subr.mxu0 0.0
    %4108 = vmatpush2.msra.mxu0 0.0
    %4109 = vmatprep.subr.mxu0 0.0
    %4110 = vmatpush2.msra.mxu0 0.0
    %4111 = vmatprep.subr.mxu0 0.0
    %4112 = vmatpush2.msra.mxu0 0.0
    %4113 = vmatprep.subr.mxu0 0.0
    %4114 = vmatpush2.msra.mxu0 0.0
    %4115 = vmatprep.mubr.f32.mxu0 0.0
    %4116 = vmatmul.mubr.f32.gmra.mxu0 %v4049
    %v4117 = vpop.f32.mrf.mxu0
    %v4118 = vadd.f32 %v598, %v4117
    %v4119 = vpop.f32.mrf.mxu0
    %v4120 = vadd.f32 %v602, %v4119
    %4121 = vdwg.mxu0
    %4122 = vmatprep.subr.mxu0 0.0
    %4123 = vmatpush1.msra.mxu0 0.0
    %4124 = vmatprep.subr.mxu0 0.0
    %4125 = vmatpush1.msra.mxu0 0.0
    %4126 = vmatprep.subr.mxu0 0.0
    %4127 = vmatpush1.msra.mxu0 0.0
    %4128 = vmatprep.subr.mxu0 0.0
    %4129 = vmatpush1.msra.mxu0 0.0
    %4130 = vmatprep.subr.mxu0 0.0
    %4131 = vmatpush1.msra.mxu0 0.0
    %4132 = vmatprep.subr.mxu0 0.0
    %4133 = vmatpush1.msra.mxu0 0.0
    %4134 = vmatprep.subr.mxu0 0.0
    %4135 = vmatpush1.msra.mxu0 0.0
    %4136 = vmatprep.subr.mxu0 0.0
    %4137 = vmatpush1.msra.mxu0 0.0
    %4138 = vmatprep.subr.mxu0 0.0
    %4139 = vmatpush1.msra.mxu0 0.0
    %4140 = vmatprep.subr.mxu0 0.0
    %4141 = vmatpush1.msra.mxu0 0.0
    %4142 = vmatprep.subr.mxu0 0.0
    %4143 = vmatpush1.msra.mxu0 0.0
    %4144 = vmatprep.subr.mxu0 0.0
    %4145 = vmatpush1.msra.mxu0 0.0
    %4146 = vmatprep.subr.mxu0 0.0
    %4147 = vmatpush1.msra.mxu0 %v88
    %4148 = vmatprep.subr.mxu0 0.0
    %4149 = vmatpush1.msra.mxu0 %v85
    %4150 = vmatprep.subr.mxu0 0.0
    %4151 = vmatpush1.msra.mxu0 %v82
    %4152 = vmatprep.subr.mxu0 0.0
    %4153 = vmatpush1.msra.mxu0 %v79
    %4154 = vmatprep.subr.mxu0 0.0
    %4155 = vmatpush2.msra.mxu0 0.0
    %4156 = vmatprep.subr.mxu0 0.0
    %4157 = vmatpush2.msra.mxu0 0.0
    %4158 = vmatprep.subr.mxu0 0.0
    %4159 = vmatpush2.msra.mxu0 0.0
    %4160 = vmatprep.subr.mxu0 0.0
    %4161 = vmatpush2.msra.mxu0 0.0
    %4162 = vmatprep.subr.mxu0 0.0
    %4163 = vmatpush2.msra.mxu0 0.0
    %4164 = vmatprep.subr.mxu0 0.0
    %4165 = vmatpush2.msra.mxu0 0.0
    %4166 = vmatprep.subr.mxu0 0.0
    %4167 = vmatpush2.msra.mxu0 0.0
    %4168 = vmatprep.subr.mxu0 0.0
    %4169 = vmatpush2.msra.mxu0 0.0
    %4170 = vmatprep.subr.mxu0 0.0
    %4171 = vmatpush2.msra.mxu0 0.0
    %4172 = vmatprep.subr.mxu0 0.0
    %4173 = vmatpush2.msra.mxu0 0.0
    %4174 = vmatprep.subr.mxu0 0.0
    %4175 = vmatpush2.msra.mxu0 0.0
    %4176 = vmatprep.subr.mxu0 0.0
    %4177 = vmatpush2.msra.mxu0 0.0
    %4178 = vmatprep.subr.mxu0 0.0
    %4179 = vmatpush2.msra.mxu0 0.0
    %4180 = vmatprep.subr.mxu0 0.0
    %4181 = vmatpush2.msra.mxu0 0.0
    %4182 = vmatprep.subr.mxu0 0.0
    %4183 = vmatpush2.msra.mxu0 0.0
    %4184 = vmatprep.subr.mxu0 0.0
    %4185 = vmatpush2.msra.mxu0 0.0
    %4186 = vmatprep.mubr.f32.mxu0 0.0
    %4187 = vmatmul.mubr.f32.gmra.mxu0 %v4049
    %v4188 = vpop.f32.mrf.mxu0
    %v4189 = vadd.f32 %v606, %v4188
    %v4190 = vpop.f32.mrf.mxu0
    %4191 = vdwg.mxu0
    %v4193 = vsel %vm165, %v3866, 0
    %4195 = vmatprep.subr.mxu0 0.0
    %4196 = vmatpush1.msra.mxu0 0.0
    %4197 = vmatprep.subr.mxu0 0.0
    %4198 = vmatpush1.msra.mxu0 0.0
    %4199 = vmatprep.subr.mxu0 0.0
    %4200 = vmatpush1.msra.mxu0 0.0
    %4201 = vmatprep.subr.mxu0 0.0
    %4202 = vmatpush1.msra.mxu0 0.0
    %4203 = vmatprep.subr.mxu0 0.0
    %4204 = vmatpush1.msra.mxu0 0.0
    %4205 = vmatprep.subr.mxu0 0.0
    %4206 = vmatpush1.msra.mxu0 0.0
    %4207 = vmatprep.subr.mxu0 0.0
    %4208 = vmatpush1.msra.mxu0 0.0
    %4209 = vmatprep.subr.mxu0 0.0
    %4210 = vmatpush1.msra.mxu0 0.0
    %4211 = vmatprep.subr.mxu0 0.0
    %4212 = vmatpush1.msra.mxu0 0.0
    %4213 = vmatprep.subr.mxu0 0.0
    %4214 = vmatpush1.msra.mxu0 0.0
    %4215 = vmatprep.subr.mxu0 0.0
    %4216 = vmatpush1.msra.mxu0 0.0
    %4217 = vmatprep.subr.mxu0 0.0
    %4218 = vmatpush1.msra.mxu0 0.0
    %4219 = vmatprep.subr.mxu0 %v100
    %4220 = vmatpush1.msra.mxu0 %v99
    %4221 = vmatprep.subr.mxu0 %v97
    %4222 = vmatpush1.msra.mxu0 %v96
    %4223 = vmatprep.subr.mxu0 %v94
    %4224 = vmatpush1.msra.mxu0 %v93
    %4225 = vmatprep.subr.mxu0 %v91
    %4226 = vmatpush1.msra.mxu0 %v90
    %4227 = vmatprep.subr.mxu0 0.0
    %4228 = vmatpush2.msra.mxu0 0.0
    %4229 = vmatprep.subr.mxu0 0.0
    %4230 = vmatpush2.msra.mxu0 0.0
    %4231 = vmatprep.subr.mxu0 0.0
    %4232 = vmatpush2.msra.mxu0 0.0
    %4233 = vmatprep.subr.mxu0 0.0
    %4234 = vmatpush2.msra.mxu0 0.0
    %4235 = vmatprep.subr.mxu0 0.0
    %4236 = vmatpush2.msra.mxu0 0.0
    %4237 = vmatprep.subr.mxu0 0.0
    %4238 = vmatpush2.msra.mxu0 0.0
    %4239 = vmatprep.subr.mxu0 0.0
    %4240 = vmatpush2.msra.mxu0 0.0
    %4241 = vmatprep.subr.mxu0 0.0
    %4242 = vmatpush2.msra.mxu0 0.0
    %4243 = vmatprep.subr.mxu0 0.0
    %4244 = vmatpush2.msra.mxu0 0.0
    %4245 = vmatprep.subr.mxu0 0.0
    %4246 = vmatpush2.msra.mxu0 0.0
    %4247 = vmatprep.subr.mxu0 0.0
    %4248 = vmatpush2.msra.mxu0 0.0
    %4249 = vmatprep.subr.mxu0 0.0
    %4250 = vmatpush2.msra.mxu0 0.0
    %4251 = vmatprep.subr.mxu0 0.0
    %4252 = vmatpush2.msra.mxu0 0.0
    %4253 = vmatprep.subr.mxu0 0.0
    %4254 = vmatpush2.msra.mxu0 0.0
    %4255 = vmatprep.subr.mxu0 0.0
    %4256 = vmatpush2.msra.mxu0 0.0
    %4257 = vmatprep.subr.mxu0 0.0
    %4258 = vmatpush2.msra.mxu0 0.0
    %4259 = vmatprep.mubr.f32.mxu0 0.0
    %4260 = vmatmul.mubr.f32.gmra.mxu0 %v4193
    %v4261 = vpop.f32.mrf.mxu0
    %v4262 = vadd.f32 0.0, %v4261
    %v4263 = vpop.f32.mrf.mxu0
    %v4264 = vadd.f32 0.0, %v4263
    %4265 = vdwg.mxu0
    %4266 = vmatprep.subr.mxu0 0.0
    %4267 = vmatpush1.msra.mxu0 0.0
    %4268 = vmatprep.subr.mxu0 0.0
    %4269 = vmatpush1.msra.mxu0 0.0
    %4270 = vmatprep.subr.mxu0 0.0
    %4271 = vmatpush1.msra.mxu0 0.0
    %4272 = vmatprep.subr.mxu0 0.0
    %4273 = vmatpush1.msra.mxu0 0.0
    %4274 = vmatprep.subr.mxu0 0.0
    %4275 = vmatpush1.msra.mxu0 0.0
    %4276 = vmatprep.subr.mxu0 0.0
    %4277 = vmatpush1.msra.mxu0 0.0
    %4278 = vmatprep.subr.mxu0 0.0
    %4279 = vmatpush1.msra.mxu0 0.0
    %4280 = vmatprep.subr.mxu0 0.0
    %4281 = vmatpush1.msra.mxu0 0.0
    %4282 = vmatprep.subr.mxu0 0.0
    %4283 = vmatpush1.msra.mxu0 0.0
    %4284 = vmatprep.subr.mxu0 0.0
    %4285 = vmatpush1.msra.mxu0 0.0
    %4286 = vmatprep.subr.mxu0 0.0
    %4287 = vmatpush1.msra.mxu0 0.0
    %4288 = vmatprep.subr.mxu0 0.0
    %4289 = vmatpush1.msra.mxu0 0.0
    %4290 = vmatprep.subr.mxu0 0.0
    %4291 = vmatpush1.msra.mxu0 %v101
    %4292 = vmatprep.subr.mxu0 0.0
    %4293 = vmatpush1.msra.mxu0 %v98
    %4294 = vmatprep.subr.mxu0 0.0
    %4295 = vmatpush1.msra.mxu0 %v95
    %4296 = vmatprep.subr.mxu0 0.0
    %4297 = vmatpush1.msra.mxu0 %v92
    %4298 = vmatprep.subr.mxu0 0.0
    %4299 = vmatpush2.msra.mxu0 0.0
    %4300 = vmatprep.subr.mxu0 0.0
    %4301 = vmatpush2.msra.mxu0 0.0
    %4302 = vmatprep.subr.mxu0 0.0
    %4303 = vmatpush2.msra.mxu0 0.0
    %4304 = vmatprep.subr.mxu0 0.0
    %4305 = vmatpush2.msra.mxu0 0.0
    %4306 = vmatprep.subr.mxu0 0.0
    %4307 = vmatpush2.msra.mxu0 0.0
    %4308 = vmatprep.subr.mxu0 0.0
    %4309 = vmatpush2.msra.mxu0 0.0
    %4310 = vmatprep.subr.mxu0 0.0
    %4311 = vmatpush2.msra.mxu0 0.0
    %4312 = vmatprep.subr.mxu0 0.0
    %4313 = vmatpush2.msra.mxu0 0.0
    %4314 = vmatprep.subr.mxu0 0.0
    %4315 = vmatpush2.msra.mxu0 0.0
    %4316 = vmatprep.subr.mxu0 0.0
    %4317 = vmatpush2.msra.mxu0 0.0
    %4318 = vmatprep.subr.mxu0 0.0
    %4319 = vmatpush2.msra.mxu0 0.0
    %4320 = vmatprep.subr.mxu0 0.0
    %4321 = vmatpush2.msra.mxu0 0.0
    %4322 = vmatprep.subr.mxu0 0.0
    %4323 = vmatpush2.msra.mxu0 0.0
    %4324 = vmatprep.subr.mxu0 0.0
    %4325 = vmatpush2.msra.mxu0 0.0
    %4326 = vmatprep.subr.mxu0 0.0
    %4327 = vmatpush2.msra.mxu0 0.0
    %4328 = vmatprep.subr.mxu0 0.0
    %4329 = vmatpush2.msra.mxu0 0.0
    %4330 = vmatprep.mubr.f32.mxu0 0.0
    %4331 = vmatmul.mubr.f32.gmra.mxu0 %v4193
    %v4332 = vpop.f32.mrf.mxu0
    %v4333 = vadd.f32 0.0, %v4332
    %v4334 = vpop.f32.mrf.mxu0
    %4335 = vdwg.mxu0
    %v4336 = vadd.f32 %v4118, %v4262
    %v4337 = vadd.f32 %v4120, %v4264
    %v4338 = vxor.u32 %v4336, 2147483648
    %v4339 = vxor.u32 %v4337, 2147483648
    %v4340 = vmul.f32 %v4338, 1.442695
    %v4341 = vpow.pop %v4340
    %v4342 = vmul.f32 %v4339, 1.442695
    %v4343 = vpow.pop %v4342
    %v4344 = vadd.f32 %v4341, 1.0
    %v4345 = vadd.f32 %v4343, 1.0
    %v4346 = vrcp.pop %v4344
    %v4347 = vmul.f32 1.0, %v4346
    %v4348 = vrcp.pop %v4345
    %v4349 = vmul.f32 1.0, %v4348
    %v4350 = vadd.f32 %v4333, %v912
    %v4351 = vmul.f32 %v4347, %v4350
    %v4352 = vadd.f32 %v4189, %v4351
    %v4353 = vtanh.pop %v4352
    %v4354 = vmul.f32 %v4349, %v3866
    %v4355 = vsub.f32 1.0, %v4349
    %v4356 = vmul.f32 %v4355, %v4353
    %v4357 = vadd.f32 %v4354, %v4356
    %v4358 = vld [vmem:[%s1] sm:$0x3]
    %v4359 = vld [vmem:[%s1 + $0x2] sm:$0x3]
    %v4360 = vld [vmem:[%s1 + $0x4] sm:$0x3]
    %v4361 = vld [vmem:[%s1 + $0x6] sm:$0x3]
    %v4362 = vld [vmem:[%s1 + $0x8] sm:$0x3]
    %v4363 = vld [vmem:[%s1 + $0xa] sm:$0x3]
    %v4364 = vld [vmem:[%s1 + $0xc] sm:$0x3]
    %v4365 = vld [vmem:[%s1 + $0xe] sm:$0x3]
    %vm4366 = vcmask 1041408
    %v4367 = vsel %vm4366, %v4047, 0.0
    %4368 = vadd.xlane.f32.xlu0 %v4367
    %v4369 = vpop.xlane.xlu0 %4368
    %v4370 = vmul.f32 %v4369, 0.03125
    %v4371 = vmul.f32 %v4047, %v4047
    %v4372 = vsel %vm4366, %v4371, 0.0
    %4373 = vadd.xlane.f32.xlu0 %v4372
    %v4374 = vpop.xlane.xlu0 %4373
    %v4375 = vmul.f32 %v4374, 0.03125
    %v4376 = vmul.f32 %v4370, %v4370
    %v4377 = vsub.f32 %v4375, %v4376
    %v4378 = vsub.f32 %v4047, %v4370
    %v4379 = vadd.f32 %v4377, 1e-05
    %v4380 = vrsqrt.pop %v4379
    %v4381 = vmul.f32 %v4378, %v4380
    %v4382 = vlaneseq
    %v4383 = vshrl.u32 %v4382, 7
    %v4384 = vsub.s32 0, %v4383
    %v4385 = vrot.slane %v38, %v4384
    %v4386 = vmul.f32 %v4381, %v4385
    %v4387 = vlaneseq
    %v4388 = vshrl.u32 %v4387, 7
    %v4389 = vsub.s32 0, %v4388
    %v4390 = vrot.slane %v39, %v4389
    %v4391 = vadd.f32 %v4386, %v4390
    %v4392 = vsel %vm4366, %v4357, 0.0
    %4393 = vadd.xlane.f32.xlu0 %v4392
    %v4394 = vpop.xlane.xlu0 %4393
    %v4395 = vmul.f32 %v4394, 0.03125
    %v4396 = vmul.f32 %v4357, %v4357
    %v4397 = vsel %vm4366, %v4396, 0.0
    %4398 = vadd.xlane.f32.xlu0 %v4397
    %v4399 = vpop.xlane.xlu0 %4398
    %v4400 = vmul.f32 %v4399, 0.03125
    %v4401 = vmul.f32 %v4395, %v4395
    %v4402 = vsub.f32 %v4400, %v4401
    %v4403 = vsub.f32 %v4357, %v4395
    %v4404 = vadd.f32 %v4402, 1e-05
    %v4405 = vrsqrt.pop %v4404
    %v4406 = vmul.f32 %v4403, %v4405
    %v4407 = vmul.f32 %v4406, %v4385
    %v4408 = vadd.f32 %v4407, %v4390
    %s4409 = scalar_lea.vmem %s2, 192
    %v4410 = vld [vmem:[%s4409] sm:$0xff]
    %v4411 = vld [vmem:[%s4409 + $0x8] sm:$0xff]
    %v4412 = vld [vmem:[%s4409 + $0x10] sm:$0xff]
    %v4413 = vld [vmem:[%s4409 + $0x18] sm:$0xff]
    %v4414 = vld [vmem:[%s4409 + $0x20] sm:$0xff]
    %v4415 = vld [vmem:[%s4409 + $0x28] sm:$0xff]
    %v4416 = vld [vmem:[%s4409 + $0x30] sm:$0xff]
    %v4417 = vld [vmem:[%s4409 + $0x38] sm:$0xff]
    %v4418 = vld [vmem:[%s4409 + $0x40] sm:$0xff]
    %v4419 = vld [vmem:[%s4409 + $0x48] sm:$0xff]
    %v4420 = vld [vmem:[%s4409 + $0x50] sm:$0xff]
    %v4421 = vld [vmem:[%s4409 + $0x58] sm:$0xff]
    %s4422 = scalar_lea.vmem [#allocation2], 192
    %v4423 = vld [vmem:[%s4422] sm:$0xff]
    %v4424 = vld [vmem:[%s4422 + $0x8] sm:$0xff]
    %v4425 = vld [vmem:[%s4422 + $0x10] sm:$0xff]
    %v4426 = vld [vmem:[%s4422 + $0x18] sm:$0xff]
    %v4427 = vld [vmem:[%s4422 + $0x20] sm:$0xff]
    %v4428 = vld [vmem:[%s4422 + $0x28] sm:$0xff]
    %v4429 = vld [vmem:[%s4422 + $0x30] sm:$0xff]
    %v4430 = vld [vmem:[%s4422 + $0x38] sm:$0xff]
    %v4431 = vld [vmem:[%s4422 + $0x40] sm:$0xff]
    %v4432 = vld [vmem:[%s4422 + $0x48] sm:$0xff]
    %v4433 = vld [vmem:[%s4422 + $0x50] sm:$0xff]
    %v4434 = vld [vmem:[%s4422 + $0x58] sm:$0xff]
    %s4435 = scalar_lea.vmem %s2, 288
    %v4436 = vld [vmem:[%s4435] sm:$0xff]
    %v4437 = vld [vmem:[%s4435 + $0x8] sm:$0xff]
    %v4438 = vld [vmem:[%s4435 + $0x10] sm:$0xff]
    %v4439 = vld [vmem:[%s4435 + $0x18] sm:$0xff]
    %v4440 = vld [vmem:[%s4435 + $0x20] sm:$0xff]
    %v4441 = vld [vmem:[%s4435 + $0x28] sm:$0xff]
    %v4442 = vld [vmem:[%s4435 + $0x30] sm:$0xff]
    %v4443 = vld [vmem:[%s4435 + $0x38] sm:$0xff]
    %v4444 = vld [vmem:[%s4435 + $0x40] sm:$0xff]
    %v4445 = vld [vmem:[%s4435 + $0x48] sm:$0xff]
    %v4446 = vld [vmem:[%s4435 + $0x50] sm:$0xff]
    %v4447 = vld [vmem:[%s4435 + $0x58] sm:$0xff]
    %s4448 = scalar_lea.vmem [#allocation2], 288
    %v4449 = vld [vmem:[%s4448] sm:$0xff]
    %v4450 = vld [vmem:[%s4448 + $0x8] sm:$0xff]
    %v4451 = vld [vmem:[%s4448 + $0x10] sm:$0xff]
    %v4452 = vld [vmem:[%s4448 + $0x18] sm:$0xff]
    %v4453 = vld [vmem:[%s4448 + $0x20] sm:$0xff]
    %v4454 = vld [vmem:[%s4448 + $0x28] sm:$0xff]
    %v4455 = vld [vmem:[%s4448 + $0x30] sm:$0xff]
    %v4456 = vld [vmem:[%s4448 + $0x38] sm:$0xff]
    %v4457 = vld [vmem:[%s4448 + $0x40] sm:$0xff]
    %v4458 = vld [vmem:[%s4448 + $0x48] sm:$0xff]
    %v4459 = vld [vmem:[%s4448 + $0x50] sm:$0xff]
    %v4460 = vld [vmem:[%s4448 + $0x58] sm:$0xff]
    %s4461 = scalar_lea.vmem %s4, 2
    %v4462 = vld [vmem:[%s4461] ss:$4 sm:$0x7]
    %v4463 = vld [vmem:[%s4 + $0xe] sm:$0x1]
    %s4464 = scalar_lea.vmem %s4, 3
    %v4465 = vld [vmem:[%s4464] ss:$4 sm:$0x7]
    %v4466 = vld [vmem:[%s4 + $0xf] sm:$0x1]
    %v4468 = vlaneseq
    %v4469 = vshrl.u32 %v4468, 7
    %v4470 = vsub.s32 0, %v4469
    %v4471 = vrot.slane %v4462, %v4470
    %v4472 = vlaneseq
    %v4473 = vshrl.u32 %v4472, 7
    %v4474 = vsub.s32 1, %v4473
    %v4475 = vrot.slane %v4462, %v4474
    %v4476 = vlaneseq
    %v4477 = vshrl.u32 %v4476, 7
    %v4478 = vsub.s32 2, %v4477
    %v4479 = vrot.slane %v4462, %v4478
    %v4491 = vcombine.low %v4358, %v4359
    %v4492 = vcombine.low %v4360, %v4361
    %v4494 = vunpack.c.l.s4 1983009808
    %v4495 = vunpack.c.0.s8 %v4494
    %v4496 = vlaneseq
    %v4497 = vshrl.u32 %v4496, 7
    %v4498 = vsub.s32 %v4495, %v4497
    %v4499 = vrot.slane %v4491, %v4498
    %v4501 = vunpack.c.l.s4 1983009808
    %v4502 = vunpack.c.0.s8 %v4501
    %v4503 = vlaneseq
    %v4504 = vshrl.u32 %v4503, 7
    %v4505 = vsub.s32 %v4502, %v4504
    %v4506 = vrot.slane %v4492, %v4505
    %v4507 = vcombine.low %v4499, %v4506
    %v4508 = vcombine.low %v4362, %v4363
    %v4509 = vcombine.low %v4364, %v4365
    %v4511 = vunpack.c.l.s4 1983009808
    %v4512 = vunpack.c.0.s8 %v4511
    %v4513 = vlaneseq
    %v4514 = vshrl.u32 %v4513, 7
    %v4515 = vsub.s32 %v4512, %v4514
    %v4516 = vrot.slane %v4508, %v4515
    %v4518 = vunpack.c.l.s4 1983009808
    %v4519 = vunpack.c.0.s8 %v4518
    %v4520 = vlaneseq
    %v4521 = vshrl.u32 %v4520, 7
    %v4522 = vsub.s32 %v4519, %v4521
    %v4523 = vrot.slane %v4509, %v4522
    %v4524 = vcombine.low %v4516, %v4523
    %v4525 = vsel %vm165, %v4507, 0
    %v4527 = vsel %vm165, %v4524, 0
    %4529 = vmatprep.subr.mxu0 0.0
    %4530 = vmatpush1.msra.mxu0 0.0
    %4531 = vmatprep.subr.mxu0 0.0
    %4532 = vmatpush1.msra.mxu0 0.0
    %4533 = vmatprep.subr.mxu0 0.0
    %4534 = vmatpush1.msra.mxu0 0.0
    %4535 = vmatprep.subr.mxu0 0.0
    %4536 = vmatpush1.msra.mxu0 0.0
    %4537 = vmatprep.subr.mxu0 0.0
    %4538 = vmatpush1.msra.mxu0 0.0
    %4539 = vmatprep.subr.mxu0 0.0
    %4540 = vmatpush1.msra.mxu0 0.0
    %4541 = vmatprep.subr.mxu0 0.0
    %4542 = vmatpush1.msra.mxu0 0.0
    %4543 = vmatprep.subr.mxu0 0.0
    %4544 = vmatpush1.msra.mxu0 0.0
    %4545 = vmatprep.subr.mxu0 0.0
    %4546 = vmatpush1.msra.mxu0 0.0
    %4547 = vmatprep.subr.mxu0 0.0
    %4548 = vmatpush1.msra.mxu0 0.0
    %4549 = vmatprep.subr.mxu0 0.0
    %4550 = vmatpush1.msra.mxu0 0.0
    %4551 = vmatprep.subr.mxu0 0.0
    %4552 = vmatpush1.msra.mxu0 0.0
    %4553 = vmatprep.subr.mxu0 %v4420
    %4554 = vmatpush1.msra.mxu0 %v4419
    %4555 = vmatprep.subr.mxu0 %v4417
    %4556 = vmatpush1.msra.mxu0 %v4416
    %4557 = vmatprep.subr.mxu0 %v4414
    %4558 = vmatpush1.msra.mxu0 %v4413
    %4559 = vmatprep.subr.mxu0 %v4411
    %4560 = vmatpush1.msra.mxu0 %v4410
    %4561 = vmatprep.subr.mxu0 0.0
    %4562 = vmatpush2.msra.mxu0 0.0
    %4563 = vmatprep.subr.mxu0 0.0
    %4564 = vmatpush2.msra.mxu0 0.0
    %4565 = vmatprep.subr.mxu0 0.0
    %4566 = vmatpush2.msra.mxu0 0.0
    %4567 = vmatprep.subr.mxu0 0.0
    %4568 = vmatpush2.msra.mxu0 0.0
    %4569 = vmatprep.subr.mxu0 0.0
    %4570 = vmatpush2.msra.mxu0 0.0
    %4571 = vmatprep.subr.mxu0 0.0
    %4572 = vmatpush2.msra.mxu0 0.0
    %4573 = vmatprep.subr.mxu0 0.0
    %4574 = vmatpush2.msra.mxu0 0.0
    %4575 = vmatprep.subr.mxu0 0.0
    %4576 = vmatpush2.msra.mxu0 0.0
    %4577 = vmatprep.subr.mxu0 0.0
    %4578 = vmatpush2.msra.mxu0 0.0
    %4579 = vmatprep.subr.mxu0 0.0
    %4580 = vmatpush2.msra.mxu0 0.0
    %4581 = vmatprep.subr.mxu0 0.0
    %4582 = vmatpush2.msra.mxu0 0.0
    %4583 = vmatprep.subr.mxu0 0.0
    %4584 = vmatpush2.msra.mxu0 0.0
    %4585 = vmatprep.subr.mxu0 0.0
    %4586 = vmatpush2.msra.mxu0 0.0
    %4587 = vmatprep.subr.mxu0 0.0
    %4588 = vmatpush2.msra.mxu0 0.0
    %4589 = vmatprep.subr.mxu0 0.0
    %4590 = vmatpush2.msra.mxu0 0.0
    %4591 = vmatprep.subr.mxu0 0.0
    %4592 = vmatpush2.msra.mxu0 0.0
    %4593 = vmatprep.mubr.f32.mxu0 0.0
    %4594 = vmatmul.mubr.f32.gmra.mxu0 %v4525
    %v4595 = vpop.f32.mrf.mxu0
    %v4596 = vadd.f32 %v4471, %v4595
    %v4597 = vpop.f32.mrf.mxu0
    %v4598 = vadd.f32 %v4475, %v4597
    %4599 = vmatprep.mubr.f32.mxu0 0.0
    %4600 = vmatmul.mubr.f32.gmra.mxu0 %v4527
    %v4601 = vpop.f32.mrf.mxu0
    %v4602 = vadd.f32 %v4471, %v4601
    %v4603 = vpop.f32.mrf.mxu0
    %v4604 = vadd.f32 %v4475, %v4603
    %4605 = vdwg.mxu0
    %4606 = vmatprep.subr.mxu0 0.0
    %4607 = vmatpush1.msra.mxu0 0.0
    %4608 = vmatprep.subr.mxu0 0.0
    %4609 = vmatpush1.msra.mxu0 0.0
    %4610 = vmatprep.subr.mxu0 0.0
    %4611 = vmatpush1.msra.mxu0 0.0
    %4612 = vmatprep.subr.mxu0 0.0
    %4613 = vmatpush1.msra.mxu0 0.0
    %4614 = vmatprep.subr.mxu0 0.0
    %4615 = vmatpush1.msra.mxu0 0.0
    %4616 = vmatprep.subr.mxu0 0.0
    %4617 = vmatpush1.msra.mxu0 0.0
    %4618 = vmatprep.subr.mxu0 0.0
    %4619 = vmatpush1.msra.mxu0 0.0
    %4620 = vmatprep.subr.mxu0 0.0
    %4621 = vmatpush1.msra.mxu0 0.0
    %4622 = vmatprep.subr.mxu0 0.0
    %4623 = vmatpush1.msra.mxu0 0.0
    %4624 = vmatprep.subr.mxu0 0.0
    %4625 = vmatpush1.msra.mxu0 0.0
    %4626 = vmatprep.subr.mxu0 0.0
    %4627 = vmatpush1.msra.mxu0 0.0
    %4628 = vmatprep.subr.mxu0 0.0
    %4629 = vmatpush1.msra.mxu0 0.0
    %4630 = vmatprep.subr.mxu0 0.0
    %4631 = vmatpush1.msra.mxu0 %v4421
    %4632 = vmatprep.subr.mxu0 0.0
    %4633 = vmatpush1.msra.mxu0 %v4418
    %4634 = vmatprep.subr.mxu0 0.0
    %4635 = vmatpush1.msra.mxu0 %v4415
    %4636 = vmatprep.subr.mxu0 0.0
    %4637 = vmatpush1.msra.mxu0 %v4412
    %4638 = vmatprep.subr.mxu0 0.0
    %4639 = vmatpush2.msra.mxu0 0.0
    %4640 = vmatprep.subr.mxu0 0.0
    %4641 = vmatpush2.msra.mxu0 0.0
    %4642 = vmatprep.subr.mxu0 0.0
    %4643 = vmatpush2.msra.mxu0 0.0
    %4644 = vmatprep.subr.mxu0 0.0
    %4645 = vmatpush2.msra.mxu0 0.0
    %4646 = vmatprep.subr.mxu0 0.0
    %4647 = vmatpush2.msra.mxu0 0.0
    %4648 = vmatprep.subr.mxu0 0.0
    %4649 = vmatpush2.msra.mxu0 0.0
    %4650 = vmatprep.subr.mxu0 0.0
    %4651 = vmatpush2.msra.mxu0 0.0
    %4652 = vmatprep.subr.mxu0 0.0
    %4653 = vmatpush2.msra.mxu0 0.0
    %4654 = vmatprep.subr.mxu0 0.0
    %4655 = vmatpush2.msra.mxu0 0.0
    %4656 = vmatprep.subr.mxu0 0.0
    %4657 = vmatpush2.msra.mxu0 0.0
    %4658 = vmatprep.subr.mxu0 0.0
    %4659 = vmatpush2.msra.mxu0 0.0
    %4660 = vmatprep.subr.mxu0 0.0
    %4661 = vmatpush2.msra.mxu0 0.0
    %4662 = vmatprep.subr.mxu0 0.0
    %4663 = vmatpush2.msra.mxu0 0.0
    %4664 = vmatprep.subr.mxu0 0.0
    %4665 = vmatpush2.msra.mxu0 0.0
    %4666 = vmatprep.subr.mxu0 0.0
    %4667 = vmatpush2.msra.mxu0 0.0
    %4668 = vmatprep.subr.mxu0 0.0
    %4669 = vmatpush2.msra.mxu0 0.0
    %4670 = vmatprep.mubr.f32.mxu0 0.0
    %4671 = vmatmul.mubr.f32.gmra.mxu0 %v4525
    %v4672 = vpop.f32.mrf.mxu0
    %v4673 = vadd.f32 %v4479, %v4672
    %v4674 = vpop.f32.mrf.mxu0
    %4675 = vmatprep.mubr.f32.mxu0 0.0
    %4676 = vmatmul.mubr.f32.gmra.mxu0 %v4527
    %v4677 = vpop.f32.mrf.mxu0
    %v4678 = vadd.f32 %v4479, %v4677
    %v4679 = vpop.f32.mrf.mxu0
    %4680 = vdwg.mxu0
    %v4687 = vcombine.low %v4596, %v4598
    %v4688 = vcombine.high %v4596, %v4598
    %v4689 = vcombine.high %v4673, %v4673
    %v4691 = vunpack.c.l.s4 1983009808
    %v4692 = vunpack.c.0.s8 %v4691
    %v4693 = vlaneseq
    %v4694 = vshrl.u32 %v4693, 7
    %v4695 = vsub.s32 %v4692, %v4694
    %v4696 = vrot.slane %v4687, %v4695
    %v4698 = vunpack.c.l.s4 1983009808
    %v4699 = vunpack.c.0.s8 %v4698
    %v4700 = vlaneseq
    %v4701 = vshrl.u32 %v4700, 7
    %v4702 = vsub.s32 %v4699, %v4701
    %v4703 = vrot.slane %v4688, %v4702
    %v4705 = vunpack.c.l.s4 1983009808
    %v4706 = vunpack.c.0.s8 %v4705
    %v4707 = vlaneseq
    %v4708 = vshrl.u32 %v4707, 7
    %v4709 = vsub.s32 %v4706, %v4708
    %v4710 = vrot.slane %v4673, %v4709
    %v4712 = vunpack.c.l.s4 1983009808
    %v4713 = vunpack.c.0.s8 %v4712
    %v4714 = vlaneseq
    %v4715 = vshrl.u32 %v4714, 7
    %v4716 = vsub.s32 %v4713, %v4715
    %v4717 = vrot.slane %v4689, %v4716
    %v4718 = vcombine.low %v4696, %v4710
    %v4719 = vcombine.high %v4696, %v4710
    %v4720 = vcombine.low %v4703, %v4717
    %v4721 = vcombine.high %v4703, %v4717
    %v4722 = vcombine.low %v4602, %v4604
    %v4723 = vcombine.high %v4602, %v4604
    %v4724 = vcombine.high %v4678, %v4678
    %v4726 = vunpack.c.l.s4 1983009808
    %v4727 = vunpack.c.0.s8 %v4726
    %v4728 = vlaneseq
    %v4729 = vshrl.u32 %v4728, 7
    %v4730 = vsub.s32 %v4727, %v4729
    %v4731 = vrot.slane %v4722, %v4730
    %v4733 = vunpack.c.l.s4 1983009808
    %v4734 = vunpack.c.0.s8 %v4733
    %v4735 = vlaneseq
    %v4736 = vshrl.u32 %v4735, 7
    %v4737 = vsub.s32 %v4734, %v4736
    %v4738 = vrot.slane %v4723, %v4737
    %v4740 = vunpack.c.l.s4 1983009808
    %v4741 = vunpack.c.0.s8 %v4740
    %v4742 = vlaneseq
    %v4743 = vshrl.u32 %v4742, 7
    %v4744 = vsub.s32 %v4741, %v4743
    %v4745 = vrot.slane %v4678, %v4744
    %v4747 = vunpack.c.l.s4 1983009808
    %v4748 = vunpack.c.0.s8 %v4747
    %v4749 = vlaneseq
    %v4750 = vshrl.u32 %v4749, 7
    %v4751 = vsub.s32 %v4748, %v4750
    %v4752 = vrot.slane %v4724, %v4751
    %v4753 = vcombine.low %v4731, %v4745
    %v4754 = vcombine.high %v4731, %v4745
    %v4755 = vcombine.low %v4738, %v4752
    %v4756 = vcombine.high %v4738, %v4752
    %v4766 = vsel %vm165, %v4391, 0
    %4768 = vmatprep.subr.mxu0 0.0
    %4769 = vmatpush1.msra.mxu0 0.0
    %4770 = vmatprep.subr.mxu0 0.0
    %4771 = vmatpush1.msra.mxu0 0.0
    %4772 = vmatprep.subr.mxu0 0.0
    %4773 = vmatpush1.msra.mxu0 0.0
    %4774 = vmatprep.subr.mxu0 0.0
    %4775 = vmatpush1.msra.mxu0 0.0
    %4776 = vmatprep.subr.mxu0 0.0
    %4777 = vmatpush1.msra.mxu0 0.0
    %4778 = vmatprep.subr.mxu0 0.0
    %4779 = vmatpush1.msra.mxu0 0.0
    %4780 = vmatprep.subr.mxu0 0.0
    %4781 = vmatpush1.msra.mxu0 0.0
    %4782 = vmatprep.subr.mxu0 0.0
    %4783 = vmatpush1.msra.mxu0 0.0
    %4784 = vmatprep.subr.mxu0 0.0
    %4785 = vmatpush1.msra.mxu0 0.0
    %4786 = vmatprep.subr.mxu0 0.0
    %4787 = vmatpush1.msra.mxu0 0.0
    %4788 = vmatprep.subr.mxu0 0.0
    %4789 = vmatpush1.msra.mxu0 0.0
    %4790 = vmatprep.subr.mxu0 0.0
    %4791 = vmatpush1.msra.mxu0 0.0
    %4792 = vmatprep.subr.mxu0 %v4433
    %4793 = vmatpush1.msra.mxu0 %v4432
    %4794 = vmatprep.subr.mxu0 %v4430
    %4795 = vmatpush1.msra.mxu0 %v4429
    %4796 = vmatprep.subr.mxu0 %v4427
    %4797 = vmatpush1.msra.mxu0 %v4426
    %4798 = vmatprep.subr.mxu0 %v4424
    %4799 = vmatpush1.msra.mxu0 %v4423
    %4800 = vmatprep.subr.mxu0 0.0
    %4801 = vmatpush2.msra.mxu0 0.0
    %4802 = vmatprep.subr.mxu0 0.0
    %4803 = vmatpush2.msra.mxu0 0.0
    %4804 = vmatprep.subr.mxu0 0.0
    %4805 = vmatpush2.msra.mxu0 0.0
    %4806 = vmatprep.subr.mxu0 0.0
    %4807 = vmatpush2.msra.mxu0 0.0
    %4808 = vmatprep.subr.mxu0 0.0
    %4809 = vmatpush2.msra.mxu0 0.0
    %4810 = vmatprep.subr.mxu0 0.0
    %4811 = vmatpush2.msra.mxu0 0.0
    %4812 = vmatprep.subr.mxu0 0.0
    %4813 = vmatpush2.msra.mxu0 0.0
    %4814 = vmatprep.subr.mxu0 0.0
    %4815 = vmatpush2.msra.mxu0 0.0
    %4816 = vmatprep.subr.mxu0 0.0
    %4817 = vmatpush2.msra.mxu0 0.0
    %4818 = vmatprep.subr.mxu0 0.0
    %4819 = vmatpush2.msra.mxu0 0.0
    %4820 = vmatprep.subr.mxu0 0.0
    %4821 = vmatpush2.msra.mxu0 0.0
    %4822 = vmatprep.subr.mxu0 0.0
    %4823 = vmatpush2.msra.mxu0 0.0
    %4824 = vmatprep.subr.mxu0 0.0
    %4825 = vmatpush2.msra.mxu0 0.0
    %4826 = vmatprep.subr.mxu0 0.0
    %4827 = vmatpush2.msra.mxu0 0.0
    %4828 = vmatprep.subr.mxu0 0.0
    %4829 = vmatpush2.msra.mxu0 0.0
    %4830 = vmatprep.subr.mxu0 0.0
    %4831 = vmatpush2.msra.mxu0 0.0
    %4832 = vmatprep.mubr.f32.mxu0 0.0
    %4833 = vmatmul.mubr.f32.gmra.mxu0 %v4766
    %v4834 = vpop.f32.mrf.mxu0
    %v4835 = vadd.f32 0.0, %v4834
    %v4836 = vpop.f32.mrf.mxu0
    %v4837 = vadd.f32 0.0, %v4836
    %4838 = vdwg.mxu0
    %4839 = vmatprep.subr.mxu0 0.0
    %4840 = vmatpush1.msra.mxu0 0.0
    %4841 = vmatprep.subr.mxu0 0.0
    %4842 = vmatpush1.msra.mxu0 0.0
    %4843 = vmatprep.subr.mxu0 0.0
    %4844 = vmatpush1.msra.mxu0 0.0
    %4845 = vmatprep.subr.mxu0 0.0
    %4846 = vmatpush1.msra.mxu0 0.0
    %4847 = vmatprep.subr.mxu0 0.0
    %4848 = vmatpush1.msra.mxu0 0.0
    %4849 = vmatprep.subr.mxu0 0.0
    %4850 = vmatpush1.msra.mxu0 0.0
    %4851 = vmatprep.subr.mxu0 0.0
    %4852 = vmatpush1.msra.mxu0 0.0
    %4853 = vmatprep.subr.mxu0 0.0
    %4854 = vmatpush1.msra.mxu0 0.0
    %4855 = vmatprep.subr.mxu0 0.0
    %4856 = vmatpush1.msra.mxu0 0.0
    %4857 = vmatprep.subr.mxu0 0.0
    %4858 = vmatpush1.msra.mxu0 0.0
    %4859 = vmatprep.subr.mxu0 0.0
    %4860 = vmatpush1.msra.mxu0 0.0
    %4861 = vmatprep.subr.mxu0 0.0
    %4862 = vmatpush1.msra.mxu0 0.0
    %4863 = vmatprep.subr.mxu0 0.0
    %4864 = vmatpush1.msra.mxu0 %v4434
    %4865 = vmatprep.subr.mxu0 0.0
    %4866 = vmatpush1.msra.mxu0 %v4431
    %4867 = vmatprep.subr.mxu0 0.0
    %4868 = vmatpush1.msra.mxu0 %v4428
    %4869 = vmatprep.subr.mxu0 0.0
    %4870 = vmatpush1.msra.mxu0 %v4425
    %4871 = vmatprep.subr.mxu0 0.0
    %4872 = vmatpush2.msra.mxu0 0.0
    %4873 = vmatprep.subr.mxu0 0.0
    %4874 = vmatpush2.msra.mxu0 0.0
    %4875 = vmatprep.subr.mxu0 0.0
    %4876 = vmatpush2.msra.mxu0 0.0
    %4877 = vmatprep.subr.mxu0 0.0
    %4878 = vmatpush2.msra.mxu0 0.0
    %4879 = vmatprep.subr.mxu0 0.0
    %4880 = vmatpush2.msra.mxu0 0.0
    %4881 = vmatprep.subr.mxu0 0.0
    %4882 = vmatpush2.msra.mxu0 0.0
    %4883 = vmatprep.subr.mxu0 0.0
    %4884 = vmatpush2.msra.mxu0 0.0
    %4885 = vmatprep.subr.mxu0 0.0
    %4886 = vmatpush2.msra.mxu0 0.0
    %4887 = vmatprep.subr.mxu0 0.0
    %4888 = vmatpush2.msra.mxu0 0.0
    %4889 = vmatprep.subr.mxu0 0.0
    %4890 = vmatpush2.msra.mxu0 0.0
    %4891 = vmatprep.subr.mxu0 0.0
    %4892 = vmatpush2.msra.mxu0 0.0
    %4893 = vmatprep.subr.mxu0 0.0
    %4894 = vmatpush2.msra.mxu0 0.0
    %4895 = vmatprep.subr.mxu0 0.0
    %4896 = vmatpush2.msra.mxu0 0.0
    %4897 = vmatprep.subr.mxu0 0.0
    %4898 = vmatpush2.msra.mxu0 0.0
    %4899 = vmatprep.subr.mxu0 0.0
    %4900 = vmatpush2.msra.mxu0 0.0
    %4901 = vmatprep.subr.mxu0 0.0
    %4902 = vmatpush2.msra.mxu0 0.0
    %4903 = vmatprep.mubr.f32.mxu0 0.0
    %4904 = vmatmul.mubr.f32.gmra.mxu0 %v4766
    %v4905 = vpop.f32.mrf.mxu0
    %v4906 = vadd.f32 0.0, %v4905
    %v4907 = vpop.f32.mrf.mxu0
    %4908 = vdwg.mxu0
    %v4912 = vcombine.low %v4835, %v4837
    %v4914 = vunpack.c.l.s4 1983009808
    %v4915 = vunpack.c.0.s8 %v4914
    %v4916 = vlaneseq
    %v4917 = vshrl.u32 %v4916, 7
    %v4918 = vsub.s32 %v4915, %v4917
    %v4919 = vrot.slane %v4912, %v4918
    %v4921 = vunpack.c.l.s4 1983009808
    %v4922 = vunpack.c.0.s8 %v4921
    %v4923 = vlaneseq
    %v4924 = vshrl.u32 %v4923, 7
    %v4925 = vsub.s32 %v4922, %v4924
    %v4926 = vrot.slane %v4906, %v4925
    %v4927 = vcombine.low %v4919, %v4926
    %v4929 = vadd.f32 %v4718, %v4927
    %v4930 = vxor.u32 %v4929, 2147483648
    %v4931 = vmul.f32 %v4930, 1.442695
    %v4932 = vpow.pop %v4931
    %v4933 = vadd.f32 %v4932, 1.0
    %v4934 = vrcp.pop %v4933
    %v4935 = vmul.f32 1.0, %v4934
    %v4936 = vlaneseq
    %v4937 = vshrl.u32 %v4936, 7
    %v4938 = vsub.s32 0, %v4937
    %v4939 = vrot.slane %v4463, %v4938
    %v4940 = vadd.f32 %v4906, %v4939
    %v4941 = vmul.f32 %v4935, %v4940
    %v4942 = vrot.slane %v4718, 4
    %v4944 = vadd.f32 %v4942, %v4941
    %v4945 = vtanh.pop %v4944
    %v4947 = vrot.slane %v4935, 2
    %v4949 = vmul.f32 %v4947, %v4391
    %v4950 = vsub.f32 1.0, %v4947
    %v4951 = vmul.f32 %v4950, %v4945
    %v4952 = vadd.f32 %v4949, %v4951
    %v4954 = vlaneseq
    %v4955 = vshrl.u32 %v4954, 7
    %v4956 = vsub.s32 0, %v4955
    %v4957 = vrot.slane %v4465, %v4956
    %v4958 = vlaneseq
    %v4959 = vshrl.u32 %v4958, 7
    %v4960 = vsub.s32 1, %v4959
    %v4961 = vrot.slane %v4465, %v4960
    %v4962 = vlaneseq
    %v4963 = vshrl.u32 %v4962, 7
    %v4964 = vsub.s32 2, %v4963
    %v4965 = vrot.slane %v4465, %v4964
    %v4970 = vsel %vm165, %v4952, 0
    %4972 = vmatprep.subr.mxu0 0.0
    %4973 = vmatpush1.msra.mxu0 0.0
    %4974 = vmatprep.subr.mxu0 0.0
    %4975 = vmatpush1.msra.mxu0 0.0
    %4976 = vmatprep.subr.mxu0 0.0
    %4977 = vmatpush1.msra.mxu0 0.0
    %4978 = vmatprep.subr.mxu0 0.0
    %4979 = vmatpush1.msra.mxu0 0.0
    %4980 = vmatprep.subr.mxu0 0.0
    %4981 = vmatpush1.msra.mxu0 0.0
    %4982 = vmatprep.subr.mxu0 0.0
    %4983 = vmatpush1.msra.mxu0 0.0
    %4984 = vmatprep.subr.mxu0 0.0
    %4985 = vmatpush1.msra.mxu0 0.0
    %4986 = vmatprep.subr.mxu0 0.0
    %4987 = vmatpush1.msra.mxu0 0.0
    %4988 = vmatprep.subr.mxu0 0.0
    %4989 = vmatpush1.msra.mxu0 0.0
    %4990 = vmatprep.subr.mxu0 0.0
    %4991 = vmatpush1.msra.mxu0 0.0
    %4992 = vmatprep.subr.mxu0 0.0
    %4993 = vmatpush1.msra.mxu0 0.0
    %4994 = vmatprep.subr.mxu0 0.0
    %4995 = vmatpush1.msra.mxu0 0.0
    %4996 = vmatprep.subr.mxu0 %v4446
    %4997 = vmatpush1.msra.mxu0 %v4445
    %4998 = vmatprep.subr.mxu0 %v4443
    %4999 = vmatpush1.msra.mxu0 %v4442
    %5000 = vmatprep.subr.mxu0 %v4440
    %5001 = vmatpush1.msra.mxu0 %v4439
    %5002 = vmatprep.subr.mxu0 %v4437
    %5003 = vmatpush1.msra.mxu0 %v4436
    %5004 = vmatprep.subr.mxu0 0.0
    %5005 = vmatpush2.msra.mxu0 0.0
    %5006 = vmatprep.subr.mxu0 0.0
    %5007 = vmatpush2.msra.mxu0 0.0
    %5008 = vmatprep.subr.mxu0 0.0
    %5009 = vmatpush2.msra.mxu0 0.0
    %5010 = vmatprep.subr.mxu0 0.0
    %5011 = vmatpush2.msra.mxu0 0.0
    %5012 = vmatprep.subr.mxu0 0.0
    %5013 = vmatpush2.msra.mxu0 0.0
    %5014 = vmatprep.subr.mxu0 0.0
    %5015 = vmatpush2.msra.mxu0 0.0
    %5016 = vmatprep.subr.mxu0 0.0
    %5017 = vmatpush2.msra.mxu0 0.0
    %5018 = vmatprep.subr.mxu0 0.0
    %5019 = vmatpush2.msra.mxu0 0.0
    %5020 = vmatprep.subr.mxu0 0.0
    %5021 = vmatpush2.msra.mxu0 0.0
    %5022 = vmatprep.subr.mxu0 0.0
    %5023 = vmatpush2.msra.mxu0 0.0
    %5024 = vmatprep.subr.mxu0 0.0
    %5025 = vmatpush2.msra.mxu0 0.0
    %5026 = vmatprep.subr.mxu0 0.0
    %5027 = vmatpush2.msra.mxu0 0.0
    %5028 = vmatprep.subr.mxu0 0.0
    %5029 = vmatpush2.msra.mxu0 0.0
    %5030 = vmatprep.subr.mxu0 0.0
    %5031 = vmatpush2.msra.mxu0 0.0
    %5032 = vmatprep.subr.mxu0 0.0
    %5033 = vmatpush2.msra.mxu0 0.0
    %5034 = vmatprep.subr.mxu0 0.0
    %5035 = vmatpush2.msra.mxu0 0.0
    %5036 = vmatprep.mubr.f32.mxu0 0.0
    %5037 = vmatmul.mubr.f32.gmra.mxu0 %v4970
    %v5038 = vpop.f32.mrf.mxu0
    %v5039 = vadd.f32 %v4957, %v5038
    %v5040 = vpop.f32.mrf.mxu0
    %v5041 = vadd.f32 %v4961, %v5040
    %5042 = vdwg.mxu0
    %5043 = vmatprep.subr.mxu0 0.0
    %5044 = vmatpush1.msra.mxu0 0.0
    %5045 = vmatprep.subr.mxu0 0.0
    %5046 = vmatpush1.msra.mxu0 0.0
    %5047 = vmatprep.subr.mxu0 0.0
    %5048 = vmatpush1.msra.mxu0 0.0
    %5049 = vmatprep.subr.mxu0 0.0
    %5050 = vmatpush1.msra.mxu0 0.0
    %5051 = vmatprep.subr.mxu0 0.0
    %5052 = vmatpush1.msra.mxu0 0.0
    %5053 = vmatprep.subr.mxu0 0.0
    %5054 = vmatpush1.msra.mxu0 0.0
    %5055 = vmatprep.subr.mxu0 0.0
    %5056 = vmatpush1.msra.mxu0 0.0
    %5057 = vmatprep.subr.mxu0 0.0
    %5058 = vmatpush1.msra.mxu0 0.0
    %5059 = vmatprep.subr.mxu0 0.0
    %5060 = vmatpush1.msra.mxu0 0.0
    %5061 = vmatprep.subr.mxu0 0.0
    %5062 = vmatpush1.msra.mxu0 0.0
    %5063 = vmatprep.subr.mxu0 0.0
    %5064 = vmatpush1.msra.mxu0 0.0
    %5065 = vmatprep.subr.mxu0 0.0
    %5066 = vmatpush1.msra.mxu0 0.0
    %5067 = vmatprep.subr.mxu0 0.0
    %5068 = vmatpush1.msra.mxu0 %v4447
    %5069 = vmatprep.subr.mxu0 0.0
    %5070 = vmatpush1.msra.mxu0 %v4444
    %5071 = vmatprep.subr.mxu0 0.0
    %5072 = vmatpush1.msra.mxu0 %v4441
    %5073 = vmatprep.subr.mxu0 0.0
    %5074 = vmatpush1.msra.mxu0 %v4438
    %5075 = vmatprep.subr.mxu0 0.0
    %5076 = vmatpush2.msra.mxu0 0.0
    %5077 = vmatprep.subr.mxu0 0.0
    %5078 = vmatpush2.msra.mxu0 0.0
    %5079 = vmatprep.subr.mxu0 0.0
    %5080 = vmatpush2.msra.mxu0 0.0
    %5081 = vmatprep.subr.mxu0 0.0
    %5082 = vmatpush2.msra.mxu0 0.0
    %5083 = vmatprep.subr.mxu0 0.0
    %5084 = vmatpush2.msra.mxu0 0.0
    %5085 = vmatprep.subr.mxu0 0.0
    %5086 = vmatpush2.msra.mxu0 0.0
    %5087 = vmatprep.subr.mxu0 0.0
    %5088 = vmatpush2.msra.mxu0 0.0
    %5089 = vmatprep.subr.mxu0 0.0
    %5090 = vmatpush2.msra.mxu0 0.0
    %5091 = vmatprep.subr.mxu0 0.0
    %5092 = vmatpush2.msra.mxu0 0.0
    %5093 = vmatprep.subr.mxu0 0.0
    %5094 = vmatpush2.msra.mxu0 0.0
    %5095 = vmatprep.subr.mxu0 0.0
    %5096 = vmatpush2.msra.mxu0 0.0
    %5097 = vmatprep.subr.mxu0 0.0
    %5098 = vmatpush2.msra.mxu0 0.0
    %5099 = vmatprep.subr.mxu0 0.0
    %5100 = vmatpush2.msra.mxu0 0.0
    %5101 = vmatprep.subr.mxu0 0.0
    %5102 = vmatpush2.msra.mxu0 0.0
    %5103 = vmatprep.subr.mxu0 0.0
    %5104 = vmatpush2.msra.mxu0 0.0
    %5105 = vmatprep.subr.mxu0 0.0
    %5106 = vmatpush2.msra.mxu0 0.0
    %5107 = vmatprep.mubr.f32.mxu0 0.0
    %5108 = vmatmul.mubr.f32.gmra.mxu0 %v4970
    %v5109 = vpop.f32.mrf.mxu0
    %v5110 = vadd.f32 %v4965, %v5109
    %v5111 = vpop.f32.mrf.mxu0
    %5112 = vdwg.mxu0
    %v5114 = vsel %vm165, %v4408, 0
    %5116 = vmatprep.subr.mxu0 0.0
    %5117 = vmatpush1.msra.mxu0 0.0
    %5118 = vmatprep.subr.mxu0 0.0
    %5119 = vmatpush1.msra.mxu0 0.0
    %5120 = vmatprep.subr.mxu0 0.0
    %5121 = vmatpush1.msra.mxu0 0.0
    %5122 = vmatprep.subr.mxu0 0.0
    %5123 = vmatpush1.msra.mxu0 0.0
    %5124 = vmatprep.subr.mxu0 0.0
    %5125 = vmatpush1.msra.mxu0 0.0
    %5126 = vmatprep.subr.mxu0 0.0
    %5127 = vmatpush1.msra.mxu0 0.0
    %5128 = vmatprep.subr.mxu0 0.0
    %5129 = vmatpush1.msra.mxu0 0.0
    %5130 = vmatprep.subr.mxu0 0.0
    %5131 = vmatpush1.msra.mxu0 0.0
    %5132 = vmatprep.subr.mxu0 0.0
    %5133 = vmatpush1.msra.mxu0 0.0
    %5134 = vmatprep.subr.mxu0 0.0
    %5135 = vmatpush1.msra.mxu0 0.0
    %5136 = vmatprep.subr.mxu0 0.0
    %5137 = vmatpush1.msra.mxu0 0.0
    %5138 = vmatprep.subr.mxu0 0.0
    %5139 = vmatpush1.msra.mxu0 0.0
    %5140 = vmatprep.subr.mxu0 %v4459
    %5141 = vmatpush1.msra.mxu0 %v4458
    %5142 = vmatprep.subr.mxu0 %v4456
    %5143 = vmatpush1.msra.mxu0 %v4455
    %5144 = vmatprep.subr.mxu0 %v4453
    %5145 = vmatpush1.msra.mxu0 %v4452
    %5146 = vmatprep.subr.mxu0 %v4450
    %5147 = vmatpush1.msra.mxu0 %v4449
    %5148 = vmatprep.subr.mxu0 0.0
    %5149 = vmatpush2.msra.mxu0 0.0
    %5150 = vmatprep.subr.mxu0 0.0
    %5151 = vmatpush2.msra.mxu0 0.0
    %5152 = vmatprep.subr.mxu0 0.0
    %5153 = vmatpush2.msra.mxu0 0.0
    %5154 = vmatprep.subr.mxu0 0.0
    %5155 = vmatpush2.msra.mxu0 0.0
    %5156 = vmatprep.subr.mxu0 0.0
    %5157 = vmatpush2.msra.mxu0 0.0
    %5158 = vmatprep.subr.mxu0 0.0
    %5159 = vmatpush2.msra.mxu0 0.0
    %5160 = vmatprep.subr.mxu0 0.0
    %5161 = vmatpush2.msra.mxu0 0.0
    %5162 = vmatprep.subr.mxu0 0.0
    %5163 = vmatpush2.msra.mxu0 0.0
    %5164 = vmatprep.subr.mxu0 0.0
    %5165 = vmatpush2.msra.mxu0 0.0
    %5166 = vmatprep.subr.mxu0 0.0
    %5167 = vmatpush2.msra.mxu0 0.0
    %5168 = vmatprep.subr.mxu0 0.0
    %5169 = vmatpush2.msra.mxu0 0.0
    %5170 = vmatprep.subr.mxu0 0.0
    %5171 = vmatpush2.msra.mxu0 0.0
    %5172 = vmatprep.subr.mxu0 0.0
    %5173 = vmatpush2.msra.mxu0 0.0
    %5174 = vmatprep.subr.mxu0 0.0
    %5175 = vmatpush2.msra.mxu0 0.0
    %5176 = vmatprep.subr.mxu0 0.0
    %5177 = vmatpush2.msra.mxu0 0.0
    %5178 = vmatprep.subr.mxu0 0.0
    %5179 = vmatpush2.msra.mxu0 0.0
    %5180 = vmatprep.mubr.f32.mxu0 0.0
    %5181 = vmatmul.mubr.f32.gmra.mxu0 %v5114
    %v5182 = vpop.f32.mrf.mxu0
    %v5183 = vadd.f32 0.0, %v5182
    %v5184 = vpop.f32.mrf.mxu0
    %v5185 = vadd.f32 0.0, %v5184
    %5186 = vdwg.mxu0
    %5187 = vmatprep.subr.mxu0 0.0
    %5188 = vmatpush1.msra.mxu0 0.0
    %5189 = vmatprep.subr.mxu0 0.0
    %5190 = vmatpush1.msra.mxu0 0.0
    %5191 = vmatprep.subr.mxu0 0.0
    %5192 = vmatpush1.msra.mxu0 0.0
    %5193 = vmatprep.subr.mxu0 0.0
    %5194 = vmatpush1.msra.mxu0 0.0
    %5195 = vmatprep.subr.mxu0 0.0
    %5196 = vmatpush1.msra.mxu0 0.0
    %5197 = vmatprep.subr.mxu0 0.0
    %5198 = vmatpush1.msra.mxu0 0.0
    %5199 = vmatprep.subr.mxu0 0.0
    %5200 = vmatpush1.msra.mxu0 0.0
    %5201 = vmatprep.subr.mxu0 0.0
    %5202 = vmatpush1.msra.mxu0 0.0
    %5203 = vmatprep.subr.mxu0 0.0
    %5204 = vmatpush1.msra.mxu0 0.0
    %5205 = vmatprep.subr.mxu0 0.0
    %5206 = vmatpush1.msra.mxu0 0.0
    %5207 = vmatprep.subr.mxu0 0.0
    %5208 = vmatpush1.msra.mxu0 0.0
    %5209 = vmatprep.subr.mxu0 0.0
    %5210 = vmatpush1.msra.mxu0 0.0
    %5211 = vmatprep.subr.mxu0 0.0
    %5212 = vmatpush1.msra.mxu0 %v4460
    %5213 = vmatprep.subr.mxu0 0.0
    %5214 = vmatpush1.msra.mxu0 %v4457
    %5215 = vmatprep.subr.mxu0 0.0
    %5216 = vmatpush1.msra.mxu0 %v4454
    %5217 = vmatprep.subr.mxu0 0.0
    %5218 = vmatpush1.msra.mxu0 %v4451
    %5219 = vmatprep.subr.mxu0 0.0
    %5220 = vmatpush2.msra.mxu0 0.0
    %5221 = vmatprep.subr.mxu0 0.0
    %5222 = vmatpush2.msra.mxu0 0.0
    %5223 = vmatprep.subr.mxu0 0.0
    %5224 = vmatpush2.msra.mxu0 0.0
    %5225 = vmatprep.subr.mxu0 0.0
    %5226 = vmatpush2.msra.mxu0 0.0
    %5227 = vmatprep.subr.mxu0 0.0
    %5228 = vmatpush2.msra.mxu0 0.0
    %5229 = vmatprep.subr.mxu0 0.0
    %5230 = vmatpush2.msra.mxu0 0.0
    %5231 = vmatprep.subr.mxu0 0.0
    %5232 = vmatpush2.msra.mxu0 0.0
    %5233 = vmatprep.subr.mxu0 0.0
    %5234 = vmatpush2.msra.mxu0 0.0
    %5235 = vmatprep.subr.mxu0 0.0
    %5236 = vmatpush2.msra.mxu0 0.0
    %5237 = vmatprep.subr.mxu0 0.0
    %5238 = vmatpush2.msra.mxu0 0.0
    %5239 = vmatprep.subr.mxu0 0.0
    %5240 = vmatpush2.msra.mxu0 0.0
    %5241 = vmatprep.subr.mxu0 0.0
    %5242 = vmatpush2.msra.mxu0 0.0
    %5243 = vmatprep.subr.mxu0 0.0
    %5244 = vmatpush2.msra.mxu0 0.0
    %5245 = vmatprep.subr.mxu0 0.0
    %5246 = vmatpush2.msra.mxu0 0.0
    %5247 = vmatprep.subr.mxu0 0.0
    %5248 = vmatpush2.msra.mxu0 0.0
    %5249 = vmatprep.subr.mxu0 0.0
    %5250 = vmatpush2.msra.mxu0 0.0
    %5251 = vmatprep.mubr.f32.mxu0 0.0
    %5252 = vmatmul.mubr.f32.gmra.mxu0 %v5114
    %v5253 = vpop.f32.mrf.mxu0
    %v5254 = vadd.f32 0.0, %v5253
    %v5255 = vpop.f32.mrf.mxu0
    %5256 = vdwg.mxu0
    %v5257 = vadd.f32 %v5039, %v5183
    %v5258 = vadd.f32 %v5041, %v5185
    %v5259 = vxor.u32 %v5257, 2147483648
    %v5260 = vxor.u32 %v5258, 2147483648
    %v5261 = vmul.f32 %v5259, 1.442695
    %v5262 = vpow.pop %v5261
    %v5263 = vmul.f32 %v5260, 1.442695
    %v5264 = vpow.pop %v5263
    %v5265 = vadd.f32 %v5262, 1.0
    %v5266 = vadd.f32 %v5264, 1.0
    %v5267 = vrcp.pop %v5265
    %v5268 = vmul.f32 1.0, %v5267
    %v5269 = vrcp.pop %v5266
    %v5270 = vmul.f32 1.0, %v5269
    %v5271 = vlaneseq
    %v5272 = vshrl.u32 %v5271, 7
    %v5273 = vsub.s32 0, %v5272
    %v5274 = vrot.slane %v4466, %v5273
    %v5275 = vadd.f32 %v5254, %v5274
    %v5276 = vmul.f32 %v5268, %v5275
    %v5277 = vadd.f32 %v5110, %v5276
    %v5278 = vtanh.pop %v5277
    %v5279 = vmul.f32 %v5270, %v4408
    %v5280 = vsub.f32 1.0, %v5270
    %v5281 = vmul.f32 %v5280, %v5278
    %v5282 = vadd.f32 %v5279, %v5281
    %5283 = vmatprep.subr.mxu0 0.0
    %5284 = vmatpush1.msra.mxu0 0.0
    %5285 = vmatprep.subr.mxu0 0.0
    %5286 = vmatpush1.msra.mxu0 0.0
    %5287 = vmatprep.subr.mxu0 0.0
    %5288 = vmatpush1.msra.mxu0 0.0
    %5289 = vmatprep.subr.mxu0 0.0
    %5290 = vmatpush1.msra.mxu0 0.0
    %5291 = vmatprep.subr.mxu0 0.0
    %5292 = vmatpush1.msra.mxu0 0.0
    %5293 = vmatprep.subr.mxu0 0.0
    %5294 = vmatpush1.msra.mxu0 0.0
    %5295 = vmatprep.subr.mxu0 0.0
    %5296 = vmatpush1.msra.mxu0 0.0
    %5297 = vmatprep.subr.mxu0 0.0
    %5298 = vmatpush1.msra.mxu0 0.0
    %5299 = vmatprep.subr.mxu0 0.0
    %5300 = vmatpush1.msra.mxu0 0.0
    %5301 = vmatprep.subr.mxu0 0.0
    %5302 = vmatpush1.msra.mxu0 0.0
    %5303 = vmatprep.subr.mxu0 0.0
    %5304 = vmatpush1.msra.mxu0 0.0
    %5305 = vmatprep.subr.mxu0 0.0
    %5306 = vmatpush1.msra.mxu0 0.0
    %5307 = vmatprep.subr.mxu0 %v4433
    %5308 = vmatpush1.msra.mxu0 %v4432
    %5309 = vmatprep.subr.mxu0 %v4430
    %5310 = vmatpush1.msra.mxu0 %v4429
    %5311 = vmatprep.subr.mxu0 %v4427
    %5312 = vmatpush1.msra.mxu0 %v4426
    %5313 = vmatprep.subr.mxu0 %v4424
    %5314 = vmatpush1.msra.mxu0 %v4423
    %5315 = vmatprep.subr.mxu0 0.0
    %5316 = vmatpush2.msra.mxu0 0.0
    %5317 = vmatprep.subr.mxu0 0.0
    %5318 = vmatpush2.msra.mxu0 0.0
    %5319 = vmatprep.subr.mxu0 0.0
    %5320 = vmatpush2.msra.mxu0 0.0
    %5321 = vmatprep.subr.mxu0 0.0
    %5322 = vmatpush2.msra.mxu0 0.0
    %5323 = vmatprep.subr.mxu0 0.0
    %5324 = vmatpush2.msra.mxu0 0.0
    %5325 = vmatprep.subr.mxu0 0.0
    %5326 = vmatpush2.msra.mxu0 0.0
    %5327 = vmatprep.subr.mxu0 0.0
    %5328 = vmatpush2.msra.mxu0 0.0
    %5329 = vmatprep.subr.mxu0 0.0
    %5330 = vmatpush2.msra.mxu0 0.0
    %5331 = vmatprep.subr.mxu0 0.0
    %5332 = vmatpush2.msra.mxu0 0.0
    %5333 = vmatprep.subr.mxu0 0.0
    %5334 = vmatpush2.msra.mxu0 0.0
    %5335 = vmatprep.subr.mxu0 0.0
    %5336 = vmatpush2.msra.mxu0 0.0
    %5337 = vmatprep.subr.mxu0 0.0
    %5338 = vmatpush2.msra.mxu0 0.0
    %5339 = vmatprep.subr.mxu0 0.0
    %5340 = vmatpush2.msra.mxu0 0.0
    %5341 = vmatprep.subr.mxu0 0.0
    %5342 = vmatpush2.msra.mxu0 0.0
    %5343 = vmatprep.subr.mxu0 0.0
    %5344 = vmatpush2.msra.mxu0 0.0
    %5345 = vmatprep.subr.mxu0 0.0
    %5346 = vmatpush2.msra.mxu0 0.0
    %5347 = vmatprep.mubr.f32.mxu0 0.0
    %5348 = vmatmul.mubr.f32.gmra.mxu0 %v4970
    %v5349 = vpop.f32.mrf.mxu0
    %v5350 = vadd.f32 0.0, %v5349
    %v5351 = vpop.f32.mrf.mxu0
    %v5352 = vadd.f32 0.0, %v5351
    %5353 = vdwg.mxu0
    %5354 = vmatprep.subr.mxu0 0.0
    %5355 = vmatpush1.msra.mxu0 0.0
    %5356 = vmatprep.subr.mxu0 0.0
    %5357 = vmatpush1.msra.mxu0 0.0
    %5358 = vmatprep.subr.mxu0 0.0
    %5359 = vmatpush1.msra.mxu0 0.0
    %5360 = vmatprep.subr.mxu0 0.0
    %5361 = vmatpush1.msra.mxu0 0.0
    %5362 = vmatprep.subr.mxu0 0.0
    %5363 = vmatpush1.msra.mxu0 0.0
    %5364 = vmatprep.subr.mxu0 0.0
    %5365 = vmatpush1.msra.mxu0 0.0
    %5366 = vmatprep.subr.mxu0 0.0
    %5367 = vmatpush1.msra.mxu0 0.0
    %5368 = vmatprep.subr.mxu0 0.0
    %5369 = vmatpush1.msra.mxu0 0.0
    %5370 = vmatprep.subr.mxu0 0.0
    %5371 = vmatpush1.msra.mxu0 0.0
    %5372 = vmatprep.subr.mxu0 0.0
    %5373 = vmatpush1.msra.mxu0 0.0
    %5374 = vmatprep.subr.mxu0 0.0
    %5375 = vmatpush1.msra.mxu0 0.0
    %5376 = vmatprep.subr.mxu0 0.0
    %5377 = vmatpush1.msra.mxu0 0.0
    %5378 = vmatprep.subr.mxu0 0.0
    %5379 = vmatpush1.msra.mxu0 %v4434
    %5380 = vmatprep.subr.mxu0 0.0
    %5381 = vmatpush1.msra.mxu0 %v4431
    %5382 = vmatprep.subr.mxu0 0.0
    %5383 = vmatpush1.msra.mxu0 %v4428
    %5384 = vmatprep.subr.mxu0 0.0
    %5385 = vmatpush1.msra.mxu0 %v4425
    %5386 = vmatprep.subr.mxu0 0.0
    %5387 = vmatpush2.msra.mxu0 0.0
    %5388 = vmatprep.subr.mxu0 0.0
    %5389 = vmatpush2.msra.mxu0 0.0
    %5390 = vmatprep.subr.mxu0 0.0
    %5391 = vmatpush2.msra.mxu0 0.0
    %5392 = vmatprep.subr.mxu0 0.0
    %5393 = vmatpush2.msra.mxu0 0.0
    %5394 = vmatprep.subr.mxu0 0.0
    %5395 = vmatpush2.msra.mxu0 0.0
    %5396 = vmatprep.subr.mxu0 0.0
    %5397 = vmatpush2.msra.mxu0 0.0
    %5398 = vmatprep.subr.mxu0 0.0
    %5399 = vmatpush2.msra.mxu0 0.0
    %5400 = vmatprep.subr.mxu0 0.0
    %5401 = vmatpush2.msra.mxu0 0.0
    %5402 = vmatprep.subr.mxu0 0.0
    %5403 = vmatpush2.msra.mxu0 0.0
    %5404 = vmatprep.subr.mxu0 0.0
    %5405 = vmatpush2.msra.mxu0 0.0
    %5406 = vmatprep.subr.mxu0 0.0
    %5407 = vmatpush2.msra.mxu0 0.0
    %5408 = vmatprep.subr.mxu0 0.0
    %5409 = vmatpush2.msra.mxu0 0.0
    %5410 = vmatprep.subr.mxu0 0.0
    %5411 = vmatpush2.msra.mxu0 0.0
    %5412 = vmatprep.subr.mxu0 0.0
    %5413 = vmatpush2.msra.mxu0 0.0
    %5414 = vmatprep.subr.mxu0 0.0
    %5415 = vmatpush2.msra.mxu0 0.0
    %5416 = vmatprep.subr.mxu0 0.0
    %5417 = vmatpush2.msra.mxu0 0.0
    %5418 = vmatprep.mubr.f32.mxu0 0.0
    %5419 = vmatmul.mubr.f32.gmra.mxu0 %v4970
    %v5420 = vpop.f32.mrf.mxu0
    %v5421 = vadd.f32 0.0, %v5420
    %v5422 = vpop.f32.mrf.mxu0
    %5423 = vdwg.mxu0
    %v5427 = vcombine.low %v5350, %v5352
    %v5429 = vunpack.c.l.s4 1983009808
    %v5430 = vunpack.c.0.s8 %v5429
    %v5431 = vlaneseq
    %v5432 = vshrl.u32 %v5431, 7
    %v5433 = vsub.s32 %v5430, %v5432
    %v5434 = vrot.slane %v5427, %v5433
    %v5436 = vunpack.c.l.s4 1983009808
    %v5437 = vunpack.c.0.s8 %v5436
    %v5438 = vlaneseq
    %v5439 = vshrl.u32 %v5438, 7
    %v5440 = vsub.s32 %v5437, %v5439
    %v5441 = vrot.slane %v5421, %v5440
    %v5442 = vcombine.low %v5434, %v5441
    %v5444 = vadd.f32 %v4719, %v5442
    %v5445 = vxor.u32 %v5444, 2147483648
    %v5446 = vmul.f32 %v5445, 1.442695
    %v5447 = vpow.pop %v5446
    %v5448 = vadd.f32 %v5447, 1.0
    %v5449 = vrcp.pop %v5448
    %v5450 = vmul.f32 1.0, %v5449
    %v5451 = vadd.f32 %v5421, %v4939
    %v5452 = vmul.f32 %v5450, %v5451
    %v5453 = vrot.slane %v4719, 4
    %v5455 = vadd.f32 %v5453, %v5452
    %v5456 = vtanh.pop %v5455
    %v5458 = vrot.slane %v5450, 2
    %v5460 = vmul.f32 %v5458, %v4952
    %v5461 = vsub.f32 1.0, %v5458
    %v5462 = vmul.f32 %v5461, %v5456
    %v5463 = vadd.f32 %v5460, %v5462
    %v5465 = vsel %vm165, %v5463, 0
    %5467 = vmatprep.subr.mxu0 0.0
    %5468 = vmatpush1.msra.mxu0 0.0
    %5469 = vmatprep.subr.mxu0 0.0
    %5470 = vmatpush1.msra.mxu0 0.0
    %5471 = vmatprep.subr.mxu0 0.0
    %5472 = vmatpush1.msra.mxu0 0.0
    %5473 = vmatprep.subr.mxu0 0.0
    %5474 = vmatpush1.msra.mxu0 0.0
    %5475 = vmatprep.subr.mxu0 0.0
    %5476 = vmatpush1.msra.mxu0 0.0
    %5477 = vmatprep.subr.mxu0 0.0
    %5478 = vmatpush1.msra.mxu0 0.0
    %5479 = vmatprep.subr.mxu0 0.0
    %5480 = vmatpush1.msra.mxu0 0.0
    %5481 = vmatprep.subr.mxu0 0.0
    %5482 = vmatpush1.msra.mxu0 0.0
    %5483 = vmatprep.subr.mxu0 0.0
    %5484 = vmatpush1.msra.mxu0 0.0
    %5485 = vmatprep.subr.mxu0 0.0
    %5486 = vmatpush1.msra.mxu0 0.0
    %5487 = vmatprep.subr.mxu0 0.0
    %5488 = vmatpush1.msra.mxu0 0.0
    %5489 = vmatprep.subr.mxu0 0.0
    %5490 = vmatpush1.msra.mxu0 0.0
    %5491 = vmatprep.subr.mxu0 %v4446
    %5492 = vmatpush1.msra.mxu0 %v4445
    %5493 = vmatprep.subr.mxu0 %v4443
    %5494 = vmatpush1.msra.mxu0 %v4442
    %5495 = vmatprep.subr.mxu0 %v4440
    %5496 = vmatpush1.msra.mxu0 %v4439
    %5497 = vmatprep.subr.mxu0 %v4437
    %5498 = vmatpush1.msra.mxu0 %v4436
    %5499 = vmatprep.subr.mxu0 0.0
    %5500 = vmatpush2.msra.mxu0 0.0
    %5501 = vmatprep.subr.mxu0 0.0
    %5502 = vmatpush2.msra.mxu0 0.0
    %5503 = vmatprep.subr.mxu0 0.0
    %5504 = vmatpush2.msra.mxu0 0.0
    %5505 = vmatprep.subr.mxu0 0.0
    %5506 = vmatpush2.msra.mxu0 0.0
    %5507 = vmatprep.subr.mxu0 0.0
    %5508 = vmatpush2.msra.mxu0 0.0
    %5509 = vmatprep.subr.mxu0 0.0
    %5510 = vmatpush2.msra.mxu0 0.0
    %5511 = vmatprep.subr.mxu0 0.0
    %5512 = vmatpush2.msra.mxu0 0.0
    %5513 = vmatprep.subr.mxu0 0.0
    %5514 = vmatpush2.msra.mxu0 0.0
    %5515 = vmatprep.subr.mxu0 0.0
    %5516 = vmatpush2.msra.mxu0 0.0
    %5517 = vmatprep.subr.mxu0 0.0
    %5518 = vmatpush2.msra.mxu0 0.0
    %5519 = vmatprep.subr.mxu0 0.0
    %5520 = vmatpush2.msra.mxu0 0.0
    %5521 = vmatprep.subr.mxu0 0.0
    %5522 = vmatpush2.msra.mxu0 0.0
    %5523 = vmatprep.subr.mxu0 0.0
    %5524 = vmatpush2.msra.mxu0 0.0
    %5525 = vmatprep.subr.mxu0 0.0
    %5526 = vmatpush2.msra.mxu0 0.0
    %5527 = vmatprep.subr.mxu0 0.0
    %5528 = vmatpush2.msra.mxu0 0.0
    %5529 = vmatprep.subr.mxu0 0.0
    %5530 = vmatpush2.msra.mxu0 0.0
    %5531 = vmatprep.mubr.f32.mxu0 0.0
    %5532 = vmatmul.mubr.f32.gmra.mxu0 %v5465
    %v5533 = vpop.f32.mrf.mxu0
    %v5534 = vadd.f32 %v4957, %v5533
    %v5535 = vpop.f32.mrf.mxu0
    %v5536 = vadd.f32 %v4961, %v5535
    %5537 = vdwg.mxu0
    %5538 = vmatprep.subr.mxu0 0.0
    %5539 = vmatpush1.msra.mxu0 0.0
    %5540 = vmatprep.subr.mxu0 0.0
    %5541 = vmatpush1.msra.mxu0 0.0
    %5542 = vmatprep.subr.mxu0 0.0
    %5543 = vmatpush1.msra.mxu0 0.0
    %5544 = vmatprep.subr.mxu0 0.0
    %5545 = vmatpush1.msra.mxu0 0.0
    %5546 = vmatprep.subr.mxu0 0.0
    %5547 = vmatpush1.msra.mxu0 0.0
    %5548 = vmatprep.subr.mxu0 0.0
    %5549 = vmatpush1.msra.mxu0 0.0
    %5550 = vmatprep.subr.mxu0 0.0
    %5551 = vmatpush1.msra.mxu0 0.0
    %5552 = vmatprep.subr.mxu0 0.0
    %5553 = vmatpush1.msra.mxu0 0.0
    %5554 = vmatprep.subr.mxu0 0.0
    %5555 = vmatpush1.msra.mxu0 0.0
    %5556 = vmatprep.subr.mxu0 0.0
    %5557 = vmatpush1.msra.mxu0 0.0
    %5558 = vmatprep.subr.mxu0 0.0
    %5559 = vmatpush1.msra.mxu0 0.0
    %5560 = vmatprep.subr.mxu0 0.0
    %5561 = vmatpush1.msra.mxu0 0.0
    %5562 = vmatprep.subr.mxu0 0.0
    %5563 = vmatpush1.msra.mxu0 %v4447
    %5564 = vmatprep.subr.mxu0 0.0
    %5565 = vmatpush1.msra.mxu0 %v4444
    %5566 = vmatprep.subr.mxu0 0.0
    %5567 = vmatpush1.msra.mxu0 %v4441
    %5568 = vmatprep.subr.mxu0 0.0
    %5569 = vmatpush1.msra.mxu0 %v4438
    %5570 = vmatprep.subr.mxu0 0.0
    %5571 = vmatpush2.msra.mxu0 0.0
    %5572 = vmatprep.subr.mxu0 0.0
    %5573 = vmatpush2.msra.mxu0 0.0
    %5574 = vmatprep.subr.mxu0 0.0
    %5575 = vmatpush2.msra.mxu0 0.0
    %5576 = vmatprep.subr.mxu0 0.0
    %5577 = vmatpush2.msra.mxu0 0.0
    %5578 = vmatprep.subr.mxu0 0.0
    %5579 = vmatpush2.msra.mxu0 0.0
    %5580 = vmatprep.subr.mxu0 0.0
    %5581 = vmatpush2.msra.mxu0 0.0
    %5582 = vmatprep.subr.mxu0 0.0
    %5583 = vmatpush2.msra.mxu0 0.0
    %5584 = vmatprep.subr.mxu0 0.0
    %5585 = vmatpush2.msra.mxu0 0.0
    %5586 = vmatprep.subr.mxu0 0.0
    %5587 = vmatpush2.msra.mxu0 0.0
    %5588 = vmatprep.subr.mxu0 0.0
    %5589 = vmatpush2.msra.mxu0 0.0
    %5590 = vmatprep.subr.mxu0 0.0
    %5591 = vmatpush2.msra.mxu0 0.0
    %5592 = vmatprep.subr.mxu0 0.0
    %5593 = vmatpush2.msra.mxu0 0.0
    %5594 = vmatprep.subr.mxu0 0.0
    %5595 = vmatpush2.msra.mxu0 0.0
    %5596 = vmatprep.subr.mxu0 0.0
    %5597 = vmatpush2.msra.mxu0 0.0
    %5598 = vmatprep.subr.mxu0 0.0
    %5599 = vmatpush2.msra.mxu0 0.0
    %5600 = vmatprep.subr.mxu0 0.0
    %5601 = vmatpush2.msra.mxu0 0.0
    %5602 = vmatprep.mubr.f32.mxu0 0.0
    %5603 = vmatmul.mubr.f32.gmra.mxu0 %v5465
    %v5604 = vpop.f32.mrf.mxu0
    %v5605 = vadd.f32 %v4965, %v5604
    %v5606 = vpop.f32.mrf.mxu0
    %5607 = vdwg.mxu0
    %v5609 = vsel %vm165, %v5282, 0
    %5611 = vmatprep.subr.mxu0 0.0
    %5612 = vmatpush1.msra.mxu0 0.0
    %5613 = vmatprep.subr.mxu0 0.0
    %5614 = vmatpush1.msra.mxu0 0.0
    %5615 = vmatprep.subr.mxu0 0.0
    %5616 = vmatpush1.msra.mxu0 0.0
    %5617 = vmatprep.subr.mxu0 0.0
    %5618 = vmatpush1.msra.mxu0 0.0
    %5619 = vmatprep.subr.mxu0 0.0
    %5620 = vmatpush1.msra.mxu0 0.0
    %5621 = vmatprep.subr.mxu0 0.0
    %5622 = vmatpush1.msra.mxu0 0.0
    %5623 = vmatprep.subr.mxu0 0.0
    %5624 = vmatpush1.msra.mxu0 0.0
    %5625 = vmatprep.subr.mxu0 0.0
    %5626 = vmatpush1.msra.mxu0 0.0
    %5627 = vmatprep.subr.mxu0 0.0
    %5628 = vmatpush1.msra.mxu0 0.0
    %5629 = vmatprep.subr.mxu0 0.0
    %5630 = vmatpush1.msra.mxu0 0.0
    %5631 = vmatprep.subr.mxu0 0.0
    %5632 = vmatpush1.msra.mxu0 0.0
    %5633 = vmatprep.subr.mxu0 0.0
    %5634 = vmatpush1.msra.mxu0 0.0
    %5635 = vmatprep.subr.mxu0 %v4459
    %5636 = vmatpush1.msra.mxu0 %v4458
    %5637 = vmatprep.subr.mxu0 %v4456
    %5638 = vmatpush1.msra.mxu0 %v4455
    %5639 = vmatprep.subr.mxu0 %v4453
    %5640 = vmatpush1.msra.mxu0 %v4452
    %5641 = vmatprep.subr.mxu0 %v4450
    %5642 = vmatpush1.msra.mxu0 %v4449
    %5643 = vmatprep.subr.mxu0 0.0
    %5644 = vmatpush2.msra.mxu0 0.0
    %5645 = vmatprep.subr.mxu0 0.0
    %5646 = vmatpush2.msra.mxu0 0.0
    %5647 = vmatprep.subr.mxu0 0.0
    %5648 = vmatpush2.msra.mxu0 0.0
    %5649 = vmatprep.subr.mxu0 0.0
    %5650 = vmatpush2.msra.mxu0 0.0
    %5651 = vmatprep.subr.mxu0 0.0
    %5652 = vmatpush2.msra.mxu0 0.0
    %5653 = vmatprep.subr.mxu0 0.0
    %5654 = vmatpush2.msra.mxu0 0.0
    %5655 = vmatprep.subr.mxu0 0.0
    %5656 = vmatpush2.msra.mxu0 0.0
    %5657 = vmatprep.subr.mxu0 0.0
    %5658 = vmatpush2.msra.mxu0 0.0
    %5659 = vmatprep.subr.mxu0 0.0
    %5660 = vmatpush2.msra.mxu0 0.0
    %5661 = vmatprep.subr.mxu0 0.0
    %5662 = vmatpush2.msra.mxu0 0.0
    %5663 = vmatprep.subr.mxu0 0.0
    %5664 = vmatpush2.msra.mxu0 0.0
    %5665 = vmatprep.subr.mxu0 0.0
    %5666 = vmatpush2.msra.mxu0 0.0
    %5667 = vmatprep.subr.mxu0 0.0
    %5668 = vmatpush2.msra.mxu0 0.0
    %5669 = vmatprep.subr.mxu0 0.0
    %5670 = vmatpush2.msra.mxu0 0.0
    %5671 = vmatprep.subr.mxu0 0.0
    %5672 = vmatpush2.msra.mxu0 0.0
    %5673 = vmatprep.subr.mxu0 0.0
    %5674 = vmatpush2.msra.mxu0 0.0
    %5675 = vmatprep.mubr.f32.mxu0 0.0
    %5676 = vmatmul.mubr.f32.gmra.mxu0 %v5609
    %v5677 = vpop.f32.mrf.mxu0
    %v5678 = vadd.f32 0.0, %v5677
    %v5679 = vpop.f32.mrf.mxu0
    %v5680 = vadd.f32 0.0, %v5679
    %5681 = vdwg.mxu0
    %5682 = vmatprep.subr.mxu0 0.0
    %5683 = vmatpush1.msra.mxu0 0.0
    %5684 = vmatprep.subr.mxu0 0.0
    %5685 = vmatpush1.msra.mxu0 0.0
    %5686 = vmatprep.subr.mxu0 0.0
    %5687 = vmatpush1.msra.mxu0 0.0
    %5688 = vmatprep.subr.mxu0 0.0
    %5689 = vmatpush1.msra.mxu0 0.0
    %5690 = vmatprep.subr.mxu0 0.0
    %5691 = vmatpush1.msra.mxu0 0.0
    %5692 = vmatprep.subr.mxu0 0.0
    %5693 = vmatpush1.msra.mxu0 0.0
    %5694 = vmatprep.subr.mxu0 0.0
    %5695 = vmatpush1.msra.mxu0 0.0
    %5696 = vmatprep.subr.mxu0 0.0
    %5697 = vmatpush1.msra.mxu0 0.0
    %5698 = vmatprep.subr.mxu0 0.0
    %5699 = vmatpush1.msra.mxu0 0.0
    %5700 = vmatprep.subr.mxu0 0.0
    %5701 = vmatpush1.msra.mxu0 0.0
    %5702 = vmatprep.subr.mxu0 0.0
    %5703 = vmatpush1.msra.mxu0 0.0
    %5704 = vmatprep.subr.mxu0 0.0
    %5705 = vmatpush1.msra.mxu0 0.0
    %5706 = vmatprep.subr.mxu0 0.0
    %5707 = vmatpush1.msra.mxu0 %v4460
    %5708 = vmatprep.subr.mxu0 0.0
    %5709 = vmatpush1.msra.mxu0 %v4457
    %5710 = vmatprep.subr.mxu0 0.0
    %5711 = vmatpush1.msra.mxu0 %v4454
    %5712 = vmatprep.subr.mxu0 0.0
    %5713 = vmatpush1.msra.mxu0 %v4451
    %5714 = vmatprep.subr.mxu0 0.0
    %5715 = vmatpush2.msra.mxu0 0.0
    %5716 = vmatprep.subr.mxu0 0.0
    %5717 = vmatpush2.msra.mxu0 0.0
    %5718 = vmatprep.subr.mxu0 0.0
    %5719 = vmatpush2.msra.mxu0 0.0
    %5720 = vmatprep.subr.mxu0 0.0
    %5721 = vmatpush2.msra.mxu0 0.0
    %5722 = vmatprep.subr.mxu0 0.0
    %5723 = vmatpush2.msra.mxu0 0.0
    %5724 = vmatprep.subr.mxu0 0.0
    %5725 = vmatpush2.msra.mxu0 0.0
    %5726 = vmatprep.subr.mxu0 0.0
    %5727 = vmatpush2.msra.mxu0 0.0
    %5728 = vmatprep.subr.mxu0 0.0
    %5729 = vmatpush2.msra.mxu0 0.0
    %5730 = vmatprep.subr.mxu0 0.0
    %5731 = vmatpush2.msra.mxu0 0.0
    %5732 = vmatprep.subr.mxu0 0.0
    %5733 = vmatpush2.msra.mxu0 0.0
    %5734 = vmatprep.subr.mxu0 0.0
    %5735 = vmatpush2.msra.mxu0 0.0
    %5736 = vmatprep.subr.mxu0 0.0
    %5737 = vmatpush2.msra.mxu0 0.0
    %5738 = vmatprep.subr.mxu0 0.0
    %5739 = vmatpush2.msra.mxu0 0.0
    %5740 = vmatprep.subr.mxu0 0.0
    %5741 = vmatpush2.msra.mxu0 0.0
    %5742 = vmatprep.subr.mxu0 0.0
    %5743 = vmatpush2.msra.mxu0 0.0
    %5744 = vmatprep.subr.mxu0 0.0
    %5745 = vmatpush2.msra.mxu0 0.0
    %5746 = vmatprep.mubr.f32.mxu0 0.0
    %5747 = vmatmul.mubr.f32.gmra.mxu0 %v5609
    %v5748 = vpop.f32.mrf.mxu0
    %v5749 = vadd.f32 0.0, %v5748
    %v5750 = vpop.f32.mrf.mxu0
    %5751 = vdwg.mxu0
    %v5752 = vadd.f32 %v5534, %v5678
    %v5753 = vadd.f32 %v5536, %v5680
    %v5754 = vxor.u32 %v5752, 2147483648
    %v5755 = vxor.u32 %v5753, 2147483648
    %v5756 = vmul.f32 %v5754, 1.442695
    %v5757 = vpow.pop %v5756
    %v5758 = vmul.f32 %v5755, 1.442695
    %v5759 = vpow.pop %v5758
    %v5760 = vadd.f32 %v5757, 1.0
    %v5761 = vadd.f32 %v5759, 1.0
    %v5762 = vrcp.pop %v5760
    %v5763 = vmul.f32 1.0, %v5762
    %v5764 = vrcp.pop %v5761
    %v5765 = vmul.f32 1.0, %v5764
    %v5766 = vadd.f32 %v5749, %v5274
    %v5767 = vmul.f32 %v5763, %v5766
    %v5768 = vadd.f32 %v5605, %v5767
    %v5769 = vtanh.pop %v5768
    %v5770 = vmul.f32 %v5765, %v5282
    %v5771 = vsub.f32 1.0, %v5765
    %v5772 = vmul.f32 %v5771, %v5769
    %v5773 = vadd.f32 %v5770, %v5772
    %5774 = vmatprep.subr.mxu0 0.0
    %5775 = vmatpush1.msra.mxu0 0.0
    %5776 = vmatprep.subr.mxu0 0.0
    %5777 = vmatpush1.msra.mxu0 0.0
    %5778 = vmatprep.subr.mxu0 0.0
    %5779 = vmatpush1.msra.mxu0 0.0
    %5780 = vmatprep.subr.mxu0 0.0
    %5781 = vmatpush1.msra.mxu0 0.0
    %5782 = vmatprep.subr.mxu0 0.0
    %5783 = vmatpush1.msra.mxu0 0.0
    %5784 = vmatprep.subr.mxu0 0.0
    %5785 = vmatpush1.msra.mxu0 0.0
    %5786 = vmatprep.subr.mxu0 0.0
    %5787 = vmatpush1.msra.mxu0 0.0
    %5788 = vmatprep.subr.mxu0 0.0
    %5789 = vmatpush1.msra.mxu0 0.0
    %5790 = vmatprep.subr.mxu0 0.0
    %5791 = vmatpush1.msra.mxu0 0.0
    %5792 = vmatprep.subr.mxu0 0.0
    %5793 = vmatpush1.msra.mxu0 0.0
    %5794 = vmatprep.subr.mxu0 0.0
    %5795 = vmatpush1.msra.mxu0 0.0
    %5796 = vmatprep.subr.mxu0 0.0
    %5797 = vmatpush1.msra.mxu0 0.0
    %5798 = vmatprep.subr.mxu0 %v4433
    %5799 = vmatpush1.msra.mxu0 %v4432
    %5800 = vmatprep.subr.mxu0 %v4430
    %5801 = vmatpush1.msra.mxu0 %v4429
    %5802 = vmatprep.subr.mxu0 %v4427
    %5803 = vmatpush1.msra.mxu0 %v4426
    %5804 = vmatprep.subr.mxu0 %v4424
    %5805 = vmatpush1.msra.mxu0 %v4423
    %5806 = vmatprep.subr.mxu0 0.0
    %5807 = vmatpush2.msra.mxu0 0.0
    %5808 = vmatprep.subr.mxu0 0.0
    %5809 = vmatpush2.msra.mxu0 0.0
    %5810 = vmatprep.subr.mxu0 0.0
    %5811 = vmatpush2.msra.mxu0 0.0
    %5812 = vmatprep.subr.mxu0 0.0
    %5813 = vmatpush2.msra.mxu0 0.0
    %5814 = vmatprep.subr.mxu0 0.0
    %5815 = vmatpush2.msra.mxu0 0.0
    %5816 = vmatprep.subr.mxu0 0.0
    %5817 = vmatpush2.msra.mxu0 0.0
    %5818 = vmatprep.subr.mxu0 0.0
    %5819 = vmatpush2.msra.mxu0 0.0
    %5820 = vmatprep.subr.mxu0 0.0
    %5821 = vmatpush2.msra.mxu0 0.0
    %5822 = vmatprep.subr.mxu0 0.0
    %5823 = vmatpush2.msra.mxu0 0.0
    %5824 = vmatprep.subr.mxu0 0.0
    %5825 = vmatpush2.msra.mxu0 0.0
    %5826 = vmatprep.subr.mxu0 0.0
    %5827 = vmatpush2.msra.mxu0 0.0
    %5828 = vmatprep.subr.mxu0 0.0
    %5829 = vmatpush2.msra.mxu0 0.0
    %5830 = vmatprep.subr.mxu0 0.0
    %5831 = vmatpush2.msra.mxu0 0.0
    %5832 = vmatprep.subr.mxu0 0.0
    %5833 = vmatpush2.msra.mxu0 0.0
    %5834 = vmatprep.subr.mxu0 0.0
    %5835 = vmatpush2.msra.mxu0 0.0
    %5836 = vmatprep.subr.mxu0 0.0
    %5837 = vmatpush2.msra.mxu0 0.0
    %5838 = vmatprep.mubr.f32.mxu0 0.0
    %5839 = vmatmul.mubr.f32.gmra.mxu0 %v5465
    %v5840 = vpop.f32.mrf.mxu0
    %v5841 = vadd.f32 0.0, %v5840
    %v5842 = vpop.f32.mrf.mxu0
    %v5843 = vadd.f32 0.0, %v5842
    %5844 = vdwg.mxu0
    %5845 = vmatprep.subr.mxu0 0.0
    %5846 = vmatpush1.msra.mxu0 0.0
    %5847 = vmatprep.subr.mxu0 0.0
    %5848 = vmatpush1.msra.mxu0 0.0
    %5849 = vmatprep.subr.mxu0 0.0
    %5850 = vmatpush1.msra.mxu0 0.0
    %5851 = vmatprep.subr.mxu0 0.0
    %5852 = vmatpush1.msra.mxu0 0.0
    %5853 = vmatprep.subr.mxu0 0.0
    %5854 = vmatpush1.msra.mxu0 0.0
    %5855 = vmatprep.subr.mxu0 0.0
    %5856 = vmatpush1.msra.mxu0 0.0
    %5857 = vmatprep.subr.mxu0 0.0
    %5858 = vmatpush1.msra.mxu0 0.0
    %5859 = vmatprep.subr.mxu0 0.0
    %5860 = vmatpush1.msra.mxu0 0.0
    %5861 = vmatprep.subr.mxu0 0.0
    %5862 = vmatpush1.msra.mxu0 0.0
    %5863 = vmatprep.subr.mxu0 0.0
    %5864 = vmatpush1.msra.mxu0 0.0
    %5865 = vmatprep.subr.mxu0 0.0
    %5866 = vmatpush1.msra.mxu0 0.0
    %5867 = vmatprep.subr.mxu0 0.0
    %5868 = vmatpush1.msra.mxu0 0.0
    %5869 = vmatprep.subr.mxu0 0.0
    %5870 = vmatpush1.msra.mxu0 %v4434
    %5871 = vmatprep.subr.mxu0 0.0
    %5872 = vmatpush1.msra.mxu0 %v4431
    %5873 = vmatprep.subr.mxu0 0.0
    %5874 = vmatpush1.msra.mxu0 %v4428
    %5875 = vmatprep.subr.mxu0 0.0
    %5876 = vmatpush1.msra.mxu0 %v4425
    %5877 = vmatprep.subr.mxu0 0.0
    %5878 = vmatpush2.msra.mxu0 0.0
    %5879 = vmatprep.subr.mxu0 0.0
    %5880 = vmatpush2.msra.mxu0 0.0
    %5881 = vmatprep.subr.mxu0 0.0
    %5882 = vmatpush2.msra.mxu0 0.0
    %5883 = vmatprep.subr.mxu0 0.0
    %5884 = vmatpush2.msra.mxu0 0.0
    %5885 = vmatprep.subr.mxu0 0.0
    %5886 = vmatpush2.msra.mxu0 0.0
    %5887 = vmatprep.subr.mxu0 0.0
    %5888 = vmatpush2.msra.mxu0 0.0
    %5889 = vmatprep.subr.mxu0 0.0
    %5890 = vmatpush2.msra.mxu0 0.0
    %5891 = vmatprep.subr.mxu0 0.0
    %5892 = vmatpush2.msra.mxu0 0.0
    %5893 = vmatprep.subr.mxu0 0.0
    %5894 = vmatpush2.msra.mxu0 0.0
    %5895 = vmatprep.subr.mxu0 0.0
    %5896 = vmatpush2.msra.mxu0 0.0
    %5897 = vmatprep.subr.mxu0 0.0
    %5898 = vmatpush2.msra.mxu0 0.0
    %5899 = vmatprep.subr.mxu0 0.0
    %5900 = vmatpush2.msra.mxu0 0.0
    %5901 = vmatprep.subr.mxu0 0.0
    %5902 = vmatpush2.msra.mxu0 0.0
    %5903 = vmatprep.subr.mxu0 0.0
    %5904 = vmatpush2.msra.mxu0 0.0
    %5905 = vmatprep.subr.mxu0 0.0
    %5906 = vmatpush2.msra.mxu0 0.0
    %5907 = vmatprep.subr.mxu0 0.0
    %5908 = vmatpush2.msra.mxu0 0.0
    %5909 = vmatprep.mubr.f32.mxu0 0.0
    %5910 = vmatmul.mubr.f32.gmra.mxu0 %v5465
    %v5911 = vpop.f32.mrf.mxu0
    %v5912 = vadd.f32 0.0, %v5911
    %v5913 = vpop.f32.mrf.mxu0
    %5914 = vdwg.mxu0
    %v5918 = vcombine.low %v5841, %v5843
    %v5920 = vunpack.c.l.s4 1983009808
    %v5921 = vunpack.c.0.s8 %v5920
    %v5922 = vlaneseq
    %v5923 = vshrl.u32 %v5922, 7
    %v5924 = vsub.s32 %v5921, %v5923
    %v5925 = vrot.slane %v5918, %v5924
    %v5927 = vunpack.c.l.s4 1983009808
    %v5928 = vunpack.c.0.s8 %v5927
    %v5929 = vlaneseq
    %v5930 = vshrl.u32 %v5929, 7
    %v5931 = vsub.s32 %v5928, %v5930
    %v5932 = vrot.slane %v5912, %v5931
    %v5933 = vcombine.low %v5925, %v5932
    %v5935 = vadd.f32 %v4720, %v5933
    %v5936 = vxor.u32 %v5935, 2147483648
    %v5937 = vmul.f32 %v5936, 1.442695
    %v5938 = vpow.pop %v5937
    %v5939 = vadd.f32 %v5938, 1.0
    %v5940 = vrcp.pop %v5939
    %v5941 = vmul.f32 1.0, %v5940
    %v5942 = vadd.f32 %v5912, %v4939
    %v5943 = vmul.f32 %v5941, %v5942
    %v5944 = vrot.slane %v4720, 4
    %v5946 = vadd.f32 %v5944, %v5943
    %v5947 = vtanh.pop %v5946
    %v5949 = vrot.slane %v5941, 2
    %v5951 = vmul.f32 %v5949, %v5463
    %v5952 = vsub.f32 1.0, %v5949
    %v5953 = vmul.f32 %v5952, %v5947
    %v5954 = vadd.f32 %v5951, %v5953
    %v5956 = vsel %vm165, %v5954, 0
    %5958 = vmatprep.subr.mxu0 0.0
    %5959 = vmatpush1.msra.mxu0 0.0
    %5960 = vmatprep.subr.mxu0 0.0
    %5961 = vmatpush1.msra.mxu0 0.0
    %5962 = vmatprep.subr.mxu0 0.0
    %5963 = vmatpush1.msra.mxu0 0.0
    %5964 = vmatprep.subr.mxu0 0.0
    %5965 = vmatpush1.msra.mxu0 0.0
    %5966 = vmatprep.subr.mxu0 0.0
    %5967 = vmatpush1.msra.mxu0 0.0
    %5968 = vmatprep.subr.mxu0 0.0
    %5969 = vmatpush1.msra.mxu0 0.0
    %5970 = vmatprep.subr.mxu0 0.0
    %5971 = vmatpush1.msra.mxu0 0.0
    %5972 = vmatprep.subr.mxu0 0.0
    %5973 = vmatpush1.msra.mxu0 0.0
    %5974 = vmatprep.subr.mxu0 0.0
    %5975 = vmatpush1.msra.mxu0 0.0
    %5976 = vmatprep.subr.mxu0 0.0
    %5977 = vmatpush1.msra.mxu0 0.0
    %5978 = vmatprep.subr.mxu0 0.0
    %5979 = vmatpush1.msra.mxu0 0.0
    %5980 = vmatprep.subr.mxu0 0.0
    %5981 = vmatpush1.msra.mxu0 0.0
    %5982 = vmatprep.subr.mxu0 %v4446
    %5983 = vmatpush1.msra.mxu0 %v4445
    %5984 = vmatprep.subr.mxu0 %v4443
    %5985 = vmatpush1.msra.mxu0 %v4442
    %5986 = vmatprep.subr.mxu0 %v4440
    %5987 = vmatpush1.msra.mxu0 %v4439
    %5988 = vmatprep.subr.mxu0 %v4437
    %5989 = vmatpush1.msra.mxu0 %v4436
    %5990 = vmatprep.subr.mxu0 0.0
    %5991 = vmatpush2.msra.mxu0 0.0
    %5992 = vmatprep.subr.mxu0 0.0
    %5993 = vmatpush2.msra.mxu0 0.0
    %5994 = vmatprep.subr.mxu0 0.0
    %5995 = vmatpush2.msra.mxu0 0.0
    %5996 = vmatprep.subr.mxu0 0.0
    %5997 = vmatpush2.msra.mxu0 0.0
    %5998 = vmatprep.subr.mxu0 0.0
    %5999 = vmatpush2.msra.mxu0 0.0
    %6000 = vmatprep.subr.mxu0 0.0
    %6001 = vmatpush2.msra.mxu0 0.0
    %6002 = vmatprep.subr.mxu0 0.0
    %6003 = vmatpush2.msra.mxu0 0.0
    %6004 = vmatprep.subr.mxu0 0.0
    %6005 = vmatpush2.msra.mxu0 0.0
    %6006 = vmatprep.subr.mxu0 0.0
    %6007 = vmatpush2.msra.mxu0 0.0
    %6008 = vmatprep.subr.mxu0 0.0
    %6009 = vmatpush2.msra.mxu0 0.0
    %6010 = vmatprep.subr.mxu0 0.0
    %6011 = vmatpush2.msra.mxu0 0.0
    %6012 = vmatprep.subr.mxu0 0.0
    %6013 = vmatpush2.msra.mxu0 0.0
    %6014 = vmatprep.subr.mxu0 0.0
    %6015 = vmatpush2.msra.mxu0 0.0
    %6016 = vmatprep.subr.mxu0 0.0
    %6017 = vmatpush2.msra.mxu0 0.0
    %6018 = vmatprep.subr.mxu0 0.0
    %6019 = vmatpush2.msra.mxu0 0.0
    %6020 = vmatprep.subr.mxu0 0.0
    %6021 = vmatpush2.msra.mxu0 0.0
    %6022 = vmatprep.mubr.f32.mxu0 0.0
    %6023 = vmatmul.mubr.f32.gmra.mxu0 %v5956
    %v6024 = vpop.f32.mrf.mxu0
    %v6025 = vadd.f32 %v4957, %v6024
    %v6026 = vpop.f32.mrf.mxu0
    %v6027 = vadd.f32 %v4961, %v6026
    %6028 = vdwg.mxu0
    %6029 = vmatprep.subr.mxu0 0.0
    %6030 = vmatpush1.msra.mxu0 0.0
    %6031 = vmatprep.subr.mxu0 0.0
    %6032 = vmatpush1.msra.mxu0 0.0
    %6033 = vmatprep.subr.mxu0 0.0
    %6034 = vmatpush1.msra.mxu0 0.0
    %6035 = vmatprep.subr.mxu0 0.0
    %6036 = vmatpush1.msra.mxu0 0.0
    %6037 = vmatprep.subr.mxu0 0.0
    %6038 = vmatpush1.msra.mxu0 0.0
    %6039 = vmatprep.subr.mxu0 0.0
    %6040 = vmatpush1.msra.mxu0 0.0
    %6041 = vmatprep.subr.mxu0 0.0
    %6042 = vmatpush1.msra.mxu0 0.0
    %6043 = vmatprep.subr.mxu0 0.0
    %6044 = vmatpush1.msra.mxu0 0.0
    %6045 = vmatprep.subr.mxu0 0.0
    %6046 = vmatpush1.msra.mxu0 0.0
    %6047 = vmatprep.subr.mxu0 0.0
    %6048 = vmatpush1.msra.mxu0 0.0
    %6049 = vmatprep.subr.mxu0 0.0
    %6050 = vmatpush1.msra.mxu0 0.0
    %6051 = vmatprep.subr.mxu0 0.0
    %6052 = vmatpush1.msra.mxu0 0.0
    %6053 = vmatprep.subr.mxu0 0.0
    %6054 = vmatpush1.msra.mxu0 %v4447
    %6055 = vmatprep.subr.mxu0 0.0
    %6056 = vmatpush1.msra.mxu0 %v4444
    %6057 = vmatprep.subr.mxu0 0.0
    %6058 = vmatpush1.msra.mxu0 %v4441
    %6059 = vmatprep.subr.mxu0 0.0
    %6060 = vmatpush1.msra.mxu0 %v4438
    %6061 = vmatprep.subr.mxu0 0.0
    %6062 = vmatpush2.msra.mxu0 0.0
    %6063 = vmatprep.subr.mxu0 0.0
    %6064 = vmatpush2.msra.mxu0 0.0
    %6065 = vmatprep.subr.mxu0 0.0
    %6066 = vmatpush2.msra.mxu0 0.0
    %6067 = vmatprep.subr.mxu0 0.0
    %6068 = vmatpush2.msra.mxu0 0.0
    %6069 = vmatprep.subr.mxu0 0.0
    %6070 = vmatpush2.msra.mxu0 0.0
    %6071 = vmatprep.subr.mxu0 0.0
    %6072 = vmatpush2.msra.mxu0 0.0
    %6073 = vmatprep.subr.mxu0 0.0
    %6074 = vmatpush2.msra.mxu0 0.0
    %6075 = vmatprep.subr.mxu0 0.0
    %6076 = vmatpush2.msra.mxu0 0.0
    %6077 = vmatprep.subr.mxu0 0.0
    %6078 = vmatpush2.msra.mxu0 0.0
    %6079 = vmatprep.subr.mxu0 0.0
    %6080 = vmatpush2.msra.mxu0 0.0
    %6081 = vmatprep.subr.mxu0 0.0
    %6082 = vmatpush2.msra.mxu0 0.0
    %6083 = vmatprep.subr.mxu0 0.0
    %6084 = vmatpush2.msra.mxu0 0.0
    %6085 = vmatprep.subr.mxu0 0.0
    %6086 = vmatpush2.msra.mxu0 0.0
    %6087 = vmatprep.subr.mxu0 0.0
    %6088 = vmatpush2.msra.mxu0 0.0
    %6089 = vmatprep.subr.mxu0 0.0
    %6090 = vmatpush2.msra.mxu0 0.0
    %6091 = vmatprep.subr.mxu0 0.0
    %6092 = vmatpush2.msra.mxu0 0.0
    %6093 = vmatprep.mubr.f32.mxu0 0.0
    %6094 = vmatmul.mubr.f32.gmra.mxu0 %v5956
    %v6095 = vpop.f32.mrf.mxu0
    %v6096 = vadd.f32 %v4965, %v6095
    %v6097 = vpop.f32.mrf.mxu0
    %6098 = vdwg.mxu0
    %v6100 = vsel %vm165, %v5773, 0
    %6102 = vmatprep.subr.mxu0 0.0
    %6103 = vmatpush1.msra.mxu0 0.0
    %6104 = vmatprep.subr.mxu0 0.0
    %6105 = vmatpush1.msra.mxu0 0.0
    %6106 = vmatprep.subr.mxu0 0.0
    %6107 = vmatpush1.msra.mxu0 0.0
    %6108 = vmatprep.subr.mxu0 0.0
    %6109 = vmatpush1.msra.mxu0 0.0
    %6110 = vmatprep.subr.mxu0 0.0
    %6111 = vmatpush1.msra.mxu0 0.0
    %6112 = vmatprep.subr.mxu0 0.0
    %6113 = vmatpush1.msra.mxu0 0.0
    %6114 = vmatprep.subr.mxu0 0.0
    %6115 = vmatpush1.msra.mxu0 0.0
    %6116 = vmatprep.subr.mxu0 0.0
    %6117 = vmatpush1.msra.mxu0 0.0
    %6118 = vmatprep.subr.mxu0 0.0
    %6119 = vmatpush1.msra.mxu0 0.0
    %6120 = vmatprep.subr.mxu0 0.0
    %6121 = vmatpush1.msra.mxu0 0.0
    %6122 = vmatprep.subr.mxu0 0.0
    %6123 = vmatpush1.msra.mxu0 0.0
    %6124 = vmatprep.subr.mxu0 0.0
    %6125 = vmatpush1.msra.mxu0 0.0
    %6126 = vmatprep.subr.mxu0 %v4459
    %6127 = vmatpush1.msra.mxu0 %v4458
    %6128 = vmatprep.subr.mxu0 %v4456
    %6129 = vmatpush1.msra.mxu0 %v4455
    %6130 = vmatprep.subr.mxu0 %v4453
    %6131 = vmatpush1.msra.mxu0 %v4452
    %6132 = vmatprep.subr.mxu0 %v4450
    %6133 = vmatpush1.msra.mxu0 %v4449
    %6134 = vmatprep.subr.mxu0 0.0
    %6135 = vmatpush2.msra.mxu0 0.0
    %6136 = vmatprep.subr.mxu0 0.0
    %6137 = vmatpush2.msra.mxu0 0.0
    %6138 = vmatprep.subr.mxu0 0.0
    %6139 = vmatpush2.msra.mxu0 0.0
    %6140 = vmatprep.subr.mxu0 0.0
    %6141 = vmatpush2.msra.mxu0 0.0
    %6142 = vmatprep.subr.mxu0 0.0
    %6143 = vmatpush2.msra.mxu0 0.0
    %6144 = vmatprep.subr.mxu0 0.0
    %6145 = vmatpush2.msra.mxu0 0.0
    %6146 = vmatprep.subr.mxu0 0.0
    %6147 = vmatpush2.msra.mxu0 0.0
    %6148 = vmatprep.subr.mxu0 0.0
    %6149 = vmatpush2.msra.mxu0 0.0
    %6150 = vmatprep.subr.mxu0 0.0
    %6151 = vmatpush2.msra.mxu0 0.0
    %6152 = vmatprep.subr.mxu0 0.0
    %6153 = vmatpush2.msra.mxu0 0.0
    %6154 = vmatprep.subr.mxu0 0.0
    %6155 = vmatpush2.msra.mxu0 0.0
    %6156 = vmatprep.subr.mxu0 0.0
    %6157 = vmatpush2.msra.mxu0 0.0
    %6158 = vmatprep.subr.mxu0 0.0
    %6159 = vmatpush2.msra.mxu0 0.0
    %6160 = vmatprep.subr.mxu0 0.0
    %6161 = vmatpush2.msra.mxu0 0.0
    %6162 = vmatprep.subr.mxu0 0.0
    %6163 = vmatpush2.msra.mxu0 0.0
    %6164 = vmatprep.subr.mxu0 0.0
    %6165 = vmatpush2.msra.mxu0 0.0
    %6166 = vmatprep.mubr.f32.mxu0 0.0
    %6167 = vmatmul.mubr.f32.gmra.mxu0 %v6100
    %v6168 = vpop.f32.mrf.mxu0
    %v6169 = vadd.f32 0.0, %v6168
    %v6170 = vpop.f32.mrf.mxu0
    %v6171 = vadd.f32 0.0, %v6170
    %6172 = vdwg.mxu0
    %6173 = vmatprep.subr.mxu0 0.0
    %6174 = vmatpush1.msra.mxu0 0.0
    %6175 = vmatprep.subr.mxu0 0.0
    %6176 = vmatpush1.msra.mxu0 0.0
    %6177 = vmatprep.subr.mxu0 0.0
    %6178 = vmatpush1.msra.mxu0 0.0
    %6179 = vmatprep.subr.mxu0 0.0
    %6180 = vmatpush1.msra.mxu0 0.0
    %6181 = vmatprep.subr.mxu0 0.0
    %6182 = vmatpush1.msra.mxu0 0.0
    %6183 = vmatprep.subr.mxu0 0.0
    %6184 = vmatpush1.msra.mxu0 0.0
    %6185 = vmatprep.subr.mxu0 0.0
    %6186 = vmatpush1.msra.mxu0 0.0
    %6187 = vmatprep.subr.mxu0 0.0
    %6188 = vmatpush1.msra.mxu0 0.0
    %6189 = vmatprep.subr.mxu0 0.0
    %6190 = vmatpush1.msra.mxu0 0.0
    %6191 = vmatprep.subr.mxu0 0.0
    %6192 = vmatpush1.msra.mxu0 0.0
    %6193 = vmatprep.subr.mxu0 0.0
    %6194 = vmatpush1.msra.mxu0 0.0
    %6195 = vmatprep.subr.mxu0 0.0
    %6196 = vmatpush1.msra.mxu0 0.0
    %6197 = vmatprep.subr.mxu0 0.0
    %6198 = vmatpush1.msra.mxu0 %v4460
    %6199 = vmatprep.subr.mxu0 0.0
    %6200 = vmatpush1.msra.mxu0 %v4457
    %6201 = vmatprep.subr.mxu0 0.0
    %6202 = vmatpush1.msra.mxu0 %v4454
    %6203 = vmatprep.subr.mxu0 0.0
    %6204 = vmatpush1.msra.mxu0 %v4451
    %6205 = vmatprep.subr.mxu0 0.0
    %6206 = vmatpush2.msra.mxu0 0.0
    %6207 = vmatprep.subr.mxu0 0.0
    %6208 = vmatpush2.msra.mxu0 0.0
    %6209 = vmatprep.subr.mxu0 0.0
    %6210 = vmatpush2.msra.mxu0 0.0
    %6211 = vmatprep.subr.mxu0 0.0
    %6212 = vmatpush2.msra.mxu0 0.0
    %6213 = vmatprep.subr.mxu0 0.0
    %6214 = vmatpush2.msra.mxu0 0.0
    %6215 = vmatprep.subr.mxu0 0.0
    %6216 = vmatpush2.msra.mxu0 0.0
    %6217 = vmatprep.subr.mxu0 0.0
    %6218 = vmatpush2.msra.mxu0 0.0
    %6219 = vmatprep.subr.mxu0 0.0
    %6220 = vmatpush2.msra.mxu0 0.0
    %6221 = vmatprep.subr.mxu0 0.0
    %6222 = vmatpush2.msra.mxu0 0.0
    %6223 = vmatprep.subr.mxu0 0.0
    %6224 = vmatpush2.msra.mxu0 0.0
    %6225 = vmatprep.subr.mxu0 0.0
    %6226 = vmatpush2.msra.mxu0 0.0
    %6227 = vmatprep.subr.mxu0 0.0
    %6228 = vmatpush2.msra.mxu0 0.0
    %6229 = vmatprep.subr.mxu0 0.0
    %6230 = vmatpush2.msra.mxu0 0.0
    %6231 = vmatprep.subr.mxu0 0.0
    %6232 = vmatpush2.msra.mxu0 0.0
    %6233 = vmatprep.subr.mxu0 0.0
    %6234 = vmatpush2.msra.mxu0 0.0
    %6235 = vmatprep.subr.mxu0 0.0
    %6236 = vmatpush2.msra.mxu0 0.0
    %6237 = vmatprep.mubr.f32.mxu0 0.0
    %6238 = vmatmul.mubr.f32.gmra.mxu0 %v6100
    %v6239 = vpop.f32.mrf.mxu0
    %v6240 = vadd.f32 0.0, %v6239
    %v6241 = vpop.f32.mrf.mxu0
    %6242 = vdwg.mxu0
    %v6243 = vadd.f32 %v6025, %v6169
    %v6244 = vadd.f32 %v6027, %v6171
    %v6245 = vxor.u32 %v6243, 2147483648
    %v6246 = vxor.u32 %v6244, 2147483648
    %v6247 = vmul.f32 %v6245, 1.442695
    %v6248 = vpow.pop %v6247
    %v6249 = vmul.f32 %v6246, 1.442695
    %v6250 = vpow.pop %v6249
    %v6251 = vadd.f32 %v6248, 1.0
    %v6252 = vadd.f32 %v6250, 1.0
    %v6253 = vrcp.pop %v6251
    %v6254 = vmul.f32 1.0, %v6253
    %v6255 = vrcp.pop %v6252
    %v6256 = vmul.f32 1.0, %v6255
    %v6257 = vadd.f32 %v6240, %v5274
    %v6258 = vmul.f32 %v6254, %v6257
    %v6259 = vadd.f32 %v6096, %v6258
    %v6260 = vtanh.pop %v6259
    %v6261 = vmul.f32 %v6256, %v5773
    %v6262 = vsub.f32 1.0, %v6256
    %v6263 = vmul.f32 %v6262, %v6260
    %v6264 = vadd.f32 %v6261, %v6263
    %6265 = vmatprep.subr.mxu0 0.0
    %6266 = vmatpush1.msra.mxu0 0.0
    %6267 = vmatprep.subr.mxu0 0.0
    %6268 = vmatpush1.msra.mxu0 0.0
    %6269 = vmatprep.subr.mxu0 0.0
    %6270 = vmatpush1.msra.mxu0 0.0
    %6271 = vmatprep.subr.mxu0 0.0
    %6272 = vmatpush1.msra.mxu0 0.0
    %6273 = vmatprep.subr.mxu0 0.0
    %6274 = vmatpush1.msra.mxu0 0.0
    %6275 = vmatprep.subr.mxu0 0.0
    %6276 = vmatpush1.msra.mxu0 0.0
    %6277 = vmatprep.subr.mxu0 0.0
    %6278 = vmatpush1.msra.mxu0 0.0
    %6279 = vmatprep.subr.mxu0 0.0
    %6280 = vmatpush1.msra.mxu0 0.0
    %6281 = vmatprep.subr.mxu0 0.0
    %6282 = vmatpush1.msra.mxu0 0.0
    %6283 = vmatprep.subr.mxu0 0.0
    %6284 = vmatpush1.msra.mxu0 0.0
    %6285 = vmatprep.subr.mxu0 0.0
    %6286 = vmatpush1.msra.mxu0 0.0
    %6287 = vmatprep.subr.mxu0 0.0
    %6288 = vmatpush1.msra.mxu0 0.0
    %6289 = vmatprep.subr.mxu0 %v4433
    %6290 = vmatpush1.msra.mxu0 %v4432
    %6291 = vmatprep.subr.mxu0 %v4430
    %6292 = vmatpush1.msra.mxu0 %v4429
    %6293 = vmatprep.subr.mxu0 %v4427
    %6294 = vmatpush1.msra.mxu0 %v4426
    %6295 = vmatprep.subr.mxu0 %v4424
    %6296 = vmatpush1.msra.mxu0 %v4423
    %6297 = vmatprep.subr.mxu0 0.0
    %6298 = vmatpush2.msra.mxu0 0.0
    %6299 = vmatprep.subr.mxu0 0.0
    %6300 = vmatpush2.msra.mxu0 0.0
    %6301 = vmatprep.subr.mxu0 0.0
    %6302 = vmatpush2.msra.mxu0 0.0
    %6303 = vmatprep.subr.mxu0 0.0
    %6304 = vmatpush2.msra.mxu0 0.0
    %6305 = vmatprep.subr.mxu0 0.0
    %6306 = vmatpush2.msra.mxu0 0.0
    %6307 = vmatprep.subr.mxu0 0.0
    %6308 = vmatpush2.msra.mxu0 0.0
    %6309 = vmatprep.subr.mxu0 0.0
    %6310 = vmatpush2.msra.mxu0 0.0
    %6311 = vmatprep.subr.mxu0 0.0
    %6312 = vmatpush2.msra.mxu0 0.0
    %6313 = vmatprep.subr.mxu0 0.0
    %6314 = vmatpush2.msra.mxu0 0.0
    %6315 = vmatprep.subr.mxu0 0.0
    %6316 = vmatpush2.msra.mxu0 0.0
    %6317 = vmatprep.subr.mxu0 0.0
    %6318 = vmatpush2.msra.mxu0 0.0
    %6319 = vmatprep.subr.mxu0 0.0
    %6320 = vmatpush2.msra.mxu0 0.0
    %6321 = vmatprep.subr.mxu0 0.0
    %6322 = vmatpush2.msra.mxu0 0.0
    %6323 = vmatprep.subr.mxu0 0.0
    %6324 = vmatpush2.msra.mxu0 0.0
    %6325 = vmatprep.subr.mxu0 0.0
    %6326 = vmatpush2.msra.mxu0 0.0
    %6327 = vmatprep.subr.mxu0 0.0
    %6328 = vmatpush2.msra.mxu0 0.0
    %6329 = vmatprep.mubr.f32.mxu0 0.0
    %6330 = vmatmul.mubr.f32.gmra.mxu0 %v5956
    %v6331 = vpop.f32.mrf.mxu0
    %v6332 = vadd.f32 0.0, %v6331
    %v6333 = vpop.f32.mrf.mxu0
    %v6334 = vadd.f32 0.0, %v6333
    %6335 = vdwg.mxu0
    %6336 = vmatprep.subr.mxu0 0.0
    %6337 = vmatpush1.msra.mxu0 0.0
    %6338 = vmatprep.subr.mxu0 0.0
    %6339 = vmatpush1.msra.mxu0 0.0
    %6340 = vmatprep.subr.mxu0 0.0
    %6341 = vmatpush1.msra.mxu0 0.0
    %6342 = vmatprep.subr.mxu0 0.0
    %6343 = vmatpush1.msra.mxu0 0.0
    %6344 = vmatprep.subr.mxu0 0.0
    %6345 = vmatpush1.msra.mxu0 0.0
    %6346 = vmatprep.subr.mxu0 0.0
    %6347 = vmatpush1.msra.mxu0 0.0
    %6348 = vmatprep.subr.mxu0 0.0
    %6349 = vmatpush1.msra.mxu0 0.0
    %6350 = vmatprep.subr.mxu0 0.0
    %6351 = vmatpush1.msra.mxu0 0.0
    %6352 = vmatprep.subr.mxu0 0.0
    %6353 = vmatpush1.msra.mxu0 0.0
    %6354 = vmatprep.subr.mxu0 0.0
    %6355 = vmatpush1.msra.mxu0 0.0
    %6356 = vmatprep.subr.mxu0 0.0
    %6357 = vmatpush1.msra.mxu0 0.0
    %6358 = vmatprep.subr.mxu0 0.0
    %6359 = vmatpush1.msra.mxu0 0.0
    %6360 = vmatprep.subr.mxu0 0.0
    %6361 = vmatpush1.msra.mxu0 %v4434
    %6362 = vmatprep.subr.mxu0 0.0
    %6363 = vmatpush1.msra.mxu0 %v4431
    %6364 = vmatprep.subr.mxu0 0.0
    %6365 = vmatpush1.msra.mxu0 %v4428
    %6366 = vmatprep.subr.mxu0 0.0
    %6367 = vmatpush1.msra.mxu0 %v4425
    %6368 = vmatprep.subr.mxu0 0.0
    %6369 = vmatpush2.msra.mxu0 0.0
    %6370 = vmatprep.subr.mxu0 0.0
    %6371 = vmatpush2.msra.mxu0 0.0
    %6372 = vmatprep.subr.mxu0 0.0
    %6373 = vmatpush2.msra.mxu0 0.0
    %6374 = vmatprep.subr.mxu0 0.0
    %6375 = vmatpush2.msra.mxu0 0.0
    %6376 = vmatprep.subr.mxu0 0.0
    %6377 = vmatpush2.msra.mxu0 0.0
    %6378 = vmatprep.subr.mxu0 0.0
    %6379 = vmatpush2.msra.mxu0 0.0
    %6380 = vmatprep.subr.mxu0 0.0
    %6381 = vmatpush2.msra.mxu0 0.0
    %6382 = vmatprep.subr.mxu0 0.0
    %6383 = vmatpush2.msra.mxu0 0.0
    %6384 = vmatprep.subr.mxu0 0.0
    %6385 = vmatpush2.msra.mxu0 0.0
    %6386 = vmatprep.subr.mxu0 0.0
    %6387 = vmatpush2.msra.mxu0 0.0
    %6388 = vmatprep.subr.mxu0 0.0
    %6389 = vmatpush2.msra.mxu0 0.0
    %6390 = vmatprep.subr.mxu0 0.0
    %6391 = vmatpush2.msra.mxu0 0.0
    %6392 = vmatprep.subr.mxu0 0.0
    %6393 = vmatpush2.msra.mxu0 0.0
    %6394 = vmatprep.subr.mxu0 0.0
    %6395 = vmatpush2.msra.mxu0 0.0
    %6396 = vmatprep.subr.mxu0 0.0
    %6397 = vmatpush2.msra.mxu0 0.0
    %6398 = vmatprep.subr.mxu0 0.0
    %6399 = vmatpush2.msra.mxu0 0.0
    %6400 = vmatprep.mubr.f32.mxu0 0.0
    %6401 = vmatmul.mubr.f32.gmra.mxu0 %v5956
    %v6402 = vpop.f32.mrf.mxu0
    %v6403 = vadd.f32 0.0, %v6402
    %v6404 = vpop.f32.mrf.mxu0
    %6405 = vdwg.mxu0
    %v6409 = vcombine.low %v6332, %v6334
    %v6411 = vunpack.c.l.s4 1983009808
    %v6412 = vunpack.c.0.s8 %v6411
    %v6413 = vlaneseq
    %v6414 = vshrl.u32 %v6413, 7
    %v6415 = vsub.s32 %v6412, %v6414
    %v6416 = vrot.slane %v6409, %v6415
    %v6418 = vunpack.c.l.s4 1983009808
    %v6419 = vunpack.c.0.s8 %v6418
    %v6420 = vlaneseq
    %v6421 = vshrl.u32 %v6420, 7
    %v6422 = vsub.s32 %v6419, %v6421
    %v6423 = vrot.slane %v6403, %v6422
    %v6424 = vcombine.low %v6416, %v6423
    %v6426 = vadd.f32 %v4721, %v6424
    %v6427 = vxor.u32 %v6426, 2147483648
    %v6428 = vmul.f32 %v6427, 1.442695
    %v6429 = vpow.pop %v6428
    %v6430 = vadd.f32 %v6429, 1.0
    %v6431 = vrcp.pop %v6430
    %v6432 = vmul.f32 1.0, %v6431
    %v6433 = vadd.f32 %v6403, %v4939
    %v6434 = vmul.f32 %v6432, %v6433
    %v6435 = vrot.slane %v4721, 4
    %v6437 = vadd.f32 %v6435, %v6434
    %v6438 = vtanh.pop %v6437
    %v6440 = vrot.slane %v6432, 2
    %v6442 = vmul.f32 %v6440, %v5954
    %v6443 = vsub.f32 1.0, %v6440
    %v6444 = vmul.f32 %v6443, %v6438
    %v6445 = vadd.f32 %v6442, %v6444
    %v6447 = vsel %vm165, %v6445, 0
    %6449 = vmatprep.subr.mxu0 0.0
    %6450 = vmatpush1.msra.mxu0 0.0
    %6451 = vmatprep.subr.mxu0 0.0
    %6452 = vmatpush1.msra.mxu0 0.0
    %6453 = vmatprep.subr.mxu0 0.0
    %6454 = vmatpush1.msra.mxu0 0.0
    %6455 = vmatprep.subr.mxu0 0.0
    %6456 = vmatpush1.msra.mxu0 0.0
    %6457 = vmatprep.subr.mxu0 0.0
    %6458 = vmatpush1.msra.mxu0 0.0
    %6459 = vmatprep.subr.mxu0 0.0
    %6460 = vmatpush1.msra.mxu0 0.0
    %6461 = vmatprep.subr.mxu0 0.0
    %6462 = vmatpush1.msra.mxu0 0.0
    %6463 = vmatprep.subr.mxu0 0.0
    %6464 = vmatpush1.msra.mxu0 0.0
    %6465 = vmatprep.subr.mxu0 0.0
    %6466 = vmatpush1.msra.mxu0 0.0
    %6467 = vmatprep.subr.mxu0 0.0
    %6468 = vmatpush1.msra.mxu0 0.0
    %6469 = vmatprep.subr.mxu0 0.0
    %6470 = vmatpush1.msra.mxu0 0.0
    %6471 = vmatprep.subr.mxu0 0.0
    %6472 = vmatpush1.msra.mxu0 0.0
    %6473 = vmatprep.subr.mxu0 %v4446
    %6474 = vmatpush1.msra.mxu0 %v4445
    %6475 = vmatprep.subr.mxu0 %v4443
    %6476 = vmatpush1.msra.mxu0 %v4442
    %6477 = vmatprep.subr.mxu0 %v4440
    %6478 = vmatpush1.msra.mxu0 %v4439
    %6479 = vmatprep.subr.mxu0 %v4437
    %6480 = vmatpush1.msra.mxu0 %v4436
    %6481 = vmatprep.subr.mxu0 0.0
    %6482 = vmatpush2.msra.mxu0 0.0
    %6483 = vmatprep.subr.mxu0 0.0
    %6484 = vmatpush2.msra.mxu0 0.0
    %6485 = vmatprep.subr.mxu0 0.0
    %6486 = vmatpush2.msra.mxu0 0.0
    %6487 = vmatprep.subr.mxu0 0.0
    %6488 = vmatpush2.msra.mxu0 0.0
    %6489 = vmatprep.subr.mxu0 0.0
    %6490 = vmatpush2.msra.mxu0 0.0
    %6491 = vmatprep.subr.mxu0 0.0
    %6492 = vmatpush2.msra.mxu0 0.0
    %6493 = vmatprep.subr.mxu0 0.0
    %6494 = vmatpush2.msra.mxu0 0.0
    %6495 = vmatprep.subr.mxu0 0.0
    %6496 = vmatpush2.msra.mxu0 0.0
    %6497 = vmatprep.subr.mxu0 0.0
    %6498 = vmatpush2.msra.mxu0 0.0
    %6499 = vmatprep.subr.mxu0 0.0
    %6500 = vmatpush2.msra.mxu0 0.0
    %6501 = vmatprep.subr.mxu0 0.0
    %6502 = vmatpush2.msra.mxu0 0.0
    %6503 = vmatprep.subr.mxu0 0.0
    %6504 = vmatpush2.msra.mxu0 0.0
    %6505 = vmatprep.subr.mxu0 0.0
    %6506 = vmatpush2.msra.mxu0 0.0
    %6507 = vmatprep.subr.mxu0 0.0
    %6508 = vmatpush2.msra.mxu0 0.0
    %6509 = vmatprep.subr.mxu0 0.0
    %6510 = vmatpush2.msra.mxu0 0.0
    %6511 = vmatprep.subr.mxu0 0.0
    %6512 = vmatpush2.msra.mxu0 0.0
    %6513 = vmatprep.mubr.f32.mxu0 0.0
    %6514 = vmatmul.mubr.f32.gmra.mxu0 %v6447
    %v6515 = vpop.f32.mrf.mxu0
    %v6516 = vadd.f32 %v4957, %v6515
    %v6517 = vpop.f32.mrf.mxu0
    %v6518 = vadd.f32 %v4961, %v6517
    %6519 = vdwg.mxu0
    %6520 = vmatprep.subr.mxu0 0.0
    %6521 = vmatpush1.msra.mxu0 0.0
    %6522 = vmatprep.subr.mxu0 0.0
    %6523 = vmatpush1.msra.mxu0 0.0
    %6524 = vmatprep.subr.mxu0 0.0
    %6525 = vmatpush1.msra.mxu0 0.0
    %6526 = vmatprep.subr.mxu0 0.0
    %6527 = vmatpush1.msra.mxu0 0.0
    %6528 = vmatprep.subr.mxu0 0.0
    %6529 = vmatpush1.msra.mxu0 0.0
    %6530 = vmatprep.subr.mxu0 0.0
    %6531 = vmatpush1.msra.mxu0 0.0
    %6532 = vmatprep.subr.mxu0 0.0
    %6533 = vmatpush1.msra.mxu0 0.0
    %6534 = vmatprep.subr.mxu0 0.0
    %6535 = vmatpush1.msra.mxu0 0.0
    %6536 = vmatprep.subr.mxu0 0.0
    %6537 = vmatpush1.msra.mxu0 0.0
    %6538 = vmatprep.subr.mxu0 0.0
    %6539 = vmatpush1.msra.mxu0 0.0
    %6540 = vmatprep.subr.mxu0 0.0
    %6541 = vmatpush1.msra.mxu0 0.0
    %6542 = vmatprep.subr.mxu0 0.0
    %6543 = vmatpush1.msra.mxu0 0.0
    %6544 = vmatprep.subr.mxu0 0.0
    %6545 = vmatpush1.msra.mxu0 %v4447
    %6546 = vmatprep.subr.mxu0 0.0
    %6547 = vmatpush1.msra.mxu0 %v4444
    %6548 = vmatprep.subr.mxu0 0.0
    %6549 = vmatpush1.msra.mxu0 %v4441
    %6550 = vmatprep.subr.mxu0 0.0
    %6551 = vmatpush1.msra.mxu0 %v4438
    %6552 = vmatprep.subr.mxu0 0.0
    %6553 = vmatpush2.msra.mxu0 0.0
    %6554 = vmatprep.subr.mxu0 0.0
    %6555 = vmatpush2.msra.mxu0 0.0
    %6556 = vmatprep.subr.mxu0 0.0
    %6557 = vmatpush2.msra.mxu0 0.0
    %6558 = vmatprep.subr.mxu0 0.0
    %6559 = vmatpush2.msra.mxu0 0.0
    %6560 = vmatprep.subr.mxu0 0.0
    %6561 = vmatpush2.msra.mxu0 0.0
    %6562 = vmatprep.subr.mxu0 0.0
    %6563 = vmatpush2.msra.mxu0 0.0
    %6564 = vmatprep.subr.mxu0 0.0
    %6565 = vmatpush2.msra.mxu0 0.0
    %6566 = vmatprep.subr.mxu0 0.0
    %6567 = vmatpush2.msra.mxu0 0.0
    %6568 = vmatprep.subr.mxu0 0.0
    %6569 = vmatpush2.msra.mxu0 0.0
    %6570 = vmatprep.subr.mxu0 0.0
    %6571 = vmatpush2.msra.mxu0 0.0
    %6572 = vmatprep.subr.mxu0 0.0
    %6573 = vmatpush2.msra.mxu0 0.0
    %6574 = vmatprep.subr.mxu0 0.0
    %6575 = vmatpush2.msra.mxu0 0.0
    %6576 = vmatprep.subr.mxu0 0.0
    %6577 = vmatpush2.msra.mxu0 0.0
    %6578 = vmatprep.subr.mxu0 0.0
    %6579 = vmatpush2.msra.mxu0 0.0
    %6580 = vmatprep.subr.mxu0 0.0
    %6581 = vmatpush2.msra.mxu0 0.0
    %6582 = vmatprep.subr.mxu0 0.0
    %6583 = vmatpush2.msra.mxu0 0.0
    %6584 = vmatprep.mubr.f32.mxu0 0.0
    %6585 = vmatmul.mubr.f32.gmra.mxu0 %v6447
    %v6586 = vpop.f32.mrf.mxu0
    %v6587 = vadd.f32 %v4965, %v6586
    %v6588 = vpop.f32.mrf.mxu0
    %6589 = vdwg.mxu0
    %v6591 = vsel %vm165, %v6264, 0
    %6593 = vmatprep.subr.mxu0 0.0
    %6594 = vmatpush1.msra.mxu0 0.0
    %6595 = vmatprep.subr.mxu0 0.0
    %6596 = vmatpush1.msra.mxu0 0.0
    %6597 = vmatprep.subr.mxu0 0.0
    %6598 = vmatpush1.msra.mxu0 0.0
    %6599 = vmatprep.subr.mxu0 0.0
    %6600 = vmatpush1.msra.mxu0 0.0
    %6601 = vmatprep.subr.mxu0 0.0
    %6602 = vmatpush1.msra.mxu0 0.0
    %6603 = vmatprep.subr.mxu0 0.0
    %6604 = vmatpush1.msra.mxu0 0.0
    %6605 = vmatprep.subr.mxu0 0.0
    %6606 = vmatpush1.msra.mxu0 0.0
    %6607 = vmatprep.subr.mxu0 0.0
    %6608 = vmatpush1.msra.mxu0 0.0
    %6609 = vmatprep.subr.mxu0 0.0
    %6610 = vmatpush1.msra.mxu0 0.0
    %6611 = vmatprep.subr.mxu0 0.0
    %6612 = vmatpush1.msra.mxu0 0.0
    %6613 = vmatprep.subr.mxu0 0.0
    %6614 = vmatpush1.msra.mxu0 0.0
    %6615 = vmatprep.subr.mxu0 0.0
    %6616 = vmatpush1.msra.mxu0 0.0
    %6617 = vmatprep.subr.mxu0 %v4459
    %6618 = vmatpush1.msra.mxu0 %v4458
    %6619 = vmatprep.subr.mxu0 %v4456
    %6620 = vmatpush1.msra.mxu0 %v4455
    %6621 = vmatprep.subr.mxu0 %v4453
    %6622 = vmatpush1.msra.mxu0 %v4452
    %6623 = vmatprep.subr.mxu0 %v4450
    %6624 = vmatpush1.msra.mxu0 %v4449
    %6625 = vmatprep.subr.mxu0 0.0
    %6626 = vmatpush2.msra.mxu0 0.0
    %6627 = vmatprep.subr.mxu0 0.0
    %6628 = vmatpush2.msra.mxu0 0.0
    %6629 = vmatprep.subr.mxu0 0.0
    %6630 = vmatpush2.msra.mxu0 0.0
    %6631 = vmatprep.subr.mxu0 0.0
    %6632 = vmatpush2.msra.mxu0 0.0
    %6633 = vmatprep.subr.mxu0 0.0
    %6634 = vmatpush2.msra.mxu0 0.0
    %6635 = vmatprep.subr.mxu0 0.0
    %6636 = vmatpush2.msra.mxu0 0.0
    %6637 = vmatprep.subr.mxu0 0.0
    %6638 = vmatpush2.msra.mxu0 0.0
    %6639 = vmatprep.subr.mxu0 0.0
    %6640 = vmatpush2.msra.mxu0 0.0
    %6641 = vmatprep.subr.mxu0 0.0
    %6642 = vmatpush2.msra.mxu0 0.0
    %6643 = vmatprep.subr.mxu0 0.0
    %6644 = vmatpush2.msra.mxu0 0.0
    %6645 = vmatprep.subr.mxu0 0.0
    %6646 = vmatpush2.msra.mxu0 0.0
    %6647 = vmatprep.subr.mxu0 0.0
    %6648 = vmatpush2.msra.mxu0 0.0
    %6649 = vmatprep.subr.mxu0 0.0
    %6650 = vmatpush2.msra.mxu0 0.0
    %6651 = vmatprep.subr.mxu0 0.0
    %6652 = vmatpush2.msra.mxu0 0.0
    %6653 = vmatprep.subr.mxu0 0.0
    %6654 = vmatpush2.msra.mxu0 0.0
    %6655 = vmatprep.subr.mxu0 0.0
    %6656 = vmatpush2.msra.mxu0 0.0
    %6657 = vmatprep.mubr.f32.mxu0 0.0
    %6658 = vmatmul.mubr.f32.gmra.mxu0 %v6591
    %v6659 = vpop.f32.mrf.mxu0
    %v6660 = vadd.f32 0.0, %v6659
    %v6661 = vpop.f32.mrf.mxu0
    %v6662 = vadd.f32 0.0, %v6661
    %6663 = vdwg.mxu0
    %6664 = vmatprep.subr.mxu0 0.0
    %6665 = vmatpush1.msra.mxu0 0.0
    %6666 = vmatprep.subr.mxu0 0.0
    %6667 = vmatpush1.msra.mxu0 0.0
    %6668 = vmatprep.subr.mxu0 0.0
    %6669 = vmatpush1.msra.mxu0 0.0
    %6670 = vmatprep.subr.mxu0 0.0
    %6671 = vmatpush1.msra.mxu0 0.0
    %6672 = vmatprep.subr.mxu0 0.0
    %6673 = vmatpush1.msra.mxu0 0.0
    %6674 = vmatprep.subr.mxu0 0.0
    %6675 = vmatpush1.msra.mxu0 0.0
    %6676 = vmatprep.subr.mxu0 0.0
    %6677 = vmatpush1.msra.mxu0 0.0
    %6678 = vmatprep.subr.mxu0 0.0
    %6679 = vmatpush1.msra.mxu0 0.0
    %6680 = vmatprep.subr.mxu0 0.0
    %6681 = vmatpush1.msra.mxu0 0.0
    %6682 = vmatprep.subr.mxu0 0.0
    %6683 = vmatpush1.msra.mxu0 0.0
    %6684 = vmatprep.subr.mxu0 0.0
    %6685 = vmatpush1.msra.mxu0 0.0
    %6686 = vmatprep.subr.mxu0 0.0
    %6687 = vmatpush1.msra.mxu0 0.0
    %6688 = vmatprep.subr.mxu0 0.0
    %6689 = vmatpush1.msra.mxu0 %v4460
    %6690 = vmatprep.subr.mxu0 0.0
    %6691 = vmatpush1.msra.mxu0 %v4457
    %6692 = vmatprep.subr.mxu0 0.0
    %6693 = vmatpush1.msra.mxu0 %v4454
    %6694 = vmatprep.subr.mxu0 0.0
    %6695 = vmatpush1.msra.mxu0 %v4451
    %6696 = vmatprep.subr.mxu0 0.0
    %6697 = vmatpush2.msra.mxu0 0.0
    %6698 = vmatprep.subr.mxu0 0.0
    %6699 = vmatpush2.msra.mxu0 0.0
    %6700 = vmatprep.subr.mxu0 0.0
    %6701 = vmatpush2.msra.mxu0 0.0
    %6702 = vmatprep.subr.mxu0 0.0
    %6703 = vmatpush2.msra.mxu0 0.0
    %6704 = vmatprep.subr.mxu0 0.0
    %6705 = vmatpush2.msra.mxu0 0.0
    %6706 = vmatprep.subr.mxu0 0.0
    %6707 = vmatpush2.msra.mxu0 0.0
    %6708 = vmatprep.subr.mxu0 0.0
    %6709 = vmatpush2.msra.mxu0 0.0
    %6710 = vmatprep.subr.mxu0 0.0
    %6711 = vmatpush2.msra.mxu0 0.0
    %6712 = vmatprep.subr.mxu0 0.0
    %6713 = vmatpush2.msra.mxu0 0.0
    %6714 = vmatprep.subr.mxu0 0.0
    %6715 = vmatpush2.msra.mxu0 0.0
    %6716 = vmatprep.subr.mxu0 0.0
    %6717 = vmatpush2.msra.mxu0 0.0
    %6718 = vmatprep.subr.mxu0 0.0
    %6719 = vmatpush2.msra.mxu0 0.0
    %6720 = vmatprep.subr.mxu0 0.0
    %6721 = vmatpush2.msra.mxu0 0.0
    %6722 = vmatprep.subr.mxu0 0.0
    %6723 = vmatpush2.msra.mxu0 0.0
    %6724 = vmatprep.subr.mxu0 0.0
    %6725 = vmatpush2.msra.mxu0 0.0
    %6726 = vmatprep.subr.mxu0 0.0
    %6727 = vmatpush2.msra.mxu0 0.0
    %6728 = vmatprep.mubr.f32.mxu0 0.0
    %6729 = vmatmul.mubr.f32.gmra.mxu0 %v6591
    %v6730 = vpop.f32.mrf.mxu0
    %v6731 = vadd.f32 0.0, %v6730
    %v6732 = vpop.f32.mrf.mxu0
    %6733 = vdwg.mxu0
    %v6734 = vadd.f32 %v6516, %v6660
    %v6735 = vadd.f32 %v6518, %v6662
    %v6736 = vxor.u32 %v6734, 2147483648
    %v6737 = vxor.u32 %v6735, 2147483648
    %v6738 = vmul.f32 %v6736, 1.442695
    %v6739 = vpow.pop %v6738
    %v6740 = vmul.f32 %v6737, 1.442695
    %v6741 = vpow.pop %v6740
    %v6742 = vadd.f32 %v6739, 1.0
    %v6743 = vadd.f32 %v6741, 1.0
    %v6744 = vrcp.pop %v6742
    %v6745 = vmul.f32 1.0, %v6744
    %v6746 = vrcp.pop %v6743
    %v6747 = vmul.f32 1.0, %v6746
    %v6748 = vadd.f32 %v6731, %v5274
    %v6749 = vmul.f32 %v6745, %v6748
    %v6750 = vadd.f32 %v6587, %v6749
    %v6751 = vtanh.pop %v6750
    %v6752 = vmul.f32 %v6747, %v6264
    %v6753 = vsub.f32 1.0, %v6747
    %v6754 = vmul.f32 %v6753, %v6751
    %v6755 = vadd.f32 %v6752, %v6754
    %6756 = vmatprep.subr.mxu0 0.0
    %6757 = vmatpush1.msra.mxu0 0.0
    %6758 = vmatprep.subr.mxu0 0.0
    %6759 = vmatpush1.msra.mxu0 0.0
    %6760 = vmatprep.subr.mxu0 0.0
    %6761 = vmatpush1.msra.mxu0 0.0
    %6762 = vmatprep.subr.mxu0 0.0
    %6763 = vmatpush1.msra.mxu0 0.0
    %6764 = vmatprep.subr.mxu0 0.0
    %6765 = vmatpush1.msra.mxu0 0.0
    %6766 = vmatprep.subr.mxu0 0.0
    %6767 = vmatpush1.msra.mxu0 0.0
    %6768 = vmatprep.subr.mxu0 0.0
    %6769 = vmatpush1.msra.mxu0 0.0
    %6770 = vmatprep.subr.mxu0 0.0
    %6771 = vmatpush1.msra.mxu0 0.0
    %6772 = vmatprep.subr.mxu0 0.0
    %6773 = vmatpush1.msra.mxu0 0.0
    %6774 = vmatprep.subr.mxu0 0.0
    %6775 = vmatpush1.msra.mxu0 0.0
    %6776 = vmatprep.subr.mxu0 0.0
    %6777 = vmatpush1.msra.mxu0 0.0
    %6778 = vmatprep.subr.mxu0 0.0
    %6779 = vmatpush1.msra.mxu0 0.0
    %6780 = vmatprep.subr.mxu0 %v4433
    %6781 = vmatpush1.msra.mxu0 %v4432
    %6782 = vmatprep.subr.mxu0 %v4430
    %6783 = vmatpush1.msra.mxu0 %v4429
    %6784 = vmatprep.subr.mxu0 %v4427
    %6785 = vmatpush1.msra.mxu0 %v4426
    %6786 = vmatprep.subr.mxu0 %v4424
    %6787 = vmatpush1.msra.mxu0 %v4423
    %6788 = vmatprep.subr.mxu0 0.0
    %6789 = vmatpush2.msra.mxu0 0.0
    %6790 = vmatprep.subr.mxu0 0.0
    %6791 = vmatpush2.msra.mxu0 0.0
    %6792 = vmatprep.subr.mxu0 0.0
    %6793 = vmatpush2.msra.mxu0 0.0
    %6794 = vmatprep.subr.mxu0 0.0
    %6795 = vmatpush2.msra.mxu0 0.0
    %6796 = vmatprep.subr.mxu0 0.0
    %6797 = vmatpush2.msra.mxu0 0.0
    %6798 = vmatprep.subr.mxu0 0.0
    %6799 = vmatpush2.msra.mxu0 0.0
    %6800 = vmatprep.subr.mxu0 0.0
    %6801 = vmatpush2.msra.mxu0 0.0
    %6802 = vmatprep.subr.mxu0 0.0
    %6803 = vmatpush2.msra.mxu0 0.0
    %6804 = vmatprep.subr.mxu0 0.0
    %6805 = vmatpush2.msra.mxu0 0.0
    %6806 = vmatprep.subr.mxu0 0.0
    %6807 = vmatpush2.msra.mxu0 0.0
    %6808 = vmatprep.subr.mxu0 0.0
    %6809 = vmatpush2.msra.mxu0 0.0
    %6810 = vmatprep.subr.mxu0 0.0
    %6811 = vmatpush2.msra.mxu0 0.0
    %6812 = vmatprep.subr.mxu0 0.0
    %6813 = vmatpush2.msra.mxu0 0.0
    %6814 = vmatprep.subr.mxu0 0.0
    %6815 = vmatpush2.msra.mxu0 0.0
    %6816 = vmatprep.subr.mxu0 0.0
    %6817 = vmatpush2.msra.mxu0 0.0
    %6818 = vmatprep.subr.mxu0 0.0
    %6819 = vmatpush2.msra.mxu0 0.0
    %6820 = vmatprep.mubr.f32.mxu0 0.0
    %6821 = vmatmul.mubr.f32.gmra.mxu0 %v6447
    %v6822 = vpop.f32.mrf.mxu0
    %v6823 = vadd.f32 0.0, %v6822
    %v6824 = vpop.f32.mrf.mxu0
    %v6825 = vadd.f32 0.0, %v6824
    %6826 = vdwg.mxu0
    %6827 = vmatprep.subr.mxu0 0.0
    %6828 = vmatpush1.msra.mxu0 0.0
    %6829 = vmatprep.subr.mxu0 0.0
    %6830 = vmatpush1.msra.mxu0 0.0
    %6831 = vmatprep.subr.mxu0 0.0
    %6832 = vmatpush1.msra.mxu0 0.0
    %6833 = vmatprep.subr.mxu0 0.0
    %6834 = vmatpush1.msra.mxu0 0.0
    %6835 = vmatprep.subr.mxu0 0.0
    %6836 = vmatpush1.msra.mxu0 0.0
    %6837 = vmatprep.subr.mxu0 0.0
    %6838 = vmatpush1.msra.mxu0 0.0
    %6839 = vmatprep.subr.mxu0 0.0
    %6840 = vmatpush1.msra.mxu0 0.0
    %6841 = vmatprep.subr.mxu0 0.0
    %6842 = vmatpush1.msra.mxu0 0.0
    %6843 = vmatprep.subr.mxu0 0.0
    %6844 = vmatpush1.msra.mxu0 0.0
    %6845 = vmatprep.subr.mxu0 0.0
    %6846 = vmatpush1.msra.mxu0 0.0
    %6847 = vmatprep.subr.mxu0 0.0
    %6848 = vmatpush1.msra.mxu0 0.0
    %6849 = vmatprep.subr.mxu0 0.0
    %6850 = vmatpush1.msra.mxu0 0.0
    %6851 = vmatprep.subr.mxu0 0.0
    %6852 = vmatpush1.msra.mxu0 %v4434
    %6853 = vmatprep.subr.mxu0 0.0
    %6854 = vmatpush1.msra.mxu0 %v4431
    %6855 = vmatprep.subr.mxu0 0.0
    %6856 = vmatpush1.msra.mxu0 %v4428
    %6857 = vmatprep.subr.mxu0 0.0
    %6858 = vmatpush1.msra.mxu0 %v4425
    %6859 = vmatprep.subr.mxu0 0.0
    %6860 = vmatpush2.msra.mxu0 0.0
    %6861 = vmatprep.subr.mxu0 0.0
    %6862 = vmatpush2.msra.mxu0 0.0
    %6863 = vmatprep.subr.mxu0 0.0
    %6864 = vmatpush2.msra.mxu0 0.0
    %6865 = vmatprep.subr.mxu0 0.0
    %6866 = vmatpush2.msra.mxu0 0.0
    %6867 = vmatprep.subr.mxu0 0.0
    %6868 = vmatpush2.msra.mxu0 0.0
    %6869 = vmatprep.subr.mxu0 0.0
    %6870 = vmatpush2.msra.mxu0 0.0
    %6871 = vmatprep.subr.mxu0 0.0
    %6872 = vmatpush2.msra.mxu0 0.0
    %6873 = vmatprep.subr.mxu0 0.0
    %6874 = vmatpush2.msra.mxu0 0.0
    %6875 = vmatprep.subr.mxu0 0.0
    %6876 = vmatpush2.msra.mxu0 0.0
    %6877 = vmatprep.subr.mxu0 0.0
    %6878 = vmatpush2.msra.mxu0 0.0
    %6879 = vmatprep.subr.mxu0 0.0
    %6880 = vmatpush2.msra.mxu0 0.0
    %6881 = vmatprep.subr.mxu0 0.0
    %6882 = vmatpush2.msra.mxu0 0.0
    %6883 = vmatprep.subr.mxu0 0.0
    %6884 = vmatpush2.msra.mxu0 0.0
    %6885 = vmatprep.subr.mxu0 0.0
    %6886 = vmatpush2.msra.mxu0 0.0
    %6887 = vmatprep.subr.mxu0 0.0
    %6888 = vmatpush2.msra.mxu0 0.0
    %6889 = vmatprep.subr.mxu0 0.0
    %6890 = vmatpush2.msra.mxu0 0.0
    %6891 = vmatprep.mubr.f32.mxu0 0.0
    %6892 = vmatmul.mubr.f32.gmra.mxu0 %v6447
    %v6893 = vpop.f32.mrf.mxu0
    %v6894 = vadd.f32 0.0, %v6893
    %v6895 = vpop.f32.mrf.mxu0
    %6896 = vdwg.mxu0
    %v6900 = vcombine.low %v6823, %v6825
    %v6902 = vunpack.c.l.s4 1983009808
    %v6903 = vunpack.c.0.s8 %v6902
    %v6904 = vlaneseq
    %v6905 = vshrl.u32 %v6904, 7
    %v6906 = vsub.s32 %v6903, %v6905
    %v6907 = vrot.slane %v6900, %v6906
    %v6909 = vunpack.c.l.s4 1983009808
    %v6910 = vunpack.c.0.s8 %v6909
    %v6911 = vlaneseq
    %v6912 = vshrl.u32 %v6911, 7
    %v6913 = vsub.s32 %v6910, %v6912
    %v6914 = vrot.slane %v6894, %v6913
    %v6915 = vcombine.low %v6907, %v6914
    %v6917 = vadd.f32 %v4753, %v6915
    %v6918 = vxor.u32 %v6917, 2147483648
    %v6919 = vmul.f32 %v6918, 1.442695
    %v6920 = vpow.pop %v6919
    %v6921 = vadd.f32 %v6920, 1.0
    %v6922 = vrcp.pop %v6921
    %v6923 = vmul.f32 1.0, %v6922
    %v6924 = vadd.f32 %v6894, %v4939
    %v6925 = vmul.f32 %v6923, %v6924
    %v6926 = vrot.slane %v4753, 4
    %v6928 = vadd.f32 %v6926, %v6925
    %v6929 = vtanh.pop %v6928
    %v6931 = vrot.slane %v6923, 2
    %v6933 = vmul.f32 %v6931, %v6445
    %v6934 = vsub.f32 1.0, %v6931
    %v6935 = vmul.f32 %v6934, %v6929
    %v6936 = vadd.f32 %v6933, %v6935
    %v6938 = vsel %vm165, %v6936, 0
    %6940 = vmatprep.subr.mxu0 0.0
    %6941 = vmatpush1.msra.mxu0 0.0
    %6942 = vmatprep.subr.mxu0 0.0
    %6943 = vmatpush1.msra.mxu0 0.0
    %6944 = vmatprep.subr.mxu0 0.0
    %6945 = vmatpush1.msra.mxu0 0.0
    %6946 = vmatprep.subr.mxu0 0.0
    %6947 = vmatpush1.msra.mxu0 0.0
    %6948 = vmatprep.subr.mxu0 0.0
    %6949 = vmatpush1.msra.mxu0 0.0
    %6950 = vmatprep.subr.mxu0 0.0
    %6951 = vmatpush1.msra.mxu0 0.0
    %6952 = vmatprep.subr.mxu0 0.0
    %6953 = vmatpush1.msra.mxu0 0.0
    %6954 = vmatprep.subr.mxu0 0.0
    %6955 = vmatpush1.msra.mxu0 0.0
    %6956 = vmatprep.subr.mxu0 0.0
    %6957 = vmatpush1.msra.mxu0 0.0
    %6958 = vmatprep.subr.mxu0 0.0
    %6959 = vmatpush1.msra.mxu0 0.0
    %6960 = vmatprep.subr.mxu0 0.0
    %6961 = vmatpush1.msra.mxu0 0.0
    %6962 = vmatprep.subr.mxu0 0.0
    %6963 = vmatpush1.msra.mxu0 0.0
    %6964 = vmatprep.subr.mxu0 %v4446
    %6965 = vmatpush1.msra.mxu0 %v4445
    %6966 = vmatprep.subr.mxu0 %v4443
    %6967 = vmatpush1.msra.mxu0 %v4442
    %6968 = vmatprep.subr.mxu0 %v4440
    %6969 = vmatpush1.msra.mxu0 %v4439
    %6970 = vmatprep.subr.mxu0 %v4437
    %6971 = vmatpush1.msra.mxu0 %v4436
    %6972 = vmatprep.subr.mxu0 0.0
    %6973 = vmatpush2.msra.mxu0 0.0
    %6974 = vmatprep.subr.mxu0 0.0
    %6975 = vmatpush2.msra.mxu0 0.0
    %6976 = vmatprep.subr.mxu0 0.0
    %6977 = vmatpush2.msra.mxu0 0.0
    %6978 = vmatprep.subr.mxu0 0.0
    %6979 = vmatpush2.msra.mxu0 0.0
    %6980 = vmatprep.subr.mxu0 0.0
    %6981 = vmatpush2.msra.mxu0 0.0
    %6982 = vmatprep.subr.mxu0 0.0
    %6983 = vmatpush2.msra.mxu0 0.0
    %6984 = vmatprep.subr.mxu0 0.0
    %6985 = vmatpush2.msra.mxu0 0.0
    %6986 = vmatprep.subr.mxu0 0.0
    %6987 = vmatpush2.msra.mxu0 0.0
    %6988 = vmatprep.subr.mxu0 0.0
    %6989 = vmatpush2.msra.mxu0 0.0
    %6990 = vmatprep.subr.mxu0 0.0
    %6991 = vmatpush2.msra.mxu0 0.0
    %6992 = vmatprep.subr.mxu0 0.0
    %6993 = vmatpush2.msra.mxu0 0.0
    %6994 = vmatprep.subr.mxu0 0.0
    %6995 = vmatpush2.msra.mxu0 0.0
    %6996 = vmatprep.subr.mxu0 0.0
    %6997 = vmatpush2.msra.mxu0 0.0
    %6998 = vmatprep.subr.mxu0 0.0
    %6999 = vmatpush2.msra.mxu0 0.0
    %7000 = vmatprep.subr.mxu0 0.0
    %7001 = vmatpush2.msra.mxu0 0.0
    %7002 = vmatprep.subr.mxu0 0.0
    %7003 = vmatpush2.msra.mxu0 0.0
    %7004 = vmatprep.mubr.f32.mxu0 0.0
    %7005 = vmatmul.mubr.f32.gmra.mxu0 %v6938
    %v7006 = vpop.f32.mrf.mxu0
    %v7007 = vadd.f32 %v4957, %v7006
    %v7008 = vpop.f32.mrf.mxu0
    %v7009 = vadd.f32 %v4961, %v7008
    %7010 = vdwg.mxu0
    %7011 = vmatprep.subr.mxu0 0.0
    %7012 = vmatpush1.msra.mxu0 0.0
    %7013 = vmatprep.subr.mxu0 0.0
    %7014 = vmatpush1.msra.mxu0 0.0
    %7015 = vmatprep.subr.mxu0 0.0
    %7016 = vmatpush1.msra.mxu0 0.0
    %7017 = vmatprep.subr.mxu0 0.0
    %7018 = vmatpush1.msra.mxu0 0.0
    %7019 = vmatprep.subr.mxu0 0.0
    %7020 = vmatpush1.msra.mxu0 0.0
    %7021 = vmatprep.subr.mxu0 0.0
    %7022 = vmatpush1.msra.mxu0 0.0
    %7023 = vmatprep.subr.mxu0 0.0
    %7024 = vmatpush1.msra.mxu0 0.0
    %7025 = vmatprep.subr.mxu0 0.0
    %7026 = vmatpush1.msra.mxu0 0.0
    %7027 = vmatprep.subr.mxu0 0.0
    %7028 = vmatpush1.msra.mxu0 0.0
    %7029 = vmatprep.subr.mxu0 0.0
    %7030 = vmatpush1.msra.mxu0 0.0
    %7031 = vmatprep.subr.mxu0 0.0
    %7032 = vmatpush1.msra.mxu0 0.0
    %7033 = vmatprep.subr.mxu0 0.0
    %7034 = vmatpush1.msra.mxu0 0.0
    %7035 = vmatprep.subr.mxu0 0.0
    %7036 = vmatpush1.msra.mxu0 %v4447
    %7037 = vmatprep.subr.mxu0 0.0
    %7038 = vmatpush1.msra.mxu0 %v4444
    %7039 = vmatprep.subr.mxu0 0.0
    %7040 = vmatpush1.msra.mxu0 %v4441
    %7041 = vmatprep.subr.mxu0 0.0
    %7042 = vmatpush1.msra.mxu0 %v4438
    %7043 = vmatprep.subr.mxu0 0.0
    %7044 = vmatpush2.msra.mxu0 0.0
    %7045 = vmatprep.subr.mxu0 0.0
    %7046 = vmatpush2.msra.mxu0 0.0
    %7047 = vmatprep.subr.mxu0 0.0
    %7048 = vmatpush2.msra.mxu0 0.0
    %7049 = vmatprep.subr.mxu0 0.0
    %7050 = vmatpush2.msra.mxu0 0.0
    %7051 = vmatprep.subr.mxu0 0.0
    %7052 = vmatpush2.msra.mxu0 0.0
    %7053 = vmatprep.subr.mxu0 0.0
    %7054 = vmatpush2.msra.mxu0 0.0
    %7055 = vmatprep.subr.mxu0 0.0
    %7056 = vmatpush2.msra.mxu0 0.0
    %7057 = vmatprep.subr.mxu0 0.0
    %7058 = vmatpush2.msra.mxu0 0.0
    %7059 = vmatprep.subr.mxu0 0.0
    %7060 = vmatpush2.msra.mxu0 0.0
    %7061 = vmatprep.subr.mxu0 0.0
    %7062 = vmatpush2.msra.mxu0 0.0
    %7063 = vmatprep.subr.mxu0 0.0
    %7064 = vmatpush2.msra.mxu0 0.0
    %7065 = vmatprep.subr.mxu0 0.0
    %7066 = vmatpush2.msra.mxu0 0.0
    %7067 = vmatprep.subr.mxu0 0.0
    %7068 = vmatpush2.msra.mxu0 0.0
    %7069 = vmatprep.subr.mxu0 0.0
    %7070 = vmatpush2.msra.mxu0 0.0
    %7071 = vmatprep.subr.mxu0 0.0
    %7072 = vmatpush2.msra.mxu0 0.0
    %7073 = vmatprep.subr.mxu0 0.0
    %7074 = vmatpush2.msra.mxu0 0.0
    %7075 = vmatprep.mubr.f32.mxu0 0.0
    %7076 = vmatmul.mubr.f32.gmra.mxu0 %v6938
    %v7077 = vpop.f32.mrf.mxu0
    %v7078 = vadd.f32 %v4965, %v7077
    %v7079 = vpop.f32.mrf.mxu0
    %7080 = vdwg.mxu0
    %v7082 = vsel %vm165, %v6755, 0
    %7084 = vmatprep.subr.mxu0 0.0
    %7085 = vmatpush1.msra.mxu0 0.0
    %7086 = vmatprep.subr.mxu0 0.0
    %7087 = vmatpush1.msra.mxu0 0.0
    %7088 = vmatprep.subr.mxu0 0.0
    %7089 = vmatpush1.msra.mxu0 0.0
    %7090 = vmatprep.subr.mxu0 0.0
    %7091 = vmatpush1.msra.mxu0 0.0
    %7092 = vmatprep.subr.mxu0 0.0
    %7093 = vmatpush1.msra.mxu0 0.0
    %7094 = vmatprep.subr.mxu0 0.0
    %7095 = vmatpush1.msra.mxu0 0.0
    %7096 = vmatprep.subr.mxu0 0.0
    %7097 = vmatpush1.msra.mxu0 0.0
    %7098 = vmatprep.subr.mxu0 0.0
    %7099 = vmatpush1.msra.mxu0 0.0
    %7100 = vmatprep.subr.mxu0 0.0
    %7101 = vmatpush1.msra.mxu0 0.0
    %7102 = vmatprep.subr.mxu0 0.0
    %7103 = vmatpush1.msra.mxu0 0.0
    %7104 = vmatprep.subr.mxu0 0.0
    %7105 = vmatpush1.msra.mxu0 0.0
    %7106 = vmatprep.subr.mxu0 0.0
    %7107 = vmatpush1.msra.mxu0 0.0
    %7108 = vmatprep.subr.mxu0 %v4459
    %7109 = vmatpush1.msra.mxu0 %v4458
    %7110 = vmatprep.subr.mxu0 %v4456
    %7111 = vmatpush1.msra.mxu0 %v4455
    %7112 = vmatprep.subr.mxu0 %v4453
    %7113 = vmatpush1.msra.mxu0 %v4452
    %7114 = vmatprep.subr.mxu0 %v4450
    %7115 = vmatpush1.msra.mxu0 %v4449
    %7116 = vmatprep.subr.mxu0 0.0
    %7117 = vmatpush2.msra.mxu0 0.0
    %7118 = vmatprep.subr.mxu0 0.0
    %7119 = vmatpush2.msra.mxu0 0.0
    %7120 = vmatprep.subr.mxu0 0.0
    %7121 = vmatpush2.msra.mxu0 0.0
    %7122 = vmatprep.subr.mxu0 0.0
    %7123 = vmatpush2.msra.mxu0 0.0
    %7124 = vmatprep.subr.mxu0 0.0
    %7125 = vmatpush2.msra.mxu0 0.0
    %7126 = vmatprep.subr.mxu0 0.0
    %7127 = vmatpush2.msra.mxu0 0.0
    %7128 = vmatprep.subr.mxu0 0.0
    %7129 = vmatpush2.msra.mxu0 0.0
    %7130 = vmatprep.subr.mxu0 0.0
    %7131 = vmatpush2.msra.mxu0 0.0
    %7132 = vmatprep.subr.mxu0 0.0
    %7133 = vmatpush2.msra.mxu0 0.0
    %7134 = vmatprep.subr.mxu0 0.0
    %7135 = vmatpush2.msra.mxu0 0.0
    %7136 = vmatprep.subr.mxu0 0.0
    %7137 = vmatpush2.msra.mxu0 0.0
    %7138 = vmatprep.subr.mxu0 0.0
    %7139 = vmatpush2.msra.mxu0 0.0
    %7140 = vmatprep.subr.mxu0 0.0
    %7141 = vmatpush2.msra.mxu0 0.0
    %7142 = vmatprep.subr.mxu0 0.0
    %7143 = vmatpush2.msra.mxu0 0.0
    %7144 = vmatprep.subr.mxu0 0.0
    %7145 = vmatpush2.msra.mxu0 0.0
    %7146 = vmatprep.subr.mxu0 0.0
    %7147 = vmatpush2.msra.mxu0 0.0
    %7148 = vmatprep.mubr.f32.mxu0 0.0
    %7149 = vmatmul.mubr.f32.gmra.mxu0 %v7082
    %v7150 = vpop.f32.mrf.mxu0
    %v7151 = vadd.f32 0.0, %v7150
    %v7152 = vpop.f32.mrf.mxu0
    %v7153 = vadd.f32 0.0, %v7152
    %7154 = vdwg.mxu0
    %7155 = vmatprep.subr.mxu0 0.0
    %7156 = vmatpush1.msra.mxu0 0.0
    %7157 = vmatprep.subr.mxu0 0.0
    %7158 = vmatpush1.msra.mxu0 0.0
    %7159 = vmatprep.subr.mxu0 0.0
    %7160 = vmatpush1.msra.mxu0 0.0
    %7161 = vmatprep.subr.mxu0 0.0
    %7162 = vmatpush1.msra.mxu0 0.0
    %7163 = vmatprep.subr.mxu0 0.0
    %7164 = vmatpush1.msra.mxu0 0.0
    %7165 = vmatprep.subr.mxu0 0.0
    %7166 = vmatpush1.msra.mxu0 0.0
    %7167 = vmatprep.subr.mxu0 0.0
    %7168 = vmatpush1.msra.mxu0 0.0
    %7169 = vmatprep.subr.mxu0 0.0
    %7170 = vmatpush1.msra.mxu0 0.0
    %7171 = vmatprep.subr.mxu0 0.0
    %7172 = vmatpush1.msra.mxu0 0.0
    %7173 = vmatprep.subr.mxu0 0.0
    %7174 = vmatpush1.msra.mxu0 0.0
    %7175 = vmatprep.subr.mxu0 0.0
    %7176 = vmatpush1.msra.mxu0 0.0
    %7177 = vmatprep.subr.mxu0 0.0
    %7178 = vmatpush1.msra.mxu0 0.0
    %7179 = vmatprep.subr.mxu0 0.0
    %7180 = vmatpush1.msra.mxu0 %v4460
    %7181 = vmatprep.subr.mxu0 0.0
    %7182 = vmatpush1.msra.mxu0 %v4457
    %7183 = vmatprep.subr.mxu0 0.0
    %7184 = vmatpush1.msra.mxu0 %v4454
    %7185 = vmatprep.subr.mxu0 0.0
    %7186 = vmatpush1.msra.mxu0 %v4451
    %7187 = vmatprep.subr.mxu0 0.0
    %7188 = vmatpush2.msra.mxu0 0.0
    %7189 = vmatprep.subr.mxu0 0.0
    %7190 = vmatpush2.msra.mxu0 0.0
    %7191 = vmatprep.subr.mxu0 0.0
    %7192 = vmatpush2.msra.mxu0 0.0
    %7193 = vmatprep.subr.mxu0 0.0
    %7194 = vmatpush2.msra.mxu0 0.0
    %7195 = vmatprep.subr.mxu0 0.0
    %7196 = vmatpush2.msra.mxu0 0.0
    %7197 = vmatprep.subr.mxu0 0.0
    %7198 = vmatpush2.msra.mxu0 0.0
    %7199 = vmatprep.subr.mxu0 0.0
    %7200 = vmatpush2.msra.mxu0 0.0
    %7201 = vmatprep.subr.mxu0 0.0
    %7202 = vmatpush2.msra.mxu0 0.0
    %7203 = vmatprep.subr.mxu0 0.0
    %7204 = vmatpush2.msra.mxu0 0.0
    %7205 = vmatprep.subr.mxu0 0.0
    %7206 = vmatpush2.msra.mxu0 0.0
    %7207 = vmatprep.subr.mxu0 0.0
    %7208 = vmatpush2.msra.mxu0 0.0
    %7209 = vmatprep.subr.mxu0 0.0
    %7210 = vmatpush2.msra.mxu0 0.0
    %7211 = vmatprep.subr.mxu0 0.0
    %7212 = vmatpush2.msra.mxu0 0.0
    %7213 = vmatprep.subr.mxu0 0.0
    %7214 = vmatpush2.msra.mxu0 0.0
    %7215 = vmatprep.subr.mxu0 0.0
    %7216 = vmatpush2.msra.mxu0 0.0
    %7217 = vmatprep.subr.mxu0 0.0
    %7218 = vmatpush2.msra.mxu0 0.0
    %7219 = vmatprep.mubr.f32.mxu0 0.0
    %7220 = vmatmul.mubr.f32.gmra.mxu0 %v7082
    %v7221 = vpop.f32.mrf.mxu0
    %v7222 = vadd.f32 0.0, %v7221
    %v7223 = vpop.f32.mrf.mxu0
    %7224 = vdwg.mxu0
    %v7225 = vadd.f32 %v7007, %v7151
    %v7226 = vadd.f32 %v7009, %v7153
    %v7227 = vxor.u32 %v7225, 2147483648
    %v7228 = vxor.u32 %v7226, 2147483648
    %v7229 = vmul.f32 %v7227, 1.442695
    %v7230 = vpow.pop %v7229
    %v7231 = vmul.f32 %v7228, 1.442695
    %v7232 = vpow.pop %v7231
    %v7233 = vadd.f32 %v7230, 1.0
    %v7234 = vadd.f32 %v7232, 1.0
    %v7235 = vrcp.pop %v7233
    %v7236 = vmul.f32 1.0, %v7235
    %v7237 = vrcp.pop %v7234
    %v7238 = vmul.f32 1.0, %v7237
    %v7239 = vadd.f32 %v7222, %v5274
    %v7240 = vmul.f32 %v7236, %v7239
    %v7241 = vadd.f32 %v7078, %v7240
    %v7242 = vtanh.pop %v7241
    %v7243 = vmul.f32 %v7238, %v6755
    %v7244 = vsub.f32 1.0, %v7238
    %v7245 = vmul.f32 %v7244, %v7242
    %v7246 = vadd.f32 %v7243, %v7245
    %7247 = vmatprep.subr.mxu0 0.0
    %7248 = vmatpush1.msra.mxu0 0.0
    %7249 = vmatprep.subr.mxu0 0.0
    %7250 = vmatpush1.msra.mxu0 0.0
    %7251 = vmatprep.subr.mxu0 0.0
    %7252 = vmatpush1.msra.mxu0 0.0
    %7253 = vmatprep.subr.mxu0 0.0
    %7254 = vmatpush1.msra.mxu0 0.0
    %7255 = vmatprep.subr.mxu0 0.0
    %7256 = vmatpush1.msra.mxu0 0.0
    %7257 = vmatprep.subr.mxu0 0.0
    %7258 = vmatpush1.msra.mxu0 0.0
    %7259 = vmatprep.subr.mxu0 0.0
    %7260 = vmatpush1.msra.mxu0 0.0
    %7261 = vmatprep.subr.mxu0 0.0
    %7262 = vmatpush1.msra.mxu0 0.0
    %7263 = vmatprep.subr.mxu0 0.0
    %7264 = vmatpush1.msra.mxu0 0.0
    %7265 = vmatprep.subr.mxu0 0.0
    %7266 = vmatpush1.msra.mxu0 0.0
    %7267 = vmatprep.subr.mxu0 0.0
    %7268 = vmatpush1.msra.mxu0 0.0
    %7269 = vmatprep.subr.mxu0 0.0
    %7270 = vmatpush1.msra.mxu0 0.0
    %7271 = vmatprep.subr.mxu0 %v4433
    %7272 = vmatpush1.msra.mxu0 %v4432
    %7273 = vmatprep.subr.mxu0 %v4430
    %7274 = vmatpush1.msra.mxu0 %v4429
    %7275 = vmatprep.subr.mxu0 %v4427
    %7276 = vmatpush1.msra.mxu0 %v4426
    %7277 = vmatprep.subr.mxu0 %v4424
    %7278 = vmatpush1.msra.mxu0 %v4423
    %7279 = vmatprep.subr.mxu0 0.0
    %7280 = vmatpush2.msra.mxu0 0.0
    %7281 = vmatprep.subr.mxu0 0.0
    %7282 = vmatpush2.msra.mxu0 0.0
    %7283 = vmatprep.subr.mxu0 0.0
    %7284 = vmatpush2.msra.mxu0 0.0
    %7285 = vmatprep.subr.mxu0 0.0
    %7286 = vmatpush2.msra.mxu0 0.0
    %7287 = vmatprep.subr.mxu0 0.0
    %7288 = vmatpush2.msra.mxu0 0.0
    %7289 = vmatprep.subr.mxu0 0.0
    %7290 = vmatpush2.msra.mxu0 0.0
    %7291 = vmatprep.subr.mxu0 0.0
    %7292 = vmatpush2.msra.mxu0 0.0
    %7293 = vmatprep.subr.mxu0 0.0
    %7294 = vmatpush2.msra.mxu0 0.0
    %7295 = vmatprep.subr.mxu0 0.0
    %7296 = vmatpush2.msra.mxu0 0.0
    %7297 = vmatprep.subr.mxu0 0.0
    %7298 = vmatpush2.msra.mxu0 0.0
    %7299 = vmatprep.subr.mxu0 0.0
    %7300 = vmatpush2.msra.mxu0 0.0
    %7301 = vmatprep.subr.mxu0 0.0
    %7302 = vmatpush2.msra.mxu0 0.0
    %7303 = vmatprep.subr.mxu0 0.0
    %7304 = vmatpush2.msra.mxu0 0.0
    %7305 = vmatprep.subr.mxu0 0.0
    %7306 = vmatpush2.msra.mxu0 0.0
    %7307 = vmatprep.subr.mxu0 0.0
    %7308 = vmatpush2.msra.mxu0 0.0
    %7309 = vmatprep.subr.mxu0 0.0
    %7310 = vmatpush2.msra.mxu0 0.0
    %7311 = vmatprep.mubr.f32.mxu0 0.0
    %7312 = vmatmul.mubr.f32.gmra.mxu0 %v6938
    %v7313 = vpop.f32.mrf.mxu0
    %v7314 = vadd.f32 0.0, %v7313
    %v7315 = vpop.f32.mrf.mxu0
    %v7316 = vadd.f32 0.0, %v7315
    %7317 = vdwg.mxu0
    %7318 = vmatprep.subr.mxu0 0.0
    %7319 = vmatpush1.msra.mxu0 0.0
    %7320 = vmatprep.subr.mxu0 0.0
    %7321 = vmatpush1.msra.mxu0 0.0
    %7322 = vmatprep.subr.mxu0 0.0
    %7323 = vmatpush1.msra.mxu0 0.0
    %7324 = vmatprep.subr.mxu0 0.0
    %7325 = vmatpush1.msra.mxu0 0.0
    %7326 = vmatprep.subr.mxu0 0.0
    %7327 = vmatpush1.msra.mxu0 0.0
    %7328 = vmatprep.subr.mxu0 0.0
    %7329 = vmatpush1.msra.mxu0 0.0
    %7330 = vmatprep.subr.mxu0 0.0
    %7331 = vmatpush1.msra.mxu0 0.0
    %7332 = vmatprep.subr.mxu0 0.0
    %7333 = vmatpush1.msra.mxu0 0.0
    %7334 = vmatprep.subr.mxu0 0.0
    %7335 = vmatpush1.msra.mxu0 0.0
    %7336 = vmatprep.subr.mxu0 0.0
    %7337 = vmatpush1.msra.mxu0 0.0
    %7338 = vmatprep.subr.mxu0 0.0
    %7339 = vmatpush1.msra.mxu0 0.0
    %7340 = vmatprep.subr.mxu0 0.0
    %7341 = vmatpush1.msra.mxu0 0.0
    %7342 = vmatprep.subr.mxu0 0.0
    %7343 = vmatpush1.msra.mxu0 %v4434
    %7344 = vmatprep.subr.mxu0 0.0
    %7345 = vmatpush1.msra.mxu0 %v4431
    %7346 = vmatprep.subr.mxu0 0.0
    %7347 = vmatpush1.msra.mxu0 %v4428
    %7348 = vmatprep.subr.mxu0 0.0
    %7349 = vmatpush1.msra.mxu0 %v4425
    %7350 = vmatprep.subr.mxu0 0.0
    %7351 = vmatpush2.msra.mxu0 0.0
    %7352 = vmatprep.subr.mxu0 0.0
    %7353 = vmatpush2.msra.mxu0 0.0
    %7354 = vmatprep.subr.mxu0 0.0
    %7355 = vmatpush2.msra.mxu0 0.0
    %7356 = vmatprep.subr.mxu0 0.0
    %7357 = vmatpush2.msra.mxu0 0.0
    %7358 = vmatprep.subr.mxu0 0.0
    %7359 = vmatpush2.msra.mxu0 0.0
    %7360 = vmatprep.subr.mxu0 0.0
    %7361 = vmatpush2.msra.mxu0 0.0
    %7362 = vmatprep.subr.mxu0 0.0
    %7363 = vmatpush2.msra.mxu0 0.0
    %7364 = vmatprep.subr.mxu0 0.0
    %7365 = vmatpush2.msra.mxu0 0.0
    %7366 = vmatprep.subr.mxu0 0.0
    %7367 = vmatpush2.msra.mxu0 0.0
    %7368 = vmatprep.subr.mxu0 0.0
    %7369 = vmatpush2.msra.mxu0 0.0
    %7370 = vmatprep.subr.mxu0 0.0
    %7371 = vmatpush2.msra.mxu0 0.0
    %7372 = vmatprep.subr.mxu0 0.0
    %7373 = vmatpush2.msra.mxu0 0.0
    %7374 = vmatprep.subr.mxu0 0.0
    %7375 = vmatpush2.msra.mxu0 0.0
    %7376 = vmatprep.subr.mxu0 0.0
    %7377 = vmatpush2.msra.mxu0 0.0
    %7378 = vmatprep.subr.mxu0 0.0
    %7379 = vmatpush2.msra.mxu0 0.0
    %7380 = vmatprep.subr.mxu0 0.0
    %7381 = vmatpush2.msra.mxu0 0.0
    %7382 = vmatprep.mubr.f32.mxu0 0.0
    %7383 = vmatmul.mubr.f32.gmra.mxu0 %v6938
    %v7384 = vpop.f32.mrf.mxu0
    %v7385 = vadd.f32 0.0, %v7384
    %v7386 = vpop.f32.mrf.mxu0
    %7387 = vdwg.mxu0
    %v7391 = vcombine.low %v7314, %v7316
    %v7393 = vunpack.c.l.s4 1983009808
    %v7394 = vunpack.c.0.s8 %v7393
    %v7395 = vlaneseq
    %v7396 = vshrl.u32 %v7395, 7
    %v7397 = vsub.s32 %v7394, %v7396
    %v7398 = vrot.slane %v7391, %v7397
    %v7400 = vunpack.c.l.s4 1983009808
    %v7401 = vunpack.c.0.s8 %v7400
    %v7402 = vlaneseq
    %v7403 = vshrl.u32 %v7402, 7
    %v7404 = vsub.s32 %v7401, %v7403
    %v7405 = vrot.slane %v7385, %v7404
    %v7406 = vcombine.low %v7398, %v7405
    %v7408 = vadd.f32 %v4754, %v7406
    %v7409 = vxor.u32 %v7408, 2147483648
    %v7410 = vmul.f32 %v7409, 1.442695
    %v7411 = vpow.pop %v7410
    %v7412 = vadd.f32 %v7411, 1.0
    %v7413 = vrcp.pop %v7412
    %v7414 = vmul.f32 1.0, %v7413
    %v7415 = vadd.f32 %v7385, %v4939
    %v7416 = vmul.f32 %v7414, %v7415
    %v7417 = vrot.slane %v4754, 4
    %v7419 = vadd.f32 %v7417, %v7416
    %v7420 = vtanh.pop %v7419
    %v7422 = vrot.slane %v7414, 2
    %v7424 = vmul.f32 %v7422, %v6936
    %v7425 = vsub.f32 1.0, %v7422
    %v7426 = vmul.f32 %v7425, %v7420
    %v7427 = vadd.f32 %v7424, %v7426
    %v7429 = vsel %vm165, %v7427, 0
    %7431 = vmatprep.subr.mxu0 0.0
    %7432 = vmatpush1.msra.mxu0 0.0
    %7433 = vmatprep.subr.mxu0 0.0
    %7434 = vmatpush1.msra.mxu0 0.0
    %7435 = vmatprep.subr.mxu0 0.0
    %7436 = vmatpush1.msra.mxu0 0.0
    %7437 = vmatprep.subr.mxu0 0.0
    %7438 = vmatpush1.msra.mxu0 0.0
    %7439 = vmatprep.subr.mxu0 0.0
    %7440 = vmatpush1.msra.mxu0 0.0
    %7441 = vmatprep.subr.mxu0 0.0
    %7442 = vmatpush1.msra.mxu0 0.0
    %7443 = vmatprep.subr.mxu0 0.0
    %7444 = vmatpush1.msra.mxu0 0.0
    %7445 = vmatprep.subr.mxu0 0.0
    %7446 = vmatpush1.msra.mxu0 0.0
    %7447 = vmatprep.subr.mxu0 0.0
    %7448 = vmatpush1.msra.mxu0 0.0
    %7449 = vmatprep.subr.mxu0 0.0
    %7450 = vmatpush1.msra.mxu0 0.0
    %7451 = vmatprep.subr.mxu0 0.0
    %7452 = vmatpush1.msra.mxu0 0.0
    %7453 = vmatprep.subr.mxu0 0.0
    %7454 = vmatpush1.msra.mxu0 0.0
    %7455 = vmatprep.subr.mxu0 %v4446
    %7456 = vmatpush1.msra.mxu0 %v4445
    %7457 = vmatprep.subr.mxu0 %v4443
    %7458 = vmatpush1.msra.mxu0 %v4442
    %7459 = vmatprep.subr.mxu0 %v4440
    %7460 = vmatpush1.msra.mxu0 %v4439
    %7461 = vmatprep.subr.mxu0 %v4437
    %7462 = vmatpush1.msra.mxu0 %v4436
    %7463 = vmatprep.subr.mxu0 0.0
    %7464 = vmatpush2.msra.mxu0 0.0
    %7465 = vmatprep.subr.mxu0 0.0
    %7466 = vmatpush2.msra.mxu0 0.0
    %7467 = vmatprep.subr.mxu0 0.0
    %7468 = vmatpush2.msra.mxu0 0.0
    %7469 = vmatprep.subr.mxu0 0.0
    %7470 = vmatpush2.msra.mxu0 0.0
    %7471 = vmatprep.subr.mxu0 0.0
    %7472 = vmatpush2.msra.mxu0 0.0
    %7473 = vmatprep.subr.mxu0 0.0
    %7474 = vmatpush2.msra.mxu0 0.0
    %7475 = vmatprep.subr.mxu0 0.0
    %7476 = vmatpush2.msra.mxu0 0.0
    %7477 = vmatprep.subr.mxu0 0.0
    %7478 = vmatpush2.msra.mxu0 0.0
    %7479 = vmatprep.subr.mxu0 0.0
    %7480 = vmatpush2.msra.mxu0 0.0
    %7481 = vmatprep.subr.mxu0 0.0
    %7482 = vmatpush2.msra.mxu0 0.0
    %7483 = vmatprep.subr.mxu0 0.0
    %7484 = vmatpush2.msra.mxu0 0.0
    %7485 = vmatprep.subr.mxu0 0.0
    %7486 = vmatpush2.msra.mxu0 0.0
    %7487 = vmatprep.subr.mxu0 0.0
    %7488 = vmatpush2.msra.mxu0 0.0
    %7489 = vmatprep.subr.mxu0 0.0
    %7490 = vmatpush2.msra.mxu0 0.0
    %7491 = vmatprep.subr.mxu0 0.0
    %7492 = vmatpush2.msra.mxu0 0.0
    %7493 = vmatprep.subr.mxu0 0.0
    %7494 = vmatpush2.msra.mxu0 0.0
    %7495 = vmatprep.mubr.f32.mxu0 0.0
    %7496 = vmatmul.mubr.f32.gmra.mxu0 %v7429
    %v7497 = vpop.f32.mrf.mxu0
    %v7498 = vadd.f32 %v4957, %v7497
    %v7499 = vpop.f32.mrf.mxu0
    %v7500 = vadd.f32 %v4961, %v7499
    %7501 = vdwg.mxu0
    %7502 = vmatprep.subr.mxu0 0.0
    %7503 = vmatpush1.msra.mxu0 0.0
    %7504 = vmatprep.subr.mxu0 0.0
    %7505 = vmatpush1.msra.mxu0 0.0
    %7506 = vmatprep.subr.mxu0 0.0
    %7507 = vmatpush1.msra.mxu0 0.0
    %7508 = vmatprep.subr.mxu0 0.0
    %7509 = vmatpush1.msra.mxu0 0.0
    %7510 = vmatprep.subr.mxu0 0.0
    %7511 = vmatpush1.msra.mxu0 0.0
    %7512 = vmatprep.subr.mxu0 0.0
    %7513 = vmatpush1.msra.mxu0 0.0
    %7514 = vmatprep.subr.mxu0 0.0
    %7515 = vmatpush1.msra.mxu0 0.0
    %7516 = vmatprep.subr.mxu0 0.0
    %7517 = vmatpush1.msra.mxu0 0.0
    %7518 = vmatprep.subr.mxu0 0.0
    %7519 = vmatpush1.msra.mxu0 0.0
    %7520 = vmatprep.subr.mxu0 0.0
    %7521 = vmatpush1.msra.mxu0 0.0
    %7522 = vmatprep.subr.mxu0 0.0
    %7523 = vmatpush1.msra.mxu0 0.0
    %7524 = vmatprep.subr.mxu0 0.0
    %7525 = vmatpush1.msra.mxu0 0.0
    %7526 = vmatprep.subr.mxu0 0.0
    %7527 = vmatpush1.msra.mxu0 %v4447
    %7528 = vmatprep.subr.mxu0 0.0
    %7529 = vmatpush1.msra.mxu0 %v4444
    %7530 = vmatprep.subr.mxu0 0.0
    %7531 = vmatpush1.msra.mxu0 %v4441
    %7532 = vmatprep.subr.mxu0 0.0
    %7533 = vmatpush1.msra.mxu0 %v4438
    %7534 = vmatprep.subr.mxu0 0.0
    %7535 = vmatpush2.msra.mxu0 0.0
    %7536 = vmatprep.subr.mxu0 0.0
    %7537 = vmatpush2.msra.mxu0 0.0
    %7538 = vmatprep.subr.mxu0 0.0
    %7539 = vmatpush2.msra.mxu0 0.0
    %7540 = vmatprep.subr.mxu0 0.0
    %7541 = vmatpush2.msra.mxu0 0.0
    %7542 = vmatprep.subr.mxu0 0.0
    %7543 = vmatpush2.msra.mxu0 0.0
    %7544 = vmatprep.subr.mxu0 0.0
    %7545 = vmatpush2.msra.mxu0 0.0
    %7546 = vmatprep.subr.mxu0 0.0
    %7547 = vmatpush2.msra.mxu0 0.0
    %7548 = vmatprep.subr.mxu0 0.0
    %7549 = vmatpush2.msra.mxu0 0.0
    %7550 = vmatprep.subr.mxu0 0.0
    %7551 = vmatpush2.msra.mxu0 0.0
    %7552 = vmatprep.subr.mxu0 0.0
    %7553 = vmatpush2.msra.mxu0 0.0
    %7554 = vmatprep.subr.mxu0 0.0
    %7555 = vmatpush2.msra.mxu0 0.0
    %7556 = vmatprep.subr.mxu0 0.0
    %7557 = vmatpush2.msra.mxu0 0.0
    %7558 = vmatprep.subr.mxu0 0.0
    %7559 = vmatpush2.msra.mxu0 0.0
    %7560 = vmatprep.subr.mxu0 0.0
    %7561 = vmatpush2.msra.mxu0 0.0
    %7562 = vmatprep.subr.mxu0 0.0
    %7563 = vmatpush2.msra.mxu0 0.0
    %7564 = vmatprep.subr.mxu0 0.0
    %7565 = vmatpush2.msra.mxu0 0.0
    %7566 = vmatprep.mubr.f32.mxu0 0.0
    %7567 = vmatmul.mubr.f32.gmra.mxu0 %v7429
    %v7568 = vpop.f32.mrf.mxu0
    %v7569 = vadd.f32 %v4965, %v7568
    %v7570 = vpop.f32.mrf.mxu0
    %7571 = vdwg.mxu0
    %v7573 = vsel %vm165, %v7246, 0
    %7575 = vmatprep.subr.mxu0 0.0
    %7576 = vmatpush1.msra.mxu0 0.0
    %7577 = vmatprep.subr.mxu0 0.0
    %7578 = vmatpush1.msra.mxu0 0.0
    %7579 = vmatprep.subr.mxu0 0.0
    %7580 = vmatpush1.msra.mxu0 0.0
    %7581 = vmatprep.subr.mxu0 0.0
    %7582 = vmatpush1.msra.mxu0 0.0
    %7583 = vmatprep.subr.mxu0 0.0
    %7584 = vmatpush1.msra.mxu0 0.0
    %7585 = vmatprep.subr.mxu0 0.0
    %7586 = vmatpush1.msra.mxu0 0.0
    %7587 = vmatprep.subr.mxu0 0.0
    %7588 = vmatpush1.msra.mxu0 0.0
    %7589 = vmatprep.subr.mxu0 0.0
    %7590 = vmatpush1.msra.mxu0 0.0
    %7591 = vmatprep.subr.mxu0 0.0
    %7592 = vmatpush1.msra.mxu0 0.0
    %7593 = vmatprep.subr.mxu0 0.0
    %7594 = vmatpush1.msra.mxu0 0.0
    %7595 = vmatprep.subr.mxu0 0.0
    %7596 = vmatpush1.msra.mxu0 0.0
    %7597 = vmatprep.subr.mxu0 0.0
    %7598 = vmatpush1.msra.mxu0 0.0
    %7599 = vmatprep.subr.mxu0 %v4459
    %7600 = vmatpush1.msra.mxu0 %v4458
    %7601 = vmatprep.subr.mxu0 %v4456
    %7602 = vmatpush1.msra.mxu0 %v4455
    %7603 = vmatprep.subr.mxu0 %v4453
    %7604 = vmatpush1.msra.mxu0 %v4452
    %7605 = vmatprep.subr.mxu0 %v4450
    %7606 = vmatpush1.msra.mxu0 %v4449
    %7607 = vmatprep.subr.mxu0 0.0
    %7608 = vmatpush2.msra.mxu0 0.0
    %7609 = vmatprep.subr.mxu0 0.0
    %7610 = vmatpush2.msra.mxu0 0.0
    %7611 = vmatprep.subr.mxu0 0.0
    %7612 = vmatpush2.msra.mxu0 0.0
    %7613 = vmatprep.subr.mxu0 0.0
    %7614 = vmatpush2.msra.mxu0 0.0
    %7615 = vmatprep.subr.mxu0 0.0
    %7616 = vmatpush2.msra.mxu0 0.0
    %7617 = vmatprep.subr.mxu0 0.0
    %7618 = vmatpush2.msra.mxu0 0.0
    %7619 = vmatprep.subr.mxu0 0.0
    %7620 = vmatpush2.msra.mxu0 0.0
    %7621 = vmatprep.subr.mxu0 0.0
    %7622 = vmatpush2.msra.mxu0 0.0
    %7623 = vmatprep.subr.mxu0 0.0
    %7624 = vmatpush2.msra.mxu0 0.0
    %7625 = vmatprep.subr.mxu0 0.0
    %7626 = vmatpush2.msra.mxu0 0.0
    %7627 = vmatprep.subr.mxu0 0.0
    %7628 = vmatpush2.msra.mxu0 0.0
    %7629 = vmatprep.subr.mxu0 0.0
    %7630 = vmatpush2.msra.mxu0 0.0
    %7631 = vmatprep.subr.mxu0 0.0
    %7632 = vmatpush2.msra.mxu0 0.0
    %7633 = vmatprep.subr.mxu0 0.0
    %7634 = vmatpush2.msra.mxu0 0.0
    %7635 = vmatprep.subr.mxu0 0.0
    %7636 = vmatpush2.msra.mxu0 0.0
    %7637 = vmatprep.subr.mxu0 0.0
    %7638 = vmatpush2.msra.mxu0 0.0
    %7639 = vmatprep.mubr.f32.mxu0 0.0
    %7640 = vmatmul.mubr.f32.gmra.mxu0 %v7573
    %v7641 = vpop.f32.mrf.mxu0
    %v7642 = vadd.f32 0.0, %v7641
    %v7643 = vpop.f32.mrf.mxu0
    %v7644 = vadd.f32 0.0, %v7643
    %7645 = vdwg.mxu0
    %7646 = vmatprep.subr.mxu0 0.0
    %7647 = vmatpush1.msra.mxu0 0.0
    %7648 = vmatprep.subr.mxu0 0.0
    %7649 = vmatpush1.msra.mxu0 0.0
    %7650 = vmatprep.subr.mxu0 0.0
    %7651 = vmatpush1.msra.mxu0 0.0
    %7652 = vmatprep.subr.mxu0 0.0
    %7653 = vmatpush1.msra.mxu0 0.0
    %7654 = vmatprep.subr.mxu0 0.0
    %7655 = vmatpush1.msra.mxu0 0.0
    %7656 = vmatprep.subr.mxu0 0.0
    %7657 = vmatpush1.msra.mxu0 0.0
    %7658 = vmatprep.subr.mxu0 0.0
    %7659 = vmatpush1.msra.mxu0 0.0
    %7660 = vmatprep.subr.mxu0 0.0
    %7661 = vmatpush1.msra.mxu0 0.0
    %7662 = vmatprep.subr.mxu0 0.0
    %7663 = vmatpush1.msra.mxu0 0.0
    %7664 = vmatprep.subr.mxu0 0.0
    %7665 = vmatpush1.msra.mxu0 0.0
    %7666 = vmatprep.subr.mxu0 0.0
    %7667 = vmatpush1.msra.mxu0 0.0
    %7668 = vmatprep.subr.mxu0 0.0
    %7669 = vmatpush1.msra.mxu0 0.0
    %7670 = vmatprep.subr.mxu0 0.0
    %7671 = vmatpush1.msra.mxu0 %v4460
    %7672 = vmatprep.subr.mxu0 0.0
    %7673 = vmatpush1.msra.mxu0 %v4457
    %7674 = vmatprep.subr.mxu0 0.0
    %7675 = vmatpush1.msra.mxu0 %v4454
    %7676 = vmatprep.subr.mxu0 0.0
    %7677 = vmatpush1.msra.mxu0 %v4451
    %7678 = vmatprep.subr.mxu0 0.0
    %7679 = vmatpush2.msra.mxu0 0.0
    %7680 = vmatprep.subr.mxu0 0.0
    %7681 = vmatpush2.msra.mxu0 0.0
    %7682 = vmatprep.subr.mxu0 0.0
    %7683 = vmatpush2.msra.mxu0 0.0
    %7684 = vmatprep.subr.mxu0 0.0
    %7685 = vmatpush2.msra.mxu0 0.0
    %7686 = vmatprep.subr.mxu0 0.0
    %7687 = vmatpush2.msra.mxu0 0.0
    %7688 = vmatprep.subr.mxu0 0.0
    %7689 = vmatpush2.msra.mxu0 0.0
    %7690 = vmatprep.subr.mxu0 0.0
    %7691 = vmatpush2.msra.mxu0 0.0
    %7692 = vmatprep.subr.mxu0 0.0
    %7693 = vmatpush2.msra.mxu0 0.0
    %7694 = vmatprep.subr.mxu0 0.0
    %7695 = vmatpush2.msra.mxu0 0.0
    %7696 = vmatprep.subr.mxu0 0.0
    %7697 = vmatpush2.msra.mxu0 0.0
    %7698 = vmatprep.subr.mxu0 0.0
    %7699 = vmatpush2.msra.mxu0 0.0
    %7700 = vmatprep.subr.mxu0 0.0
    %7701 = vmatpush2.msra.mxu0 0.0
    %7702 = vmatprep.subr.mxu0 0.0
    %7703 = vmatpush2.msra.mxu0 0.0
    %7704 = vmatprep.subr.mxu0 0.0
    %7705 = vmatpush2.msra.mxu0 0.0
    %7706 = vmatprep.subr.mxu0 0.0
    %7707 = vmatpush2.msra.mxu0 0.0
    %7708 = vmatprep.subr.mxu0 0.0
    %7709 = vmatpush2.msra.mxu0 0.0
    %7710 = vmatprep.mubr.f32.mxu0 0.0
    %7711 = vmatmul.mubr.f32.gmra.mxu0 %v7573
    %v7712 = vpop.f32.mrf.mxu0
    %v7713 = vadd.f32 0.0, %v7712
    %v7714 = vpop.f32.mrf.mxu0
    %7715 = vdwg.mxu0
    %v7716 = vadd.f32 %v7498, %v7642
    %v7717 = vadd.f32 %v7500, %v7644
    %v7718 = vxor.u32 %v7716, 2147483648
    %v7719 = vxor.u32 %v7717, 2147483648
    %v7720 = vmul.f32 %v7718, 1.442695
    %v7721 = vpow.pop %v7720
    %v7722 = vmul.f32 %v7719, 1.442695
    %v7723 = vpow.pop %v7722
    %v7724 = vadd.f32 %v7721, 1.0
    %v7725 = vadd.f32 %v7723, 1.0
    %v7726 = vrcp.pop %v7724
    %v7727 = vmul.f32 1.0, %v7726
    %v7728 = vrcp.pop %v7725
    %v7729 = vmul.f32 1.0, %v7728
    %v7730 = vadd.f32 %v7713, %v5274
    %v7731 = vmul.f32 %v7727, %v7730
    %v7732 = vadd.f32 %v7569, %v7731
    %v7733 = vtanh.pop %v7732
    %v7734 = vmul.f32 %v7729, %v7246
    %v7735 = vsub.f32 1.0, %v7729
    %v7736 = vmul.f32 %v7735, %v7733
    %v7737 = vadd.f32 %v7734, %v7736
    %7738 = vmatprep.subr.mxu0 0.0
    %7739 = vmatpush1.msra.mxu0 0.0
    %7740 = vmatprep.subr.mxu0 0.0
    %7741 = vmatpush1.msra.mxu0 0.0
    %7742 = vmatprep.subr.mxu0 0.0
    %7743 = vmatpush1.msra.mxu0 0.0
    %7744 = vmatprep.subr.mxu0 0.0
    %7745 = vmatpush1.msra.mxu0 0.0
    %7746 = vmatprep.subr.mxu0 0.0
    %7747 = vmatpush1.msra.mxu0 0.0
    %7748 = vmatprep.subr.mxu0 0.0
    %7749 = vmatpush1.msra.mxu0 0.0
    %7750 = vmatprep.subr.mxu0 0.0
    %7751 = vmatpush1.msra.mxu0 0.0
    %7752 = vmatprep.subr.mxu0 0.0
    %7753 = vmatpush1.msra.mxu0 0.0
    %7754 = vmatprep.subr.mxu0 0.0
    %7755 = vmatpush1.msra.mxu0 0.0
    %7756 = vmatprep.subr.mxu0 0.0
    %7757 = vmatpush1.msra.mxu0 0.0
    %7758 = vmatprep.subr.mxu0 0.0
    %7759 = vmatpush1.msra.mxu0 0.0
    %7760 = vmatprep.subr.mxu0 0.0
    %7761 = vmatpush1.msra.mxu0 0.0
    %7762 = vmatprep.subr.mxu0 %v4433
    %7763 = vmatpush1.msra.mxu0 %v4432
    %7764 = vmatprep.subr.mxu0 %v4430
    %7765 = vmatpush1.msra.mxu0 %v4429
    %7766 = vmatprep.subr.mxu0 %v4427
    %7767 = vmatpush1.msra.mxu0 %v4426
    %7768 = vmatprep.subr.mxu0 %v4424
    %7769 = vmatpush1.msra.mxu0 %v4423
    %7770 = vmatprep.subr.mxu0 0.0
    %7771 = vmatpush2.msra.mxu0 0.0
    %7772 = vmatprep.subr.mxu0 0.0
    %7773 = vmatpush2.msra.mxu0 0.0
    %7774 = vmatprep.subr.mxu0 0.0
    %7775 = vmatpush2.msra.mxu0 0.0
    %7776 = vmatprep.subr.mxu0 0.0
    %7777 = vmatpush2.msra.mxu0 0.0
    %7778 = vmatprep.subr.mxu0 0.0
    %7779 = vmatpush2.msra.mxu0 0.0
    %7780 = vmatprep.subr.mxu0 0.0
    %7781 = vmatpush2.msra.mxu0 0.0
    %7782 = vmatprep.subr.mxu0 0.0
    %7783 = vmatpush2.msra.mxu0 0.0
    %7784 = vmatprep.subr.mxu0 0.0
    %7785 = vmatpush2.msra.mxu0 0.0
    %7786 = vmatprep.subr.mxu0 0.0
    %7787 = vmatpush2.msra.mxu0 0.0
    %7788 = vmatprep.subr.mxu0 0.0
    %7789 = vmatpush2.msra.mxu0 0.0
    %7790 = vmatprep.subr.mxu0 0.0
    %7791 = vmatpush2.msra.mxu0 0.0
    %7792 = vmatprep.subr.mxu0 0.0
    %7793 = vmatpush2.msra.mxu0 0.0
    %7794 = vmatprep.subr.mxu0 0.0
    %7795 = vmatpush2.msra.mxu0 0.0
    %7796 = vmatprep.subr.mxu0 0.0
    %7797 = vmatpush2.msra.mxu0 0.0
    %7798 = vmatprep.subr.mxu0 0.0
    %7799 = vmatpush2.msra.mxu0 0.0
    %7800 = vmatprep.subr.mxu0 0.0
    %7801 = vmatpush2.msra.mxu0 0.0
    %7802 = vmatprep.mubr.f32.mxu0 0.0
    %7803 = vmatmul.mubr.f32.gmra.mxu0 %v7429
    %v7804 = vpop.f32.mrf.mxu0
    %v7805 = vadd.f32 0.0, %v7804
    %v7806 = vpop.f32.mrf.mxu0
    %v7807 = vadd.f32 0.0, %v7806
    %7808 = vdwg.mxu0
    %7809 = vmatprep.subr.mxu0 0.0
    %7810 = vmatpush1.msra.mxu0 0.0
    %7811 = vmatprep.subr.mxu0 0.0
    %7812 = vmatpush1.msra.mxu0 0.0
    %7813 = vmatprep.subr.mxu0 0.0
    %7814 = vmatpush1.msra.mxu0 0.0
    %7815 = vmatprep.subr.mxu0 0.0
    %7816 = vmatpush1.msra.mxu0 0.0
    %7817 = vmatprep.subr.mxu0 0.0
    %7818 = vmatpush1.msra.mxu0 0.0
    %7819 = vmatprep.subr.mxu0 0.0
    %7820 = vmatpush1.msra.mxu0 0.0
    %7821 = vmatprep.subr.mxu0 0.0
    %7822 = vmatpush1.msra.mxu0 0.0
    %7823 = vmatprep.subr.mxu0 0.0
    %7824 = vmatpush1.msra.mxu0 0.0
    %7825 = vmatprep.subr.mxu0 0.0
    %7826 = vmatpush1.msra.mxu0 0.0
    %7827 = vmatprep.subr.mxu0 0.0
    %7828 = vmatpush1.msra.mxu0 0.0
    %7829 = vmatprep.subr.mxu0 0.0
    %7830 = vmatpush1.msra.mxu0 0.0
    %7831 = vmatprep.subr.mxu0 0.0
    %7832 = vmatpush1.msra.mxu0 0.0
    %7833 = vmatprep.subr.mxu0 0.0
    %7834 = vmatpush1.msra.mxu0 %v4434
    %7835 = vmatprep.subr.mxu0 0.0
    %7836 = vmatpush1.msra.mxu0 %v4431
    %7837 = vmatprep.subr.mxu0 0.0
    %7838 = vmatpush1.msra.mxu0 %v4428
    %7839 = vmatprep.subr.mxu0 0.0
    %7840 = vmatpush1.msra.mxu0 %v4425
    %7841 = vmatprep.subr.mxu0 0.0
    %7842 = vmatpush2.msra.mxu0 0.0
    %7843 = vmatprep.subr.mxu0 0.0
    %7844 = vmatpush2.msra.mxu0 0.0
    %7845 = vmatprep.subr.mxu0 0.0
    %7846 = vmatpush2.msra.mxu0 0.0
    %7847 = vmatprep.subr.mxu0 0.0
    %7848 = vmatpush2.msra.mxu0 0.0
    %7849 = vmatprep.subr.mxu0 0.0
    %7850 = vmatpush2.msra.mxu0 0.0
    %7851 = vmatprep.subr.mxu0 0.0
    %7852 = vmatpush2.msra.mxu0 0.0
    %7853 = vmatprep.subr.mxu0 0.0
    %7854 = vmatpush2.msra.mxu0 0.0
    %7855 = vmatprep.subr.mxu0 0.0
    %7856 = vmatpush2.msra.mxu0 0.0
    %7857 = vmatprep.subr.mxu0 0.0
    %7858 = vmatpush2.msra.mxu0 0.0
    %7859 = vmatprep.subr.mxu0 0.0
    %7860 = vmatpush2.msra.mxu0 0.0
    %7861 = vmatprep.subr.mxu0 0.0
    %7862 = vmatpush2.msra.mxu0 0.0
    %7863 = vmatprep.subr.mxu0 0.0
    %7864 = vmatpush2.msra.mxu0 0.0
    %7865 = vmatprep.subr.mxu0 0.0
    %7866 = vmatpush2.msra.mxu0 0.0
    %7867 = vmatprep.subr.mxu0 0.0
    %7868 = vmatpush2.msra.mxu0 0.0
    %7869 = vmatprep.subr.mxu0 0.0
    %7870 = vmatpush2.msra.mxu0 0.0
    %7871 = vmatprep.subr.mxu0 0.0
    %7872 = vmatpush2.msra.mxu0 0.0
    %7873 = vmatprep.mubr.f32.mxu0 0.0
    %7874 = vmatmul.mubr.f32.gmra.mxu0 %v7429
    %v7875 = vpop.f32.mrf.mxu0
    %v7876 = vadd.f32 0.0, %v7875
    %v7877 = vpop.f32.mrf.mxu0
    %7878 = vdwg.mxu0
    %v7882 = vcombine.low %v7805, %v7807
    %v7884 = vunpack.c.l.s4 1983009808
    %v7885 = vunpack.c.0.s8 %v7884
    %v7886 = vlaneseq
    %v7887 = vshrl.u32 %v7886, 7
    %v7888 = vsub.s32 %v7885, %v7887
    %v7889 = vrot.slane %v7882, %v7888
    %v7891 = vunpack.c.l.s4 1983009808
    %v7892 = vunpack.c.0.s8 %v7891
    %v7893 = vlaneseq
    %v7894 = vshrl.u32 %v7893, 7
    %v7895 = vsub.s32 %v7892, %v7894
    %v7896 = vrot.slane %v7876, %v7895
    %v7897 = vcombine.low %v7889, %v7896
    %v7899 = vadd.f32 %v4755, %v7897
    %v7900 = vxor.u32 %v7899, 2147483648
    %v7901 = vmul.f32 %v7900, 1.442695
    %v7902 = vpow.pop %v7901
    %v7903 = vadd.f32 %v7902, 1.0
    %v7904 = vrcp.pop %v7903
    %v7905 = vmul.f32 1.0, %v7904
    %v7906 = vadd.f32 %v7876, %v4939
    %v7907 = vmul.f32 %v7905, %v7906
    %v7908 = vrot.slane %v4755, 4
    %v7910 = vadd.f32 %v7908, %v7907
    %v7911 = vtanh.pop %v7910
    %v7913 = vrot.slane %v7905, 2
    %v7915 = vmul.f32 %v7913, %v7427
    %v7916 = vsub.f32 1.0, %v7913
    %v7917 = vmul.f32 %v7916, %v7911
    %v7918 = vadd.f32 %v7915, %v7917
    %v7920 = vsel %vm165, %v7918, 0
    %7922 = vmatprep.subr.mxu0 0.0
    %7923 = vmatpush1.msra.mxu0 0.0
    %7924 = vmatprep.subr.mxu0 0.0
    %7925 = vmatpush1.msra.mxu0 0.0
    %7926 = vmatprep.subr.mxu0 0.0
    %7927 = vmatpush1.msra.mxu0 0.0
    %7928 = vmatprep.subr.mxu0 0.0
    %7929 = vmatpush1.msra.mxu0 0.0
    %7930 = vmatprep.subr.mxu0 0.0
    %7931 = vmatpush1.msra.mxu0 0.0
    %7932 = vmatprep.subr.mxu0 0.0
    %7933 = vmatpush1.msra.mxu0 0.0
    %7934 = vmatprep.subr.mxu0 0.0
    %7935 = vmatpush1.msra.mxu0 0.0
    %7936 = vmatprep.subr.mxu0 0.0
    %7937 = vmatpush1.msra.mxu0 0.0
    %7938 = vmatprep.subr.mxu0 0.0
    %7939 = vmatpush1.msra.mxu0 0.0
    %7940 = vmatprep.subr.mxu0 0.0
    %7941 = vmatpush1.msra.mxu0 0.0
    %7942 = vmatprep.subr.mxu0 0.0
    %7943 = vmatpush1.msra.mxu0 0.0
    %7944 = vmatprep.subr.mxu0 0.0
    %7945 = vmatpush1.msra.mxu0 0.0
    %7946 = vmatprep.subr.mxu0 %v4446
    %7947 = vmatpush1.msra.mxu0 %v4445
    %7948 = vmatprep.subr.mxu0 %v4443
    %7949 = vmatpush1.msra.mxu0 %v4442
    %7950 = vmatprep.subr.mxu0 %v4440
    %7951 = vmatpush1.msra.mxu0 %v4439
    %7952 = vmatprep.subr.mxu0 %v4437
    %7953 = vmatpush1.msra.mxu0 %v4436
    %7954 = vmatprep.subr.mxu0 0.0
    %7955 = vmatpush2.msra.mxu0 0.0
    %7956 = vmatprep.subr.mxu0 0.0
    %7957 = vmatpush2.msra.mxu0 0.0
    %7958 = vmatprep.subr.mxu0 0.0
    %7959 = vmatpush2.msra.mxu0 0.0
    %7960 = vmatprep.subr.mxu0 0.0
    %7961 = vmatpush2.msra.mxu0 0.0
    %7962 = vmatprep.subr.mxu0 0.0
    %7963 = vmatpush2.msra.mxu0 0.0
    %7964 = vmatprep.subr.mxu0 0.0
    %7965 = vmatpush2.msra.mxu0 0.0
    %7966 = vmatprep.subr.mxu0 0.0
    %7967 = vmatpush2.msra.mxu0 0.0
    %7968 = vmatprep.subr.mxu0 0.0
    %7969 = vmatpush2.msra.mxu0 0.0
    %7970 = vmatprep.subr.mxu0 0.0
    %7971 = vmatpush2.msra.mxu0 0.0
    %7972 = vmatprep.subr.mxu0 0.0
    %7973 = vmatpush2.msra.mxu0 0.0
    %7974 = vmatprep.subr.mxu0 0.0
    %7975 = vmatpush2.msra.mxu0 0.0
    %7976 = vmatprep.subr.mxu0 0.0
    %7977 = vmatpush2.msra.mxu0 0.0
    %7978 = vmatprep.subr.mxu0 0.0
    %7979 = vmatpush2.msra.mxu0 0.0
    %7980 = vmatprep.subr.mxu0 0.0
    %7981 = vmatpush2.msra.mxu0 0.0
    %7982 = vmatprep.subr.mxu0 0.0
    %7983 = vmatpush2.msra.mxu0 0.0
    %7984 = vmatprep.subr.mxu0 0.0
    %7985 = vmatpush2.msra.mxu0 0.0
    %7986 = vmatprep.mubr.f32.mxu0 0.0
    %7987 = vmatmul.mubr.f32.gmra.mxu0 %v7920
    %v7988 = vpop.f32.mrf.mxu0
    %v7989 = vadd.f32 %v4957, %v7988
    %v7990 = vpop.f32.mrf.mxu0
    %v7991 = vadd.f32 %v4961, %v7990
    %7992 = vdwg.mxu0
    %7993 = vmatprep.subr.mxu0 0.0
    %7994 = vmatpush1.msra.mxu0 0.0
    %7995 = vmatprep.subr.mxu0 0.0
    %7996 = vmatpush1.msra.mxu0 0.0
    %7997 = vmatprep.subr.mxu0 0.0
    %7998 = vmatpush1.msra.mxu0 0.0
    %7999 = vmatprep.subr.mxu0 0.0
    %8000 = vmatpush1.msra.mxu0 0.0
    %8001 = vmatprep.subr.mxu0 0.0
    %8002 = vmatpush1.msra.mxu0 0.0
    %8003 = vmatprep.subr.mxu0 0.0
    %8004 = vmatpush1.msra.mxu0 0.0
    %8005 = vmatprep.subr.mxu0 0.0
    %8006 = vmatpush1.msra.mxu0 0.0
    %8007 = vmatprep.subr.mxu0 0.0
    %8008 = vmatpush1.msra.mxu0 0.0
    %8009 = vmatprep.subr.mxu0 0.0
    %8010 = vmatpush1.msra.mxu0 0.0
    %8011 = vmatprep.subr.mxu0 0.0
    %8012 = vmatpush1.msra.mxu0 0.0
    %8013 = vmatprep.subr.mxu0 0.0
    %8014 = vmatpush1.msra.mxu0 0.0
    %8015 = vmatprep.subr.mxu0 0.0
    %8016 = vmatpush1.msra.mxu0 0.0
    %8017 = vmatprep.subr.mxu0 0.0
    %8018 = vmatpush1.msra.mxu0 %v4447
    %8019 = vmatprep.subr.mxu0 0.0
    %8020 = vmatpush1.msra.mxu0 %v4444
    %8021 = vmatprep.subr.mxu0 0.0
    %8022 = vmatpush1.msra.mxu0 %v4441
    %8023 = vmatprep.subr.mxu0 0.0
    %8024 = vmatpush1.msra.mxu0 %v4438
    %8025 = vmatprep.subr.mxu0 0.0
    %8026 = vmatpush2.msra.mxu0 0.0
    %8027 = vmatprep.subr.mxu0 0.0
    %8028 = vmatpush2.msra.mxu0 0.0
    %8029 = vmatprep.subr.mxu0 0.0
    %8030 = vmatpush2.msra.mxu0 0.0
    %8031 = vmatprep.subr.mxu0 0.0
    %8032 = vmatpush2.msra.mxu0 0.0
    %8033 = vmatprep.subr.mxu0 0.0
    %8034 = vmatpush2.msra.mxu0 0.0
    %8035 = vmatprep.subr.mxu0 0.0
    %8036 = vmatpush2.msra.mxu0 0.0
    %8037 = vmatprep.subr.mxu0 0.0
    %8038 = vmatpush2.msra.mxu0 0.0
    %8039 = vmatprep.subr.mxu0 0.0
    %8040 = vmatpush2.msra.mxu0 0.0
    %8041 = vmatprep.subr.mxu0 0.0
    %8042 = vmatpush2.msra.mxu0 0.0
    %8043 = vmatprep.subr.mxu0 0.0
    %8044 = vmatpush2.msra.mxu0 0.0
    %8045 = vmatprep.subr.mxu0 0.0
    %8046 = vmatpush2.msra.mxu0 0.0
    %8047 = vmatprep.subr.mxu0 0.0
    %8048 = vmatpush2.msra.mxu0 0.0
    %8049 = vmatprep.subr.mxu0 0.0
    %8050 = vmatpush2.msra.mxu0 0.0
    %8051 = vmatprep.subr.mxu0 0.0
    %8052 = vmatpush2.msra.mxu0 0.0
    %8053 = vmatprep.subr.mxu0 0.0
    %8054 = vmatpush2.msra.mxu0 0.0
    %8055 = vmatprep.subr.mxu0 0.0
    %8056 = vmatpush2.msra.mxu0 0.0
    %8057 = vmatprep.mubr.f32.mxu0 0.0
    %8058 = vmatmul.mubr.f32.gmra.mxu0 %v7920
    %v8059 = vpop.f32.mrf.mxu0
    %v8060 = vadd.f32 %v4965, %v8059
    %v8061 = vpop.f32.mrf.mxu0
    %8062 = vdwg.mxu0
    %v8064 = vsel %vm165, %v7737, 0
    %8066 = vmatprep.subr.mxu0 0.0
    %8067 = vmatpush1.msra.mxu0 0.0
    %8068 = vmatprep.subr.mxu0 0.0
    %8069 = vmatpush1.msra.mxu0 0.0
    %8070 = vmatprep.subr.mxu0 0.0
    %8071 = vmatpush1.msra.mxu0 0.0
    %8072 = vmatprep.subr.mxu0 0.0
    %8073 = vmatpush1.msra.mxu0 0.0
    %8074 = vmatprep.subr.mxu0 0.0
    %8075 = vmatpush1.msra.mxu0 0.0
    %8076 = vmatprep.subr.mxu0 0.0
    %8077 = vmatpush1.msra.mxu0 0.0
    %8078 = vmatprep.subr.mxu0 0.0
    %8079 = vmatpush1.msra.mxu0 0.0
    %8080 = vmatprep.subr.mxu0 0.0
    %8081 = vmatpush1.msra.mxu0 0.0
    %8082 = vmatprep.subr.mxu0 0.0
    %8083 = vmatpush1.msra.mxu0 0.0
    %8084 = vmatprep.subr.mxu0 0.0
    %8085 = vmatpush1.msra.mxu0 0.0
    %8086 = vmatprep.subr.mxu0 0.0
    %8087 = vmatpush1.msra.mxu0 0.0
    %8088 = vmatprep.subr.mxu0 0.0
    %8089 = vmatpush1.msra.mxu0 0.0
    %8090 = vmatprep.subr.mxu0 %v4459
    %8091 = vmatpush1.msra.mxu0 %v4458
    %8092 = vmatprep.subr.mxu0 %v4456
    %8093 = vmatpush1.msra.mxu0 %v4455
    %8094 = vmatprep.subr.mxu0 %v4453
    %8095 = vmatpush1.msra.mxu0 %v4452
    %8096 = vmatprep.subr.mxu0 %v4450
    %8097 = vmatpush1.msra.mxu0 %v4449
    %8098 = vmatprep.subr.mxu0 0.0
    %8099 = vmatpush2.msra.mxu0 0.0
    %8100 = vmatprep.subr.mxu0 0.0
    %8101 = vmatpush2.msra.mxu0 0.0
    %8102 = vmatprep.subr.mxu0 0.0
    %8103 = vmatpush2.msra.mxu0 0.0
    %8104 = vmatprep.subr.mxu0 0.0
    %8105 = vmatpush2.msra.mxu0 0.0
    %8106 = vmatprep.subr.mxu0 0.0
    %8107 = vmatpush2.msra.mxu0 0.0
    %8108 = vmatprep.subr.mxu0 0.0
    %8109 = vmatpush2.msra.mxu0 0.0
    %8110 = vmatprep.subr.mxu0 0.0
    %8111 = vmatpush2.msra.mxu0 0.0
    %8112 = vmatprep.subr.mxu0 0.0
    %8113 = vmatpush2.msra.mxu0 0.0
    %8114 = vmatprep.subr.mxu0 0.0
    %8115 = vmatpush2.msra.mxu0 0.0
    %8116 = vmatprep.subr.mxu0 0.0
    %8117 = vmatpush2.msra.mxu0 0.0
    %8118 = vmatprep.subr.mxu0 0.0
    %8119 = vmatpush2.msra.mxu0 0.0
    %8120 = vmatprep.subr.mxu0 0.0
    %8121 = vmatpush2.msra.mxu0 0.0
    %8122 = vmatprep.subr.mxu0 0.0
    %8123 = vmatpush2.msra.mxu0 0.0
    %8124 = vmatprep.subr.mxu0 0.0
    %8125 = vmatpush2.msra.mxu0 0.0
    %8126 = vmatprep.subr.mxu0 0.0
    %8127 = vmatpush2.msra.mxu0 0.0
    %8128 = vmatprep.subr.mxu0 0.0
    %8129 = vmatpush2.msra.mxu0 0.0
    %8130 = vmatprep.mubr.f32.mxu0 0.0
    %8131 = vmatmul.mubr.f32.gmra.mxu0 %v8064
    %v8132 = vpop.f32.mrf.mxu0
    %v8133 = vadd.f32 0.0, %v8132
    %v8134 = vpop.f32.mrf.mxu0
    %v8135 = vadd.f32 0.0, %v8134
    %8136 = vdwg.mxu0
    %8137 = vmatprep.subr.mxu0 0.0
    %8138 = vmatpush1.msra.mxu0 0.0
    %8139 = vmatprep.subr.mxu0 0.0
    %8140 = vmatpush1.msra.mxu0 0.0
    %8141 = vmatprep.subr.mxu0 0.0
    %8142 = vmatpush1.msra.mxu0 0.0
    %8143 = vmatprep.subr.mxu0 0.0
    %8144 = vmatpush1.msra.mxu0 0.0
    %8145 = vmatprep.subr.mxu0 0.0
    %8146 = vmatpush1.msra.mxu0 0.0
    %8147 = vmatprep.subr.mxu0 0.0
    %8148 = vmatpush1.msra.mxu0 0.0
    %8149 = vmatprep.subr.mxu0 0.0
    %8150 = vmatpush1.msra.mxu0 0.0
    %8151 = vmatprep.subr.mxu0 0.0
    %8152 = vmatpush1.msra.mxu0 0.0
    %8153 = vmatprep.subr.mxu0 0.0
    %8154 = vmatpush1.msra.mxu0 0.0
    %8155 = vmatprep.subr.mxu0 0.0
    %8156 = vmatpush1.msra.mxu0 0.0
    %8157 = vmatprep.subr.mxu0 0.0
    %8158 = vmatpush1.msra.mxu0 0.0
    %8159 = vmatprep.subr.mxu0 0.0
    %8160 = vmatpush1.msra.mxu0 0.0
    %8161 = vmatprep.subr.mxu0 0.0
    %8162 = vmatpush1.msra.mxu0 %v4460
    %8163 = vmatprep.subr.mxu0 0.0
    %8164 = vmatpush1.msra.mxu0 %v4457
    %8165 = vmatprep.subr.mxu0 0.0
    %8166 = vmatpush1.msra.mxu0 %v4454
    %8167 = vmatprep.subr.mxu0 0.0
    %8168 = vmatpush1.msra.mxu0 %v4451
    %8169 = vmatprep.subr.mxu0 0.0
    %8170 = vmatpush2.msra.mxu0 0.0
    %8171 = vmatprep.subr.mxu0 0.0
    %8172 = vmatpush2.msra.mxu0 0.0
    %8173 = vmatprep.subr.mxu0 0.0
    %8174 = vmatpush2.msra.mxu0 0.0
    %8175 = vmatprep.subr.mxu0 0.0
    %8176 = vmatpush2.msra.mxu0 0.0
    %8177 = vmatprep.subr.mxu0 0.0
    %8178 = vmatpush2.msra.mxu0 0.0
    %8179 = vmatprep.subr.mxu0 0.0
    %8180 = vmatpush2.msra.mxu0 0.0
    %8181 = vmatprep.subr.mxu0 0.0
    %8182 = vmatpush2.msra.mxu0 0.0
    %8183 = vmatprep.subr.mxu0 0.0
    %8184 = vmatpush2.msra.mxu0 0.0
    %8185 = vmatprep.subr.mxu0 0.0
    %8186 = vmatpush2.msra.mxu0 0.0
    %8187 = vmatprep.subr.mxu0 0.0
    %8188 = vmatpush2.msra.mxu0 0.0
    %8189 = vmatprep.subr.mxu0 0.0
    %8190 = vmatpush2.msra.mxu0 0.0
    %8191 = vmatprep.subr.mxu0 0.0
    %8192 = vmatpush2.msra.mxu0 0.0
    %8193 = vmatprep.subr.mxu0 0.0
    %8194 = vmatpush2.msra.mxu0 0.0
    %8195 = vmatprep.subr.mxu0 0.0
    %8196 = vmatpush2.msra.mxu0 0.0
    %8197 = vmatprep.subr.mxu0 0.0
    %8198 = vmatpush2.msra.mxu0 0.0
    %8199 = vmatprep.subr.mxu0 0.0
    %8200 = vmatpush2.msra.mxu0 0.0
    %8201 = vmatprep.mubr.f32.mxu0 0.0
    %8202 = vmatmul.mubr.f32.gmra.mxu0 %v8064
    %v8203 = vpop.f32.mrf.mxu0
    %v8204 = vadd.f32 0.0, %v8203
    %v8205 = vpop.f32.mrf.mxu0
    %8206 = vdwg.mxu0
    %v8207 = vadd.f32 %v7989, %v8133
    %v8208 = vadd.f32 %v7991, %v8135
    %v8209 = vxor.u32 %v8207, 2147483648
    %v8210 = vxor.u32 %v8208, 2147483648
    %v8211 = vmul.f32 %v8209, 1.442695
    %v8212 = vpow.pop %v8211
    %v8213 = vmul.f32 %v8210, 1.442695
    %v8214 = vpow.pop %v8213
    %v8215 = vadd.f32 %v8212, 1.0
    %v8216 = vadd.f32 %v8214, 1.0
    %v8217 = vrcp.pop %v8215
    %v8218 = vmul.f32 1.0, %v8217
    %v8219 = vrcp.pop %v8216
    %v8220 = vmul.f32 1.0, %v8219
    %v8221 = vadd.f32 %v8204, %v5274
    %v8222 = vmul.f32 %v8218, %v8221
    %v8223 = vadd.f32 %v8060, %v8222
    %v8224 = vtanh.pop %v8223
    %v8225 = vmul.f32 %v8220, %v7737
    %v8226 = vsub.f32 1.0, %v8220
    %v8227 = vmul.f32 %v8226, %v8224
    %v8228 = vadd.f32 %v8225, %v8227
    %8229 = vmatprep.subr.mxu0 0.0
    %8230 = vmatpush1.msra.mxu0 0.0
    %8231 = vmatprep.subr.mxu0 0.0
    %8232 = vmatpush1.msra.mxu0 0.0
    %8233 = vmatprep.subr.mxu0 0.0
    %8234 = vmatpush1.msra.mxu0 0.0
    %8235 = vmatprep.subr.mxu0 0.0
    %8236 = vmatpush1.msra.mxu0 0.0
    %8237 = vmatprep.subr.mxu0 0.0
    %8238 = vmatpush1.msra.mxu0 0.0
    %8239 = vmatprep.subr.mxu0 0.0
    %8240 = vmatpush1.msra.mxu0 0.0
    %8241 = vmatprep.subr.mxu0 0.0
    %8242 = vmatpush1.msra.mxu0 0.0
    %8243 = vmatprep.subr.mxu0 0.0
    %8244 = vmatpush1.msra.mxu0 0.0
    %8245 = vmatprep.subr.mxu0 0.0
    %8246 = vmatpush1.msra.mxu0 0.0
    %8247 = vmatprep.subr.mxu0 0.0
    %8248 = vmatpush1.msra.mxu0 0.0
    %8249 = vmatprep.subr.mxu0 0.0
    %8250 = vmatpush1.msra.mxu0 0.0
    %8251 = vmatprep.subr.mxu0 0.0
    %8252 = vmatpush1.msra.mxu0 0.0
    %8253 = vmatprep.subr.mxu0 %v4433
    %8254 = vmatpush1.msra.mxu0 %v4432
    %8255 = vmatprep.subr.mxu0 %v4430
    %8256 = vmatpush1.msra.mxu0 %v4429
    %8257 = vmatprep.subr.mxu0 %v4427
    %8258 = vmatpush1.msra.mxu0 %v4426
    %8259 = vmatprep.subr.mxu0 %v4424
    %8260 = vmatpush1.msra.mxu0 %v4423
    %8261 = vmatprep.subr.mxu0 0.0
    %8262 = vmatpush2.msra.mxu0 0.0
    %8263 = vmatprep.subr.mxu0 0.0
    %8264 = vmatpush2.msra.mxu0 0.0
    %8265 = vmatprep.subr.mxu0 0.0
    %8266 = vmatpush2.msra.mxu0 0.0
    %8267 = vmatprep.subr.mxu0 0.0
    %8268 = vmatpush2.msra.mxu0 0.0
    %8269 = vmatprep.subr.mxu0 0.0
    %8270 = vmatpush2.msra.mxu0 0.0
    %8271 = vmatprep.subr.mxu0 0.0
    %8272 = vmatpush2.msra.mxu0 0.0
    %8273 = vmatprep.subr.mxu0 0.0
    %8274 = vmatpush2.msra.mxu0 0.0
    %8275 = vmatprep.subr.mxu0 0.0
    %8276 = vmatpush2.msra.mxu0 0.0
    %8277 = vmatprep.subr.mxu0 0.0
    %8278 = vmatpush2.msra.mxu0 0.0
    %8279 = vmatprep.subr.mxu0 0.0
    %8280 = vmatpush2.msra.mxu0 0.0
    %8281 = vmatprep.subr.mxu0 0.0
    %8282 = vmatpush2.msra.mxu0 0.0
    %8283 = vmatprep.subr.mxu0 0.0
    %8284 = vmatpush2.msra.mxu0 0.0
    %8285 = vmatprep.subr.mxu0 0.0
    %8286 = vmatpush2.msra.mxu0 0.0
    %8287 = vmatprep.subr.mxu0 0.0
    %8288 = vmatpush2.msra.mxu0 0.0
    %8289 = vmatprep.subr.mxu0 0.0
    %8290 = vmatpush2.msra.mxu0 0.0
    %8291 = vmatprep.subr.mxu0 0.0
    %8292 = vmatpush2.msra.mxu0 0.0
    %8293 = vmatprep.mubr.f32.mxu0 0.0
    %8294 = vmatmul.mubr.f32.gmra.mxu0 %v7920
    %v8295 = vpop.f32.mrf.mxu0
    %v8296 = vadd.f32 0.0, %v8295
    %v8297 = vpop.f32.mrf.mxu0
    %v8298 = vadd.f32 0.0, %v8297
    %8299 = vdwg.mxu0
    %8300 = vmatprep.subr.mxu0 0.0
    %8301 = vmatpush1.msra.mxu0 0.0
    %8302 = vmatprep.subr.mxu0 0.0
    %8303 = vmatpush1.msra.mxu0 0.0
    %8304 = vmatprep.subr.mxu0 0.0
    %8305 = vmatpush1.msra.mxu0 0.0
    %8306 = vmatprep.subr.mxu0 0.0
    %8307 = vmatpush1.msra.mxu0 0.0
    %8308 = vmatprep.subr.mxu0 0.0
    %8309 = vmatpush1.msra.mxu0 0.0
    %8310 = vmatprep.subr.mxu0 0.0
    %8311 = vmatpush1.msra.mxu0 0.0
    %8312 = vmatprep.subr.mxu0 0.0
    %8313 = vmatpush1.msra.mxu0 0.0
    %8314 = vmatprep.subr.mxu0 0.0
    %8315 = vmatpush1.msra.mxu0 0.0
    %8316 = vmatprep.subr.mxu0 0.0
    %8317 = vmatpush1.msra.mxu0 0.0
    %8318 = vmatprep.subr.mxu0 0.0
    %8319 = vmatpush1.msra.mxu0 0.0
    %8320 = vmatprep.subr.mxu0 0.0
    %8321 = vmatpush1.msra.mxu0 0.0
    %8322 = vmatprep.subr.mxu0 0.0
    %8323 = vmatpush1.msra.mxu0 0.0
    %8324 = vmatprep.subr.mxu0 0.0
    %8325 = vmatpush1.msra.mxu0 %v4434
    %8326 = vmatprep.subr.mxu0 0.0
    %8327 = vmatpush1.msra.mxu0 %v4431
    %8328 = vmatprep.subr.mxu0 0.0
    %8329 = vmatpush1.msra.mxu0 %v4428
    %8330 = vmatprep.subr.mxu0 0.0
    %8331 = vmatpush1.msra.mxu0 %v4425
    %8332 = vmatprep.subr.mxu0 0.0
    %8333 = vmatpush2.msra.mxu0 0.0
    %8334 = vmatprep.subr.mxu0 0.0
    %8335 = vmatpush2.msra.mxu0 0.0
    %8336 = vmatprep.subr.mxu0 0.0
    %8337 = vmatpush2.msra.mxu0 0.0
    %8338 = vmatprep.subr.mxu0 0.0
    %8339 = vmatpush2.msra.mxu0 0.0
    %8340 = vmatprep.subr.mxu0 0.0
    %8341 = vmatpush2.msra.mxu0 0.0
    %8342 = vmatprep.subr.mxu0 0.0
    %8343 = vmatpush2.msra.mxu0 0.0
    %8344 = vmatprep.subr.mxu0 0.0
    %8345 = vmatpush2.msra.mxu0 0.0
    %8346 = vmatprep.subr.mxu0 0.0
    %8347 = vmatpush2.msra.mxu0 0.0
    %8348 = vmatprep.subr.mxu0 0.0
    %8349 = vmatpush2.msra.mxu0 0.0
    %8350 = vmatprep.subr.mxu0 0.0
    %8351 = vmatpush2.msra.mxu0 0.0
    %8352 = vmatprep.subr.mxu0 0.0
    %8353 = vmatpush2.msra.mxu0 0.0
    %8354 = vmatprep.subr.mxu0 0.0
    %8355 = vmatpush2.msra.mxu0 0.0
    %8356 = vmatprep.subr.mxu0 0.0
    %8357 = vmatpush2.msra.mxu0 0.0
    %8358 = vmatprep.subr.mxu0 0.0
    %8359 = vmatpush2.msra.mxu0 0.0
    %8360 = vmatprep.subr.mxu0 0.0
    %8361 = vmatpush2.msra.mxu0 0.0
    %8362 = vmatprep.subr.mxu0 0.0
    %8363 = vmatpush2.msra.mxu0 0.0
    %8364 = vmatprep.mubr.f32.mxu0 0.0
    %8365 = vmatmul.mubr.f32.gmra.mxu0 %v7920
    %v8366 = vpop.f32.mrf.mxu0
    %v8367 = vadd.f32 0.0, %v8366
    %v8368 = vpop.f32.mrf.mxu0
    %8369 = vdwg.mxu0
    %v8373 = vcombine.low %v8296, %v8298
    %v8375 = vunpack.c.l.s4 1983009808
    %v8376 = vunpack.c.0.s8 %v8375
    %v8377 = vlaneseq
    %v8378 = vshrl.u32 %v8377, 7
    %v8379 = vsub.s32 %v8376, %v8378
    %v8380 = vrot.slane %v8373, %v8379
    %v8382 = vunpack.c.l.s4 1983009808
    %v8383 = vunpack.c.0.s8 %v8382
    %v8384 = vlaneseq
    %v8385 = vshrl.u32 %v8384, 7
    %v8386 = vsub.s32 %v8383, %v8385
    %v8387 = vrot.slane %v8367, %v8386
    %v8388 = vcombine.low %v8380, %v8387
    %v8390 = vadd.f32 %v4756, %v8388
    %v8391 = vxor.u32 %v8390, 2147483648
    %v8392 = vmul.f32 %v8391, 1.442695
    %v8393 = vpow.pop %v8392
    %v8394 = vadd.f32 %v8393, 1.0
    %v8395 = vrcp.pop %v8394
    %v8396 = vmul.f32 1.0, %v8395
    %v8397 = vadd.f32 %v8367, %v4939
    %v8398 = vmul.f32 %v8396, %v8397
    %v8399 = vrot.slane %v4756, 4
    %v8401 = vadd.f32 %v8399, %v8398
    %v8402 = vtanh.pop %v8401
    %v8404 = vrot.slane %v8396, 2
    %v8406 = vmul.f32 %v8404, %v7918
    %v8407 = vsub.f32 1.0, %v8404
    %v8408 = vmul.f32 %v8407, %v8402
    %v8409 = vadd.f32 %v8406, %v8408
    %v8411 = vsel %vm165, %v8409, 0
    %8413 = vmatprep.subr.mxu0 0.0
    %8414 = vmatpush1.msra.mxu0 0.0
    %8415 = vmatprep.subr.mxu0 0.0
    %8416 = vmatpush1.msra.mxu0 0.0
    %8417 = vmatprep.subr.mxu0 0.0
    %8418 = vmatpush1.msra.mxu0 0.0
    %8419 = vmatprep.subr.mxu0 0.0
    %8420 = vmatpush1.msra.mxu0 0.0
    %8421 = vmatprep.subr.mxu0 0.0
    %8422 = vmatpush1.msra.mxu0 0.0
    %8423 = vmatprep.subr.mxu0 0.0
    %8424 = vmatpush1.msra.mxu0 0.0
    %8425 = vmatprep.subr.mxu0 0.0
    %8426 = vmatpush1.msra.mxu0 0.0
    %8427 = vmatprep.subr.mxu0 0.0
    %8428 = vmatpush1.msra.mxu0 0.0
    %8429 = vmatprep.subr.mxu0 0.0
    %8430 = vmatpush1.msra.mxu0 0.0
    %8431 = vmatprep.subr.mxu0 0.0
    %8432 = vmatpush1.msra.mxu0 0.0
    %8433 = vmatprep.subr.mxu0 0.0
    %8434 = vmatpush1.msra.mxu0 0.0
    %8435 = vmatprep.subr.mxu0 0.0
    %8436 = vmatpush1.msra.mxu0 0.0
    %8437 = vmatprep.subr.mxu0 %v4446
    %8438 = vmatpush1.msra.mxu0 %v4445
    %8439 = vmatprep.subr.mxu0 %v4443
    %8440 = vmatpush1.msra.mxu0 %v4442
    %8441 = vmatprep.subr.mxu0 %v4440
    %8442 = vmatpush1.msra.mxu0 %v4439
    %8443 = vmatprep.subr.mxu0 %v4437
    %8444 = vmatpush1.msra.mxu0 %v4436
    %8445 = vmatprep.subr.mxu0 0.0
    %8446 = vmatpush2.msra.mxu0 0.0
    %8447 = vmatprep.subr.mxu0 0.0
    %8448 = vmatpush2.msra.mxu0 0.0
    %8449 = vmatprep.subr.mxu0 0.0
    %8450 = vmatpush2.msra.mxu0 0.0
    %8451 = vmatprep.subr.mxu0 0.0
    %8452 = vmatpush2.msra.mxu0 0.0
    %8453 = vmatprep.subr.mxu0 0.0
    %8454 = vmatpush2.msra.mxu0 0.0
    %8455 = vmatprep.subr.mxu0 0.0
    %8456 = vmatpush2.msra.mxu0 0.0
    %8457 = vmatprep.subr.mxu0 0.0
    %8458 = vmatpush2.msra.mxu0 0.0
    %8459 = vmatprep.subr.mxu0 0.0
    %8460 = vmatpush2.msra.mxu0 0.0
    %8461 = vmatprep.subr.mxu0 0.0
    %8462 = vmatpush2.msra.mxu0 0.0
    %8463 = vmatprep.subr.mxu0 0.0
    %8464 = vmatpush2.msra.mxu0 0.0
    %8465 = vmatprep.subr.mxu0 0.0
    %8466 = vmatpush2.msra.mxu0 0.0
    %8467 = vmatprep.subr.mxu0 0.0
    %8468 = vmatpush2.msra.mxu0 0.0
    %8469 = vmatprep.subr.mxu0 0.0
    %8470 = vmatpush2.msra.mxu0 0.0
    %8471 = vmatprep.subr.mxu0 0.0
    %8472 = vmatpush2.msra.mxu0 0.0
    %8473 = vmatprep.subr.mxu0 0.0
    %8474 = vmatpush2.msra.mxu0 0.0
    %8475 = vmatprep.subr.mxu0 0.0
    %8476 = vmatpush2.msra.mxu0 0.0
    %8477 = vmatprep.mubr.f32.mxu0 0.0
    %8478 = vmatmul.mubr.f32.gmra.mxu0 %v8411
    %v8479 = vpop.f32.mrf.mxu0
    %v8480 = vadd.f32 %v4957, %v8479
    %v8481 = vpop.f32.mrf.mxu0
    %v8482 = vadd.f32 %v4961, %v8481
    %8483 = vdwg.mxu0
    %8484 = vmatprep.subr.mxu0 0.0
    %8485 = vmatpush1.msra.mxu0 0.0
    %8486 = vmatprep.subr.mxu0 0.0
    %8487 = vmatpush1.msra.mxu0 0.0
    %8488 = vmatprep.subr.mxu0 0.0
    %8489 = vmatpush1.msra.mxu0 0.0
    %8490 = vmatprep.subr.mxu0 0.0
    %8491 = vmatpush1.msra.mxu0 0.0
    %8492 = vmatprep.subr.mxu0 0.0
    %8493 = vmatpush1.msra.mxu0 0.0
    %8494 = vmatprep.subr.mxu0 0.0
    %8495 = vmatpush1.msra.mxu0 0.0
    %8496 = vmatprep.subr.mxu0 0.0
    %8497 = vmatpush1.msra.mxu0 0.0
    %8498 = vmatprep.subr.mxu0 0.0
    %8499 = vmatpush1.msra.mxu0 0.0
    %8500 = vmatprep.subr.mxu0 0.0
    %8501 = vmatpush1.msra.mxu0 0.0
    %8502 = vmatprep.subr.mxu0 0.0
    %8503 = vmatpush1.msra.mxu0 0.0
    %8504 = vmatprep.subr.mxu0 0.0
    %8505 = vmatpush1.msra.mxu0 0.0
    %8506 = vmatprep.subr.mxu0 0.0
    %8507 = vmatpush1.msra.mxu0 0.0
    %8508 = vmatprep.subr.mxu0 0.0
    %8509 = vmatpush1.msra.mxu0 %v4447
    %8510 = vmatprep.subr.mxu0 0.0
    %8511 = vmatpush1.msra.mxu0 %v4444
    %8512 = vmatprep.subr.mxu0 0.0
    %8513 = vmatpush1.msra.mxu0 %v4441
    %8514 = vmatprep.subr.mxu0 0.0
    %8515 = vmatpush1.msra.mxu0 %v4438
    %8516 = vmatprep.subr.mxu0 0.0
    %8517 = vmatpush2.msra.mxu0 0.0
    %8518 = vmatprep.subr.mxu0 0.0
    %8519 = vmatpush2.msra.mxu0 0.0
    %8520 = vmatprep.subr.mxu0 0.0
    %8521 = vmatpush2.msra.mxu0 0.0
    %8522 = vmatprep.subr.mxu0 0.0
    %8523 = vmatpush2.msra.mxu0 0.0
    %8524 = vmatprep.subr.mxu0 0.0
    %8525 = vmatpush2.msra.mxu0 0.0
    %8526 = vmatprep.subr.mxu0 0.0
    %8527 = vmatpush2.msra.mxu0 0.0
    %8528 = vmatprep.subr.mxu0 0.0
    %8529 = vmatpush2.msra.mxu0 0.0
    %8530 = vmatprep.subr.mxu0 0.0
    %8531 = vmatpush2.msra.mxu0 0.0
    %8532 = vmatprep.subr.mxu0 0.0
    %8533 = vmatpush2.msra.mxu0 0.0
    %8534 = vmatprep.subr.mxu0 0.0
    %8535 = vmatpush2.msra.mxu0 0.0
    %8536 = vmatprep.subr.mxu0 0.0
    %8537 = vmatpush2.msra.mxu0 0.0
    %8538 = vmatprep.subr.mxu0 0.0
    %8539 = vmatpush2.msra.mxu0 0.0
    %8540 = vmatprep.subr.mxu0 0.0
    %8541 = vmatpush2.msra.mxu0 0.0
    %8542 = vmatprep.subr.mxu0 0.0
    %8543 = vmatpush2.msra.mxu0 0.0
    %8544 = vmatprep.subr.mxu0 0.0
    %8545 = vmatpush2.msra.mxu0 0.0
    %8546 = vmatprep.subr.mxu0 0.0
    %8547 = vmatpush2.msra.mxu0 0.0
    %8548 = vmatprep.mubr.f32.mxu0 0.0
    %8549 = vmatmul.mubr.f32.gmra.mxu0 %v8411
    %v8550 = vpop.f32.mrf.mxu0
    %v8551 = vadd.f32 %v4965, %v8550
    %v8552 = vpop.f32.mrf.mxu0
    %8553 = vdwg.mxu0
    %v8555 = vsel %vm165, %v8228, 0
    %8557 = vmatprep.subr.mxu0 0.0
    %8558 = vmatpush1.msra.mxu0 0.0
    %8559 = vmatprep.subr.mxu0 0.0
    %8560 = vmatpush1.msra.mxu0 0.0
    %8561 = vmatprep.subr.mxu0 0.0
    %8562 = vmatpush1.msra.mxu0 0.0
    %8563 = vmatprep.subr.mxu0 0.0
    %8564 = vmatpush1.msra.mxu0 0.0
    %8565 = vmatprep.subr.mxu0 0.0
    %8566 = vmatpush1.msra.mxu0 0.0
    %8567 = vmatprep.subr.mxu0 0.0
    %8568 = vmatpush1.msra.mxu0 0.0
    %8569 = vmatprep.subr.mxu0 0.0
    %8570 = vmatpush1.msra.mxu0 0.0
    %8571 = vmatprep.subr.mxu0 0.0
    %8572 = vmatpush1.msra.mxu0 0.0
    %8573 = vmatprep.subr.mxu0 0.0
    %8574 = vmatpush1.msra.mxu0 0.0
    %8575 = vmatprep.subr.mxu0 0.0
    %8576 = vmatpush1.msra.mxu0 0.0
    %8577 = vmatprep.subr.mxu0 0.0
    %8578 = vmatpush1.msra.mxu0 0.0
    %8579 = vmatprep.subr.mxu0 0.0
    %8580 = vmatpush1.msra.mxu0 0.0
    %8581 = vmatprep.subr.mxu0 %v4459
    %8582 = vmatpush1.msra.mxu0 %v4458
    %8583 = vmatprep.subr.mxu0 %v4456
    %8584 = vmatpush1.msra.mxu0 %v4455
    %8585 = vmatprep.subr.mxu0 %v4453
    %8586 = vmatpush1.msra.mxu0 %v4452
    %8587 = vmatprep.subr.mxu0 %v4450
    %8588 = vmatpush1.msra.mxu0 %v4449
    %8589 = vmatprep.subr.mxu0 0.0
    %8590 = vmatpush2.msra.mxu0 0.0
    %8591 = vmatprep.subr.mxu0 0.0
    %8592 = vmatpush2.msra.mxu0 0.0
    %8593 = vmatprep.subr.mxu0 0.0
    %8594 = vmatpush2.msra.mxu0 0.0
    %8595 = vmatprep.subr.mxu0 0.0
    %8596 = vmatpush2.msra.mxu0 0.0
    %8597 = vmatprep.subr.mxu0 0.0
    %8598 = vmatpush2.msra.mxu0 0.0
    %8599 = vmatprep.subr.mxu0 0.0
    %8600 = vmatpush2.msra.mxu0 0.0
    %8601 = vmatprep.subr.mxu0 0.0
    %8602 = vmatpush2.msra.mxu0 0.0
    %8603 = vmatprep.subr.mxu0 0.0
    %8604 = vmatpush2.msra.mxu0 0.0
    %8605 = vmatprep.subr.mxu0 0.0
    %8606 = vmatpush2.msra.mxu0 0.0
    %8607 = vmatprep.subr.mxu0 0.0
    %8608 = vmatpush2.msra.mxu0 0.0
    %8609 = vmatprep.subr.mxu0 0.0
    %8610 = vmatpush2.msra.mxu0 0.0
    %8611 = vmatprep.subr.mxu0 0.0
    %8612 = vmatpush2.msra.mxu0 0.0
    %8613 = vmatprep.subr.mxu0 0.0
    %8614 = vmatpush2.msra.mxu0 0.0
    %8615 = vmatprep.subr.mxu0 0.0
    %8616 = vmatpush2.msra.mxu0 0.0
    %8617 = vmatprep.subr.mxu0 0.0
    %8618 = vmatpush2.msra.mxu0 0.0
    %8619 = vmatprep.subr.mxu0 0.0
    %8620 = vmatpush2.msra.mxu0 0.0
    %8621 = vmatprep.mubr.f32.mxu0 0.0
    %8622 = vmatmul.mubr.f32.gmra.mxu0 %v8555
    %v8623 = vpop.f32.mrf.mxu0
    %v8624 = vadd.f32 0.0, %v8623
    %v8625 = vpop.f32.mrf.mxu0
    %v8626 = vadd.f32 0.0, %v8625
    %8627 = vdwg.mxu0
    %8628 = vmatprep.subr.mxu0 0.0
    %8629 = vmatpush1.msra.mxu0 0.0
    %8630 = vmatprep.subr.mxu0 0.0
    %8631 = vmatpush1.msra.mxu0 0.0
    %8632 = vmatprep.subr.mxu0 0.0
    %8633 = vmatpush1.msra.mxu0 0.0
    %8634 = vmatprep.subr.mxu0 0.0
    %8635 = vmatpush1.msra.mxu0 0.0
    %8636 = vmatprep.subr.mxu0 0.0
    %8637 = vmatpush1.msra.mxu0 0.0
    %8638 = vmatprep.subr.mxu0 0.0
    %8639 = vmatpush1.msra.mxu0 0.0
    %8640 = vmatprep.subr.mxu0 0.0
    %8641 = vmatpush1.msra.mxu0 0.0
    %8642 = vmatprep.subr.mxu0 0.0
    %8643 = vmatpush1.msra.mxu0 0.0
    %8644 = vmatprep.subr.mxu0 0.0
    %8645 = vmatpush1.msra.mxu0 0.0
    %8646 = vmatprep.subr.mxu0 0.0
    %8647 = vmatpush1.msra.mxu0 0.0
    %8648 = vmatprep.subr.mxu0 0.0
    %8649 = vmatpush1.msra.mxu0 0.0
    %8650 = vmatprep.subr.mxu0 0.0
    %8651 = vmatpush1.msra.mxu0 0.0
    %8652 = vmatprep.subr.mxu0 0.0
    %8653 = vmatpush1.msra.mxu0 %v4460
    %8654 = vmatprep.subr.mxu0 0.0
    %8655 = vmatpush1.msra.mxu0 %v4457
    %8656 = vmatprep.subr.mxu0 0.0
    %8657 = vmatpush1.msra.mxu0 %v4454
    %8658 = vmatprep.subr.mxu0 0.0
    %8659 = vmatpush1.msra.mxu0 %v4451
    %8660 = vmatprep.subr.mxu0 0.0
    %8661 = vmatpush2.msra.mxu0 0.0
    %8662 = vmatprep.subr.mxu0 0.0
    %8663 = vmatpush2.msra.mxu0 0.0
    %8664 = vmatprep.subr.mxu0 0.0
    %8665 = vmatpush2.msra.mxu0 0.0
    %8666 = vmatprep.subr.mxu0 0.0
    %8667 = vmatpush2.msra.mxu0 0.0
    %8668 = vmatprep.subr.mxu0 0.0
    %8669 = vmatpush2.msra.mxu0 0.0
    %8670 = vmatprep.subr.mxu0 0.0
    %8671 = vmatpush2.msra.mxu0 0.0
    %8672 = vmatprep.subr.mxu0 0.0
    %8673 = vmatpush2.msra.mxu0 0.0
    %8674 = vmatprep.subr.mxu0 0.0
    %8675 = vmatpush2.msra.mxu0 0.0
    %8676 = vmatprep.subr.mxu0 0.0
    %8677 = vmatpush2.msra.mxu0 0.0
    %8678 = vmatprep.subr.mxu0 0.0
    %8679 = vmatpush2.msra.mxu0 0.0
    %8680 = vmatprep.subr.mxu0 0.0
    %8681 = vmatpush2.msra.mxu0 0.0
    %8682 = vmatprep.subr.mxu0 0.0
    %8683 = vmatpush2.msra.mxu0 0.0
    %8684 = vmatprep.subr.mxu0 0.0
    %8685 = vmatpush2.msra.mxu0 0.0
    %8686 = vmatprep.subr.mxu0 0.0
    %8687 = vmatpush2.msra.mxu0 0.0
    %8688 = vmatprep.subr.mxu0 0.0
    %8689 = vmatpush2.msra.mxu0 0.0
    %8690 = vmatprep.subr.mxu0 0.0
    %8691 = vmatpush2.msra.mxu0 0.0
    %8692 = vmatprep.mubr.f32.mxu0 0.0
    %8693 = vmatmul.mubr.f32.gmra.mxu0 %v8555
    %v8694 = vpop.f32.mrf.mxu0
    %v8695 = vadd.f32 0.0, %v8694
    %v8696 = vpop.f32.mrf.mxu0
    %8697 = vdwg.mxu0
    %v8698 = vadd.f32 %v8480, %v8624
    %v8699 = vadd.f32 %v8482, %v8626
    %v8700 = vxor.u32 %v8698, 2147483648
    %v8701 = vxor.u32 %v8699, 2147483648
    %v8702 = vmul.f32 %v8700, 1.442695
    %v8703 = vpow.pop %v8702
    %v8704 = vmul.f32 %v8701, 1.442695
    %v8705 = vpow.pop %v8704
    %v8706 = vadd.f32 %v8703, 1.0
    %v8707 = vadd.f32 %v8705, 1.0
    %v8708 = vrcp.pop %v8706
    %v8709 = vmul.f32 1.0, %v8708
    %v8710 = vrcp.pop %v8707
    %v8711 = vmul.f32 1.0, %v8710
    %v8712 = vadd.f32 %v8695, %v5274
    %v8713 = vmul.f32 %v8709, %v8712
    %v8714 = vadd.f32 %v8551, %v8713
    %v8715 = vtanh.pop %v8714
    %v8716 = vmul.f32 %v8711, %v8228
    %v8717 = vsub.f32 1.0, %v8711
    %v8718 = vmul.f32 %v8717, %v8715
    %v8719 = vadd.f32 %v8716, %v8718
    %v8720 = vlaneseq
    %v8721 = vshrl.u32 %v8720, 7
    %v8722 = vsub.s32 0, %v8721
    %v8723 = vrot.slane %v37, %v8722
    %v8725 = vcombine.low %v5282, %v5773
    %v8726 = vcombine.low %v6264, %v6755
    %v8728 = vunpack.c.l.s4 1983009808
    %v8729 = vunpack.c.0.s8 %v8728
    %v8730 = vlaneseq
    %v8731 = vshrl.u32 %v8730, 7
    %v8732 = vsub.s32 %v8729, %v8731
    %v8733 = vrot.slane %v8725, %v8732
    %v8735 = vunpack.c.l.s4 1983009808
    %v8736 = vunpack.c.0.s8 %v8735
    %v8737 = vlaneseq
    %v8738 = vshrl.u32 %v8737, 7
    %v8739 = vsub.s32 %v8736, %v8738
    %v8740 = vrot.slane %v8726, %v8739
    %v8741 = vcombine.low %v8733, %v8740
    %v8742 = vcombine.low %v7246, %v7737
    %v8743 = vcombine.low %v8228, %v8719
    %v8745 = vunpack.c.l.s4 1983009808
    %v8746 = vunpack.c.0.s8 %v8745
    %v8747 = vlaneseq
    %v8748 = vshrl.u32 %v8747, 7
    %v8749 = vsub.s32 %v8746, %v8748
    %v8750 = vrot.slane %v8742, %v8749
    %v8752 = vunpack.c.l.s4 1983009808
    %v8753 = vunpack.c.0.s8 %v8752
    %v8754 = vlaneseq
    %v8755 = vshrl.u32 %v8754, 7
    %v8756 = vsub.s32 %v8753, %v8755
    %v8757 = vrot.slane %v8743, %v8756
    %v8758 = vcombine.low %v8750, %v8757
    %v8759 = vsel %vm165, %v8741, 0
    %v8761 = vsel %vm165, %v8758, 0
    %8763 = vmatprep.subr.mxu0 0.0
    %8764 = vmatpush1.msra.mxu0 0.0
    %8765 = vmatprep.subr.mxu0 0.0
    %8766 = vmatpush1.msra.mxu0 0.0
    %8767 = vmatprep.subr.mxu0 0.0
    %8768 = vmatpush1.msra.mxu0 0.0
    %8769 = vmatprep.subr.mxu0 0.0
    %8770 = vmatpush1.msra.mxu0 0.0
    %8771 = vmatprep.subr.mxu0 0.0
    %8772 = vmatpush1.msra.mxu0 0.0
    %8773 = vmatprep.subr.mxu0 0.0
    %8774 = vmatpush1.msra.mxu0 0.0
    %8775 = vmatprep.subr.mxu0 0.0
    %8776 = vmatpush1.msra.mxu0 0.0
    %8777 = vmatprep.subr.mxu0 0.0
    %8778 = vmatpush1.msra.mxu0 0.0
    %8779 = vmatprep.subr.mxu0 0.0
    %8780 = vmatpush1.msra.mxu0 0.0
    %8781 = vmatprep.subr.mxu0 0.0
    %8782 = vmatpush1.msra.mxu0 0.0
    %8783 = vmatprep.subr.mxu0 0.0
    %8784 = vmatpush1.msra.mxu0 0.0
    %8785 = vmatprep.subr.mxu0 0.0
    %8786 = vmatpush1.msra.mxu0 0.0
    %8787 = vmatprep.subr.mxu0 0.0
    %8788 = vmatpush1.msra.mxu0 %v43
    %8789 = vmatprep.subr.mxu0 0.0
    %8790 = vmatpush1.msra.mxu0 %v42
    %8791 = vmatprep.subr.mxu0 0.0
    %8792 = vmatpush1.msra.mxu0 %v41
    %8793 = vmatprep.subr.mxu0 0.0
    %8794 = vmatpush1.msra.mxu0 %v40
    %8795 = vmatprep.subr.mxu0 0.0
    %8796 = vmatpush2.msra.mxu0 0.0
    %8797 = vmatprep.subr.mxu0 0.0
    %8798 = vmatpush2.msra.mxu0 0.0
    %8799 = vmatprep.subr.mxu0 0.0
    %8800 = vmatpush2.msra.mxu0 0.0
    %8801 = vmatprep.subr.mxu0 0.0
    %8802 = vmatpush2.msra.mxu0 0.0
    %8803 = vmatprep.subr.mxu0 0.0
    %8804 = vmatpush2.msra.mxu0 0.0
    %8805 = vmatprep.subr.mxu0 0.0
    %8806 = vmatpush2.msra.mxu0 0.0
    %8807 = vmatprep.subr.mxu0 0.0
    %8808 = vmatpush2.msra.mxu0 0.0
    %8809 = vmatprep.subr.mxu0 0.0
    %8810 = vmatpush2.msra.mxu0 0.0
    %8811 = vmatprep.subr.mxu0 0.0
    %8812 = vmatpush2.msra.mxu0 0.0
    %8813 = vmatprep.subr.mxu0 0.0
    %8814 = vmatpush2.msra.mxu0 0.0
    %8815 = vmatprep.subr.mxu0 0.0
    %8816 = vmatpush2.msra.mxu0 0.0
    %8817 = vmatprep.subr.mxu0 0.0
    %8818 = vmatpush2.msra.mxu0 0.0
    %8819 = vmatprep.subr.mxu0 0.0
    %8820 = vmatpush2.msra.mxu0 0.0
    %8821 = vmatprep.subr.mxu0 0.0
    %8822 = vmatpush2.msra.mxu0 0.0
    %8823 = vmatprep.subr.mxu0 0.0
    %8824 = vmatpush2.msra.mxu0 0.0
    %8825 = vmatprep.subr.mxu0 0.0
    %8826 = vmatpush2.msra.mxu0 0.0
    %8827 = vmatprep.mubr.f32.mxu0 0.0
    %8828 = vmatmul.mubr.f32.gmra.mxu0 %v8759
    %v8829 = vpop.f32.mrf.mxu0
    %v8830 = vadd.f32 %v8723, %v8829
    %v8831 = vpop.f32.mrf.mxu0
    %8832 = vmatprep.mubr.f32.mxu0 0.0
    %8833 = vmatmul.mubr.f32.gmra.mxu0 %v8761
    %v8834 = vpop.f32.mrf.mxu0
    %v8835 = vadd.f32 %v8723, %v8834
    %v8836 = vpop.f32.mrf.mxu0
    %8837 = vdwg.mxu0
    %v8840 = vcombine.high %v8830, %v8830
    %v8842 = vunpack.c.l.s4 1983009808
    %v8843 = vunpack.c.0.s8 %v8842
    %v8844 = vlaneseq
    %v8845 = vshrl.u32 %v8844, 7
    %v8846 = vsub.s32 %v8843, %v8845
    %v8847 = vrot.slane %v8830, %v8846
    %v8849 = vunpack.c.l.s4 1983009808
    %v8850 = vunpack.c.0.s8 %v8849
    %v8851 = vlaneseq
    %v8852 = vshrl.u32 %v8851, 7
    %v8853 = vsub.s32 %v8850, %v8852
    %v8854 = vrot.slane %v8840, %v8853
    %v8855 = vcombine.high %v8847, %v8847
    %v8856 = vcombine.high %v8854, %v8854
    %v8857 = vcombine.high %v8835, %v8835
    %v8859 = vunpack.c.l.s4 1983009808
    %v8860 = vunpack.c.0.s8 %v8859
    %v8861 = vlaneseq
    %v8862 = vshrl.u32 %v8861, 7
    %v8863 = vsub.s32 %v8860, %v8862
    %v8864 = vrot.slane %v8835, %v8863
    %v8866 = vunpack.c.l.s4 1983009808
    %v8867 = vunpack.c.0.s8 %v8866
    %v8868 = vlaneseq
    %v8869 = vshrl.u32 %v8868, 7
    %v8870 = vsub.s32 %v8867, %v8869
    %v8871 = vrot.slane %v8857, %v8870
    %v8872 = vcombine.high %v8864, %v8864
    %v8873 = vcombine.high %v8871, %v8871
    %8882 = vst [vmem:[%s6] sm:$0x3] %v8847
    %8883 = vst [vmem:[%s6 + $0x2] sm:$0x3] %v8855
    %8884 = vst [vmem:[%s6 + $0x4] sm:$0x3] %v8854
    %8885 = vst [vmem:[%s6 + $0x6] sm:$0x3] %v8856
    %8886 = vst [vmem:[%s6 + $0x8] sm:$0x3] %v8864
    %8887 = vst [vmem:[%s6 + $0xa] sm:$0x3] %v8872
    %8888 = vst [vmem:[%s6 + $0xc] sm:$0x3] %v8871
    %8889 = vst [vmem:[%s6 + $0xe] sm:$0x3] %v8873
    // Predicated region
    $region30: #{translation_rnn_forward.1} parent=1 // pred_check
      _
    $region31: #{translation_rnn_forward.1} parent=1 // pred_check_branch
      %8891 = sbr.rel (0) target = $region33
    $region32: #{translation_rnn_forward.1} parent=1 // pred_region
      _
    $region33: #{translation_rnn_forward.1} parent=1 // pred_fallthru
      _
    // Predicated region
    $region34: #{translation_rnn_forward.1} parent=1 // pred_check
      _
    $region35: #{translation_rnn_forward.1} parent=1 // pred_check_branch
      %8893 = sbr.rel (0) target = $region37
    $region36: #{translation_rnn_forward.1} parent=1 // pred_region
      _
    $region37: #{translation_rnn_forward.1} parent=1 // pred_fallthru
      _
    %8894 = vsyncpa [#allocation3], 1

</llo_original>
